<compile_context>
chip_gen: v7x
topology: tpu7x:2x2x1
jax: 0.10.0
libtpu: 0.0.40
codegen_flags: <defaults>
</compile_context>

<pallas_src>
from functools import partial

import numpy as np
import jax
import jax.numpy as jnp
from jax.experimental import pallas as pl
from jax.experimental.pallas import tpu as pltpu

BN_EPS = 1e-5
SUB_BF16 = 16   # bf16 sublane packing
SUB_F32 = 8     # f32 sublane packing


# ----------------------------------------------------------------------------
# Linear-operator construction (exact PyTorch adaptive-pool bins and
# align_corners=True bilinear weights).  Pure numpy, trace-time constants.
# ----------------------------------------------------------------------------
def adaptive_pool_matrix(s, H, W):
    """(s*s, H*W) row-stochastic adaptive-average-pool operator."""
    P = np.zeros((s * s, H * W), np.float32)
    for i in range(s):
        hs, he = (i * H) // s, -(-((i + 1) * H) // s)
        for j in range(s):
            ws, we = (j * W) // s, -(-((j + 1) * W) // s)
            val = 1.0 / ((he - hs) * (we - ws))
            for y in range(hs, he):
                P[i * s + j, y * W + ws: y * W + we] = val
    return P


def upsample_matrix(s, H, W):
    """(H*W, s*s) bilinear align_corners=True upsample operator (rows sum to 1)."""
    def axis_weights(out_len, in_len):
        A = np.zeros((out_len, in_len), np.float32)
        if in_len == 1:
            A[:, 0] = 1.0
            return A
        scale = (in_len - 1) / (out_len - 1) if out_len > 1 else 0.0
        for o in range(out_len):
            src = o * scale
            i0 = min(int(np.floor(src)), in_len - 1)
            i1 = min(i0 + 1, in_len - 1)
            w = src - i0
            A[o, i0] += 1.0 - w
            A[o, i1] += w
        return A

    Ay = axis_weights(H, s)
    Ax = axis_weights(W, s)
    return np.einsum("yi,xj->yxij", Ay, Ax).reshape(H * W, s * s).astype(np.float32)


# ----------------------------------------------------------------------------
# Parameter init (BN scale folded into the conv weights at init/trace time).
# ----------------------------------------------------------------------------
def init_params(key, features, out_features, sizes):
    def bn_fold(key):
        k1, k2, k3, k4 = jax.random.split(key, 4)
        gamma = 1.0 + 0.1 * jax.random.normal(k1, (out_features,), jnp.float32)
        beta = 0.1 * jax.random.normal(k2, (out_features,), jnp.float32)
        mean = 0.1 * jax.random.normal(k3, (out_features,), jnp.float32)
        var = 1.0 + 0.1 * jax.random.uniform(k4, (out_features,), jnp.float32)
        scale = gamma / jnp.sqrt(var + BN_EPS)
        bias = beta - mean * scale
        return scale, bias.reshape(1, -1)

    params = {"stages": []}
    for s in sizes:
        key, kw, kbn = jax.random.split(key, 3)
        w1 = 0.1 * jax.random.normal(kw, (features, out_features), jnp.float32)
        scale, bias = bn_fold(kbn)
        params["stages"].append({"size": s, "w1": w1 * scale[None, :], "bias": bias})

    ctot = features + len(sizes) * out_features
    key, kw, kbn = jax.random.split(key, 3)
    w3 = 0.05 * jax.random.normal(kw, (3, 3, ctot, out_features), jnp.float32)
    scale, bias = bn_fold(kbn)
    params["bottleneck"] = {
        "w9": (w3 * scale[None, None, None, :]).reshape(9, ctot, out_features),
        "bias": bias,
    }
    return params


# ----------------------------------------------------------------------------
# Fused PSP forward: one pallas_call, one grid step per batch element.
# ----------------------------------------------------------------------------
@partial(jax.jit, static_argnames=("sizes",))
def psp_forward(feats_nchw, params, sizes):
    """feats_nchw: (N, C, H, W) f32 -> (N, out_features, H, W) f32."""
    N, C, H, W = feats_nchw.shape
    Cout = params["bottleneck"]["bias"].shape[-1]
    Cs = len(sizes) * Cout            # fused stage-slab channels
    Ctot = Cs + C                     # concat channels seen by the 3x3 conv

    # Padded-pitch flat layout: row pitch Wp >= W+1 and a multiple of the bf16
    # sublane pack, plus a Wp-row zero halo above and below the image.
    Wp = ((W + 1 + SUB_BF16 - 1) // SUB_BF16) * SUB_BF16
    Hp = H * Wp                       # padded flat image size
    Hext = (H + 2) * Wp               # padded flat image + top/bottom halos
    G = SUB_F32                       # zero-guard rows around the conv accumulator

    # --- stacked pyramid operators embedded at padded flat positions (numpy) ---
    s2 = [s * s for s in sizes]
    S2 = int(sum(s2))
    offs = np.cumsum([0] + s2)
    pos = (np.arange(H)[:, None] * Wp + np.arange(W)[None, :]).reshape(-1)
    P_pad = np.zeros((S2, Hext), np.float32)    # stacked adaptive-pool operator
    U_full = np.zeros((Hext, S2), np.float32)   # block upsample op (zeros at pads/halos)
    zmask = np.zeros((S2, Cs), np.float32)      # keep each stage's own channel block
    for k, s in enumerate(sizes):
        P_pad[offs[k]:offs[k + 1], Wp + pos] = adaptive_pool_matrix(s, H, W)
        U_full[Wp + pos, offs[k]:offs[k + 1]] = upsample_matrix(s, H, W)
        zmask[offs[k]:offs[k + 1], k * Cout:(k + 1) * Cout] = 1.0

    # --- stacked / folded weights ---
    W1_stk = jnp.concatenate([st["w1"] for st in params["stages"]], axis=1)   # (C, Cs)
    ubias = jnp.concatenate([st["bias"] for st in params["stages"]], axis=1)  # (1, Cs)
    w9 = params["bottleneck"]["w9"]                                           # (9, Ctot, Cout)
    # dx folded into the lane dim: one (Ctot, 3*Cout) RHS per dy.
    w3_wide = jnp.stack(
        [jnp.concatenate([w9[3 * d + 0], w9[3 * d + 1], w9[3 * d + 2]], axis=1)
         for d in range(3)], axis=0).astype(jnp.bfloat16)                     # (3, Ctot, 3*Cout)
    bbias = params["bottleneck"]["bias"]                                      # (1, Cout)

    # --- x relayout: NCHW -> padded/haloed channels-last flat (one fused XLA copy).
    #     Kept f32 so the adaptive pooling runs at full precision.
    x_pad = jnp.pad(jnp.transpose(feats_nchw, (0, 2, 3, 1)),
                    ((0, 0), (1, 1), (0, Wp - W), (0, 0))).reshape(N, Hext, C)

    P_j = jnp.asarray(P_pad)
    U_j = jnp.asarray(U_full)
    zm_j = jnp.asarray(zmask)

    def kernel(x_ref, p_ref, w1_ref, zm_ref, ub_ref, u_ref, w3_ref, bb_ref,
               o_ref, ext_ref, acc_ref):
        # (1) pyramid stages, all f32: pool -> 1x1 conv (+folded BN) -> block mask
        #     -> bilinear upsample.  U_full scatters straight into the padded layout
        #     and writes exact zeros at pad columns / halo rows.
        pooled = jnp.dot(p_ref[...], x_ref[...],
                         preferred_element_type=jnp.float32)                   # (S2, C)
        z = (jnp.dot(pooled, w1_ref[...], preferred_element_type=jnp.float32)
             + ub_ref[...]) * zm_ref[...]                                      # (S2, Cs)
        slab = jnp.dot(u_ref[...], z, preferred_element_type=jnp.float32)      # (Hext, Cs)

        # (2) fused channel concat into the zero-haloed VMEM buffer (aligned stores).
        ext_ref[:, pl.ds(0, Cs)] = slab.astype(jnp.bfloat16)
        ext_ref[:, pl.ds(Cs, C)] = x_ref[...].astype(jnp.bfloat16)

        # (3) 3x3 conv: 3 matmuls (one per dy).  LHS = aligned Wp-multiple row slice
        #     of ext (streams VMEM->MXU, no shuffles); RHS = (Ctot, 3*Cout) with the
        #     three dx taps folded into the lane dimension.
        acc_ref[pl.ds(0, G), :] = jnp.zeros((G, 3 * Cout), jnp.float32)
        acc_ref[pl.ds(G + Hp, G), :] = jnp.zeros((G, 3 * Cout), jnp.float32)
        for d in range(3):                         # d = dy + 1, statically unrolled
            r = jnp.dot(ext_ref[pl.ds(d * Wp, Hp), :], w3_ref[d],
                        preferred_element_type=jnp.float32)                    # (Hp, 3*Cout)
            if d == 0:
                acc_ref[pl.ds(G, Hp), :] = r
            else:
                acc_ref[pl.ds(G, Hp), :] += r

        # (4) recombine the dx lanes with +-1-row offset reads of the small f32
        #     accumulator; the zero guard rows / pad columns supply the conv padding.
        center = acc_ref[pl.ds(G, Hp), pl.ds(Cout, Cout)]
        left = acc_ref[pl.ds(G - 1, Hp), pl.ds(0, Cout)]
        right = acc_ref[pl.ds(G + 1, Hp), pl.ds(2 * Cout, Cout)]
        # folded BN bias + ReLU; Dropout2d(0.1) is identity in eval mode.
        o_ref[...] = jnp.maximum(center + left + right + bb_ref[...],
                                 0.0).astype(o_ref.dtype)

    flops = N * 2 * (S2 * Hext * C + S2 * C * Cs + Hext * S2 * Cs
                     + 3 * Hp * Ctot * 3 * Cout)
    bytes_accessed = (N * Hext * C * 4 + N * Hp * Cout * 4
                      + 3 * Ctot * 3 * Cout * 2
                      + (S2 * Hext + Hext * S2 + C * Cs + S2 * Cs + Cs + Cout) * 4)

    out = pl.pallas_call(
        kernel,
        out_shape=jax.ShapeDtypeStruct((N, Hp, Cout), jnp.float32),
        grid=(N,),
        in_specs=[
            pl.BlockSpec((None, Hext, C), lambda n: (n, 0, 0)),
            pl.BlockSpec((S2, Hext), lambda n: (0, 0)),
            pl.BlockSpec((C, Cs), lambda n: (0, 0)),
            pl.BlockSpec((S2, Cs), lambda n: (0, 0)),
            pl.BlockSpec((1, Cs), lambda n: (0, 0)),
            pl.BlockSpec((Hext, S2), lambda n: (0, 0)),
            pl.BlockSpec((3, Ctot, 3 * Cout), lambda n: (0, 0, 0)),
            pl.BlockSpec((1, Cout), lambda n: (0, 0)),
        ],
        out_specs=pl.BlockSpec((None, Hp, Cout), lambda n: (n, 0, 0)),
        scratch_shapes=[
            pltpu.VMEM((Hext, Ctot), jnp.bfloat16),           # concat buffer (haloed)
            pltpu.VMEM((Hp + 2 * G, 3 * Cout), jnp.float32),  # conv acc + guard rows
        ],
        compiler_params=pltpu.CompilerParams(
            dimension_semantics=("parallel",),
            vmem_limit_bytes=32 * 1024 * 1024,
        ),
        cost_estimate=pl.CostEstimate(flops=flops, transcendentals=0,
                                      bytes_accessed=bytes_accessed),
    )(x_pad, P_j, W1_stk, zm_j, ubias, U_j, w3_wide, bbias)

    # Drop pad columns and return NCHW (one fused XLA relayout at the API boundary).
    return jnp.transpose(out.reshape(N, H, Wp, Cout)[:, :, :W, :], (0, 3, 1, 2))


# ----------------------------------------------------------------------------
# Pure-JAX (XLA) eval-mode reference with the same quantization points as the
# kernel (f32 stage path; bf16 only for the concat slab and the 3x3 weights).
# ----------------------------------------------------------------------------
def reference_forward(feats_nchw, params, sizes):
    N, C, H, W = feats_nchw.shape
    x_nhwc = jnp.transpose(feats_nchw, (0, 2, 3, 1))
    x_flat = x_nhwc.reshape(N, H * W, C)
    priors = []
    for st in params["stages"]:
        s = st["size"]
        P = jnp.asarray(adaptive_pool_matrix(s, H, W))
        U = jnp.asarray(upsample_matrix(s, H, W))
        pooled = jnp.einsum("qh,nhc->nqc", P, x_flat)
        z = jnp.einsum("nqc,cd->nqd", pooled, st["w1"]) + st["bias"]
        up = jnp.einsum("hq,nqd->nhd", U, z)
        priors.append(up.reshape(N, H, W, -1))
    priors.append(x_nhwc)
    cat = jnp.concatenate(priors, axis=-1)
    q = lambda a: jnp.asarray(a).astype(jnp.bfloat16).astype(jnp.float32)
    cout = params["bottleneck"]["bias"].shape[-1]
    w3 = q(params["bottleneck"]["w9"]).reshape(3, 3, cat.shape[-1], cout)
    conv = jax.lax.conv_general_dilated(
        q(cat), w3, window_strides=(1, 1), padding=((1, 1), (1, 1)),
        dimension_numbers=("NHWC", "HWIO", "NHWC"))
    out = jnp.maximum(conv + params["bottleneck"]["bias"], 0.0)
    return jnp.transpose(out, (0, 3, 1, 2))


if __name__ == "__main__":
    key = jax.random.PRNGKey(0)
    N, C, H, W = 2, 32, 12, 12          # features=32, spatial 12x12
    out_features = 128                  # keeps every output slab lane-dense
    sizes = (1, 2, 3, 6)

    kx, kp = jax.random.split(key)
    x = jax.random.normal(kx, (N, C, H, W), jnp.float32)
    params = init_params(kp, C, out_features, sizes)

    out = jax.block_until_ready(psp_forward(x, params, sizes))
    assert out.shape == (N, out_features, H, W), out.shape
    assert bool(jnp.all(jnp.isfinite(out)))

    ref = jax.block_until_ready(reference_forward(x, params, sizes))
    err = float(jnp.max(jnp.abs(out - ref)))
    assert err < 3e-2, f"max abs err vs reference: {err}"

    print("KERNEL_OK")
</pallas_src>

<mosaic_0001>
module attributes {stable_mosaic.version = 11 : i64} {
  func.func @kernel(%arg0: i32, %arg1: memref<1x224x32xf32, #tpu.memory_space<vmem>>, %arg2: memref<50x224xf32, #tpu.memory_space<vmem>>, %arg3: memref<32x512xf32, #tpu.memory_space<vmem>>, %arg4: memref<50x512xf32, #tpu.memory_space<vmem>>, %arg5: memref<1x512xf32, #tpu.memory_space<vmem>>, %arg6: memref<224x50xf32, #tpu.memory_space<vmem>>, %arg7: memref<3x544x384xbf16, #tpu.memory_space<vmem>>, %arg8: memref<1x128xf32, #tpu.memory_space<vmem>>, %arg9: memref<1x192x128xf32, #tpu.memory_space<vmem>>, %arg10: memref<224x544xbf16, #tpu.memory_space<vmem>>, %arg11: memref<208x384xf32, #tpu.memory_space<vmem>>) attributes {dimension_semantics = [#tpu.dimension_semantics<parallel>], iteration_bounds = array<i64: 2>, scalar_prefetch = 0 : i64, scratch_operands = 2 : i64, tpu.core_type = #tpu.core_type<tc>, window_params = [{transform_indices = @transform_0, window_bounds = array<i64: 1, 224, 32>}, {pipeline_mode = #tpu.pipeline_mode<synchronous>, transform_indices = @transform_1, window_bounds = array<i64: 50, 224>}, {pipeline_mode = #tpu.pipeline_mode<synchronous>, transform_indices = @transform_2, window_bounds = array<i64: 32, 512>}, {pipeline_mode = #tpu.pipeline_mode<synchronous>, transform_indices = @transform_3, window_bounds = array<i64: 50, 512>}, {pipeline_mode = #tpu.pipeline_mode<synchronous>, transform_indices = @transform_4, window_bounds = array<i64: 1, 512>}, {pipeline_mode = #tpu.pipeline_mode<synchronous>, transform_indices = @transform_5, window_bounds = array<i64: 224, 50>}, {pipeline_mode = #tpu.pipeline_mode<synchronous>, transform_indices = @transform_6, window_bounds = array<i64: 3, 544, 384>}, {pipeline_mode = #tpu.pipeline_mode<synchronous>, transform_indices = @transform_7, window_bounds = array<i64: 1, 128>}, {transform_indices = @transform_8, window_bounds = array<i64: 1, 192, 128>}]} {
    %c0 = arith.constant 0 : index
    %c0_0 = arith.constant 0 : index
    %0 = vector.load %arg2[%c0, %c0_0] : memref<50x224xf32, #tpu.memory_space<vmem>>, vector<50x224xf32>
    %c0_1 = arith.constant 0 : index
    %c0_2 = arith.constant 0 : index
    %c0_3 = arith.constant 0 : index
    %1 = vector.load %arg1[%c0_1, %c0_2, %c0_3] : memref<1x224x32xf32, #tpu.memory_space<vmem>>, vector<1x224x32xf32>
    %2 = vector.shape_cast %1 : vector<1x224x32xf32> to vector<224x32xf32>
    %cst = arith.constant dense<0.000000e+00> : vector<50x32xf32>
    %3 = tpu.matmul %0, %2, %cst {dimension_numbers = #tpu.dot_dimension_numbers<[1], [0], [0], [1], [0, 0, 1, 1], [], []>} : vector<50x224xf32>, vector<224x32xf32>, vector<50x32xf32> -> vector<50x32xf32>
    %c0_4 = arith.constant 0 : index
    %c0_5 = arith.constant 0 : index
    %4 = vector.load %arg3[%c0_4, %c0_5] : memref<32x512xf32, #tpu.memory_space<vmem>>, vector<32x512xf32>
    %cst_6 = arith.constant dense<0.000000e+00> : vector<50x512xf32>
    %5 = tpu.matmul %3, %4, %cst_6 {dimension_numbers = #tpu.dot_dimension_numbers<[1], [0], [0], [1], [0, 0, 1, 1], [], []>} : vector<50x32xf32>, vector<32x512xf32>, vector<50x512xf32> -> vector<50x512xf32>
    %c0_7 = arith.constant 0 : index
    %c0_8 = arith.constant 0 : index
    %6 = vector.load %arg5[%c0_7, %c0_8] : memref<1x512xf32, #tpu.memory_space<vmem>>, vector<1x512xf32>
    %7 = vector.broadcast %6 : vector<1x512xf32> to vector<50x512xf32>
    %8 = arith.addf %5, %7 : vector<50x512xf32>
    %c0_9 = arith.constant 0 : index
    %c0_10 = arith.constant 0 : index
    %9 = vector.load %arg4[%c0_9, %c0_10] : memref<50x512xf32, #tpu.memory_space<vmem>>, vector<50x512xf32>
    %10 = arith.mulf %8, %9 : vector<50x512xf32>
    %c0_11 = arith.constant 0 : index
    %c0_12 = arith.constant 0 : index
    %11 = vector.load %arg6[%c0_11, %c0_12] : memref<224x50xf32, #tpu.memory_space<vmem>>, vector<224x50xf32>
    %cst_13 = arith.constant dense<0.000000e+00> : vector<224x512xf32>
    %12 = tpu.matmul %11, %10, %cst_13 {dimension_numbers = #tpu.dot_dimension_numbers<[1], [0], [0], [1], [0, 0, 1, 1], [], []>} : vector<224x50xf32>, vector<50x512xf32>, vector<224x512xf32> -> vector<224x512xf32>
    %13 = arith.truncf %12 : vector<224x512xf32> to vector<224x512xbf16>
    %c0_14 = arith.constant 0 : index
    %c0_15 = arith.constant 0 : index
    %14 = vector.load %arg10[%c0_14, %c0_15] : memref<224x544xbf16, #tpu.memory_space<vmem>>, vector<224x512xbf16>
    tpu.vector_store %arg10[%c0_14, %c0_15], %13 {strides = array<i32>} : memref<224x544xbf16, #tpu.memory_space<vmem>>, vector<224x512xbf16>,
    %c0_16 = arith.constant 0 : index
    %c0_17 = arith.constant 0 : index
    %c0_18 = arith.constant 0 : index
    %15 = vector.load %arg1[%c0_16, %c0_17, %c0_18] : memref<1x224x32xf32, #tpu.memory_space<vmem>>, vector<1x224x32xf32>
    %16 = vector.shape_cast %15 : vector<1x224x32xf32> to vector<224x32xf32>
    %17 = arith.truncf %16 : vector<224x32xf32> to vector<224x32xbf16>
    %c0_19 = arith.constant 0 : index
    %c512 = arith.constant 512 : index
    %18 = vector.load %arg10[%c0_19, %c512] : memref<224x544xbf16, #tpu.memory_space<vmem>>, vector<224x32xbf16>
    tpu.vector_store %arg10[%c0_19, %c512], %17 {strides = array<i32>} : memref<224x544xbf16, #tpu.memory_space<vmem>>, vector<224x32xbf16>,
    %cst_20 = arith.constant 0.000000e+00 : f32
    %19 = vector.broadcast %cst_20 : f32 to vector<8x384xf32>
    %c0_21 = arith.constant 0 : index
    %c0_22 = arith.constant 0 : index
    %20 = vector.load %arg11[%c0_21, %c0_22] : memref<208x384xf32, #tpu.memory_space<vmem>>, vector<8x384xf32>
    tpu.vector_store %arg11[%c0_21, %c0_22], %19 {strides = array<i32>} : memref<208x384xf32, #tpu.memory_space<vmem>>, vector<8x384xf32>,
    %cst_23 = arith.constant 0.000000e+00 : f32
    %21 = vector.broadcast %cst_23 : f32 to vector<8x384xf32>
    %c200 = arith.constant 200 : index
    %c0_24 = arith.constant 0 : index
    %22 = vector.load %arg11[%c200, %c0_24] : memref<208x384xf32, #tpu.memory_space<vmem>>, vector<8x384xf32>
    tpu.vector_store %arg11[%c200, %c0_24], %21 {strides = array<i32>} : memref<208x384xf32, #tpu.memory_space<vmem>>, vector<8x384xf32>,
    %c0_25 = arith.constant 0 : index
    %c0_26 = arith.constant 0 : index
    %23 = vector.load %arg10[%c0_25, %c0_26] : memref<224x544xbf16, #tpu.memory_space<vmem>>, vector<192x544xbf16>
    %c0_27 = arith.constant 0 : index
    %c0_28 = arith.constant 0 : index
    %c0_29 = arith.constant 0 : index
    %24 = vector.load %arg7[%c0_27, %c0_28, %c0_29] : memref<3x544x384xbf16, #tpu.memory_space<vmem>>, vector<1x544x384xbf16>
    %25 = vector.shape_cast %24 : vector<1x544x384xbf16> to vector<544x384xbf16>
    %cst_30 = arith.constant dense<0.000000e+00> : vector<192x384xf32>
    %26 = tpu.matmul %23, %25, %cst_30 {dimension_numbers = #tpu.dot_dimension_numbers<[1], [0], [0], [1], [0, 0, 1, 1], [], []>} : vector<192x544xbf16>, vector<544x384xbf16>, vector<192x384xf32> -> vector<192x384xf32>
    %c8 = arith.constant 8 : index
    %c0_31 = arith.constant 0 : index
    %27 = vector.load %arg11[%c8, %c0_31] : memref<208x384xf32, #tpu.memory_space<vmem>>, vector<192x384xf32>
    tpu.vector_store %arg11[%c8, %c0_31], %26 {strides = array<i32>} : memref<208x384xf32, #tpu.memory_space<vmem>>, vector<192x384xf32>,
    %c16 = arith.constant 16 : index
    %c0_32 = arith.constant 0 : index
    %28 = vector.load %arg10[%c16, %c0_32] : memref<224x544xbf16, #tpu.memory_space<vmem>>, vector<192x544xbf16>
    %c1 = arith.constant 1 : index
    %c0_33 = arith.constant 0 : index
    %c0_34 = arith.constant 0 : index
    %29 = vector.load %arg7[%c1, %c0_33, %c0_34] : memref<3x544x384xbf16, #tpu.memory_space<vmem>>, vector<1x544x384xbf16>
    %30 = vector.shape_cast %29 : vector<1x544x384xbf16> to vector<544x384xbf16>
    %cst_35 = arith.constant dense<0.000000e+00> : vector<192x384xf32>
    %31 = tpu.matmul %28, %30, %cst_35 {dimension_numbers = #tpu.dot_dimension_numbers<[1], [0], [0], [1], [0, 0, 1, 1], [], []>} : vector<192x544xbf16>, vector<544x384xbf16>, vector<192x384xf32> -> vector<192x384xf32>
    %c8_36 = arith.constant 8 : index
    %c0_37 = arith.constant 0 : index
    %32 = vector.load %arg11[%c8_36, %c0_37] : memref<208x384xf32, #tpu.memory_space<vmem>>, vector<192x384xf32>
    %33 = arith.addf %32, %31 : vector<192x384xf32>
    %c8_38 = arith.constant 8 : index
    %c0_39 = arith.constant 0 : index
    %34 = vector.load %arg11[%c8_38, %c0_39] : memref<208x384xf32, #tpu.memory_space<vmem>>, vector<192x384xf32>
    tpu.vector_store %arg11[%c8_38, %c0_39], %33 {strides = array<i32>} : memref<208x384xf32, #tpu.memory_space<vmem>>, vector<192x384xf32>,
    %c32 = arith.constant 32 : index
    %c0_40 = arith.constant 0 : index
    %35 = vector.load %arg10[%c32, %c0_40] : memref<224x544xbf16, #tpu.memory_space<vmem>>, vector<192x544xbf16>
    %c2 = arith.constant 2 : index
    %c0_41 = arith.constant 0 : index
    %c0_42 = arith.constant 0 : index
    %36 = vector.load %arg7[%c2, %c0_41, %c0_42] : memref<3x544x384xbf16, #tpu.memory_space<vmem>>, vector<1x544x384xbf16>
    %37 = vector.shape_cast %36 : vector<1x544x384xbf16> to vector<544x384xbf16>
    %cst_43 = arith.constant dense<0.000000e+00> : vector<192x384xf32>
    %38 = tpu.matmul %35, %37, %cst_43 {dimension_numbers = #tpu.dot_dimension_numbers<[1], [0], [0], [1], [0, 0, 1, 1], [], []>} : vector<192x544xbf16>, vector<544x384xbf16>, vector<192x384xf32> -> vector<192x384xf32>
    %c8_44 = arith.constant 8 : index
    %c0_45 = arith.constant 0 : index
    %39 = vector.load %arg11[%c8_44, %c0_45] : memref<208x384xf32, #tpu.memory_space<vmem>>, vector<192x384xf32>
    %40 = arith.addf %39, %38 : vector<192x384xf32>
    %c8_46 = arith.constant 8 : index
    %c0_47 = arith.constant 0 : index
    %41 = vector.load %arg11[%c8_46, %c0_47] : memref<208x384xf32, #tpu.memory_space<vmem>>, vector<192x384xf32>
    tpu.vector_store %arg11[%c8_46, %c0_47], %40 {strides = array<i32>} : memref<208x384xf32, #tpu.memory_space<vmem>>, vector<192x384xf32>,
    %c8_48 = arith.constant 8 : index
    %c128 = arith.constant 128 : index
    %42 = vector.load %arg11[%c8_48, %c128] : memref<208x384xf32, #tpu.memory_space<vmem>>, vector<192x128xf32>
    %c7 = arith.constant 7 : index
    %c0_49 = arith.constant 0 : index
    %43 = vector.load %arg11[%c7, %c0_49] : memref<208x384xf32, #tpu.memory_space<vmem>>, vector<192x128xf32>
    %c9 = arith.constant 9 : index
    %c256 = arith.constant 256 : index
    %44 = vector.load %arg11[%c9, %c256] : memref<208x384xf32, #tpu.memory_space<vmem>>, vector<192x128xf32>
    %45 = arith.addf %42, %43 : vector<192x128xf32>
    %46 = arith.addf %45, %44 : vector<192x128xf32>
    %c0_50 = arith.constant 0 : index
    %c0_51 = arith.constant 0 : index
    %47 = vector.load %arg8[%c0_50, %c0_51] : memref<1x128xf32, #tpu.memory_space<vmem>>, vector<1x128xf32>
    %48 = vector.broadcast %47 : vector<1x128xf32> to vector<192x128xf32>
    %49 = arith.addf %46, %48 : vector<192x128xf32>
    %cst_52 = arith.constant 0.000000e+00 : f32
    %50 = vector.broadcast %cst_52 : f32 to vector<192x128xf32>
    %51 = arith.maximumf %49, %50 : vector<192x128xf32>
    %c0_53 = arith.constant 0 : index
    %c0_54 = arith.constant 0 : index
    %c0_55 = arith.constant 0 : index
    %52 = vector.load %arg9[%c0_53, %c0_54, %c0_55] : memref<1x192x128xf32, #tpu.memory_space<vmem>>, vector<1x192x128xf32>
    %53 = vector.shape_cast %52 : vector<1x192x128xf32> to vector<192x128xf32>
    %54 = vector.shape_cast %51 : vector<192x128xf32> to vector<1x192x128xf32>
    tpu.vector_store %arg9[%c0_53, %c0_54, %c0_55], %54 {strides = array<i32>} : memref<1x192x128xf32, #tpu.memory_space<vmem>>, vector<1x192x128xf32>,
    return
  }
  func.func @transform_0(%arg0: i32) -> (i32, i32, i32) {
    %c0_i32 = arith.constant 0 : i32
    %c0_i32_0 = arith.constant 0 : i32
    %c0_i32_1 = arith.constant 0 : i32
    return %arg0, %c0_i32, %c0_i32_0 : i32, i32, i32
  }
  func.func @transform_1(%arg0: i32) -> (i32, i32) {
    %c0_i32 = arith.constant 0 : i32
    %c0_i32_0 = arith.constant 0 : i32
    %c0_i32_1 = arith.constant 0 : i32
    return %c0_i32, %c0_i32_0 : i32, i32
  }
  func.func @transform_2(%arg0: i32) -> (i32, i32) {
    %c0_i32 = arith.constant 0 : i32
    %c0_i32_0 = arith.constant 0 : i32
    %c0_i32_1 = arith.constant 0 : i32
    return %c0_i32, %c0_i32_0 : i32, i32
  }
  func.func @transform_3(%arg0: i32) -> (i32, i32) {
    %c0_i32 = arith.constant 0 : i32
    %c0_i32_0 = arith.constant 0 : i32
    %c0_i32_1 = arith.constant 0 : i32
    return %c0_i32, %c0_i32_0 : i32, i32
  }
  func.func @transform_4(%arg0: i32) -> (i32, i32) {
    %c0_i32 = arith.constant 0 : i32
    %c0_i32_0 = arith.constant 0 : i32
    %c0_i32_1 = arith.constant 0 : i32
    return %c0_i32, %c0_i32_0 : i32, i32
  }
  func.func @transform_5(%arg0: i32) -> (i32, i32) {
    %c0_i32 = arith.constant 0 : i32
    %c0_i32_0 = arith.constant 0 : i32
    %c0_i32_1 = arith.constant 0 : i32
    return %c0_i32, %c0_i32_0 : i32, i32
  }
  func.func @transform_6(%arg0: i32) -> (i32, i32, i32) {
    %c0_i32 = arith.constant 0 : i32
    %c0_i32_0 = arith.constant 0 : i32
    %c0_i32_1 = arith.constant 0 : i32
    %c0_i32_2 = arith.constant 0 : i32
    return %c0_i32, %c0_i32_0, %c0_i32_1 : i32, i32, i32
  }
  func.func @transform_7(%arg0: i32) -> (i32, i32) {
    %c0_i32 = arith.constant 0 : i32
    %c0_i32_0 = arith.constant 0 : i32
    %c0_i32_1 = arith.constant 0 : i32
    return %c0_i32, %c0_i32_0 : i32, i32
  }
  func.func @transform_8(%arg0: i32) -> (i32, i32, i32) {
    %c0_i32 = arith.constant 0 : i32
    %c0_i32_0 = arith.constant 0 : i32
    %c0_i32_1 = arith.constant 0 : i32
    return %arg0, %c0_i32, %c0_i32_0 : i32, i32, i32
  }
}

</mosaic_0001>

<llo_original>
// kernel: psp_forward.1
$region0: #{psp_forward.1}
  #allocation0 [shape = 'u32[]', space=smem, size = 0x4, offset = 0x4, fixed_abs, tag = 'smem constant byte address 0x4 - core index']
  #allocation1 [shape = 'u32[144,128]{1,0:T(1,128)}', space=vmem, size = 0x12000, scoped, tag = 'internal scratch']
  #allocation2 [shape = 'bf16[224,544]{1,0:T(16,128)(2,1)}', space=vmem, size = 0x46000, scoped, tag = 'scratch operand']
  #allocation3 [shape = 'f32[208,384]{1,0:T(8,128)}', space=vmem, size = 0x4e000, scoped, tag = 'scratch operand']
  %s0 = inlined_call_operand.vmem [shape: f32[2,224,32], index: 0, kind: input, shape index: {}]
  %s1 = inlined_call_operand.vmem [shape: f32[50,224], index: 1, kind: input, shape index: {}]
  %s2 = inlined_call_operand.vmem [shape: f32[32,512], index: 2, kind: input, shape index: {}]
  %s3 = inlined_call_operand.vmem [shape: f32[50,512], index: 3, kind: input, shape index: {}]
  %s4 = inlined_call_operand.vmem [shape: f32[1,512], index: 4, kind: input, shape index: {}]
  %s5 = inlined_call_operand.vmem [shape: f32[224,50], index: 5, kind: input, shape index: {}]
  %s6 = inlined_call_operand.vmem [shape: bf16[3,544,384], index: 6, kind: input, shape index: {}]
  %s7 = inlined_call_operand.vmem [shape: f32[1,128], index: 7, kind: input, shape index: {}]
  %s8 = inlined_call_operand.vmem [shape: f32[2,192,128], index: 8, kind: output, shape index: {}]
  %s9 = sld [smem:[#allocation0]]
  $region65: #{psp_forward.1} parent=0
    _
  %s11 = ssub.s32 1, %s9
  %s12 = scalar_select 0, %s11, %s9
  loop: start=0, step=1, limit=4
  $region2: #{psp_forward.1} parent=0 // loop_pre_header
    _
  $region3: #{psp_forward.1} parent=0 // loop_header
    %s14 = sphi 0, %s18
    %p15 = scmp.ge.s32.totalorder %s14, 4
    %s24 = sphi 0, %s26
    %s27 = sphi 0, %s24
    %s28 = sphi 0, %s27
    %s44 = sphi 0, %s28
    %s48 = sphi 0, %s48
    %s50 = sphi 0, %s48
    %s51 = sphi 0, %s50
    %s65 = sphi 0, %s51
    %s69 = sphi 0, %s69
    %s71 = sphi 0, %s69
    %s72 = sphi 0, %s71
    %s86 = sphi 0, %s72
    %s90 = sphi 0, %s90
    %s92 = sphi 0, %s90
    %s93 = sphi 0, %s92
    %s107 = sphi 0, %s93
    %s111 = sphi 0, %s111
    %s113 = sphi 0, %s111
    %s114 = sphi 0, %s113
    %s128 = sphi 0, %s114
    %s132 = sphi 0, %s132
    %s134 = sphi 0, %s132
    %s135 = sphi 0, %s134
    %s149 = sphi 0, %s135
    %s153 = sphi 0, %s153
    %s155 = sphi 0, %s153
    %s156 = sphi 0, %s155
    %s170 = sphi 0, %s156
    %s174 = sphi 0, %s174
    %s176 = sphi 0, %s174
    %s177 = sphi 0, %s176
    %s191 = sphi 0, %s177
    %s197 = sphi 0, %s199
    %s200 = sphi 0, %s197
    %s201 = sphi 0, %s200
    %s217 = sphi 0, %s201
  $region4: #{psp_forward.1} parent=0 // loop_header_branch
    %17 = sbr.rel (%p15) target = $region8
  $region5: #{psp_forward.1} parent=0 // loop_body
    %s19 = ssub.s32 %s14, 1
    %s20 = ssub.s32 %s14, 2
    %s21 = sadd.s32 %s14, 1
    %s22 = ssub.s32 %s14, %s21
    %p23 = scmp.eq.s32.totalorder %s22, 0
    %s25 = sadd.s32 %s24, 1
    %s26 = scalar_select %p23, %s24, %s25
    %p29 = pneg %p23
    %p30 = scmp.eq.s32.totalorder %s14, 1
    %p31 = por %p29, %p30
    %p32 = scmp.ne.s32.totalorder %s24, %s27
    %p33 = scmp.eq.s32.totalorder %s14, 0
    %p34 = por %p32, %p33
    %p35 = scmp.ne.s32.totalorder %s24, %s27
    %p36 = scmp.eq.s32.totalorder %s19, 1
    %p37 = por %p35, %p36
    %p38 = scmp.ne.s32.totalorder %s27, %s28
    %p39 = scmp.eq.s32.totalorder %s19, 0
    %p40 = por %p38, %p39
    %p41 = scmp.ne.s32.totalorder %s27, %s28
    %p42 = scmp.eq.s32.totalorder %s20, 1
    %p43 = por %p41, %p42
    %p45 = scmp.ne.s32.totalorder %s28, %s44
    %p46 = scmp.eq.s32.totalorder %s20, 0
    %p47 = por %p45, %p46
    %s49 = sadd.s32 %s48, 1
    %p52 = scmp.eq.s32.totalorder %s14, 1
    %p53 = scmp.ne.s32.totalorder %s48, %s50
    %p54 = scmp.eq.s32.totalorder %s14, 0
    %p55 = por %p53, %p54
    %p56 = scmp.ne.s32.totalorder %s48, %s50
    %p57 = scmp.eq.s32.totalorder %s19, 1
    %p58 = por %p56, %p57
    %p59 = scmp.ne.s32.totalorder %s50, %s51
    %p60 = scmp.eq.s32.totalorder %s19, 0
    %p61 = por %p59, %p60
    %p62 = scmp.ne.s32.totalorder %s50, %s51
    %p63 = scmp.eq.s32.totalorder %s20, 1
    %p64 = por %p62, %p63
    %p66 = scmp.ne.s32.totalorder %s51, %s65
    %p67 = scmp.eq.s32.totalorder %s20, 0
    %p68 = por %p66, %p67
    %s70 = sadd.s32 %s69, 1
    %p73 = scmp.eq.s32.totalorder %s14, 1
    %p74 = scmp.ne.s32.totalorder %s69, %s71
    %p75 = scmp.eq.s32.totalorder %s14, 0
    %p76 = por %p74, %p75
    %p77 = scmp.ne.s32.totalorder %s69, %s71
    %p78 = scmp.eq.s32.totalorder %s19, 1
    %p79 = por %p77, %p78
    %p80 = scmp.ne.s32.totalorder %s71, %s72
    %p81 = scmp.eq.s32.totalorder %s19, 0
    %p82 = por %p80, %p81
    %p83 = scmp.ne.s32.totalorder %s71, %s72
    %p84 = scmp.eq.s32.totalorder %s20, 1
    %p85 = por %p83, %p84
    %p87 = scmp.ne.s32.totalorder %s72, %s86
    %p88 = scmp.eq.s32.totalorder %s20, 0
    %p89 = por %p87, %p88
    %s91 = sadd.s32 %s90, 1
    %p94 = scmp.eq.s32.totalorder %s14, 1
    %p95 = scmp.ne.s32.totalorder %s90, %s92
    %p96 = scmp.eq.s32.totalorder %s14, 0
    %p97 = por %p95, %p96
    %p98 = scmp.ne.s32.totalorder %s90, %s92
    %p99 = scmp.eq.s32.totalorder %s19, 1
    %p100 = por %p98, %p99
    %p101 = scmp.ne.s32.totalorder %s92, %s93
    %p102 = scmp.eq.s32.totalorder %s19, 0
    %p103 = por %p101, %p102
    %p104 = scmp.ne.s32.totalorder %s92, %s93
    %p105 = scmp.eq.s32.totalorder %s20, 1
    %p106 = por %p104, %p105
    %p108 = scmp.ne.s32.totalorder %s93, %s107
    %p109 = scmp.eq.s32.totalorder %s20, 0
    %p110 = por %p108, %p109
    %s112 = sadd.s32 %s111, 1
    %p115 = scmp.eq.s32.totalorder %s14, 1
    %p116 = scmp.ne.s32.totalorder %s111, %s113
    %p117 = scmp.eq.s32.totalorder %s14, 0
    %p118 = por %p116, %p117
    %p119 = scmp.ne.s32.totalorder %s111, %s113
    %p120 = scmp.eq.s32.totalorder %s19, 1
    %p121 = por %p119, %p120
    %p122 = scmp.ne.s32.totalorder %s113, %s114
    %p123 = scmp.eq.s32.totalorder %s19, 0
    %p124 = por %p122, %p123
    %p125 = scmp.ne.s32.totalorder %s113, %s114
    %p126 = scmp.eq.s32.totalorder %s20, 1
    %p127 = por %p125, %p126
    %p129 = scmp.ne.s32.totalorder %s114, %s128
    %p130 = scmp.eq.s32.totalorder %s20, 0
    %p131 = por %p129, %p130
    %s133 = sadd.s32 %s132, 1
    %p136 = scmp.eq.s32.totalorder %s14, 1
    %p137 = scmp.ne.s32.totalorder %s132, %s134
    %p138 = scmp.eq.s32.totalorder %s14, 0
    %p139 = por %p137, %p138
    %p140 = scmp.ne.s32.totalorder %s132, %s134
    %p141 = scmp.eq.s32.totalorder %s19, 1
    %p142 = por %p140, %p141
    %p143 = scmp.ne.s32.totalorder %s134, %s135
    %p144 = scmp.eq.s32.totalorder %s19, 0
    %p145 = por %p143, %p144
    %p146 = scmp.ne.s32.totalorder %s134, %s135
    %p147 = scmp.eq.s32.totalorder %s20, 1
    %p148 = por %p146, %p147
    %p150 = scmp.ne.s32.totalorder %s135, %s149
    %p151 = scmp.eq.s32.totalorder %s20, 0
    %p152 = por %p150, %p151
    %s154 = sadd.s32 %s153, 1
    %p157 = scmp.eq.s32.totalorder %s14, 1
    %p158 = scmp.ne.s32.totalorder %s153, %s155
    %p159 = scmp.eq.s32.totalorder %s14, 0
    %p160 = por %p158, %p159
    %p161 = scmp.ne.s32.totalorder %s153, %s155
    %p162 = scmp.eq.s32.totalorder %s19, 1
    %p163 = por %p161, %p162
    %p164 = scmp.ne.s32.totalorder %s155, %s156
    %p165 = scmp.eq.s32.totalorder %s19, 0
    %p166 = por %p164, %p165
    %p167 = scmp.ne.s32.totalorder %s155, %s156
    %p168 = scmp.eq.s32.totalorder %s20, 1
    %p169 = por %p167, %p168
    %p171 = scmp.ne.s32.totalorder %s156, %s170
    %p172 = scmp.eq.s32.totalorder %s20, 0
    %p173 = por %p171, %p172
    %s175 = sadd.s32 %s174, 1
    %p178 = scmp.eq.s32.totalorder %s14, 1
    %p179 = scmp.ne.s32.totalorder %s174, %s176
    %p180 = scmp.eq.s32.totalorder %s14, 0
    %p181 = por %p179, %p180
    %p182 = scmp.ne.s32.totalorder %s174, %s176
    %p183 = scmp.eq.s32.totalorder %s19, 1
    %p184 = por %p182, %p183
    %p185 = scmp.ne.s32.totalorder %s176, %s177
    %p186 = scmp.eq.s32.totalorder %s19, 0
    %p187 = por %p185, %p186
    %p188 = scmp.ne.s32.totalorder %s176, %s177
    %p189 = scmp.eq.s32.totalorder %s20, 1
    %p190 = por %p188, %p189
    %p192 = scmp.ne.s32.totalorder %s177, %s191
    %p193 = scmp.eq.s32.totalorder %s20, 0
    %p194 = por %p192, %p193
    %s195 = ssub.s32 %s14, %s21
    %p196 = scmp.eq.s32.totalorder %s195, 0
    %s198 = sadd.s32 %s197, 1
    %s199 = scalar_select %p196, %s197, %s198
    %p202 = pneg %p196
    %p203 = scmp.eq.s32.totalorder %s14, 1
    %p204 = por %p202, %p203
    %p205 = scmp.ne.s32.totalorder %s197, %s200
    %p206 = scmp.eq.s32.totalorder %s14, 0
    %p207 = por %p205, %p206
    %p208 = scmp.ne.s32.totalorder %s197, %s200
    %p209 = scmp.eq.s32.totalorder %s19, 1
    %p210 = por %p208, %p209
    %p211 = scmp.ne.s32.totalorder %s200, %s201
    %p212 = scmp.eq.s32.totalorder %s19, 0
    %p213 = por %p211, %p212
    %p214 = scmp.ne.s32.totalorder %s200, %s201
    %p215 = scmp.eq.s32.totalorder %s20, 1
    %p216 = por %p214, %p215
    %p218 = scmp.ne.s32.totalorder %s201, %s217
    %p219 = scmp.eq.s32.totalorder %s20, 0
    %p220 = por %p218, %p219
    %p221 = scmp.le.s32.totalorder 1, %s14
    %p222 = scmp.lt.s32.totalorder %s14, 3
    %p223 = pnand %p221, %p222
    %p224 = pneg %p223
    // Predicated region
    $region9: #{psp_forward.1} parent=5 // pred_check
      _
    $region10: #{psp_forward.1} parent=5 // pred_check_branch
      %226 = sbr.rel (%p223) target = $region12
    $region11: #{psp_forward.1} parent=5 // pred_region
      %s227 = ssub.s32 %s14, 1
      // Predicated region
      $region13: #{psp_forward.1} parent=11 // pred_check
        %p228 = pneg %p61
      $region14: #{psp_forward.1} parent=11 // pred_check_branch
        %230 = sbr.rel (%p228) target = $region16
      $region15: #{psp_forward.1} parent=11 // pred_region
        _
      $region16: #{psp_forward.1} parent=11 // pred_fallthru
        _
      // Predicated region
      $region17: #{psp_forward.1} parent=11 // pred_check
        %p231 = pneg %p82
      $region18: #{psp_forward.1} parent=11 // pred_check_branch
        %233 = sbr.rel (%p231) target = $region20
      $region19: #{psp_forward.1} parent=11 // pred_region
        _
      $region20: #{psp_forward.1} parent=11 // pred_fallthru
        _
      // Predicated region
      $region21: #{psp_forward.1} parent=11 // pred_check
        %p234 = pneg %p103
      $region22: #{psp_forward.1} parent=11 // pred_check_branch
        %236 = sbr.rel (%p234) target = $region24
      $region23: #{psp_forward.1} parent=11 // pred_region
        _
      $region24: #{psp_forward.1} parent=11 // pred_fallthru
        _
      // Predicated region
      $region25: #{psp_forward.1} parent=11 // pred_check
        %p237 = pneg %p124
      $region26: #{psp_forward.1} parent=11 // pred_check_branch
        %239 = sbr.rel (%p237) target = $region28
      $region27: #{psp_forward.1} parent=11 // pred_region
        _
      $region28: #{psp_forward.1} parent=11 // pred_fallthru
        _
      // Predicated region
      $region29: #{psp_forward.1} parent=11 // pred_check
        %p240 = pneg %p145
      $region30: #{psp_forward.1} parent=11 // pred_check_branch
        %242 = sbr.rel (%p240) target = $region32
      $region31: #{psp_forward.1} parent=11 // pred_region
        _
      $region32: #{psp_forward.1} parent=11 // pred_fallthru
        _
      // Predicated region
      $region33: #{psp_forward.1} parent=11 // pred_check
        %p243 = pneg %p166
      $region34: #{psp_forward.1} parent=11 // pred_check_branch
        %245 = sbr.rel (%p243) target = $region36
      $region35: #{psp_forward.1} parent=11 // pred_region
        _
      $region36: #{psp_forward.1} parent=11 // pred_fallthru
        _
      // Predicated region
      $region37: #{psp_forward.1} parent=11 // pred_check
        %p246 = pneg %p187
      $region38: #{psp_forward.1} parent=11 // pred_check_branch
        %248 = sbr.rel (%p246) target = $region40
      $region39: #{psp_forward.1} parent=11 // pred_region
        _
      $region40: #{psp_forward.1} parent=11 // pred_fallthru
        _
    $region12: #{psp_forward.1} parent=5 // pred_fallthru
      _
    %p249 = scmp.lt.s32.totalorder %s14, 2
    // Predicated region
    $region41: #{psp_forward.1} parent=5 // pred_check
      %p250 = pneg %p249
    $region42: #{psp_forward.1} parent=5 // pred_check_branch
      %252 = sbr.rel (%p250) target = $region44
    $region43: #{psp_forward.1} parent=5 // pred_region
      // Predicated region
      $region45: #{psp_forward.1} parent=43 // pred_check
        %p253 = pneg %p34
      $region46: #{psp_forward.1} parent=43 // pred_check_branch
        %255 = sbr.rel (%p253) target = $region48
      $region47: #{psp_forward.1} parent=43 // pred_region
        %p256 = scmp.lt.s32.totalorder %s14, 1
        %s257 = scalar_select %p256, %s14, 1
        %s258 = smul.addr %s257, 28
        %s259 = smul.addr %s258, 8
        %s260 = scalar_lea.vmem %s0, %s259
      $region48: #{psp_forward.1} parent=43 // pred_fallthru
        _
    $region44: #{psp_forward.1} parent=5 // pred_fallthru
      _
    %p261 = scmp.le.s32.totalorder 1, %s14
    %p262 = scmp.lt.s32.totalorder %s14, 3
    %p263 = pnand %p261, %p262
    %p264 = pneg %p263
    // Predicated region
    $region49: #{psp_forward.1} parent=5 // pred_check
      _
    $region50: #{psp_forward.1} parent=5 // pred_check_branch
      %266 = sbr.rel (%p263) target = $region52
    $region51: #{psp_forward.1} parent=5 // pred_region
      %s267 = ssub.s32 %s14, 1
      %p268 = scmp.lt.s32.totalorder %s19, 1
      %s269 = scalar_select %p268, %s19, 1
      %s270 = smul.addr %s269, 28
      %s271 = smul.addr %s270, 8
      %s272 = scalar_lea.vmem %s0, %s271
      %p273 = pneg %p40
      %p274 = pneg %p37
      %p275 = pneg %p61
      %p276 = pneg %p58
      %p277 = pneg %p82
      %p278 = pneg %p79
      %p279 = pneg %p103
      %p280 = pneg %p100
      %p281 = pneg %p124
      %p282 = pneg %p121
      %p283 = pneg %p145
      %p284 = pneg %p142
      %p285 = pneg %p166
      %p286 = pneg %p163
      %p287 = pneg %p187
      %p288 = pneg %p184
      %p289 = pneg %p213
      %p290 = pneg %p210
      %p291 = scmp.lt.s32.totalorder %s19, 1
      %s292 = scalar_select %p291, %s19, 1
      %s293 = smul.addr %s292, 24
      %s294 = smul.addr %s293, 8
      %s295 = scalar_lea.vmem %s8, %s294
      %p296 = scmp.lt.s32.totalorder %s19, 1
      %s297 = scalar_select %p296, %s19, 1
      %s298 = smul.addr %s297, 28
      %s299 = smul.addr %s298, 8
      %s300 = scalar_lea.vmem %s0, %s299
      %p301 = scmp.lt.s32.totalorder %s19, 1
      %s302 = scalar_select %p301, %s19, 1
      %s303 = smul.addr %s302, 24
      %s304 = smul.addr %s303, 8
      %s305 = scalar_lea.vmem %s8, %s304
      %v307 = vld [vmem:[%s1] sm:$0xff]
      %v308 = vld [vmem:[%s1 + $0x8] sm:$0xff]
      %v309 = vld [vmem:[%s1 + $0x10] sm:$0xff]
      %v310 = vld [vmem:[%s1 + $0x18] sm:$0xff]
      %v311 = vld [vmem:[%s1 + $0x20] sm:$0xff]
      %v312 = vld [vmem:[%s1 + $0x28] sm:$0xff]
      %v313 = vld [vmem:[%s1 + $0x30] sm:$0xff]
      %v314 = vld [vmem:[%s1 + $0x38] sm:$0xff]
      %v315 = vld [vmem:[%s1 + $0x40] sm:$0xff]
      %v316 = vld [vmem:[%s1 + $0x48] sm:$0xff]
      %v317 = vld [vmem:[%s1 + $0x50] sm:$0xff]
      %v318 = vld [vmem:[%s1 + $0x58] sm:$0xff]
      %v319 = vld [vmem:[%s1 + $0x60] sm:$0x3]
      %v320 = vld [vmem:[%s1 + $0x68] sm:$0x3]
      %v321 = vld [vmem:[%s300] sm:$0xff]
      %v322 = vld [vmem:[%s300 + $0x8] sm:$0xff]
      %v323 = vld [vmem:[%s300 + $0x10] sm:$0xff]
      %v324 = vld [vmem:[%s300 + $0x18] sm:$0xff]
      %v325 = vld [vmem:[%s300 + $0x20] sm:$0xff]
      %v326 = vld [vmem:[%s300 + $0x28] sm:$0xff]
      %v327 = vld [vmem:[%s300 + $0x30] sm:$0xff]
      %v328 = vld [vmem:[%s300 + $0x38] sm:$0xff]
      %v329 = vld [vmem:[%s300 + $0x40] sm:$0xff]
      %v330 = vld [vmem:[%s300 + $0x48] sm:$0xff]
      %v331 = vld [vmem:[%s300 + $0x50] sm:$0xff]
      %v332 = vld [vmem:[%s300 + $0x58] sm:$0xff]
      %v333 = vld [vmem:[%s300 + $0x60] sm:$0xff]
      %v334 = vld [vmem:[%s300 + $0x68] sm:$0xff]
      %v335 = vld [vmem:[%s300 + $0x70] sm:$0xff]
      %v336 = vld [vmem:[%s300 + $0x78] sm:$0xff]
      %v337 = vld [vmem:[%s300 + $0x80] sm:$0xff]
      %v338 = vld [vmem:[%s300 + $0x88] sm:$0xff]
      %v339 = vld [vmem:[%s300 + $0x90] sm:$0xff]
      %v340 = vld [vmem:[%s300 + $0x98] sm:$0xff]
      %v341 = vld [vmem:[%s300 + $0xa0] sm:$0xff]
      %v342 = vld [vmem:[%s300 + $0xa8] sm:$0xff]
      %v343 = vld [vmem:[%s300 + $0xb0] sm:$0xff]
      %v344 = vld [vmem:[%s300 + $0xb8] sm:$0xff]
      %v345 = vld [vmem:[%s300 + $0xc0] sm:$0xff]
      %v346 = vld [vmem:[%s300 + $0xc8] sm:$0xff]
      %v347 = vld [vmem:[%s300 + $0xd0] sm:$0xff]
      %v348 = vld [vmem:[%s300 + $0xd8] sm:$0xff]
      %vm349 = vcmask 785408
      %v351 = vsel %vm349, %v308, 0
      %v354 = vsel %vm349, %v310, 0
      %v357 = vsel %vm349, %v312, 0
      %v360 = vsel %vm349, %v314, 0
      %v363 = vsel %vm349, %v316, 0
      %v366 = vsel %vm349, %v318, 0
      %v369 = vsel %vm349, %v320, 0
      %371 = vmatprep.subr.mxu0 0.0
      %372 = vmatpush1.msra.mxu0 %v321
      %373 = vmatprep.subr.mxu0 0.0
      %374 = vmatpush1.msra.mxu0 %v322
      %375 = vmatprep.subr.mxu0 0.0
      %376 = vmatpush1.msra.mxu0 %v323
      %377 = vmatprep.subr.mxu0 0.0
      %378 = vmatpush1.msra.mxu0 %v324
      %379 = vmatprep.subr.mxu0 0.0
      %380 = vmatpush1.msra.mxu0 %v325
      %381 = vmatprep.subr.mxu0 0.0
      %382 = vmatpush1.msra.mxu0 %v326
      %383 = vmatprep.subr.mxu0 0.0
      %384 = vmatpush1.msra.mxu0 %v327
      %385 = vmatprep.subr.mxu0 0.0
      %386 = vmatpush1.msra.mxu0 %v328
      %387 = vmatprep.subr.mxu0 0.0
      %388 = vmatpush1.msra.mxu0 %v329
      %389 = vmatprep.subr.mxu0 0.0
      %390 = vmatpush1.msra.mxu0 %v330
      %391 = vmatprep.subr.mxu0 0.0
      %392 = vmatpush1.msra.mxu0 %v331
      %393 = vmatprep.subr.mxu0 0.0
      %394 = vmatpush1.msra.mxu0 %v332
      %395 = vmatprep.subr.mxu0 0.0
      %396 = vmatpush1.msra.mxu0 %v333
      %397 = vmatprep.subr.mxu0 0.0
      %398 = vmatpush1.msra.mxu0 %v334
      %399 = vmatprep.subr.mxu0 0.0
      %400 = vmatpush1.msra.mxu0 %v335
      %401 = vmatprep.subr.mxu0 0.0
      %402 = vmatpush1.msra.mxu0 %v336
      %403 = vmatprep.subr.mxu0 0.0
      %404 = vmatpush1.msra.mxu0 %v337
      %405 = vmatprep.subr.mxu0 0.0
      %406 = vmatpush1.msra.mxu0 %v338
      %407 = vmatprep.subr.mxu0 0.0
      %408 = vmatpush1.msra.mxu0 %v339
      %409 = vmatprep.subr.mxu0 0.0
      %410 = vmatpush1.msra.mxu0 %v340
      %411 = vmatprep.subr.mxu0 0.0
      %412 = vmatpush1.msra.mxu0 %v341
      %413 = vmatprep.subr.mxu0 0.0
      %414 = vmatpush1.msra.mxu0 %v342
      %415 = vmatprep.subr.mxu0 0.0
      %416 = vmatpush1.msra.mxu0 %v343
      %417 = vmatprep.subr.mxu0 0.0
      %418 = vmatpush1.msra.mxu0 %v344
      %419 = vmatprep.subr.mxu0 0.0
      %420 = vmatpush1.msra.mxu0 %v345
      %421 = vmatprep.subr.mxu0 0.0
      %422 = vmatpush1.msra.mxu0 %v346
      %423 = vmatprep.subr.mxu0 0.0
      %424 = vmatpush1.msra.mxu0 %v347
      %425 = vmatprep.subr.mxu0 0.0
      %426 = vmatpush1.msra.mxu0 %v348
      %427 = vmatprep.subr.mxu0 0.0
      %428 = vmatpush1.msra.mxu0 0.0
      %429 = vmatprep.subr.mxu0 0.0
      %430 = vmatpush1.msra.mxu0 0.0
      %431 = vmatprep.subr.mxu0 0.0
      %432 = vmatpush1.msra.mxu0 0.0
      %433 = vmatprep.subr.mxu0 0.0
      %434 = vmatpush1.msra.mxu0 0.0
      %435 = vmatprep.mubr.f32.mxu0 %v351
      %436 = vmatmul.mubr.f32.gmra.mrb[0].mxu0 %v307
      %v437 = vpop.f32.mrb[0].mxu0
      %v438 = vadd.f32 0.0, %v437
      %v439 = vpop.f32.mrb[0].mxu0
      %440 = vmatprep.mubr.f32.mxu0 %v354
      %441 = vmatmul.mubr.f32.gmra.mrb[0].mxu0 %v309
      %v442 = vpop.f32.mrb[0].mxu0
      %v443 = vadd.f32 0.0, %v442
      %v444 = vpop.f32.mrb[0].mxu0
      %445 = vmatprep.mubr.f32.mxu0 %v357
      %446 = vmatmul.mubr.f32.gmra.mrb[0].mxu0 %v311
      %v447 = vpop.f32.mrb[0].mxu0
      %v448 = vadd.f32 0.0, %v447
      %v449 = vpop.f32.mrb[0].mxu0
      %450 = vmatprep.mubr.f32.mxu0 %v360
      %451 = vmatmul.mubr.f32.gmra.mrb[0].mxu0 %v313
      %v452 = vpop.f32.mrb[0].mxu0
      %v453 = vadd.f32 0.0, %v452
      %v454 = vpop.f32.mrb[0].mxu0
      %455 = vmatprep.mubr.f32.mxu0 %v363
      %456 = vmatmul.mubr.f32.gmra.mrb[0].mxu0 %v315
      %v457 = vpop.f32.mrb[0].mxu0
      %v458 = vadd.f32 0.0, %v457
      %v459 = vpop.f32.mrb[0].mxu0
      %460 = vmatprep.mubr.f32.mxu0 %v366
      %461 = vmatmul.mubr.f32.gmra.mrb[0].mxu0 %v317
      %v462 = vpop.f32.mrb[0].mxu0
      %v463 = vadd.f32 0.0, %v462
      %v464 = vpop.f32.mrb[0].mxu0
      %465 = vmatprep.mubr.f32.mxu0 %v369
      %466 = vmatmul.mubr.f32.gmra.mrb[0].mxu0 %v319
      %v467 = vpop.f32.mrb[0].mxu0
      %v468 = vadd.f32 0.0, %v467
      %v469 = vpop.f32.mrb[0].mxu0
      %470 = vdwg.mxu0
      %v471 = vld [vmem:[%s2] sm:$0xff]
      %v472 = vld [vmem:[%s2 + $0x8] sm:$0xff]
      %v473 = vld [vmem:[%s2 + $0x10] sm:$0xff]
      %v474 = vld [vmem:[%s2 + $0x18] sm:$0xff]
      %v475 = vld [vmem:[%s2 + $0x20] sm:$0xff]
      %v476 = vld [vmem:[%s2 + $0x28] sm:$0xff]
      %v477 = vld [vmem:[%s2 + $0x30] sm:$0xff]
      %v478 = vld [vmem:[%s2 + $0x38] sm:$0xff]
      %v479 = vld [vmem:[%s2 + $0x40] sm:$0xff]
      %v480 = vld [vmem:[%s2 + $0x48] sm:$0xff]
      %v481 = vld [vmem:[%s2 + $0x50] sm:$0xff]
      %v482 = vld [vmem:[%s2 + $0x58] sm:$0xff]
      %v483 = vld [vmem:[%s2 + $0x60] sm:$0xff]
      %v484 = vld [vmem:[%s2 + $0x68] sm:$0xff]
      %v485 = vld [vmem:[%s2 + $0x70] sm:$0xff]
      %v486 = vld [vmem:[%s2 + $0x78] sm:$0xff]
      %v487 = vld [vmem:[%s4] sm:$0xf]
      %v489 = vlaneseq
      %v490 = vshrl.u32 %v489, 7
      %v491 = vsub.s32 0, %v490
      %v492 = vrot.slane %v487, %v491
      %v493 = vlaneseq
      %v494 = vshrl.u32 %v493, 7
      %v495 = vsub.s32 1, %v494
      %v496 = vrot.slane %v487, %v495
      %v497 = vlaneseq
      %v498 = vshrl.u32 %v497, 7
      %v499 = vsub.s32 2, %v498
      %v500 = vrot.slane %v487, %v499
      %v501 = vlaneseq
      %v502 = vshrl.u32 %v501, 7
      %v503 = vsub.s32 3, %v502
      %v504 = vrot.slane %v487, %v503
      %vm509 = vcmask 261120
      %v511 = vsel %vm509, %v438, 0
      %v514 = vsel %vm509, %v443, 0
      %v517 = vsel %vm509, %v448, 0
      %v520 = vsel %vm509, %v453, 0
      %v523 = vsel %vm509, %v458, 0
      %v526 = vsel %vm509, %v463, 0
      %v529 = vsel %vm509, %v468, 0
      %531 = vmatprep.subr.mxu0 %v472
      %532 = vmatpush1.msra.mxu0 %v471
      %533 = vmatprep.subr.mxu0 %v476
      %534 = vmatpush1.msra.mxu0 %v475
      %535 = vmatprep.subr.mxu0 %v480
      %536 = vmatpush1.msra.mxu0 %v479
      %537 = vmatprep.subr.mxu0 %v484
      %538 = vmatpush1.msra.mxu0 %v483
      %539 = vmatprep.subr.mxu0 0.0
      %540 = vmatpush1.msra.mxu0 0.0
      %541 = vmatprep.subr.mxu0 0.0
      %542 = vmatpush1.msra.mxu0 0.0
      %543 = vmatprep.subr.mxu0 0.0
      %544 = vmatpush1.msra.mxu0 0.0
      %545 = vmatprep.subr.mxu0 0.0
      %546 = vmatpush1.msra.mxu0 0.0
      %547 = vmatprep.subr.mxu0 0.0
      %548 = vmatpush1.msra.mxu0 0.0
      %549 = vmatprep.subr.mxu0 0.0
      %550 = vmatpush1.msra.mxu0 0.0
      %551 = vmatprep.subr.mxu0 0.0
      %552 = vmatpush1.msra.mxu0 0.0
      %553 = vmatprep.subr.mxu0 0.0
      %554 = vmatpush1.msra.mxu0 0.0
      %555 = vmatprep.subr.mxu0 0.0
      %556 = vmatpush1.msra.mxu0 0.0
      %557 = vmatprep.subr.mxu0 0.0
      %558 = vmatpush1.msra.mxu0 0.0
      %559 = vmatprep.subr.mxu0 0.0
      %560 = vmatpush1.msra.mxu0 0.0
      %561 = vmatprep.subr.mxu0 0.0
      %562 = vmatpush1.msra.mxu0 0.0
      %563 = vmatprep.subr.mxu0 0.0
      %564 = vmatpush1.msra.mxu0 0.0
      %565 = vmatprep.subr.mxu0 0.0
      %566 = vmatpush1.msra.mxu0 0.0
      %567 = vmatprep.subr.mxu0 0.0
      %568 = vmatpush1.msra.mxu0 0.0
      %569 = vmatprep.subr.mxu0 0.0
      %570 = vmatpush1.msra.mxu0 0.0
      %571 = vmatprep.subr.mxu0 0.0
      %572 = vmatpush1.msra.mxu0 0.0
      %573 = vmatprep.subr.mxu0 0.0
      %574 = vmatpush1.msra.mxu0 0.0
      %575 = vmatprep.subr.mxu0 0.0
      %576 = vmatpush1.msra.mxu0 0.0
      %577 = vmatprep.subr.mxu0 0.0
      %578 = vmatpush1.msra.mxu0 0.0
      %579 = vmatprep.subr.mxu0 0.0
      %580 = vmatpush1.msra.mxu0 0.0
      %581 = vmatprep.subr.mxu0 0.0
      %582 = vmatpush1.msra.mxu0 0.0
      %583 = vmatprep.subr.mxu0 0.0
      %584 = vmatpush1.msra.mxu0 0.0
      %585 = vmatprep.subr.mxu0 0.0
      %586 = vmatpush1.msra.mxu0 0.0
      %587 = vmatprep.subr.mxu0 0.0
      %588 = vmatpush1.msra.mxu0 0.0
      %589 = vmatprep.subr.mxu0 0.0
      %590 = vmatpush1.msra.mxu0 0.0
      %591 = vmatprep.subr.mxu0 0.0
      %592 = vmatpush1.msra.mxu0 0.0
      %593 = vmatprep.subr.mxu0 0.0
      %594 = vmatpush1.msra.mxu0 0.0
      %595 = vmatprep.mubr.f32.mxu0 0.0
      %596 = vmatmul.mubr.f32.gmra.mrb[0].mxu0 %v511
      %v597 = vpop.f32.mrb[0].mxu0
      %v598 = vadd.f32 %v492, %v597
      %v599 = vpop.f32.mrb[0].mxu0
      %v600 = vadd.f32 %v496, %v599
      %601 = vmatprep.mubr.f32.mxu0 0.0
      %602 = vmatmul.mubr.f32.gmra.mrb[0].mxu0 %v514
      %v603 = vpop.f32.mrb[0].mxu0
      %v604 = vadd.f32 %v492, %v603
      %v605 = vpop.f32.mrb[0].mxu0
      %v606 = vadd.f32 %v496, %v605
      %607 = vmatprep.mubr.f32.mxu0 0.0
      %608 = vmatmul.mubr.f32.gmra.mrb[0].mxu0 %v517
      %v609 = vpop.f32.mrb[0].mxu0
      %v610 = vadd.f32 %v492, %v609
      %v611 = vpop.f32.mrb[0].mxu0
      %v612 = vadd.f32 %v496, %v611
      %613 = vmatprep.mubr.f32.mxu0 0.0
      %614 = vmatmul.mubr.f32.gmra.mrb[0].mxu0 %v520
      %v615 = vpop.f32.mrb[0].mxu0
      %v616 = vadd.f32 %v492, %v615
      %v617 = vpop.f32.mrb[0].mxu0
      %v618 = vadd.f32 %v496, %v617
      %619 = vmatprep.mubr.f32.mxu0 0.0
      %620 = vmatmul.mubr.f32.gmra.mrb[0].mxu0 %v523
      %v621 = vpop.f32.mrb[0].mxu0
      %v622 = vadd.f32 %v492, %v621
      %v623 = vpop.f32.mrb[0].mxu0
      %v624 = vadd.f32 %v496, %v623
      %625 = vmatprep.mubr.f32.mxu0 0.0
      %626 = vmatmul.mubr.f32.gmra.mrb[0].mxu0 %v526
      %v627 = vpop.f32.mrb[0].mxu0
      %v628 = vadd.f32 %v492, %v627
      %v629 = vpop.f32.mrb[0].mxu0
      %v630 = vadd.f32 %v496, %v629
      %631 = vmatprep.mubr.f32.mxu0 0.0
      %632 = vmatmul.mubr.f32.gmra.mrb[0].mxu0 %v529
      %v633 = vpop.f32.mrb[0].mxu0
      %v634 = vadd.f32 %v492, %v633
      %v635 = vpop.f32.mrb[0].mxu0
      %v636 = vadd.f32 %v496, %v635
      %637 = vdwg.mxu0
      %638 = vmatprep.subr.mxu0 %v474
      %639 = vmatpush1.msra.mxu0 %v473
      %640 = vmatprep.subr.mxu0 %v478
      %641 = vmatpush1.msra.mxu0 %v477
      %642 = vmatprep.subr.mxu0 %v482
      %643 = vmatpush1.msra.mxu0 %v481
      %644 = vmatprep.subr.mxu0 %v486
      %645 = vmatpush1.msra.mxu0 %v485
      %646 = vmatprep.subr.mxu0 0.0
      %647 = vmatpush1.msra.mxu0 0.0
      %648 = vmatprep.subr.mxu0 0.0
      %649 = vmatpush1.msra.mxu0 0.0
      %650 = vmatprep.subr.mxu0 0.0
      %651 = vmatpush1.msra.mxu0 0.0
      %652 = vmatprep.subr.mxu0 0.0
      %653 = vmatpush1.msra.mxu0 0.0
      %654 = vmatprep.subr.mxu0 0.0
      %655 = vmatpush1.msra.mxu0 0.0
      %656 = vmatprep.subr.mxu0 0.0
      %657 = vmatpush1.msra.mxu0 0.0
      %658 = vmatprep.subr.mxu0 0.0
      %659 = vmatpush1.msra.mxu0 0.0
      %660 = vmatprep.subr.mxu0 0.0
      %661 = vmatpush1.msra.mxu0 0.0
      %662 = vmatprep.subr.mxu0 0.0
      %663 = vmatpush1.msra.mxu0 0.0
      %664 = vmatprep.subr.mxu0 0.0
      %665 = vmatpush1.msra.mxu0 0.0
      %666 = vmatprep.subr.mxu0 0.0
      %667 = vmatpush1.msra.mxu0 0.0
      %668 = vmatprep.subr.mxu0 0.0
      %669 = vmatpush1.msra.mxu0 0.0
      %670 = vmatprep.subr.mxu0 0.0
      %671 = vmatpush1.msra.mxu0 0.0
      %672 = vmatprep.subr.mxu0 0.0
      %673 = vmatpush1.msra.mxu0 0.0
      %674 = vmatprep.subr.mxu0 0.0
      %675 = vmatpush1.msra.mxu0 0.0
      %676 = vmatprep.subr.mxu0 0.0
      %677 = vmatpush1.msra.mxu0 0.0
      %678 = vmatprep.subr.mxu0 0.0
      %679 = vmatpush1.msra.mxu0 0.0
      %680 = vmatprep.subr.mxu0 0.0
      %681 = vmatpush1.msra.mxu0 0.0
      %682 = vmatprep.subr.mxu0 0.0
      %683 = vmatpush1.msra.mxu0 0.0
      %684 = vmatprep.subr.mxu0 0.0
      %685 = vmatpush1.msra.mxu0 0.0
      %686 = vmatprep.subr.mxu0 0.0
      %687 = vmatpush1.msra.mxu0 0.0
      %688 = vmatprep.subr.mxu0 0.0
      %689 = vmatpush1.msra.mxu0 0.0
      %690 = vmatprep.subr.mxu0 0.0
      %691 = vmatpush1.msra.mxu0 0.0
      %692 = vmatprep.subr.mxu0 0.0
      %693 = vmatpush1.msra.mxu0 0.0
      %694 = vmatprep.subr.mxu0 0.0
      %695 = vmatpush1.msra.mxu0 0.0
      %696 = vmatprep.subr.mxu0 0.0
      %697 = vmatpush1.msra.mxu0 0.0
      %698 = vmatprep.subr.mxu0 0.0
      %699 = vmatpush1.msra.mxu0 0.0
      %700 = vmatprep.subr.mxu0 0.0
      %701 = vmatpush1.msra.mxu0 0.0
      %702 = vmatprep.mubr.f32.mxu0 0.0
      %703 = vmatmul.mubr.f32.gmra.mrb[0].mxu0 %v511
      %v704 = vpop.f32.mrb[0].mxu0
      %v705 = vadd.f32 %v500, %v704
      %v706 = vpop.f32.mrb[0].mxu0
      %v707 = vadd.f32 %v504, %v706
      %708 = vmatprep.mubr.f32.mxu0 0.0
      %709 = vmatmul.mubr.f32.gmra.mrb[0].mxu0 %v514
      %v710 = vpop.f32.mrb[0].mxu0
      %v711 = vadd.f32 %v500, %v710
      %v712 = vpop.f32.mrb[0].mxu0
      %v713 = vadd.f32 %v504, %v712
      %714 = vmatprep.mubr.f32.mxu0 0.0
      %715 = vmatmul.mubr.f32.gmra.mrb[0].mxu0 %v517
      %v716 = vpop.f32.mrb[0].mxu0
      %v717 = vadd.f32 %v500, %v716
      %v718 = vpop.f32.mrb[0].mxu0
      %v719 = vadd.f32 %v504, %v718
      %720 = vmatprep.mubr.f32.mxu0 0.0
      %721 = vmatmul.mubr.f32.gmra.mrb[0].mxu0 %v520
      %v722 = vpop.f32.mrb[0].mxu0
      %v723 = vadd.f32 %v500, %v722
      %v724 = vpop.f32.mrb[0].mxu0
      %v725 = vadd.f32 %v504, %v724
      %726 = vmatprep.mubr.f32.mxu0 0.0
      %727 = vmatmul.mubr.f32.gmra.mrb[0].mxu0 %v523
      %v728 = vpop.f32.mrb[0].mxu0
      %v729 = vadd.f32 %v500, %v728
      %v730 = vpop.f32.mrb[0].mxu0
      %v731 = vadd.f32 %v504, %v730
      %732 = vmatprep.mubr.f32.mxu0 0.0
      %733 = vmatmul.mubr.f32.gmra.mrb[0].mxu0 %v526
      %v734 = vpop.f32.mrb[0].mxu0
      %v735 = vadd.f32 %v500, %v734
      %v736 = vpop.f32.mrb[0].mxu0
      %v737 = vadd.f32 %v504, %v736
      %738 = vmatprep.mubr.f32.mxu0 0.0
      %739 = vmatmul.mubr.f32.gmra.mrb[0].mxu0 %v529
      %v740 = vpop.f32.mrb[0].mxu0
      %v741 = vadd.f32 %v500, %v740
      %v742 = vpop.f32.mrb[0].mxu0
      %v743 = vadd.f32 %v504, %v742
      %744 = vdwg.mxu0
      %v745 = vld [vmem:[%s3] sm:$0xff]
      %v746 = vld [vmem:[%s3 + $0x8] sm:$0xff]
      %v747 = vld [vmem:[%s3 + $0x10] sm:$0xff]
      %v748 = vld [vmem:[%s3 + $0x18] sm:$0xff]
      %v749 = vld [vmem:[%s3 + $0x20] sm:$0xff]
      %v750 = vld [vmem:[%s3 + $0x28] sm:$0xff]
      %v751 = vld [vmem:[%s3 + $0x30] sm:$0xff]
      %v752 = vld [vmem:[%s3 + $0x38] sm:$0xff]
      %v753 = vld [vmem:[%s3 + $0x40] sm:$0xff]
      %v754 = vld [vmem:[%s3 + $0x48] sm:$0xff]
      %v755 = vld [vmem:[%s3 + $0x50] sm:$0xff]
      %v756 = vld [vmem:[%s3 + $0x58] sm:$0xff]
      %v757 = vld [vmem:[%s3 + $0x60] sm:$0xff]
      %v758 = vld [vmem:[%s3 + $0x68] sm:$0xff]
      %v759 = vld [vmem:[%s3 + $0x70] sm:$0xff]
      %v760 = vld [vmem:[%s3 + $0x78] sm:$0xff]
      %v761 = vld [vmem:[%s3 + $0x80] sm:$0xff]
      %v762 = vld [vmem:[%s3 + $0x88] sm:$0xff]
      %v763 = vld [vmem:[%s3 + $0x90] sm:$0xff]
      %v764 = vld [vmem:[%s3 + $0x98] sm:$0xff]
      %v765 = vld [vmem:[%s3 + $0xa0] sm:$0xff]
      %v766 = vld [vmem:[%s3 + $0xa8] sm:$0xff]
      %v767 = vld [vmem:[%s3 + $0xb0] sm:$0xff]
      %v768 = vld [vmem:[%s3 + $0xb8] sm:$0xff]
      %v769 = vld [vmem:[%s3 + $0xc0] sm:$0x3]
      %v770 = vld [vmem:[%s3 + $0xc8] sm:$0x3]
      %v771 = vld [vmem:[%s3 + $0xd0] sm:$0x3]
      %v772 = vld [vmem:[%s3 + $0xd8] sm:$0x3]
      %v773 = vmul.f32 %v598, %v745
      %v774 = vmul.f32 %v600, %v746
      %v775 = vmul.f32 %v705, %v747
      %v776 = vmul.f32 %v707, %v748
      %v777 = vmul.f32 %v604, %v749
      %v778 = vmul.f32 %v606, %v750
      %v779 = vmul.f32 %v711, %v751
      %v780 = vmul.f32 %v713, %v752
      %v781 = vmul.f32 %v610, %v753
      %v782 = vmul.f32 %v612, %v754
      %v783 = vmul.f32 %v717, %v755
      %v784 = vmul.f32 %v719, %v756
      %v785 = vmul.f32 %v616, %v757
      %v786 = vmul.f32 %v618, %v758
      %v787 = vmul.f32 %v723, %v759
      %v788 = vmul.f32 %v725, %v760
      %v789 = vmul.f32 %v622, %v761
      %v790 = vmul.f32 %v624, %v762
      %v791 = vmul.f32 %v729, %v763
      %v792 = vmul.f32 %v731, %v764
      %v793 = vmul.f32 %v628, %v765
      %v794 = vmul.f32 %v630, %v766
      %v795 = vmul.f32 %v735, %v767
      %v796 = vmul.f32 %v737, %v768
      %v797 = vmul.f32 %v634, %v769
      %v798 = vmul.f32 %v636, %v770
      %v799 = vmul.f32 %v741, %v771
      %v800 = vmul.f32 %v743, %v772
      %v801 = vld [vmem:[%s5] sm:$0xff]
      %v802 = vld [vmem:[%s5 + $0x8] sm:$0xff]
      %v803 = vld [vmem:[%s5 + $0x10] sm:$0xff]
      %v804 = vld [vmem:[%s5 + $0x18] sm:$0xff]
      %v805 = vld [vmem:[%s5 + $0x20] sm:$0xff]
      %v806 = vld [vmem:[%s5 + $0x28] sm:$0xff]
      %v807 = vld [vmem:[%s5 + $0x30] sm:$0xff]
      %v808 = vld [vmem:[%s5 + $0x38] sm:$0xff]
      %v809 = vld [vmem:[%s5 + $0x40] sm:$0xff]
      %v810 = vld [vmem:[%s5 + $0x48] sm:$0xff]
      %v811 = vld [vmem:[%s5 + $0x50] sm:$0xff]
      %v812 = vld [vmem:[%s5 + $0x58] sm:$0xff]
      %v813 = vld [vmem:[%s5 + $0x60] sm:$0xff]
      %v814 = vld [vmem:[%s5 + $0x68] sm:$0xff]
      %v815 = vld [vmem:[%s5 + $0x70] sm:$0xff]
      %v816 = vld [vmem:[%s5 + $0x78] sm:$0xff]
      %v817 = vld [vmem:[%s5 + $0x80] sm:$0xff]
      %v818 = vld [vmem:[%s5 + $0x88] sm:$0xff]
      %v819 = vld [vmem:[%s5 + $0x90] sm:$0xff]
      %v820 = vld [vmem:[%s5 + $0x98] sm:$0xff]
      %v821 = vld [vmem:[%s5 + $0xa0] sm:$0xff]
      %v822 = vld [vmem:[%s5 + $0xa8] sm:$0xff]
      %v823 = vld [vmem:[%s5 + $0xb0] sm:$0xff]
      %v824 = vld [vmem:[%s5 + $0xb8] sm:$0xff]
      %v825 = vld [vmem:[%s5 + $0xc0] sm:$0xff]
      %v826 = vld [vmem:[%s5 + $0xc8] sm:$0xff]
      %v827 = vld [vmem:[%s5 + $0xd0] sm:$0xff]
      %v828 = vld [vmem:[%s5 + $0xd8] sm:$0xff]
      %vm829 = vcmask 408576
      %v831 = vsel %vm829, %v801, 0
      %v834 = vsel %vm829, %v802, 0
      %v837 = vsel %vm829, %v803, 0
      %v840 = vsel %vm829, %v804, 0
      %v843 = vsel %vm829, %v805, 0
      %v846 = vsel %vm829, %v806, 0
      %v849 = vsel %vm829, %v807, 0
      %v852 = vsel %vm829, %v808, 0
      %v855 = vsel %vm829, %v809, 0
      %v858 = vsel %vm829, %v810, 0
      %v861 = vsel %vm829, %v811, 0
      %v864 = vsel %vm829, %v812, 0
      %v867 = vsel %vm829, %v813, 0
      %v870 = vsel %vm829, %v814, 0
      %v873 = vsel %vm829, %v815, 0
      %v876 = vsel %vm829, %v816, 0
      %v879 = vsel %vm829, %v817, 0
      %v882 = vsel %vm829, %v818, 0
      %v885 = vsel %vm829, %v819, 0
      %v888 = vsel %vm829, %v820, 0
      %v891 = vsel %vm829, %v821, 0
      %v894 = vsel %vm829, %v822, 0
      %v897 = vsel %vm829, %v823, 0
      %v900 = vsel %vm829, %v824, 0
      %v903 = vsel %vm829, %v825, 0
      %v906 = vsel %vm829, %v826, 0
      %v909 = vsel %vm829, %v827, 0
      %v912 = vsel %vm829, %v828, 0
      %vm914 = vcmask 1041408
      %v916 = vsel %vm914, %v797, 0
      %v919 = vsel %vm914, %v798, 0
      %v922 = vsel %vm914, %v799, 0
      %v925 = vsel %vm914, %v800, 0
      %927 = vmatprep.subr.mxu0 %v774
      %928 = vmatpush1.msra.mxu0 %v773
      %929 = vmatprep.subr.mxu0 %v778
      %930 = vmatpush1.msra.mxu0 %v777
      %931 = vmatprep.subr.mxu0 %v782
      %932 = vmatpush1.msra.mxu0 %v781
      %933 = vmatprep.subr.mxu0 %v786
      %934 = vmatpush1.msra.mxu0 %v785
      %935 = vmatprep.subr.mxu0 %v790
      %936 = vmatpush1.msra.mxu0 %v789
      %937 = vmatprep.subr.mxu0 %v794
      %938 = vmatpush1.msra.mxu0 %v793
      %939 = vmatprep.subr.mxu0 %v919
      %940 = vmatpush1.msra.mxu0 %v916
      %941 = vmatprep.subr.mxu0 0.0
      %942 = vmatpush1.msra.mxu0 0.0
      %943 = vmatprep.subr.mxu0 0.0
      %944 = vmatpush1.msra.mxu0 0.0
      %945 = vmatprep.subr.mxu0 0.0
      %946 = vmatpush1.msra.mxu0 0.0
      %947 = vmatprep.subr.mxu0 0.0
      %948 = vmatpush1.msra.mxu0 0.0
      %949 = vmatprep.subr.mxu0 0.0
      %950 = vmatpush1.msra.mxu0 0.0
      %951 = vmatprep.subr.mxu0 0.0
      %952 = vmatpush1.msra.mxu0 0.0
      %953 = vmatprep.subr.mxu0 0.0
      %954 = vmatpush1.msra.mxu0 0.0
      %955 = vmatprep.subr.mxu0 0.0
      %956 = vmatpush1.msra.mxu0 0.0
      %957 = vmatprep.subr.mxu0 0.0
      %958 = vmatpush1.msra.mxu0 0.0
      %959 = vmatprep.subr.mxu0 0.0
      %960 = vmatpush1.msra.mxu0 0.0
      %961 = vmatprep.subr.mxu0 0.0
      %962 = vmatpush1.msra.mxu0 0.0
      %963 = vmatprep.subr.mxu0 0.0
      %964 = vmatpush1.msra.mxu0 0.0
      %965 = vmatprep.subr.mxu0 0.0
      %966 = vmatpush1.msra.mxu0 0.0
      %967 = vmatprep.subr.mxu0 0.0
      %968 = vmatpush1.msra.mxu0 0.0
      %969 = vmatprep.subr.mxu0 0.0
      %970 = vmatpush1.msra.mxu0 0.0
      %971 = vmatprep.subr.mxu0 0.0
      %972 = vmatpush1.msra.mxu0 0.0
      %973 = vmatprep.subr.mxu0 0.0
      %974 = vmatpush1.msra.mxu0 0.0
      %975 = vmatprep.subr.mxu0 0.0
      %976 = vmatpush1.msra.mxu0 0.0
      %977 = vmatprep.subr.mxu0 0.0
      %978 = vmatpush1.msra.mxu0 0.0
      %979 = vmatprep.subr.mxu0 0.0
      %980 = vmatpush1.msra.mxu0 0.0
      %981 = vmatprep.subr.mxu0 0.0
      %982 = vmatpush1.msra.mxu0 0.0
      %983 = vmatprep.subr.mxu0 0.0
      %984 = vmatpush1.msra.mxu0 0.0
      %985 = vmatprep.subr.mxu0 0.0
      %986 = vmatpush1.msra.mxu0 0.0
      %987 = vmatprep.subr.mxu0 0.0
      %988 = vmatpush1.msra.mxu0 0.0
      %989 = vmatprep.subr.mxu0 0.0
      %990 = vmatpush1.msra.mxu0 0.0
      %991 = vmatprep.mubr.f32.mxu0 0.0
      %992 = vmatmul.mubr.f32.gmra.mrb[0].mxu0 %v831
      %v993 = vpop.f32.mrb[0].mxu0
      %v994 = vadd.f32 0.0, %v993
      %v995 = vpop.f32.mrb[0].mxu0
      %v996 = vadd.f32 0.0, %v995
      %997 = vmatprep.mubr.f32.mxu0 0.0
      %998 = vmatmul.mubr.f32.gmra.mrb[0].mxu0 %v834
      %v999 = vpop.f32.mrb[0].mxu0
      %v1000 = vadd.f32 0.0, %v999
      %v1001 = vpop.f32.mrb[0].mxu0
      %v1002 = vadd.f32 0.0, %v1001
      %1003 = vmatprep.mubr.f32.mxu0 0.0
      %1004 = vmatmul.mubr.f32.gmra.mrb[0].mxu0 %v837
      %v1005 = vpop.f32.mrb[0].mxu0
      %v1006 = vadd.f32 0.0, %v1005
      %v1007 = vpop.f32.mrb[0].mxu0
      %v1008 = vadd.f32 0.0, %v1007
      %1009 = vmatprep.mubr.f32.mxu0 0.0
      %1010 = vmatmul.mubr.f32.gmra.mrb[0].mxu0 %v840
      %v1011 = vpop.f32.mrb[0].mxu0
      %v1012 = vadd.f32 0.0, %v1011
      %v1013 = vpop.f32.mrb[0].mxu0
      %v1014 = vadd.f32 0.0, %v1013
      %1015 = vmatprep.mubr.f32.mxu0 0.0
      %1016 = vmatmul.mubr.f32.gmra.mrb[0].mxu0 %v843
      %v1017 = vpop.f32.mrb[0].mxu0
      %v1018 = vadd.f32 0.0, %v1017
      %v1019 = vpop.f32.mrb[0].mxu0
      %v1020 = vadd.f32 0.0, %v1019
      %1021 = vmatprep.mubr.f32.mxu0 0.0
      %1022 = vmatmul.mubr.f32.gmra.mrb[0].mxu0 %v846
      %v1023 = vpop.f32.mrb[0].mxu0
      %v1024 = vadd.f32 0.0, %v1023
      %v1025 = vpop.f32.mrb[0].mxu0
      %v1026 = vadd.f32 0.0, %v1025
      %1027 = vmatprep.mubr.f32.mxu0 0.0
      %1028 = vmatmul.mubr.f32.gmra.mrb[0].mxu0 %v849
      %v1029 = vpop.f32.mrb[0].mxu0
      %v1030 = vadd.f32 0.0, %v1029
      %v1031 = vpop.f32.mrb[0].mxu0
      %v1032 = vadd.f32 0.0, %v1031
      %1033 = vmatprep.mubr.f32.mxu0 0.0
      %1034 = vmatmul.mubr.f32.gmra.mrb[0].mxu0 %v852
      %v1035 = vpop.f32.mrb[0].mxu0
      %v1036 = vadd.f32 0.0, %v1035
      %v1037 = vpop.f32.mrb[0].mxu0
      %v1038 = vadd.f32 0.0, %v1037
      %1039 = vmatprep.mubr.f32.mxu0 0.0
      %1040 = vmatmul.mubr.f32.gmra.mrb[0].mxu0 %v855
      %v1041 = vpop.f32.mrb[0].mxu0
      %v1042 = vadd.f32 0.0, %v1041
      %v1043 = vpop.f32.mrb[0].mxu0
      %v1044 = vadd.f32 0.0, %v1043
      %1045 = vmatprep.mubr.f32.mxu0 0.0
      %1046 = vmatmul.mubr.f32.gmra.mrb[0].mxu0 %v858
      %v1047 = vpop.f32.mrb[0].mxu0
      %v1048 = vadd.f32 0.0, %v1047
      %v1049 = vpop.f32.mrb[0].mxu0
      %v1050 = vadd.f32 0.0, %v1049
      %1051 = vmatprep.mubr.f32.mxu0 0.0
      %1052 = vmatmul.mubr.f32.gmra.mrb[0].mxu0 %v861
      %v1053 = vpop.f32.mrb[0].mxu0
      %v1054 = vadd.f32 0.0, %v1053
      %v1055 = vpop.f32.mrb[0].mxu0
      %v1056 = vadd.f32 0.0, %v1055
      %1057 = vmatprep.mubr.f32.mxu0 0.0
      %1058 = vmatmul.mubr.f32.gmra.mrb[0].mxu0 %v864
      %v1059 = vpop.f32.mrb[0].mxu0
      %v1060 = vadd.f32 0.0, %v1059
      %v1061 = vpop.f32.mrb[0].mxu0
      %v1062 = vadd.f32 0.0, %v1061
      %1063 = vmatprep.mubr.f32.mxu0 0.0
      %1064 = vmatmul.mubr.f32.gmra.mrb[0].mxu0 %v867
      %v1065 = vpop.f32.mrb[0].mxu0
      %v1066 = vadd.f32 0.0, %v1065
      %v1067 = vpop.f32.mrb[0].mxu0
      %v1068 = vadd.f32 0.0, %v1067
      %1069 = vmatprep.mubr.f32.mxu0 0.0
      %1070 = vmatmul.mubr.f32.gmra.mrb[0].mxu0 %v870
      %v1071 = vpop.f32.mrb[0].mxu0
      %v1072 = vadd.f32 0.0, %v1071
      %v1073 = vpop.f32.mrb[0].mxu0
      %v1074 = vadd.f32 0.0, %v1073
      %1075 = vmatprep.mubr.f32.mxu0 0.0
      %1076 = vmatmul.mubr.f32.gmra.mrb[0].mxu0 %v873
      %v1077 = vpop.f32.mrb[0].mxu0
      %v1078 = vadd.f32 0.0, %v1077
      %v1079 = vpop.f32.mrb[0].mxu0
      %v1080 = vadd.f32 0.0, %v1079
      %1081 = vmatprep.mubr.f32.mxu0 0.0
      %1082 = vmatmul.mubr.f32.gmra.mrb[0].mxu0 %v876
      %v1083 = vpop.f32.mrb[0].mxu0
      %v1084 = vadd.f32 0.0, %v1083
      %v1085 = vpop.f32.mrb[0].mxu0
      %v1086 = vadd.f32 0.0, %v1085
      %1087 = vmatprep.mubr.f32.mxu0 0.0
      %1088 = vmatmul.mubr.f32.gmra.mrb[0].mxu0 %v879
      %v1089 = vpop.f32.mrb[0].mxu0
      %v1090 = vadd.f32 0.0, %v1089
      %v1091 = vpop.f32.mrb[0].mxu0
      %v1092 = vadd.f32 0.0, %v1091
      %1093 = vmatprep.mubr.f32.mxu0 0.0
      %1094 = vmatmul.mubr.f32.gmra.mrb[0].mxu0 %v882
      %v1095 = vpop.f32.mrb[0].mxu0
      %v1096 = vadd.f32 0.0, %v1095
      %v1097 = vpop.f32.mrb[0].mxu0
      %v1098 = vadd.f32 0.0, %v1097
      %1099 = vmatprep.mubr.f32.mxu0 0.0
      %1100 = vmatmul.mubr.f32.gmra.mrb[0].mxu0 %v885
      %v1101 = vpop.f32.mrb[0].mxu0
      %v1102 = vadd.f32 0.0, %v1101
      %v1103 = vpop.f32.mrb[0].mxu0
      %v1104 = vadd.f32 0.0, %v1103
      %1105 = vmatprep.mubr.f32.mxu0 0.0
      %1106 = vmatmul.mubr.f32.gmra.mrb[0].mxu0 %v888
      %v1107 = vpop.f32.mrb[0].mxu0
      %v1108 = vadd.f32 0.0, %v1107
      %v1109 = vpop.f32.mrb[0].mxu0
      %v1110 = vadd.f32 0.0, %v1109
      %1111 = vmatprep.mubr.f32.mxu0 0.0
      %1112 = vmatmul.mubr.f32.gmra.mrb[0].mxu0 %v891
      %v1113 = vpop.f32.mrb[0].mxu0
      %v1114 = vadd.f32 0.0, %v1113
      %v1115 = vpop.f32.mrb[0].mxu0
      %v1116 = vadd.f32 0.0, %v1115
      %1117 = vmatprep.mubr.f32.mxu0 0.0
      %1118 = vmatmul.mubr.f32.gmra.mrb[0].mxu0 %v894
      %v1119 = vpop.f32.mrb[0].mxu0
      %v1120 = vadd.f32 0.0, %v1119
      %v1121 = vpop.f32.mrb[0].mxu0
      %v1122 = vadd.f32 0.0, %v1121
      %1123 = vmatprep.mubr.f32.mxu0 0.0
      %1124 = vmatmul.mubr.f32.gmra.mrb[0].mxu0 %v897
      %v1125 = vpop.f32.mrb[0].mxu0
      %v1126 = vadd.f32 0.0, %v1125
      %v1127 = vpop.f32.mrb[0].mxu0
      %v1128 = vadd.f32 0.0, %v1127
      %1129 = vmatprep.mubr.f32.mxu0 0.0
      %1130 = vmatmul.mubr.f32.gmra.mrb[0].mxu0 %v900
      %v1131 = vpop.f32.mrb[0].mxu0
      %v1132 = vadd.f32 0.0, %v1131
      %v1133 = vpop.f32.mrb[0].mxu0
      %v1134 = vadd.f32 0.0, %v1133
      %1135 = vmatprep.mubr.f32.mxu0 0.0
      %1136 = vmatmul.mubr.f32.gmra.mrb[0].mxu0 %v903
      %v1137 = vpop.f32.mrb[0].mxu0
      %v1138 = vadd.f32 0.0, %v1137
      %v1139 = vpop.f32.mrb[0].mxu0
      %v1140 = vadd.f32 0.0, %v1139
      %1141 = vmatprep.mubr.f32.mxu0 0.0
      %1142 = vmatmul.mubr.f32.gmra.mrb[0].mxu0 %v906
      %v1143 = vpop.f32.mrb[0].mxu0
      %v1144 = vadd.f32 0.0, %v1143
      %v1145 = vpop.f32.mrb[0].mxu0
      %v1146 = vadd.f32 0.0, %v1145
      %1147 = vmatprep.mubr.f32.mxu0 0.0
      %1148 = vmatmul.mubr.f32.gmra.mrb[0].mxu0 %v909
      %v1149 = vpop.f32.mrb[0].mxu0
      %v1150 = vadd.f32 0.0, %v1149
      %v1151 = vpop.f32.mrb[0].mxu0
      %v1152 = vadd.f32 0.0, %v1151
      %1153 = vmatprep.mubr.f32.mxu0 0.0
      %1154 = vmatmul.mubr.f32.gmra.mrb[0].mxu0 %v912
      %v1155 = vpop.f32.mrb[0].mxu0
      %v1156 = vadd.f32 0.0, %v1155
      %v1157 = vpop.f32.mrb[0].mxu0
      %v1158 = vadd.f32 0.0, %v1157
      %1159 = vdwg.mxu0
      %1160 = vmatprep.subr.mxu0 %v776
      %1161 = vmatpush1.msra.mxu0 %v775
      %1162 = vmatprep.subr.mxu0 %v780
      %1163 = vmatpush1.msra.mxu0 %v779
      %1164 = vmatprep.subr.mxu0 %v784
      %1165 = vmatpush1.msra.mxu0 %v783
      %1166 = vmatprep.subr.mxu0 %v788
      %1167 = vmatpush1.msra.mxu0 %v787
      %1168 = vmatprep.subr.mxu0 %v792
      %1169 = vmatpush1.msra.mxu0 %v791
      %1170 = vmatprep.subr.mxu0 %v796
      %1171 = vmatpush1.msra.mxu0 %v795
      %1172 = vmatprep.subr.mxu0 %v925
      %1173 = vmatpush1.msra.mxu0 %v922
      %1174 = vmatprep.subr.mxu0 0.0
      %1175 = vmatpush1.msra.mxu0 0.0
      %1176 = vmatprep.subr.mxu0 0.0
      %1177 = vmatpush1.msra.mxu0 0.0
      %1178 = vmatprep.subr.mxu0 0.0
      %1179 = vmatpush1.msra.mxu0 0.0
      %1180 = vmatprep.subr.mxu0 0.0
      %1181 = vmatpush1.msra.mxu0 0.0
      %1182 = vmatprep.subr.mxu0 0.0
      %1183 = vmatpush1.msra.mxu0 0.0
      %1184 = vmatprep.subr.mxu0 0.0
      %1185 = vmatpush1.msra.mxu0 0.0
      %1186 = vmatprep.subr.mxu0 0.0
      %1187 = vmatpush1.msra.mxu0 0.0
      %1188 = vmatprep.subr.mxu0 0.0
      %1189 = vmatpush1.msra.mxu0 0.0
      %1190 = vmatprep.subr.mxu0 0.0
      %1191 = vmatpush1.msra.mxu0 0.0
      %1192 = vmatprep.subr.mxu0 0.0
      %1193 = vmatpush1.msra.mxu0 0.0
      %1194 = vmatprep.subr.mxu0 0.0
      %1195 = vmatpush1.msra.mxu0 0.0
      %1196 = vmatprep.subr.mxu0 0.0
      %1197 = vmatpush1.msra.mxu0 0.0
      %1198 = vmatprep.subr.mxu0 0.0
      %1199 = vmatpush1.msra.mxu0 0.0
      %1200 = vmatprep.subr.mxu0 0.0
      %1201 = vmatpush1.msra.mxu0 0.0
      %1202 = vmatprep.subr.mxu0 0.0
      %1203 = vmatpush1.msra.mxu0 0.0
      %1204 = vmatprep.subr.mxu0 0.0
      %1205 = vmatpush1.msra.mxu0 0.0
      %1206 = vmatprep.subr.mxu0 0.0
      %1207 = vmatpush1.msra.mxu0 0.0
      %1208 = vmatprep.subr.mxu0 0.0
      %1209 = vmatpush1.msra.mxu0 0.0
      %1210 = vmatprep.subr.mxu0 0.0
      %1211 = vmatpush1.msra.mxu0 0.0
      %1212 = vmatprep.subr.mxu0 0.0
      %1213 = vmatpush1.msra.mxu0 0.0
      %1214 = vmatprep.subr.mxu0 0.0
      %1215 = vmatpush1.msra.mxu0 0.0
      %1216 = vmatprep.subr.mxu0 0.0
      %1217 = vmatpush1.msra.mxu0 0.0
      %1218 = vmatprep.subr.mxu0 0.0
      %1219 = vmatpush1.msra.mxu0 0.0
      %1220 = vmatprep.subr.mxu0 0.0
      %1221 = vmatpush1.msra.mxu0 0.0
      %1222 = vmatprep.subr.mxu0 0.0
      %1223 = vmatpush1.msra.mxu0 0.0
      %1224 = vmatprep.mubr.f32.mxu0 0.0
      %1225 = vmatmul.mubr.f32.gmra.mrb[0].mxu0 %v831
      %v1226 = vpop.f32.mrb[0].mxu0
      %v1227 = vadd.f32 0.0, %v1226
      %v1228 = vpop.f32.mrb[0].mxu0
      %v1229 = vadd.f32 0.0, %v1228
      %1230 = vmatprep.mubr.f32.mxu0 0.0
      %1231 = vmatmul.mubr.f32.gmra.mrb[0].mxu0 %v834
      %v1232 = vpop.f32.mrb[0].mxu0
      %v1233 = vadd.f32 0.0, %v1232
      %v1234 = vpop.f32.mrb[0].mxu0
      %v1235 = vadd.f32 0.0, %v1234
      %1236 = vmatprep.mubr.f32.mxu0 0.0
      %1237 = vmatmul.mubr.f32.gmra.mrb[0].mxu0 %v837
      %v1238 = vpop.f32.mrb[0].mxu0
      %v1239 = vadd.f32 0.0, %v1238
      %v1240 = vpop.f32.mrb[0].mxu0
      %v1241 = vadd.f32 0.0, %v1240
      %1242 = vmatprep.mubr.f32.mxu0 0.0
      %1243 = vmatmul.mubr.f32.gmra.mrb[0].mxu0 %v840
      %v1244 = vpop.f32.mrb[0].mxu0
      %v1245 = vadd.f32 0.0, %v1244
      %v1246 = vpop.f32.mrb[0].mxu0
      %v1247 = vadd.f32 0.0, %v1246
      %1248 = vmatprep.mubr.f32.mxu0 0.0
      %1249 = vmatmul.mubr.f32.gmra.mrb[0].mxu0 %v843
      %v1250 = vpop.f32.mrb[0].mxu0
      %v1251 = vadd.f32 0.0, %v1250
      %v1252 = vpop.f32.mrb[0].mxu0
      %v1253 = vadd.f32 0.0, %v1252
      %1254 = vmatprep.mubr.f32.mxu0 0.0
      %1255 = vmatmul.mubr.f32.gmra.mrb[0].mxu0 %v846
      %v1256 = vpop.f32.mrb[0].mxu0
      %v1257 = vadd.f32 0.0, %v1256
      %v1258 = vpop.f32.mrb[0].mxu0
      %v1259 = vadd.f32 0.0, %v1258
      %1260 = vmatprep.mubr.f32.mxu0 0.0
      %1261 = vmatmul.mubr.f32.gmra.mrb[0].mxu0 %v849
      %v1262 = vpop.f32.mrb[0].mxu0
      %v1263 = vadd.f32 0.0, %v1262
      %v1264 = vpop.f32.mrb[0].mxu0
      %v1265 = vadd.f32 0.0, %v1264
      %1266 = vmatprep.mubr.f32.mxu0 0.0
      %1267 = vmatmul.mubr.f32.gmra.mrb[0].mxu0 %v852
      %v1268 = vpop.f32.mrb[0].mxu0
      %v1269 = vadd.f32 0.0, %v1268
      %v1270 = vpop.f32.mrb[0].mxu0
      %v1271 = vadd.f32 0.0, %v1270
      %1272 = vmatprep.mubr.f32.mxu0 0.0
      %1273 = vmatmul.mubr.f32.gmra.mrb[0].mxu0 %v855
      %v1274 = vpop.f32.mrb[0].mxu0
      %v1275 = vadd.f32 0.0, %v1274
      %v1276 = vpop.f32.mrb[0].mxu0
      %v1277 = vadd.f32 0.0, %v1276
      %1278 = vmatprep.mubr.f32.mxu0 0.0
      %1279 = vmatmul.mubr.f32.gmra.mrb[0].mxu0 %v858
      %v1280 = vpop.f32.mrb[0].mxu0
      %v1281 = vadd.f32 0.0, %v1280
      %v1282 = vpop.f32.mrb[0].mxu0
      %v1283 = vadd.f32 0.0, %v1282
      %1284 = vmatprep.mubr.f32.mxu0 0.0
      %1285 = vmatmul.mubr.f32.gmra.mrb[0].mxu0 %v861
      %v1286 = vpop.f32.mrb[0].mxu0
      %v1287 = vadd.f32 0.0, %v1286
      %v1288 = vpop.f32.mrb[0].mxu0
      %v1289 = vadd.f32 0.0, %v1288
      %1290 = vmatprep.mubr.f32.mxu0 0.0
      %1291 = vmatmul.mubr.f32.gmra.mrb[0].mxu0 %v864
      %v1292 = vpop.f32.mrb[0].mxu0
      %v1293 = vadd.f32 0.0, %v1292
      %v1294 = vpop.f32.mrb[0].mxu0
      %v1295 = vadd.f32 0.0, %v1294
      %1296 = vmatprep.mubr.f32.mxu0 0.0
      %1297 = vmatmul.mubr.f32.gmra.mrb[0].mxu0 %v867
      %v1298 = vpop.f32.mrb[0].mxu0
      %v1299 = vadd.f32 0.0, %v1298
      %v1300 = vpop.f32.mrb[0].mxu0
      %v1301 = vadd.f32 0.0, %v1300
      %1302 = vmatprep.mubr.f32.mxu0 0.0
      %1303 = vmatmul.mubr.f32.gmra.mrb[0].mxu0 %v870
      %v1304 = vpop.f32.mrb[0].mxu0
      %v1305 = vadd.f32 0.0, %v1304
      %v1306 = vpop.f32.mrb[0].mxu0
      %v1307 = vadd.f32 0.0, %v1306
      %1308 = vmatprep.mubr.f32.mxu0 0.0
      %1309 = vmatmul.mubr.f32.gmra.mrb[0].mxu0 %v873
      %v1310 = vpop.f32.mrb[0].mxu0
      %v1311 = vadd.f32 0.0, %v1310
      %v1312 = vpop.f32.mrb[0].mxu0
      %v1313 = vadd.f32 0.0, %v1312
      %1314 = vmatprep.mubr.f32.mxu0 0.0
      %1315 = vmatmul.mubr.f32.gmra.mrb[0].mxu0 %v876
      %v1316 = vpop.f32.mrb[0].mxu0
      %v1317 = vadd.f32 0.0, %v1316
      %v1318 = vpop.f32.mrb[0].mxu0
      %v1319 = vadd.f32 0.0, %v1318
      %1320 = vmatprep.mubr.f32.mxu0 0.0
      %1321 = vmatmul.mubr.f32.gmra.mrb[0].mxu0 %v879
      %v1322 = vpop.f32.mrb[0].mxu0
      %v1323 = vadd.f32 0.0, %v1322
      %v1324 = vpop.f32.mrb[0].mxu0
      %v1325 = vadd.f32 0.0, %v1324
      %1326 = vmatprep.mubr.f32.mxu0 0.0
      %1327 = vmatmul.mubr.f32.gmra.mrb[0].mxu0 %v882
      %v1328 = vpop.f32.mrb[0].mxu0
      %v1329 = vadd.f32 0.0, %v1328
      %v1330 = vpop.f32.mrb[0].mxu0
      %v1331 = vadd.f32 0.0, %v1330
      %1332 = vmatprep.mubr.f32.mxu0 0.0
      %1333 = vmatmul.mubr.f32.gmra.mrb[0].mxu0 %v885
      %v1334 = vpop.f32.mrb[0].mxu0
      %v1335 = vadd.f32 0.0, %v1334
      %v1336 = vpop.f32.mrb[0].mxu0
      %v1337 = vadd.f32 0.0, %v1336
      %1338 = vmatprep.mubr.f32.mxu0 0.0
      %1339 = vmatmul.mubr.f32.gmra.mrb[0].mxu0 %v888
      %v1340 = vpop.f32.mrb[0].mxu0
      %v1341 = vadd.f32 0.0, %v1340
      %v1342 = vpop.f32.mrb[0].mxu0
      %v1343 = vadd.f32 0.0, %v1342
      %1344 = vmatprep.mubr.f32.mxu0 0.0
      %1345 = vmatmul.mubr.f32.gmra.mrb[0].mxu0 %v891
      %v1346 = vpop.f32.mrb[0].mxu0
      %v1347 = vadd.f32 0.0, %v1346
      %v1348 = vpop.f32.mrb[0].mxu0
      %v1349 = vadd.f32 0.0, %v1348
      %1350 = vmatprep.mubr.f32.mxu0 0.0
      %1351 = vmatmul.mubr.f32.gmra.mrb[0].mxu0 %v894
      %v1352 = vpop.f32.mrb[0].mxu0
      %v1353 = vadd.f32 0.0, %v1352
      %v1354 = vpop.f32.mrb[0].mxu0
      %v1355 = vadd.f32 0.0, %v1354
      %1356 = vmatprep.mubr.f32.mxu0 0.0
      %1357 = vmatmul.mubr.f32.gmra.mrb[0].mxu0 %v897
      %v1358 = vpop.f32.mrb[0].mxu0
      %v1359 = vadd.f32 0.0, %v1358
      %v1360 = vpop.f32.mrb[0].mxu0
      %v1361 = vadd.f32 0.0, %v1360
      %1362 = vmatprep.mubr.f32.mxu0 0.0
      %1363 = vmatmul.mubr.f32.gmra.mrb[0].mxu0 %v900
      %v1364 = vpop.f32.mrb[0].mxu0
      %v1365 = vadd.f32 0.0, %v1364
      %v1366 = vpop.f32.mrb[0].mxu0
      %v1367 = vadd.f32 0.0, %v1366
      %1368 = vmatprep.mubr.f32.mxu0 0.0
      %1369 = vmatmul.mubr.f32.gmra.mrb[0].mxu0 %v903
      %v1370 = vpop.f32.mrb[0].mxu0
      %v1371 = vadd.f32 0.0, %v1370
      %v1372 = vpop.f32.mrb[0].mxu0
      %v1373 = vadd.f32 0.0, %v1372
      %1374 = vmatprep.mubr.f32.mxu0 0.0
      %1375 = vmatmul.mubr.f32.gmra.mrb[0].mxu0 %v906
      %v1376 = vpop.f32.mrb[0].mxu0
      %v1377 = vadd.f32 0.0, %v1376
      %v1378 = vpop.f32.mrb[0].mxu0
      %v1379 = vadd.f32 0.0, %v1378
      %1380 = vmatprep.mubr.f32.mxu0 0.0
      %1381 = vmatmul.mubr.f32.gmra.mrb[0].mxu0 %v909
      %v1382 = vpop.f32.mrb[0].mxu0
      %v1383 = vadd.f32 0.0, %v1382
      %v1384 = vpop.f32.mrb[0].mxu0
      %v1385 = vadd.f32 0.0, %v1384
      %1386 = vmatprep.mubr.f32.mxu0 0.0
      %1387 = vmatmul.mubr.f32.gmra.mrb[0].mxu0 %v912
      %v1388 = vpop.f32.mrb[0].mxu0
      %v1389 = vadd.f32 0.0, %v1388
      %v1390 = vpop.f32.mrb[0].mxu0
      %v1391 = vadd.f32 0.0, %v1390
      %1392 = vdwg.mxu0
      %v1393 = vpack.c.bf16 %v1000, %v994
      %v1394 = vpack.c.bf16 %v1002, %v996
      %v1395 = vpack.c.bf16 %v1233, %v1227
      %v1396 = vpack.c.bf16 %v1235, %v1229
      %v1397 = vpack.c.bf16 %v1012, %v1006
      %v1398 = vpack.c.bf16 %v1014, %v1008
      %v1399 = vpack.c.bf16 %v1245, %v1239
      %v1400 = vpack.c.bf16 %v1247, %v1241
      %v1401 = vpack.c.bf16 %v1024, %v1018
      %v1402 = vpack.c.bf16 %v1026, %v1020
      %v1403 = vpack.c.bf16 %v1257, %v1251
      %v1404 = vpack.c.bf16 %v1259, %v1253
      %v1405 = vpack.c.bf16 %v1036, %v1030
      %v1406 = vpack.c.bf16 %v1038, %v1032
      %v1407 = vpack.c.bf16 %v1269, %v1263
      %v1408 = vpack.c.bf16 %v1271, %v1265
      %v1409 = vpack.c.bf16 %v1048, %v1042
      %v1410 = vpack.c.bf16 %v1050, %v1044
      %v1411 = vpack.c.bf16 %v1281, %v1275
      %v1412 = vpack.c.bf16 %v1283, %v1277
      %v1413 = vpack.c.bf16 %v1060, %v1054
      %v1414 = vpack.c.bf16 %v1062, %v1056
      %v1415 = vpack.c.bf16 %v1293, %v1287
      %v1416 = vpack.c.bf16 %v1295, %v1289
      %v1417 = vpack.c.bf16 %v1072, %v1066
      %v1418 = vpack.c.bf16 %v1074, %v1068
      %v1419 = vpack.c.bf16 %v1305, %v1299
      %v1420 = vpack.c.bf16 %v1307, %v1301
      %v1421 = vpack.c.bf16 %v1084, %v1078
      %v1422 = vpack.c.bf16 %v1086, %v1080
      %v1423 = vpack.c.bf16 %v1317, %v1311
      %v1424 = vpack.c.bf16 %v1319, %v1313
      %v1425 = vpack.c.bf16 %v1096, %v1090
      %v1426 = vpack.c.bf16 %v1098, %v1092
      %v1427 = vpack.c.bf16 %v1329, %v1323
      %v1428 = vpack.c.bf16 %v1331, %v1325
      %v1429 = vpack.c.bf16 %v1108, %v1102
      %v1430 = vpack.c.bf16 %v1110, %v1104
      %v1431 = vpack.c.bf16 %v1341, %v1335
      %v1432 = vpack.c.bf16 %v1343, %v1337
      %v1433 = vpack.c.bf16 %v1120, %v1114
      %v1434 = vpack.c.bf16 %v1122, %v1116
      %v1435 = vpack.c.bf16 %v1353, %v1347
      %v1436 = vpack.c.bf16 %v1355, %v1349
      %v1437 = vpack.c.bf16 %v1132, %v1126
      %v1438 = vpack.c.bf16 %v1134, %v1128
      %v1439 = vpack.c.bf16 %v1365, %v1359
      %v1440 = vpack.c.bf16 %v1367, %v1361
      %v1441 = vpack.c.bf16 %v1144, %v1138
      %v1442 = vpack.c.bf16 %v1146, %v1140
      %v1443 = vpack.c.bf16 %v1377, %v1371
      %v1444 = vpack.c.bf16 %v1379, %v1373
      %v1445 = vpack.c.bf16 %v1156, %v1150
      %v1446 = vpack.c.bf16 %v1158, %v1152
      %v1447 = vpack.c.bf16 %v1389, %v1383
      %v1448 = vpack.c.bf16 %v1391, %v1385
      %1449 = vst [vmem:[#allocation2] sm:$0xff] %v1393
      %1450 = vst [vmem:[#allocation2 + $0x8] sm:$0xff] %v1394
      %1451 = vst [vmem:[#allocation2 + $0x10] sm:$0xff] %v1395
      %1452 = vst [vmem:[#allocation2 + $0x18] sm:$0xff] %v1396
      %1453 = vst [vmem:[#allocation2 + $0x28] sm:$0xff] %v1397
      %1454 = vst [vmem:[#allocation2 + $0x30] sm:$0xff] %v1398
      %1455 = vst [vmem:[#allocation2 + $0x38] sm:$0xff] %v1399
      %1456 = vst [vmem:[#allocation2 + $0x40] sm:$0xff] %v1400
      %1457 = vst [vmem:[#allocation2 + $0x50] sm:$0xff] %v1401
      %1458 = vst [vmem:[#allocation2 + $0x58] sm:$0xff] %v1402
      %1459 = vst [vmem:[#allocation2 + $0x60] sm:$0xff] %v1403
      %1460 = vst [vmem:[#allocation2 + $0x68] sm:$0xff] %v1404
      %1461 = vst [vmem:[#allocation2 + $0x78] sm:$0xff] %v1405
      %1462 = vst [vmem:[#allocation2 + $0x80] sm:$0xff] %v1406
      %1463 = vst [vmem:[#allocation2 + $0x88] sm:$0xff] %v1407
      %1464 = vst [vmem:[#allocation2 + $0x90] sm:$0xff] %v1408
      %1465 = vst [vmem:[#allocation2 + $0xa0] sm:$0xff] %v1409
      %1466 = vst [vmem:[#allocation2 + $0xa8] sm:$0xff] %v1410
      %1467 = vst [vmem:[#allocation2 + $0xb0] sm:$0xff] %v1411
      %1468 = vst [vmem:[#allocation2 + $0xb8] sm:$0xff] %v1412
      %1469 = vst [vmem:[#allocation2 + $0xc8] sm:$0xff] %v1413
      %1470 = vst [vmem:[#allocation2 + $0xd0] sm:$0xff] %v1414
      %1471 = vst [vmem:[#allocation2 + $0xd8] sm:$0xff] %v1415
      %1472 = vst [vmem:[#allocation2 + $0xe0] sm:$0xff] %v1416
      %1473 = vst [vmem:[#allocation2 + $0xf0] sm:$0xff] %v1417
      %1474 = vst [vmem:[#allocation2 + $0xf8] sm:$0xff] %v1418
      %1475 = vst [vmem:[#allocation2 + $0x100] sm:$0xff] %v1419
      %1476 = vst [vmem:[#allocation2 + $0x108] sm:$0xff] %v1420
      %1477 = vst [vmem:[#allocation2 + $0x118] sm:$0xff] %v1421
      %1478 = vst [vmem:[#allocation2 + $0x120] sm:$0xff] %v1422
      %1479 = vst [vmem:[#allocation2 + $0x128] sm:$0xff] %v1423
      %1480 = vst [vmem:[#allocation2 + $0x130] sm:$0xff] %v1424
      %1481 = vst [vmem:[#allocation2 + $0x140] sm:$0xff] %v1425
      %1482 = vst [vmem:[#allocation2 + $0x148] sm:$0xff] %v1426
      %1483 = vst [vmem:[#allocation2 + $0x150] sm:$0xff] %v1427
      %1484 = vst [vmem:[#allocation2 + $0x158] sm:$0xff] %v1428
      %1485 = vst [vmem:[#allocation2 + $0x168] sm:$0xff] %v1429
      %1486 = vst [vmem:[#allocation2 + $0x170] sm:$0xff] %v1430
      %1487 = vst [vmem:[#allocation2 + $0x178] sm:$0xff] %v1431
      %1488 = vst [vmem:[#allocation2 + $0x180] sm:$0xff] %v1432
      %1489 = vst [vmem:[#allocation2 + $0x190] sm:$0xff] %v1433
      %1490 = vst [vmem:[#allocation2 + $0x198] sm:$0xff] %v1434
      %1491 = vst [vmem:[#allocation2 + $0x1a0] sm:$0xff] %v1435
      %1492 = vst [vmem:[#allocation2 + $0x1a8] sm:$0xff] %v1436
      %1493 = vst [vmem:[#allocation2 + $0x1b8] sm:$0xff] %v1437
      %1494 = vst [vmem:[#allocation2 + $0x1c0] sm:$0xff] %v1438
      %1495 = vst [vmem:[#allocation2 + $0x1c8] sm:$0xff] %v1439
      %1496 = vst [vmem:[#allocation2 + $0x1d0] sm:$0xff] %v1440
      %1497 = vst [vmem:[#allocation2 + $0x1e0] sm:$0xff] %v1441
      %1498 = vst [vmem:[#allocation2 + $0x1e8] sm:$0xff] %v1442
      %1499 = vst [vmem:[#allocation2 + $0x1f0] sm:$0xff] %v1443
      %1500 = vst [vmem:[#allocation2 + $0x1f8] sm:$0xff] %v1444
      %1501 = vst [vmem:[#allocation2 + $0x208] sm:$0xff] %v1445
      %1502 = vst [vmem:[#allocation2 + $0x210] sm:$0xff] %v1446
      %1503 = vst [vmem:[#allocation2 + $0x218] sm:$0xff] %v1447
      %1504 = vst [vmem:[#allocation2 + $0x220] sm:$0xff] %v1448
      %v1505 = vld [vmem:[%s300] sm:$0xff]
      %v1506 = vld [vmem:[%s300 + $0x8] sm:$0xff]
      %v1507 = vld [vmem:[%s300 + $0x10] sm:$0xff]
      %v1508 = vld [vmem:[%s300 + $0x18] sm:$0xff]
      %v1509 = vld [vmem:[%s300 + $0x20] sm:$0xff]
      %v1510 = vld [vmem:[%s300 + $0x28] sm:$0xff]
      %v1511 = vld [vmem:[%s300 + $0x30] sm:$0xff]
      %v1512 = vld [vmem:[%s300 + $0x38] sm:$0xff]
      %v1513 = vld [vmem:[%s300 + $0x40] sm:$0xff]
      %v1514 = vld [vmem:[%s300 + $0x48] sm:$0xff]
      %v1515 = vld [vmem:[%s300 + $0x50] sm:$0xff]
      %v1516 = vld [vmem:[%s300 + $0x58] sm:$0xff]
      %v1517 = vld [vmem:[%s300 + $0x60] sm:$0xff]
      %v1518 = vld [vmem:[%s300 + $0x68] sm:$0xff]
      %v1519 = vld [vmem:[%s300 + $0x70] sm:$0xff]
      %v1520 = vld [vmem:[%s300 + $0x78] sm:$0xff]
      %v1521 = vld [vmem:[%s300 + $0x80] sm:$0xff]
      %v1522 = vld [vmem:[%s300 + $0x88] sm:$0xff]
      %v1523 = vld [vmem:[%s300 + $0x90] sm:$0xff]
      %v1524 = vld [vmem:[%s300 + $0x98] sm:$0xff]
      %v1525 = vld [vmem:[%s300 + $0xa0] sm:$0xff]
      %v1526 = vld [vmem:[%s300 + $0xa8] sm:$0xff]
      %v1527 = vld [vmem:[%s300 + $0xb0] sm:$0xff]
      %v1528 = vld [vmem:[%s300 + $0xb8] sm:$0xff]
      %v1529 = vld [vmem:[%s300 + $0xc0] sm:$0xff]
      %v1530 = vld [vmem:[%s300 + $0xc8] sm:$0xff]
      %v1531 = vld [vmem:[%s300 + $0xd0] sm:$0xff]
      %v1532 = vld [vmem:[%s300 + $0xd8] sm:$0xff]
      %v1533 = vpack.c.bf16 %v1506, %v1505
      %v1534 = vpack.c.bf16 %v1508, %v1507
      %v1535 = vpack.c.bf16 %v1510, %v1509
      %v1536 = vpack.c.bf16 %v1512, %v1511
      %v1537 = vpack.c.bf16 %v1514, %v1513
      %v1538 = vpack.c.bf16 %v1516, %v1515
      %v1539 = vpack.c.bf16 %v1518, %v1517
      %v1540 = vpack.c.bf16 %v1520, %v1519
      %v1541 = vpack.c.bf16 %v1522, %v1521
      %v1542 = vpack.c.bf16 %v1524, %v1523
      %v1543 = vpack.c.bf16 %v1526, %v1525
      %v1544 = vpack.c.bf16 %v1528, %v1527
      %v1545 = vpack.c.bf16 %v1530, %v1529
      %v1546 = vpack.c.bf16 %v1532, %v1531
      %1547 = vst.msk [vmem:[#allocation2 + $0x20] sm:$0xff] %vm509, %v1533
      %1548 = vst.msk [vmem:[#allocation2 + $0x48] sm:$0xff] %vm509, %v1534
      %1549 = vst.msk [vmem:[#allocation2 + $0x70] sm:$0xff] %vm509, %v1535
      %1550 = vst.msk [vmem:[#allocation2 + $0x98] sm:$0xff] %vm509, %v1536
      %1551 = vst.msk [vmem:[#allocation2 + $0xc0] sm:$0xff] %vm509, %v1537
      %1552 = vst.msk [vmem:[#allocation2 + $0xe8] sm:$0xff] %vm509, %v1538
      %1553 = vst.msk [vmem:[#allocation2 + $0x110] sm:$0xff] %vm509, %v1539
      %1554 = vst.msk [vmem:[#allocation2 + $0x138] sm:$0xff] %vm509, %v1540
      %1555 = vst.msk [vmem:[#allocation2 + $0x160] sm:$0xff] %vm509, %v1541
      %1556 = vst.msk [vmem:[#allocation2 + $0x188] sm:$0xff] %vm509, %v1542
      %1557 = vst.msk [vmem:[#allocation2 + $0x1b0] sm:$0xff] %vm509, %v1543
      %1558 = vst.msk [vmem:[#allocation2 + $0x1d8] sm:$0xff] %vm509, %v1544
      %1559 = vst.msk [vmem:[#allocation2 + $0x200] sm:$0xff] %vm509, %v1545
      %1560 = vst.msk [vmem:[#allocation2 + $0x228] sm:$0xff] %vm509, %v1546
      %1561 = vst [vmem:[#allocation3] sm:$0xff] 0.0
      %1562 = vst [vmem:[#allocation3 + $0x8] sm:$0xff] 0.0
      %1563 = vst [vmem:[#allocation3 + $0x10] sm:$0xff] 0.0
      %1564 = vst [vmem:[#allocation3 + $0x258] sm:$0xff] 0.0
      %1565 = vst [vmem:[#allocation3 + $0x260] sm:$0xff] 0.0
      %1566 = vst [vmem:[#allocation3 + $0x268] sm:$0xff] 0.0
      %v1567 = vld [vmem:[#allocation2] sm:$0xff]
      %v1568 = vld [vmem:[#allocation2 + $0x8] sm:$0xff]
      %v1569 = vld [vmem:[#allocation2 + $0x10] sm:$0xff]
      %v1570 = vld [vmem:[#allocation2 + $0x18] sm:$0xff]
      %v1571 = vld [vmem:[#allocation2 + $0x20] sm:$0xff]
      %v1572 = vld [vmem:[#allocation2 + $0x28] sm:$0xff]
      %v1573 = vld [vmem:[#allocation2 + $0x30] sm:$0xff]
      %v1574 = vld [vmem:[#allocation2 + $0x38] sm:$0xff]
      %v1575 = vld [vmem:[#allocation2 + $0x40] sm:$0xff]
      %v1576 = vld [vmem:[#allocation2 + $0x48] sm:$0xff]
      %v1577 = vld [vmem:[#allocation2 + $0x50] sm:$0xff]
      %v1578 = vld [vmem:[#allocation2 + $0x58] sm:$0xff]
      %v1579 = vld [vmem:[#allocation2 + $0x60] sm:$0xff]
      %v1580 = vld [vmem:[#allocation2 + $0x68] sm:$0xff]
      %v1581 = vld [vmem:[#allocation2 + $0x70] sm:$0xff]
      %v1582 = vld [vmem:[#allocation2 + $0x78] sm:$0xff]
      %v1583 = vld [vmem:[#allocation2 + $0x80] sm:$0xff]
      %v1584 = vld [vmem:[#allocation2 + $0x88] sm:$0xff]
      %v1585 = vld [vmem:[#allocation2 + $0x90] sm:$0xff]
      %v1586 = vld [vmem:[#allocation2 + $0x98] sm:$0xff]
      %v1587 = vld [vmem:[#allocation2 + $0xa0] sm:$0xff]
      %v1588 = vld [vmem:[#allocation2 + $0xa8] sm:$0xff]
      %v1589 = vld [vmem:[#allocation2 + $0xb0] sm:$0xff]
      %v1590 = vld [vmem:[#allocation2 + $0xb8] sm:$0xff]
      %v1591 = vld [vmem:[#allocation2 + $0xc0] sm:$0xff]
      %v1592 = vld [vmem:[#allocation2 + $0xc8] sm:$0xff]
      %v1593 = vld [vmem:[#allocation2 + $0xd0] sm:$0xff]
      %v1594 = vld [vmem:[#allocation2 + $0xd8] sm:$0xff]
      %v1595 = vld [vmem:[#allocation2 + $0xe0] sm:$0xff]
      %v1596 = vld [vmem:[#allocation2 + $0xe8] sm:$0xff]
      %v1597 = vld [vmem:[#allocation2 + $0xf0] sm:$0xff]
      %v1598 = vld [vmem:[#allocation2 + $0xf8] sm:$0xff]
      %v1599 = vld [vmem:[#allocation2 + $0x100] sm:$0xff]
      %v1600 = vld [vmem:[#allocation2 + $0x108] sm:$0xff]
      %v1601 = vld [vmem:[#allocation2 + $0x110] sm:$0xff]
      %v1602 = vld [vmem:[#allocation2 + $0x118] sm:$0xff]
      %v1603 = vld [vmem:[#allocation2 + $0x120] sm:$0xff]
      %v1604 = vld [vmem:[#allocation2 + $0x128] sm:$0xff]
      %v1605 = vld [vmem:[#allocation2 + $0x130] sm:$0xff]
      %v1606 = vld [vmem:[#allocation2 + $0x138] sm:$0xff]
      %v1607 = vld [vmem:[#allocation2 + $0x140] sm:$0xff]
      %v1608 = vld [vmem:[#allocation2 + $0x148] sm:$0xff]
      %v1609 = vld [vmem:[#allocation2 + $0x150] sm:$0xff]
      %v1610 = vld [vmem:[#allocation2 + $0x158] sm:$0xff]
      %v1611 = vld [vmem:[#allocation2 + $0x160] sm:$0xff]
      %v1612 = vld [vmem:[#allocation2 + $0x168] sm:$0xff]
      %v1613 = vld [vmem:[#allocation2 + $0x170] sm:$0xff]
      %v1614 = vld [vmem:[#allocation2 + $0x178] sm:$0xff]
      %v1615 = vld [vmem:[#allocation2 + $0x180] sm:$0xff]
      %v1616 = vld [vmem:[#allocation2 + $0x188] sm:$0xff]
      %v1617 = vld [vmem:[#allocation2 + $0x190] sm:$0xff]
      %v1618 = vld [vmem:[#allocation2 + $0x198] sm:$0xff]
      %v1619 = vld [vmem:[#allocation2 + $0x1a0] sm:$0xff]
      %v1620 = vld [vmem:[#allocation2 + $0x1a8] sm:$0xff]
      %v1621 = vld [vmem:[#allocation2 + $0x1b0] sm:$0xff]
      %v1622 = vld [vmem:[#allocation2 + $0x1b8] sm:$0xff]
      %v1623 = vld [vmem:[#allocation2 + $0x1c0] sm:$0xff]
      %v1624 = vld [vmem:[#allocation2 + $0x1c8] sm:$0xff]
      %v1625 = vld [vmem:[#allocation2 + $0x1d0] sm:$0xff]
      %v1626 = vld [vmem:[#allocation2 + $0x1d8] sm:$0xff]
      %v1627 = vld [vmem:[%s6] sm:$0xff]
      %v1628 = vld [vmem:[%s6 + $0x8] sm:$0xf]
      %v1629 = vld [vmem:[%s6 + $0xc] sm:$0xff]
      %v1630 = vld [vmem:[%s6 + $0x14] sm:$0xf]
      %v1631 = vld [vmem:[%s6 + $0x18] sm:$0xff]
      %v1632 = vld [vmem:[%s6 + $0x20] sm:$0xf]
      %v1633 = vld [vmem:[%s6 + $0x24] sm:$0xff]
      %v1634 = vld [vmem:[%s6 + $0x2c] sm:$0xf]
      %v1635 = vld [vmem:[%s6 + $0x30] sm:$0xff]
      %v1636 = vld [vmem:[%s6 + $0x38] sm:$0xf]
      %v1637 = vld [vmem:[%s6 + $0x3c] sm:$0xff]
      %v1638 = vld [vmem:[%s6 + $0x44] sm:$0xf]
      %v1639 = vld [vmem:[%s6 + $0x48] sm:$0xff]
      %v1640 = vld [vmem:[%s6 + $0x50] sm:$0xf]
      %v1641 = vld [vmem:[%s6 + $0x54] sm:$0xff]
      %v1642 = vld [vmem:[%s6 + $0x5c] sm:$0xf]
      %v1643 = vld [vmem:[%s6 + $0x60] sm:$0xff]
      %v1644 = vld [vmem:[%s6 + $0x68] sm:$0xf]
      %v1645 = vld [vmem:[%s6 + $0x6c] sm:$0xff]
      %v1646 = vld [vmem:[%s6 + $0x74] sm:$0xf]
      %v1647 = vld [vmem:[%s6 + $0x78] sm:$0xff]
      %v1648 = vld [vmem:[%s6 + $0x80] sm:$0xf]
      %v1649 = vld [vmem:[%s6 + $0x84] sm:$0xff]
      %v1650 = vld [vmem:[%s6 + $0x8c] sm:$0xf]
      %v1651 = vld [vmem:[%s6 + $0x90] sm:$0xff]
      %v1652 = vld [vmem:[%s6 + $0x98] sm:$0xf]
      %v1653 = vld [vmem:[%s6 + $0x9c] sm:$0xff]
      %v1654 = vld [vmem:[%s6 + $0xa4] sm:$0xf]
      %v1655 = vld [vmem:[%s6 + $0xa8] sm:$0xff]
      %v1656 = vld [vmem:[%s6 + $0xb0] sm:$0xf]
      %v1657 = vld [vmem:[%s6 + $0xb4] sm:$0xff]
      %v1658 = vld [vmem:[%s6 + $0xbc] sm:$0xf]
      %v1659 = vld [vmem:[%s6 + $0xc0] sm:$0xff]
      %v1660 = vld [vmem:[%s6 + $0xc8] sm:$0xf]
      %v1661 = vld [vmem:[%s6 + $0xcc] sm:$0xff]
      %v1662 = vld [vmem:[%s6 + $0xd4] sm:$0xf]
      %v1663 = vld [vmem:[%s6 + $0xd8] sm:$0xff]
      %v1664 = vld [vmem:[%s6 + $0xe0] sm:$0xf]
      %v1665 = vld [vmem:[%s6 + $0xe4] sm:$0xff]
      %v1666 = vld [vmem:[%s6 + $0xec] sm:$0xf]
      %v1667 = vld [vmem:[%s6 + $0xf0] sm:$0xff]
      %v1668 = vld [vmem:[%s6 + $0xf8] sm:$0xf]
      %v1669 = vld [vmem:[%s6 + $0xfc] sm:$0xff]
      %v1670 = vld [vmem:[%s6 + $0x104] sm:$0xf]
      %v1671 = vld [vmem:[%s6 + $0x108] sm:$0xff]
      %v1672 = vld [vmem:[%s6 + $0x110] sm:$0xf]
      %v1673 = vld [vmem:[%s6 + $0x114] sm:$0xff]
      %v1674 = vld [vmem:[%s6 + $0x11c] sm:$0xf]
      %v1675 = vld [vmem:[%s6 + $0x120] sm:$0xff]
      %v1676 = vld [vmem:[%s6 + $0x128] sm:$0xf]
      %v1677 = vld [vmem:[%s6 + $0x12c] sm:$0xff]
      %v1678 = vld [vmem:[%s6 + $0x134] sm:$0xf]
      %v1679 = vld [vmem:[%s6 + $0x138] sm:$0xff]
      %v1680 = vld [vmem:[%s6 + $0x140] sm:$0xf]
      %v1681 = vld [vmem:[%s6 + $0x144] sm:$0xff]
      %v1682 = vld [vmem:[%s6 + $0x14c] sm:$0xf]
      %v1683 = vld [vmem:[%s6 + $0x150] sm:$0xff]
      %v1684 = vld [vmem:[%s6 + $0x158] sm:$0xf]
      %v1685 = vld [vmem:[%s6 + $0x15c] sm:$0xff]
      %v1686 = vld [vmem:[%s6 + $0x164] sm:$0xf]
      %v1687 = vld [vmem:[%s6 + $0x168] sm:$0xff]
      %v1688 = vld [vmem:[%s6 + $0x170] sm:$0xf]
      %v1689 = vld [vmem:[%s6 + $0x174] sm:$0xff]
      %v1690 = vld [vmem:[%s6 + $0x17c] sm:$0xf]
      %v1691 = vld [vmem:[%s6 + $0x180] sm:$0xff]
      %v1692 = vld [vmem:[%s6 + $0x188] sm:$0xf]
      %v1693 = vld [vmem:[%s6 + $0x18c] sm:$0xff]
      %v1694 = vld [vmem:[%s6 + $0x194] sm:$0xf]
      %v1695 = vld [vmem:[%s6 + $0x198] sm:$0xff]
      %v1696 = vld [vmem:[%s6 + $0x1a0] sm:$0xf]
      %v1697 = vld [vmem:[%s6 + $0x1a4] sm:$0xff]
      %v1698 = vld [vmem:[%s6 + $0x1ac] sm:$0xf]
      %v1699 = vld [vmem:[%s6 + $0x1b0] sm:$0xff]
      %v1700 = vld [vmem:[%s6 + $0x1b8] sm:$0xf]
      %v1701 = vld [vmem:[%s6 + $0x1bc] sm:$0xff]
      %v1702 = vld [vmem:[%s6 + $0x1c4] sm:$0xf]
      %v1703 = vld [vmem:[%s6 + $0x1c8] sm:$0xff]
      %v1704 = vld [vmem:[%s6 + $0x1d0] sm:$0xf]
      %v1705 = vld [vmem:[%s6 + $0x1d4] sm:$0xff]
      %v1706 = vld [vmem:[%s6 + $0x1dc] sm:$0xf]
      %v1707 = vld [vmem:[%s6 + $0x1e0] sm:$0xff]
      %v1708 = vld [vmem:[%s6 + $0x1e8] sm:$0xf]
      %v1709 = vld [vmem:[%s6 + $0x1ec] sm:$0xff]
      %v1710 = vld [vmem:[%s6 + $0x1f4] sm:$0xf]
      %v1711 = vld [vmem:[%s6 + $0x1f8] sm:$0xff]
      %v1712 = vld [vmem:[%s6 + $0x200] sm:$0xf]
      %v1713 = vld [vmem:[%s6 + $0x204] sm:$0xff]
      %v1714 = vld [vmem:[%s6 + $0x20c] sm:$0xf]
      %v1715 = vld [vmem:[%s6 + $0x210] sm:$0xff]
      %v1716 = vld [vmem:[%s6 + $0x218] sm:$0xf]
      %v1717 = vld [vmem:[%s6 + $0x21c] sm:$0xff]
      %v1718 = vld [vmem:[%s6 + $0x224] sm:$0xf]
      %v1719 = vld [vmem:[%s6 + $0x228] sm:$0xff]
      %v1720 = vld [vmem:[%s6 + $0x230] sm:$0xf]
      %v1721 = vld [vmem:[%s6 + $0x234] sm:$0xff]
      %v1722 = vld [vmem:[%s6 + $0x23c] sm:$0xf]
      %v1723 = vld [vmem:[%s6 + $0x240] sm:$0xff]
      %v1724 = vld [vmem:[%s6 + $0x248] sm:$0xf]
      %v1725 = vld [vmem:[%s6 + $0x24c] sm:$0xff]
      %v1726 = vld [vmem:[%s6 + $0x254] sm:$0xf]
      %v1727 = vld [vmem:[%s6 + $0x258] sm:$0xff]
      %v1728 = vld [vmem:[%s6 + $0x260] sm:$0xf]
      %v1729 = vld [vmem:[%s6 + $0x264] sm:$0xff]
      %v1730 = vld [vmem:[%s6 + $0x26c] sm:$0xf]
      %v1731 = vld [vmem:[%s6 + $0x270] sm:$0xff]
      %v1732 = vld [vmem:[%s6 + $0x278] sm:$0xf]
      %v1733 = vld [vmem:[%s6 + $0x27c] sm:$0xff]
      %v1734 = vld [vmem:[%s6 + $0x284] sm:$0xf]
      %v1735 = vld [vmem:[%s6 + $0x288] sm:$0xff]
      %v1736 = vld [vmem:[%s6 + $0x290] sm:$0xf]
      %v1737 = vld [vmem:[%s6 + $0x294] sm:$0xff]
      %v1738 = vld [vmem:[%s6 + $0x29c] sm:$0xf]
      %v1739 = vld [vmem:[%s6 + $0x2a0] sm:$0xff]
      %v1740 = vld [vmem:[%s6 + $0x2a8] sm:$0xf]
      %v1741 = vld [vmem:[%s6 + $0x2ac] sm:$0xff]
      %v1742 = vld [vmem:[%s6 + $0x2b4] sm:$0xf]
      %v1743 = vld [vmem:[%s6 + $0x2b8] sm:$0xff]
      %v1744 = vld [vmem:[%s6 + $0x2c0] sm:$0xf]
      %v1745 = vld [vmem:[%s6 + $0x2c4] sm:$0xff]
      %v1746 = vld [vmem:[%s6 + $0x2cc] sm:$0xf]
      %v1747 = vld [vmem:[%s6 + $0x2d0] sm:$0xff]
      %v1748 = vld [vmem:[%s6 + $0x2d8] sm:$0xf]
      %v1749 = vld [vmem:[%s6 + $0x2dc] sm:$0xff]
      %v1750 = vld [vmem:[%s6 + $0x2e4] sm:$0xf]
      %v1751 = vld [vmem:[%s6 + $0x2e8] sm:$0xff]
      %v1752 = vld [vmem:[%s6 + $0x2f0] sm:$0xf]
      %v1753 = vld [vmem:[%s6 + $0x2f4] sm:$0xff]
      %v1754 = vld [vmem:[%s6 + $0x2fc] sm:$0xf]
      %v1755 = vld [vmem:[%s6 + $0x300] sm:$0xff]
      %v1756 = vld [vmem:[%s6 + $0x308] sm:$0xf]
      %v1757 = vld [vmem:[%s6 + $0x30c] sm:$0xff]
      %v1758 = vld [vmem:[%s6 + $0x314] sm:$0xf]
      %v1759 = vld [vmem:[%s6 + $0x318] sm:$0xff]
      %v1760 = vld [vmem:[%s6 + $0x320] sm:$0xf]
      %v1761 = vld [vmem:[%s6 + $0x324] sm:$0xff]
      %v1762 = vld [vmem:[%s6 + $0x32c] sm:$0xf]
      %v1899 = vunpack.c.l.b16 %v1627
      %v1900 = vunpack.c.h.b16 %v1627
      %v1901 = vunpack.c.l.b16 %v1628
      %v1902 = vunpack.c.l.b16 %v1629
      %v1903 = vunpack.c.h.b16 %v1629
      %v1904 = vunpack.c.l.b16 %v1630
      %v1905 = vunpack.c.l.b16 %v1631
      %v1906 = vunpack.c.h.b16 %v1631
      %v1907 = vunpack.c.l.b16 %v1632
      %v1908 = vunpack.c.l.b16 %v1633
      %v1909 = vunpack.c.h.b16 %v1633
      %v1910 = vunpack.c.l.b16 %v1634
      %v1911 = vunpack.c.l.b16 %v1635
      %v1912 = vunpack.c.h.b16 %v1635
      %v1913 = vunpack.c.l.b16 %v1636
      %v1914 = vunpack.c.l.b16 %v1637
      %v1915 = vunpack.c.h.b16 %v1637
      %v1916 = vunpack.c.l.b16 %v1638
      %v1917 = vunpack.c.l.b16 %v1639
      %v1918 = vunpack.c.h.b16 %v1639
      %v1919 = vunpack.c.l.b16 %v1640
      %v1920 = vunpack.c.l.b16 %v1641
      %v1921 = vunpack.c.h.b16 %v1641
      %v1922 = vunpack.c.l.b16 %v1642
      %v1923 = vunpack.c.l.b16 %v1643
      %v1924 = vunpack.c.h.b16 %v1643
      %v1925 = vunpack.c.l.b16 %v1644
      %v1926 = vunpack.c.l.b16 %v1645
      %v1927 = vunpack.c.h.b16 %v1645
      %v1928 = vunpack.c.l.b16 %v1646
      %v1929 = vunpack.c.l.b16 %v1647
      %v1930 = vunpack.c.h.b16 %v1647
      %v1931 = vunpack.c.l.b16 %v1648
      %v1932 = vunpack.c.l.b16 %v1649
      %v1933 = vunpack.c.h.b16 %v1649
      %v1934 = vunpack.c.l.b16 %v1650
      %v1935 = vunpack.c.l.b16 %v1651
      %v1936 = vunpack.c.h.b16 %v1651
      %v1937 = vunpack.c.l.b16 %v1652
      %v1938 = vunpack.c.l.b16 %v1653
      %v1939 = vunpack.c.h.b16 %v1653
      %v1940 = vunpack.c.l.b16 %v1654
      %v1941 = vunpack.c.l.b16 %v1655
      %v1942 = vunpack.c.h.b16 %v1655
      %v1943 = vunpack.c.l.b16 %v1656
      %v1944 = vunpack.c.l.b16 %v1657
      %v1945 = vunpack.c.h.b16 %v1657
      %v1946 = vunpack.c.l.b16 %v1658
      %v1947 = vunpack.c.l.b16 %v1659
      %v1948 = vunpack.c.h.b16 %v1659
      %v1949 = vunpack.c.l.b16 %v1660
      %v1950 = vunpack.c.l.b16 %v1661
      %v1951 = vunpack.c.h.b16 %v1661
      %v1952 = vunpack.c.l.b16 %v1662
      %v1953 = vunpack.c.l.b16 %v1663
      %v1954 = vunpack.c.h.b16 %v1663
      %v1955 = vunpack.c.l.b16 %v1664
      %v1956 = vunpack.c.l.b16 %v1665
      %v1957 = vunpack.c.h.b16 %v1665
      %v1958 = vunpack.c.l.b16 %v1666
      %v1959 = vunpack.c.l.b16 %v1667
      %v1960 = vunpack.c.h.b16 %v1667
      %v1961 = vunpack.c.l.b16 %v1668
      %v1962 = vunpack.c.l.b16 %v1669
      %v1963 = vunpack.c.h.b16 %v1669
      %v1964 = vunpack.c.l.b16 %v1670
      %v1965 = vunpack.c.l.b16 %v1671
      %v1966 = vunpack.c.h.b16 %v1671
      %v1967 = vunpack.c.l.b16 %v1672
      %v1968 = vunpack.c.l.b16 %v1673
      %v1969 = vunpack.c.h.b16 %v1673
      %v1970 = vunpack.c.l.b16 %v1674
      %v1971 = vunpack.c.l.b16 %v1675
      %v1972 = vunpack.c.h.b16 %v1675
      %v1973 = vunpack.c.l.b16 %v1676
      %v1974 = vunpack.c.l.b16 %v1677
      %v1975 = vunpack.c.h.b16 %v1677
      %v1976 = vunpack.c.l.b16 %v1678
      %v1977 = vunpack.c.l.b16 %v1679
      %v1978 = vunpack.c.h.b16 %v1679
      %v1979 = vunpack.c.l.b16 %v1680
      %v1980 = vunpack.c.l.b16 %v1681
      %v1981 = vunpack.c.h.b16 %v1681
      %v1982 = vunpack.c.l.b16 %v1682
      %v1983 = vunpack.c.l.b16 %v1683
      %v1984 = vunpack.c.h.b16 %v1683
      %v1985 = vunpack.c.l.b16 %v1684
      %v1986 = vunpack.c.l.b16 %v1685
      %v1987 = vunpack.c.h.b16 %v1685
      %v1988 = vunpack.c.l.b16 %v1686
      %v1989 = vunpack.c.l.b16 %v1687
      %v1990 = vunpack.c.h.b16 %v1687
      %v1991 = vunpack.c.l.b16 %v1688
      %v1992 = vunpack.c.l.b16 %v1689
      %v1993 = vunpack.c.h.b16 %v1689
      %v1994 = vunpack.c.l.b16 %v1690
      %v1995 = vunpack.c.l.b16 %v1691
      %v1996 = vunpack.c.h.b16 %v1691
      %v1997 = vunpack.c.l.b16 %v1692
      %v1998 = vunpack.c.l.b16 %v1693
      %v1999 = vunpack.c.h.b16 %v1693
      %v2000 = vunpack.c.l.b16 %v1694
      %v2001 = vunpack.c.l.b16 %v1695
      %v2002 = vunpack.c.h.b16 %v1695
      %v2003 = vunpack.c.l.b16 %v1696
      %v2004 = vunpack.c.l.b16 %v1697
      %v2005 = vunpack.c.h.b16 %v1697
      %v2006 = vunpack.c.l.b16 %v1698
      %v2007 = vunpack.c.l.b16 %v1699
      %v2008 = vunpack.c.h.b16 %v1699
      %v2009 = vunpack.c.l.b16 %v1700
      %v2010 = vunpack.c.l.b16 %v1701
      %v2011 = vunpack.c.h.b16 %v1701
      %v2012 = vunpack.c.l.b16 %v1702
      %v2013 = vunpack.c.l.b16 %v1703
      %v2014 = vunpack.c.h.b16 %v1703
      %v2015 = vunpack.c.l.b16 %v1704
      %v2016 = vunpack.c.l.b16 %v1705
      %v2017 = vunpack.c.h.b16 %v1705
      %v2018 = vunpack.c.l.b16 %v1706
      %v2019 = vunpack.c.l.b16 %v1707
      %v2020 = vunpack.c.h.b16 %v1707
      %v2021 = vunpack.c.l.b16 %v1708
      %v2022 = vunpack.c.l.b16 %v1709
      %v2023 = vunpack.c.h.b16 %v1709
      %v2024 = vunpack.c.l.b16 %v1710
      %v2025 = vunpack.c.l.b16 %v1711
      %v2026 = vunpack.c.h.b16 %v1711
      %v2027 = vunpack.c.l.b16 %v1712
      %v2028 = vunpack.c.l.b16 %v1713
      %v2029 = vunpack.c.h.b16 %v1713
      %v2030 = vunpack.c.l.b16 %v1714
      %v2031 = vunpack.c.l.b16 %v1715
      %v2032 = vunpack.c.h.b16 %v1715
      %v2033 = vunpack.c.l.b16 %v1716
      %v2034 = vunpack.c.l.b16 %v1717
      %v2035 = vunpack.c.h.b16 %v1717
      %v2036 = vunpack.c.l.b16 %v1718
      %v2037 = vunpack.c.l.b16 %v1719
      %v2038 = vunpack.c.h.b16 %v1719
      %v2039 = vunpack.c.l.b16 %v1720
      %v2040 = vunpack.c.l.b16 %v1721
      %v2041 = vunpack.c.h.b16 %v1721
      %v2042 = vunpack.c.l.b16 %v1722
      %v2043 = vunpack.c.l.b16 %v1723
      %v2044 = vunpack.c.h.b16 %v1723
      %v2045 = vunpack.c.l.b16 %v1724
      %v2046 = vunpack.c.l.b16 %v1725
      %v2047 = vunpack.c.h.b16 %v1725
      %v2048 = vunpack.c.l.b16 %v1726
      %v2049 = vunpack.c.l.b16 %v1727
      %v2050 = vunpack.c.h.b16 %v1727
      %v2051 = vunpack.c.l.b16 %v1728
      %v2052 = vunpack.c.l.b16 %v1729
      %v2053 = vunpack.c.h.b16 %v1729
      %v2054 = vunpack.c.l.b16 %v1730
      %v2055 = vunpack.c.l.b16 %v1731
      %v2056 = vunpack.c.h.b16 %v1731
      %v2057 = vunpack.c.l.b16 %v1732
      %v2058 = vunpack.c.l.b16 %v1733
      %v2059 = vunpack.c.h.b16 %v1733
      %v2060 = vunpack.c.l.b16 %v1734
      %v2061 = vunpack.c.l.b16 %v1735
      %v2062 = vunpack.c.h.b16 %v1735
      %v2063 = vunpack.c.l.b16 %v1736
      %v2064 = vunpack.c.l.b16 %v1737
      %v2065 = vunpack.c.h.b16 %v1737
      %v2066 = vunpack.c.l.b16 %v1738
      %v2067 = vunpack.c.l.b16 %v1739
      %v2068 = vunpack.c.h.b16 %v1739
      %v2069 = vunpack.c.l.b16 %v1740
      %v2070 = vunpack.c.l.b16 %v1741
      %v2071 = vunpack.c.h.b16 %v1741
      %v2072 = vunpack.c.l.b16 %v1742
      %v2073 = vunpack.c.l.b16 %v1743
      %v2074 = vunpack.c.h.b16 %v1743
      %v2075 = vunpack.c.l.b16 %v1744
      %v2076 = vunpack.c.l.b16 %v1745
      %v2077 = vunpack.c.h.b16 %v1745
      %v2078 = vunpack.c.l.b16 %v1746
      %v2079 = vunpack.c.l.b16 %v1747
      %v2080 = vunpack.c.h.b16 %v1747
      %v2081 = vunpack.c.l.b16 %v1748
      %v2082 = vunpack.c.l.b16 %v1749
      %v2083 = vunpack.c.h.b16 %v1749
      %v2084 = vunpack.c.l.b16 %v1750
      %v2085 = vunpack.c.l.b16 %v1751
      %v2086 = vunpack.c.h.b16 %v1751
      %v2087 = vunpack.c.l.b16 %v1752
      %v2088 = vunpack.c.l.b16 %v1753
      %v2089 = vunpack.c.h.b16 %v1753
      %v2090 = vunpack.c.l.b16 %v1754
      %v2091 = vunpack.c.l.b16 %v1755
      %v2092 = vunpack.c.h.b16 %v1755
      %v2093 = vunpack.c.l.b16 %v1756
      %v2094 = vunpack.c.l.b16 %v1757
      %v2095 = vunpack.c.h.b16 %v1757
      %v2096 = vunpack.c.l.b16 %v1758
      %v2097 = vunpack.c.l.b16 %v1759
      %v2098 = vunpack.c.h.b16 %v1759
      %v2099 = vunpack.c.l.b16 %v1760
      %v2100 = vunpack.c.l.b16 %v1761
      %v2101 = vunpack.c.h.b16 %v1761
      %v2102 = vunpack.c.l.b16 %v1762
      %v2103 = vpack.c.b16 %v1902, %v1899
      %v2104 = vpack.c.b16 %v1903, %v1900
      %v2105 = vpack.c.b16 %v1904, %v1901
      %v2106 = vpack.c.b16 %v1908, %v1905
      %v2107 = vpack.c.b16 %v1909, %v1906
      %v2108 = vpack.c.b16 %v1910, %v1907
      %v2109 = vpack.c.b16 %v1914, %v1911
      %v2110 = vpack.c.b16 %v1915, %v1912
      %v2111 = vpack.c.b16 %v1916, %v1913
      %v2112 = vpack.c.b16 %v1920, %v1917
      %v2113 = vpack.c.b16 %v1921, %v1918
      %v2114 = vpack.c.b16 %v1922, %v1919
      %v2115 = vpack.c.b16 %v1926, %v1923
      %v2116 = vpack.c.b16 %v1927, %v1924
      %v2117 = vpack.c.b16 %v1928, %v1925
      %v2118 = vpack.c.b16 %v1932, %v1929
      %v2119 = vpack.c.b16 %v1933, %v1930
      %v2120 = vpack.c.b16 %v1934, %v1931
      %v2121 = vpack.c.b16 %v1938, %v1935
      %v2122 = vpack.c.b16 %v1939, %v1936
      %v2123 = vpack.c.b16 %v1940, %v1937
      %v2124 = vpack.c.b16 %v1944, %v1941
      %v2125 = vpack.c.b16 %v1945, %v1942
      %v2126 = vpack.c.b16 %v1946, %v1943
      %v2127 = vpack.c.b16 %v1950, %v1947
      %v2128 = vpack.c.b16 %v1951, %v1948
      %v2129 = vpack.c.b16 %v1952, %v1949
      %v2130 = vpack.c.b16 %v1956, %v1953
      %v2131 = vpack.c.b16 %v1957, %v1954
      %v2132 = vpack.c.b16 %v1958, %v1955
      %v2133 = vpack.c.b16 %v1962, %v1959
      %v2134 = vpack.c.b16 %v1963, %v1960
      %v2135 = vpack.c.b16 %v1964, %v1961
      %v2136 = vpack.c.b16 %v1968, %v1965
      %v2137 = vpack.c.b16 %v1969, %v1966
      %v2138 = vpack.c.b16 %v1970, %v1967
      %v2139 = vpack.c.b16 %v1974, %v1971
      %v2140 = vpack.c.b16 %v1975, %v1972
      %v2141 = vpack.c.b16 %v1976, %v1973
      %v2142 = vpack.c.b16 %v1980, %v1977
      %v2143 = vpack.c.b16 %v1981, %v1978
      %v2144 = vpack.c.b16 %v1982, %v1979
      %v2145 = vpack.c.b16 %v1986, %v1983
      %v2146 = vpack.c.b16 %v1987, %v1984
      %v2147 = vpack.c.b16 %v1988, %v1985
      %v2148 = vpack.c.b16 %v1992, %v1989
      %v2149 = vpack.c.b16 %v1993, %v1990
      %v2150 = vpack.c.b16 %v1994, %v1991
      %v2151 = vpack.c.b16 %v1998, %v1995
      %v2152 = vpack.c.b16 %v1999, %v1996
      %v2153 = vpack.c.b16 %v2000, %v1997
      %v2154 = vpack.c.b16 %v2004, %v2001
      %v2155 = vpack.c.b16 %v2005, %v2002
      %v2156 = vpack.c.b16 %v2006, %v2003
      %v2157 = vpack.c.b16 %v2010, %v2007
      %v2158 = vpack.c.b16 %v2011, %v2008
      %v2159 = vpack.c.b16 %v2012, %v2009
      %v2160 = vpack.c.b16 %v2016, %v2013
      %v2161 = vpack.c.b16 %v2017, %v2014
      %v2162 = vpack.c.b16 %v2018, %v2015
      %v2163 = vpack.c.b16 %v2022, %v2019
      %v2164 = vpack.c.b16 %v2023, %v2020
      %v2165 = vpack.c.b16 %v2024, %v2021
      %v2166 = vpack.c.b16 %v2028, %v2025
      %v2167 = vpack.c.b16 %v2029, %v2026
      %v2168 = vpack.c.b16 %v2030, %v2027
      %v2169 = vpack.c.b16 %v2034, %v2031
      %v2170 = vpack.c.b16 %v2035, %v2032
      %v2171 = vpack.c.b16 %v2036, %v2033
      %v2172 = vpack.c.b16 %v2040, %v2037
      %v2173 = vpack.c.b16 %v2041, %v2038
      %v2174 = vpack.c.b16 %v2042, %v2039
      %v2175 = vpack.c.b16 %v2046, %v2043
      %v2176 = vpack.c.b16 %v2047, %v2044
      %v2177 = vpack.c.b16 %v2048, %v2045
      %v2178 = vpack.c.b16 %v2052, %v2049
      %v2179 = vpack.c.b16 %v2053, %v2050
      %v2180 = vpack.c.b16 %v2054, %v2051
      %v2181 = vpack.c.b16 %v2058, %v2055
      %v2182 = vpack.c.b16 %v2059, %v2056
      %v2183 = vpack.c.b16 %v2060, %v2057
      %v2184 = vpack.c.b16 %v2064, %v2061
      %v2185 = vpack.c.b16 %v2065, %v2062
      %v2186 = vpack.c.b16 %v2066, %v2063
      %v2187 = vpack.c.b16 %v2070, %v2067
      %v2188 = vpack.c.b16 %v2071, %v2068
      %v2189 = vpack.c.b16 %v2072, %v2069
      %v2190 = vpack.c.b16 %v2076, %v2073
      %v2191 = vpack.c.b16 %v2077, %v2074
      %v2192 = vpack.c.b16 %v2078, %v2075
      %v2193 = vpack.c.b16 %v2082, %v2079
      %v2194 = vpack.c.b16 %v2083, %v2080
      %v2195 = vpack.c.b16 %v2084, %v2081
      %v2196 = vpack.c.b16 %v2088, %v2085
      %v2197 = vpack.c.b16 %v2089, %v2086
      %v2198 = vpack.c.b16 %v2090, %v2087
      %v2199 = vpack.c.b16 %v2094, %v2091
      %v2200 = vpack.c.b16 %v2095, %v2092
      %v2201 = vpack.c.b16 %v2096, %v2093
      %v2202 = vpack.c.b16 %v2100, %v2097
      %v2203 = vpack.c.b16 %v2101, %v2098
      %v2204 = vpack.c.b16 %v2102, %v2099
      %v2308 = vsel %vm509, %v1571, 0
      %v2311 = vsel %vm509, %v1576, 0
      %v2314 = vsel %vm509, %v1581, 0
      %v2317 = vsel %vm509, %v1586, 0
      %v2320 = vsel %vm509, %v1591, 0
      %v2323 = vsel %vm509, %v1596, 0
      %v2326 = vsel %vm509, %v1601, 0
      %v2329 = vsel %vm509, %v1606, 0
      %v2332 = vsel %vm509, %v1611, 0
      %v2335 = vsel %vm509, %v1616, 0
      %v2338 = vsel %vm509, %v1621, 0
      %v2341 = vsel %vm509, %v1626, 0
      %2343 = vmatprep.subr.bf16.mxu0 %v2104
      %2344 = vmatpush1.bf16.msra.mxu0 %v2103
      %2345 = vmatprep.subr.bf16.mxu0 %v2107
      %2346 = vmatpush1.bf16.msra.mxu0 %v2106
      %2347 = vmatprep.subr.bf16.mxu0 %v2110
      %2348 = vmatpush1.bf16.msra.mxu0 %v2109
      %2349 = vmatprep.subr.bf16.mxu0 %v2113
      %2350 = vmatpush1.bf16.msra.mxu0 %v2112
      %2351 = vmatprep.subr.bf16.mxu0 %v2116
      %2352 = vmatpush1.bf16.msra.mxu0 %v2115
      %2353 = vmatprep.subr.bf16.mxu0 %v2119
      %2354 = vmatpush1.bf16.msra.mxu0 %v2118
      %2355 = vmatprep.subr.bf16.mxu0 %v2122
      %2356 = vmatpush1.bf16.msra.mxu0 %v2121
      %2357 = vmatprep.subr.bf16.mxu0 %v2125
      %2358 = vmatpush1.bf16.msra.mxu0 %v2124
      %2359 = vmatprep.subr.bf16.mxu0 %v2128
      %2360 = vmatpush1.bf16.msra.mxu0 %v2127
      %2361 = vmatprep.subr.bf16.mxu0 %v2131
      %2362 = vmatpush1.bf16.msra.mxu0 %v2130
      %2363 = vmatprep.subr.bf16.mxu0 %v2134
      %2364 = vmatpush1.bf16.msra.mxu0 %v2133
      %2365 = vmatprep.subr.bf16.mxu0 %v2137
      %2366 = vmatpush1.bf16.msra.mxu0 %v2136
      %2367 = vmatprep.subr.bf16.mxu0 %v2140
      %2368 = vmatpush1.bf16.msra.mxu0 %v2139
      %2369 = vmatprep.subr.bf16.mxu0 %v2143
      %2370 = vmatpush1.bf16.msra.mxu0 %v2142
      %2371 = vmatprep.subr.bf16.mxu0 %v2146
      %2372 = vmatpush1.bf16.msra.mxu0 %v2145
      %2373 = vmatprep.subr.bf16.mxu0 %v2149
      %2374 = vmatpush1.bf16.msra.mxu0 %v2148
      %2375 = vmatprep.mubr.bf16.mxu0 %v1568
      %2376 = vmatmul.mubr.bf16.gmra.mrb[0].mxu0 %v1567
      %v2377 = vpop.f32.mrb[0].mxu0
      %v2378 = vadd.f32 0.0, %v2377
      %v2379 = vpop.f32.mrb[0].mxu0
      %v2380 = vadd.f32 0.0, %v2379
      %v2381 = vpop.f32.mrb[0].mxu0
      %v2382 = vadd.f32 0.0, %v2381
      %v2383 = vpop.f32.mrb[0].mxu0
      %v2384 = vadd.f32 0.0, %v2383
      %2385 = vmatprep.mubr.bf16.mxu0 %v1573
      %2386 = vmatmul.mubr.bf16.gmra.mrb[0].mxu0 %v1572
      %v2387 = vpop.f32.mrb[0].mxu0
      %v2388 = vadd.f32 0.0, %v2387
      %v2389 = vpop.f32.mrb[0].mxu0
      %v2390 = vadd.f32 0.0, %v2389
      %v2391 = vpop.f32.mrb[0].mxu0
      %v2392 = vadd.f32 0.0, %v2391
      %v2393 = vpop.f32.mrb[0].mxu0
      %v2394 = vadd.f32 0.0, %v2393
      %2395 = vmatprep.mubr.bf16.mxu0 %v1578
      %2396 = vmatmul.mubr.bf16.gmra.mrb[0].mxu0 %v1577
      %v2397 = vpop.f32.mrb[0].mxu0
      %v2398 = vadd.f32 0.0, %v2397
      %v2399 = vpop.f32.mrb[0].mxu0
      %v2400 = vadd.f32 0.0, %v2399
      %v2401 = vpop.f32.mrb[0].mxu0
      %v2402 = vadd.f32 0.0, %v2401
      %v2403 = vpop.f32.mrb[0].mxu0
      %v2404 = vadd.f32 0.0, %v2403
      %2405 = vmatprep.mubr.bf16.mxu0 %v1583
      %2406 = vmatmul.mubr.bf16.gmra.mrb[0].mxu0 %v1582
      %v2407 = vpop.f32.mrb[0].mxu0
      %v2408 = vadd.f32 0.0, %v2407
      %v2409 = vpop.f32.mrb[0].mxu0
      %v2410 = vadd.f32 0.0, %v2409
      %v2411 = vpop.f32.mrb[0].mxu0
      %v2412 = vadd.f32 0.0, %v2411
      %v2413 = vpop.f32.mrb[0].mxu0
      %v2414 = vadd.f32 0.0, %v2413
      %2415 = vmatprep.mubr.bf16.mxu0 %v1588
      %2416 = vmatmul.mubr.bf16.gmra.mrb[0].mxu0 %v1587
      %v2417 = vpop.f32.mrb[0].mxu0
      %v2418 = vadd.f32 0.0, %v2417
      %v2419 = vpop.f32.mrb[0].mxu0
      %v2420 = vadd.f32 0.0, %v2419
      %v2421 = vpop.f32.mrb[0].mxu0
      %v2422 = vadd.f32 0.0, %v2421
      %v2423 = vpop.f32.mrb[0].mxu0
      %v2424 = vadd.f32 0.0, %v2423
      %2425 = vmatprep.mubr.bf16.mxu0 %v1593
      %2426 = vmatmul.mubr.bf16.gmra.mrb[0].mxu0 %v1592
      %v2427 = vpop.f32.mrb[0].mxu0
      %v2428 = vadd.f32 0.0, %v2427
      %v2429 = vpop.f32.mrb[0].mxu0
      %v2430 = vadd.f32 0.0, %v2429
      %v2431 = vpop.f32.mrb[0].mxu0
      %v2432 = vadd.f32 0.0, %v2431
      %v2433 = vpop.f32.mrb[0].mxu0
      %v2434 = vadd.f32 0.0, %v2433
      %2435 = vmatprep.mubr.bf16.mxu0 %v1598
      %2436 = vmatmul.mubr.bf16.gmra.mrb[0].mxu0 %v1597
      %v2437 = vpop.f32.mrb[0].mxu0
      %v2438 = vadd.f32 0.0, %v2437
      %v2439 = vpop.f32.mrb[0].mxu0
      %v2440 = vadd.f32 0.0, %v2439
      %v2441 = vpop.f32.mrb[0].mxu0
      %v2442 = vadd.f32 0.0, %v2441
      %v2443 = vpop.f32.mrb[0].mxu0
      %v2444 = vadd.f32 0.0, %v2443
      %2445 = vmatprep.mubr.bf16.mxu0 %v1603
      %2446 = vmatmul.mubr.bf16.gmra.mrb[0].mxu0 %v1602
      %v2447 = vpop.f32.mrb[0].mxu0
      %v2448 = vadd.f32 0.0, %v2447
      %v2449 = vpop.f32.mrb[0].mxu0
      %v2450 = vadd.f32 0.0, %v2449
      %v2451 = vpop.f32.mrb[0].mxu0
      %v2452 = vadd.f32 0.0, %v2451
      %v2453 = vpop.f32.mrb[0].mxu0
      %v2454 = vadd.f32 0.0, %v2453
      %2455 = vmatprep.mubr.bf16.mxu0 %v1608
      %2456 = vmatmul.mubr.bf16.gmra.mrb[0].mxu0 %v1607
      %v2457 = vpop.f32.mrb[0].mxu0
      %v2458 = vadd.f32 0.0, %v2457
      %v2459 = vpop.f32.mrb[0].mxu0
      %v2460 = vadd.f32 0.0, %v2459
      %v2461 = vpop.f32.mrb[0].mxu0
      %v2462 = vadd.f32 0.0, %v2461
      %v2463 = vpop.f32.mrb[0].mxu0
      %v2464 = vadd.f32 0.0, %v2463
      %2465 = vmatprep.mubr.bf16.mxu0 %v1613
      %2466 = vmatmul.mubr.bf16.gmra.mrb[0].mxu0 %v1612
      %v2467 = vpop.f32.mrb[0].mxu0
      %v2468 = vadd.f32 0.0, %v2467
      %v2469 = vpop.f32.mrb[0].mxu0
      %v2470 = vadd.f32 0.0, %v2469
      %v2471 = vpop.f32.mrb[0].mxu0
      %v2472 = vadd.f32 0.0, %v2471
      %v2473 = vpop.f32.mrb[0].mxu0
      %v2474 = vadd.f32 0.0, %v2473
      %2475 = vmatprep.mubr.bf16.mxu0 %v1618
      %2476 = vmatmul.mubr.bf16.gmra.mrb[0].mxu0 %v1617
      %v2477 = vpop.f32.mrb[0].mxu0
      %v2478 = vadd.f32 0.0, %v2477
      %v2479 = vpop.f32.mrb[0].mxu0
      %v2480 = vadd.f32 0.0, %v2479
      %v2481 = vpop.f32.mrb[0].mxu0
      %v2482 = vadd.f32 0.0, %v2481
      %v2483 = vpop.f32.mrb[0].mxu0
      %v2484 = vadd.f32 0.0, %v2483
      %2485 = vmatprep.mubr.bf16.mxu0 %v1623
      %2486 = vmatmul.mubr.bf16.gmra.mrb[0].mxu0 %v1622
      %v2487 = vpop.f32.mrb[0].mxu0
      %v2488 = vadd.f32 0.0, %v2487
      %v2489 = vpop.f32.mrb[0].mxu0
      %v2490 = vadd.f32 0.0, %v2489
      %v2491 = vpop.f32.mrb[0].mxu0
      %v2492 = vadd.f32 0.0, %v2491
      %v2493 = vpop.f32.mrb[0].mxu0
      %v2494 = vadd.f32 0.0, %v2493
      %2495 = vdwg.mxu0
      %2496 = vmatprep.subr.bf16.mxu0 %v2152
      %2497 = vmatpush1.bf16.msra.mxu0 %v2151
      %2498 = vmatprep.subr.bf16.mxu0 %v2155
      %2499 = vmatpush1.bf16.msra.mxu0 %v2154
      %2500 = vmatprep.subr.bf16.mxu0 %v2158
      %2501 = vmatpush1.bf16.msra.mxu0 %v2157
      %2502 = vmatprep.subr.bf16.mxu0 %v2161
      %2503 = vmatpush1.bf16.msra.mxu0 %v2160
      %2504 = vmatprep.subr.bf16.mxu0 %v2164
      %2505 = vmatpush1.bf16.msra.mxu0 %v2163
      %2506 = vmatprep.subr.bf16.mxu0 %v2167
      %2507 = vmatpush1.bf16.msra.mxu0 %v2166
      %2508 = vmatprep.subr.bf16.mxu0 %v2170
      %2509 = vmatpush1.bf16.msra.mxu0 %v2169
      %2510 = vmatprep.subr.bf16.mxu0 %v2173
      %2511 = vmatpush1.bf16.msra.mxu0 %v2172
      %2512 = vmatprep.subr.bf16.mxu0 %v2176
      %2513 = vmatpush1.bf16.msra.mxu0 %v2175
      %2514 = vmatprep.subr.bf16.mxu0 %v2179
      %2515 = vmatpush1.bf16.msra.mxu0 %v2178
      %2516 = vmatprep.subr.bf16.mxu0 %v2182
      %2517 = vmatpush1.bf16.msra.mxu0 %v2181
      %2518 = vmatprep.subr.bf16.mxu0 %v2185
      %2519 = vmatpush1.bf16.msra.mxu0 %v2184
      %2520 = vmatprep.subr.bf16.mxu0 %v2188
      %2521 = vmatpush1.bf16.msra.mxu0 %v2187
      %2522 = vmatprep.subr.bf16.mxu0 %v2191
      %2523 = vmatpush1.bf16.msra.mxu0 %v2190
      %2524 = vmatprep.subr.bf16.mxu0 %v2194
      %2525 = vmatpush1.bf16.msra.mxu0 %v2193
      %2526 = vmatprep.subr.bf16.mxu0 %v2197
      %2527 = vmatpush1.bf16.msra.mxu0 %v2196
      %2528 = vmatprep.mubr.bf16.mxu0 %v1570
      %2529 = vmatmul.mubr.bf16.gmra.mrb[0].mxu0 %v1569
      %v2530 = vpop.f32.mrb[0].mxu0
      %v2531 = vadd.f32 %v2378, %v2530
      %v2532 = vpop.f32.mrb[0].mxu0
      %v2533 = vadd.f32 %v2380, %v2532
      %v2534 = vpop.f32.mrb[0].mxu0
      %v2535 = vadd.f32 %v2382, %v2534
      %v2536 = vpop.f32.mrb[0].mxu0
      %v2537 = vadd.f32 %v2384, %v2536
      %2538 = vmatprep.mubr.bf16.mxu0 %v1575
      %2539 = vmatmul.mubr.bf16.gmra.mrb[0].mxu0 %v1574
      %v2540 = vpop.f32.mrb[0].mxu0
      %v2541 = vadd.f32 %v2388, %v2540
      %v2542 = vpop.f32.mrb[0].mxu0
      %v2543 = vadd.f32 %v2390, %v2542
      %v2544 = vpop.f32.mrb[0].mxu0
      %v2545 = vadd.f32 %v2392, %v2544
      %v2546 = vpop.f32.mrb[0].mxu0
      %v2547 = vadd.f32 %v2394, %v2546
      %2548 = vmatprep.mubr.bf16.mxu0 %v1580
      %2549 = vmatmul.mubr.bf16.gmra.mrb[0].mxu0 %v1579
      %v2550 = vpop.f32.mrb[0].mxu0
      %v2551 = vadd.f32 %v2398, %v2550
      %v2552 = vpop.f32.mrb[0].mxu0
      %v2553 = vadd.f32 %v2400, %v2552
      %v2554 = vpop.f32.mrb[0].mxu0
      %v2555 = vadd.f32 %v2402, %v2554
      %v2556 = vpop.f32.mrb[0].mxu0
      %v2557 = vadd.f32 %v2404, %v2556
      %2558 = vmatprep.mubr.bf16.mxu0 %v1585
      %2559 = vmatmul.mubr.bf16.gmra.mrb[0].mxu0 %v1584
      %v2560 = vpop.f32.mrb[0].mxu0
      %v2561 = vadd.f32 %v2408, %v2560
      %v2562 = vpop.f32.mrb[0].mxu0
      %v2563 = vadd.f32 %v2410, %v2562
      %v2564 = vpop.f32.mrb[0].mxu0
      %v2565 = vadd.f32 %v2412, %v2564
      %v2566 = vpop.f32.mrb[0].mxu0
      %v2567 = vadd.f32 %v2414, %v2566
      %2568 = vmatprep.mubr.bf16.mxu0 %v1590
      %2569 = vmatmul.mubr.bf16.gmra.mrb[0].mxu0 %v1589
      %v2570 = vpop.f32.mrb[0].mxu0
      %v2571 = vadd.f32 %v2418, %v2570
      %v2572 = vpop.f32.mrb[0].mxu0
      %v2573 = vadd.f32 %v2420, %v2572
      %v2574 = vpop.f32.mrb[0].mxu0
      %v2575 = vadd.f32 %v2422, %v2574
      %v2576 = vpop.f32.mrb[0].mxu0
      %v2577 = vadd.f32 %v2424, %v2576
      %2578 = vmatprep.mubr.bf16.mxu0 %v1595
      %2579 = vmatmul.mubr.bf16.gmra.mrb[0].mxu0 %v1594
      %v2580 = vpop.f32.mrb[0].mxu0
      %v2581 = vadd.f32 %v2428, %v2580
      %v2582 = vpop.f32.mrb[0].mxu0
      %v2583 = vadd.f32 %v2430, %v2582
      %v2584 = vpop.f32.mrb[0].mxu0
      %v2585 = vadd.f32 %v2432, %v2584
      %v2586 = vpop.f32.mrb[0].mxu0
      %v2587 = vadd.f32 %v2434, %v2586
      %2588 = vmatprep.mubr.bf16.mxu0 %v1600
      %2589 = vmatmul.mubr.bf16.gmra.mrb[0].mxu0 %v1599
      %v2590 = vpop.f32.mrb[0].mxu0
      %v2591 = vadd.f32 %v2438, %v2590
      %v2592 = vpop.f32.mrb[0].mxu0
      %v2593 = vadd.f32 %v2440, %v2592
      %v2594 = vpop.f32.mrb[0].mxu0
      %v2595 = vadd.f32 %v2442, %v2594
      %v2596 = vpop.f32.mrb[0].mxu0
      %v2597 = vadd.f32 %v2444, %v2596
      %2598 = vmatprep.mubr.bf16.mxu0 %v1605
      %2599 = vmatmul.mubr.bf16.gmra.mrb[0].mxu0 %v1604
      %v2600 = vpop.f32.mrb[0].mxu0
      %v2601 = vadd.f32 %v2448, %v2600
      %v2602 = vpop.f32.mrb[0].mxu0
      %v2603 = vadd.f32 %v2450, %v2602
      %v2604 = vpop.f32.mrb[0].mxu0
      %v2605 = vadd.f32 %v2452, %v2604
      %v2606 = vpop.f32.mrb[0].mxu0
      %v2607 = vadd.f32 %v2454, %v2606
      %2608 = vmatprep.mubr.bf16.mxu0 %v1610
      %2609 = vmatmul.mubr.bf16.gmra.mrb[0].mxu0 %v1609
      %v2610 = vpop.f32.mrb[0].mxu0
      %v2611 = vadd.f32 %v2458, %v2610
      %v2612 = vpop.f32.mrb[0].mxu0
      %v2613 = vadd.f32 %v2460, %v2612
      %v2614 = vpop.f32.mrb[0].mxu0
      %v2615 = vadd.f32 %v2462, %v2614
      %v2616 = vpop.f32.mrb[0].mxu0
      %v2617 = vadd.f32 %v2464, %v2616
      %2618 = vmatprep.mubr.bf16.mxu0 %v1615
      %2619 = vmatmul.mubr.bf16.gmra.mrb[0].mxu0 %v1614
      %v2620 = vpop.f32.mrb[0].mxu0
      %v2621 = vadd.f32 %v2468, %v2620
      %v2622 = vpop.f32.mrb[0].mxu0
      %v2623 = vadd.f32 %v2470, %v2622
      %v2624 = vpop.f32.mrb[0].mxu0
      %v2625 = vadd.f32 %v2472, %v2624
      %v2626 = vpop.f32.mrb[0].mxu0
      %v2627 = vadd.f32 %v2474, %v2626
      %2628 = vmatprep.mubr.bf16.mxu0 %v1620
      %2629 = vmatmul.mubr.bf16.gmra.mrb[0].mxu0 %v1619
      %v2630 = vpop.f32.mrb[0].mxu0
      %v2631 = vadd.f32 %v2478, %v2630
      %v2632 = vpop.f32.mrb[0].mxu0
      %v2633 = vadd.f32 %v2480, %v2632
      %v2634 = vpop.f32.mrb[0].mxu0
      %v2635 = vadd.f32 %v2482, %v2634
      %v2636 = vpop.f32.mrb[0].mxu0
      %v2637 = vadd.f32 %v2484, %v2636
      %2638 = vmatprep.mubr.bf16.mxu0 %v1625
      %2639 = vmatmul.mubr.bf16.gmra.mrb[0].mxu0 %v1624
      %v2640 = vpop.f32.mrb[0].mxu0
      %v2641 = vadd.f32 %v2488, %v2640
      %v2642 = vpop.f32.mrb[0].mxu0
      %v2643 = vadd.f32 %v2490, %v2642
      %v2644 = vpop.f32.mrb[0].mxu0
      %v2645 = vadd.f32 %v2492, %v2644
      %v2646 = vpop.f32.mrb[0].mxu0
      %v2647 = vadd.f32 %v2494, %v2646
      %2648 = vdwg.mxu0
      %2649 = vmatprep.subr.bf16.mxu0 %v2200
      %2650 = vmatpush1.bf16.msra.mxu0 %v2199
      %2651 = vmatprep.subr.bf16.mxu0 %v2203
      %2652 = vmatpush1.bf16.msra.mxu0 %v2202
      %2653 = vmatprep.subr.bf16.mxu0 0
      %2654 = vmatpush1.bf16.msra.mxu0 0
      %2655 = vmatprep.subr.bf16.mxu0 0
      %2656 = vmatpush1.bf16.msra.mxu0 0
      %2657 = vmatprep.subr.bf16.mxu0 0
      %2658 = vmatpush1.bf16.msra.mxu0 0
      %2659 = vmatprep.subr.bf16.mxu0 0
      %2660 = vmatpush1.bf16.msra.mxu0 0
      %2661 = vmatprep.subr.bf16.mxu0 0
      %2662 = vmatpush1.bf16.msra.mxu0 0
      %2663 = vmatprep.subr.bf16.mxu0 0
      %2664 = vmatpush1.bf16.msra.mxu0 0
      %2665 = vmatprep.subr.bf16.mxu0 0
      %2666 = vmatpush1.bf16.msra.mxu0 0
      %2667 = vmatprep.subr.bf16.mxu0 0
      %2668 = vmatpush1.bf16.msra.mxu0 0
      %2669 = vmatprep.subr.bf16.mxu0 0
      %2670 = vmatpush1.bf16.msra.mxu0 0
      %2671 = vmatprep.subr.bf16.mxu0 0
      %2672 = vmatpush1.bf16.msra.mxu0 0
      %2673 = vmatprep.subr.bf16.mxu0 0
      %2674 = vmatpush1.bf16.msra.mxu0 0
      %2675 = vmatprep.subr.bf16.mxu0 0
      %2676 = vmatpush1.bf16.msra.mxu0 0
      %2677 = vmatprep.subr.bf16.mxu0 0
      %2678 = vmatpush1.bf16.msra.mxu0 0
      %2679 = vmatprep.subr.bf16.mxu0 0
      %2680 = vmatpush1.bf16.msra.mxu0 0
      %2681 = vmatprep.mubr.bf16.mxu0 0
      %2682 = vmatmul.mubr.bf16.gmra.mrb[0].mxu0 %v2308
      %v2683 = vpop.f32.mrb[0].mxu0
      %v2684 = vadd.f32 %v2531, %v2683
      %v2685 = vpop.f32.mrb[0].mxu0
      %v2686 = vadd.f32 %v2533, %v2685
      %v2687 = vpop.f32.mrb[0].mxu0
      %v2688 = vadd.f32 %v2535, %v2687
      %v2689 = vpop.f32.mrb[0].mxu0
      %v2690 = vadd.f32 %v2537, %v2689
      %2691 = vmatprep.mubr.bf16.mxu0 0
      %2692 = vmatmul.mubr.bf16.gmra.mrb[0].mxu0 %v2311
      %v2693 = vpop.f32.mrb[0].mxu0
      %v2694 = vadd.f32 %v2541, %v2693
      %v2695 = vpop.f32.mrb[0].mxu0
      %v2696 = vadd.f32 %v2543, %v2695
      %v2697 = vpop.f32.mrb[0].mxu0
      %v2698 = vadd.f32 %v2545, %v2697
      %v2699 = vpop.f32.mrb[0].mxu0
      %v2700 = vadd.f32 %v2547, %v2699
      %2701 = vmatprep.mubr.bf16.mxu0 0
      %2702 = vmatmul.mubr.bf16.gmra.mrb[0].mxu0 %v2314
      %v2703 = vpop.f32.mrb[0].mxu0
      %v2704 = vadd.f32 %v2551, %v2703
      %v2705 = vpop.f32.mrb[0].mxu0
      %v2706 = vadd.f32 %v2553, %v2705
      %v2707 = vpop.f32.mrb[0].mxu0
      %v2708 = vadd.f32 %v2555, %v2707
      %v2709 = vpop.f32.mrb[0].mxu0
      %v2710 = vadd.f32 %v2557, %v2709
      %2711 = vmatprep.mubr.bf16.mxu0 0
      %2712 = vmatmul.mubr.bf16.gmra.mrb[0].mxu0 %v2317
      %v2713 = vpop.f32.mrb[0].mxu0
      %v2714 = vadd.f32 %v2561, %v2713
      %v2715 = vpop.f32.mrb[0].mxu0
      %v2716 = vadd.f32 %v2563, %v2715
      %v2717 = vpop.f32.mrb[0].mxu0
      %v2718 = vadd.f32 %v2565, %v2717
      %v2719 = vpop.f32.mrb[0].mxu0
      %v2720 = vadd.f32 %v2567, %v2719
      %2721 = vmatprep.mubr.bf16.mxu0 0
      %2722 = vmatmul.mubr.bf16.gmra.mrb[0].mxu0 %v2320
      %v2723 = vpop.f32.mrb[0].mxu0
      %v2724 = vadd.f32 %v2571, %v2723
      %v2725 = vpop.f32.mrb[0].mxu0
      %v2726 = vadd.f32 %v2573, %v2725
      %v2727 = vpop.f32.mrb[0].mxu0
      %v2728 = vadd.f32 %v2575, %v2727
      %v2729 = vpop.f32.mrb[0].mxu0
      %v2730 = vadd.f32 %v2577, %v2729
      %2731 = vmatprep.mubr.bf16.mxu0 0
      %2732 = vmatmul.mubr.bf16.gmra.mrb[0].mxu0 %v2323
      %v2733 = vpop.f32.mrb[0].mxu0
      %v2734 = vadd.f32 %v2581, %v2733
      %v2735 = vpop.f32.mrb[0].mxu0
      %v2736 = vadd.f32 %v2583, %v2735
      %v2737 = vpop.f32.mrb[0].mxu0
      %v2738 = vadd.f32 %v2585, %v2737
      %v2739 = vpop.f32.mrb[0].mxu0
      %v2740 = vadd.f32 %v2587, %v2739
      %2741 = vmatprep.mubr.bf16.mxu0 0
      %2742 = vmatmul.mubr.bf16.gmra.mrb[0].mxu0 %v2326
      %v2743 = vpop.f32.mrb[0].mxu0
      %v2744 = vadd.f32 %v2591, %v2743
      %v2745 = vpop.f32.mrb[0].mxu0
      %v2746 = vadd.f32 %v2593, %v2745
      %v2747 = vpop.f32.mrb[0].mxu0
      %v2748 = vadd.f32 %v2595, %v2747
      %v2749 = vpop.f32.mrb[0].mxu0
      %v2750 = vadd.f32 %v2597, %v2749
      %2751 = vmatprep.mubr.bf16.mxu0 0
      %2752 = vmatmul.mubr.bf16.gmra.mrb[0].mxu0 %v2329
      %v2753 = vpop.f32.mrb[0].mxu0
      %v2754 = vadd.f32 %v2601, %v2753
      %v2755 = vpop.f32.mrb[0].mxu0
      %v2756 = vadd.f32 %v2603, %v2755
      %v2757 = vpop.f32.mrb[0].mxu0
      %v2758 = vadd.f32 %v2605, %v2757
      %v2759 = vpop.f32.mrb[0].mxu0
      %v2760 = vadd.f32 %v2607, %v2759
      %2761 = vmatprep.mubr.bf16.mxu0 0
      %2762 = vmatmul.mubr.bf16.gmra.mrb[0].mxu0 %v2332
      %v2763 = vpop.f32.mrb[0].mxu0
      %v2764 = vadd.f32 %v2611, %v2763
      %v2765 = vpop.f32.mrb[0].mxu0
      %v2766 = vadd.f32 %v2613, %v2765
      %v2767 = vpop.f32.mrb[0].mxu0
      %v2768 = vadd.f32 %v2615, %v2767
      %v2769 = vpop.f32.mrb[0].mxu0
      %v2770 = vadd.f32 %v2617, %v2769
      %2771 = vmatprep.mubr.bf16.mxu0 0
      %2772 = vmatmul.mubr.bf16.gmra.mrb[0].mxu0 %v2335
      %v2773 = vpop.f32.mrb[0].mxu0
      %v2774 = vadd.f32 %v2621, %v2773
      %v2775 = vpop.f32.mrb[0].mxu0
      %v2776 = vadd.f32 %v2623, %v2775
      %v2777 = vpop.f32.mrb[0].mxu0
      %v2778 = vadd.f32 %v2625, %v2777
      %v2779 = vpop.f32.mrb[0].mxu0
      %v2780 = vadd.f32 %v2627, %v2779
      %2781 = vmatprep.mubr.bf16.mxu0 0
      %2782 = vmatmul.mubr.bf16.gmra.mrb[0].mxu0 %v2338
      %v2783 = vpop.f32.mrb[0].mxu0
      %v2784 = vadd.f32 %v2631, %v2783
      %v2785 = vpop.f32.mrb[0].mxu0
      %v2786 = vadd.f32 %v2633, %v2785
      %v2787 = vpop.f32.mrb[0].mxu0
      %v2788 = vadd.f32 %v2635, %v2787
      %v2789 = vpop.f32.mrb[0].mxu0
      %v2790 = vadd.f32 %v2637, %v2789
      %2791 = vmatprep.mubr.bf16.mxu0 0
      %2792 = vmatmul.mubr.bf16.gmra.mrb[0].mxu0 %v2341
      %v2793 = vpop.f32.mrb[0].mxu0
      %v2794 = vadd.f32 %v2641, %v2793
      %v2795 = vpop.f32.mrb[0].mxu0
      %v2796 = vadd.f32 %v2643, %v2795
      %v2797 = vpop.f32.mrb[0].mxu0
      %v2798 = vadd.f32 %v2645, %v2797
      %v2799 = vpop.f32.mrb[0].mxu0
      %v2800 = vadd.f32 %v2647, %v2799
      %2801 = vdwg.mxu0
      %2802 = vmatprep.subr.bf16.mxu0 0
      %2803 = vmatpush1.bf16.msra.mxu0 %v2105
      %2804 = vmatprep.subr.bf16.mxu0 0
      %2805 = vmatpush1.bf16.msra.mxu0 %v2108
      %2806 = vmatprep.subr.bf16.mxu0 0
      %2807 = vmatpush1.bf16.msra.mxu0 %v2111
      %2808 = vmatprep.subr.bf16.mxu0 0
      %2809 = vmatpush1.bf16.msra.mxu0 %v2114
      %2810 = vmatprep.subr.bf16.mxu0 0
      %2811 = vmatpush1.bf16.msra.mxu0 %v2117
      %2812 = vmatprep.subr.bf16.mxu0 0
      %2813 = vmatpush1.bf16.msra.mxu0 %v2120
      %2814 = vmatprep.subr.bf16.mxu0 0
      %2815 = vmatpush1.bf16.msra.mxu0 %v2123
      %2816 = vmatprep.subr.bf16.mxu0 0
      %2817 = vmatpush1.bf16.msra.mxu0 %v2126
      %2818 = vmatprep.subr.bf16.mxu0 0
      %2819 = vmatpush1.bf16.msra.mxu0 %v2129
      %2820 = vmatprep.subr.bf16.mxu0 0
      %2821 = vmatpush1.bf16.msra.mxu0 %v2132
      %2822 = vmatprep.subr.bf16.mxu0 0
      %2823 = vmatpush1.bf16.msra.mxu0 %v2135
      %2824 = vmatprep.subr.bf16.mxu0 0
      %2825 = vmatpush1.bf16.msra.mxu0 %v2138
      %2826 = vmatprep.subr.bf16.mxu0 0
      %2827 = vmatpush1.bf16.msra.mxu0 %v2141
      %2828 = vmatprep.subr.bf16.mxu0 0
      %2829 = vmatpush1.bf16.msra.mxu0 %v2144
      %2830 = vmatprep.subr.bf16.mxu0 0
      %2831 = vmatpush1.bf16.msra.mxu0 %v2147
      %2832 = vmatprep.subr.bf16.mxu0 0
      %2833 = vmatpush1.bf16.msra.mxu0 %v2150
      %2834 = vmatprep.mubr.bf16.mxu0 %v1568
      %2835 = vmatmul.mubr.bf16.gmra.mrb[0].mxu0 %v1567
      %v2836 = vpop.f32.mrb[0].mxu0
      %v2837 = vadd.f32 0.0, %v2836
      %v2838 = vpop.f32.mrb[0].mxu0
      %v2839 = vpop.f32.mrb[0].mxu0
      %v2840 = vadd.f32 0.0, %v2839
      %v2841 = vpop.f32.mrb[0].mxu0
      %2842 = vmatprep.mubr.bf16.mxu0 %v1573
      %2843 = vmatmul.mubr.bf16.gmra.mrb[0].mxu0 %v1572
      %v2844 = vpop.f32.mrb[0].mxu0
      %v2845 = vadd.f32 0.0, %v2844
      %v2846 = vpop.f32.mrb[0].mxu0
      %v2847 = vpop.f32.mrb[0].mxu0
      %v2848 = vadd.f32 0.0, %v2847
      %v2849 = vpop.f32.mrb[0].mxu0
      %2850 = vmatprep.mubr.bf16.mxu0 %v1578
      %2851 = vmatmul.mubr.bf16.gmra.mrb[0].mxu0 %v1577
      %v2852 = vpop.f32.mrb[0].mxu0
      %v2853 = vadd.f32 0.0, %v2852
      %v2854 = vpop.f32.mrb[0].mxu0
      %v2855 = vpop.f32.mrb[0].mxu0
      %v2856 = vadd.f32 0.0, %v2855
      %v2857 = vpop.f32.mrb[0].mxu0
      %2858 = vmatprep.mubr.bf16.mxu0 %v1583
      %2859 = vmatmul.mubr.bf16.gmra.mrb[0].mxu0 %v1582
      %v2860 = vpop.f32.mrb[0].mxu0
      %v2861 = vadd.f32 0.0, %v2860
      %v2862 = vpop.f32.mrb[0].mxu0
      %v2863 = vpop.f32.mrb[0].mxu0
      %v2864 = vadd.f32 0.0, %v2863
      %v2865 = vpop.f32.mrb[0].mxu0
      %2866 = vmatprep.mubr.bf16.mxu0 %v1588
      %2867 = vmatmul.mubr.bf16.gmra.mrb[0].mxu0 %v1587
      %v2868 = vpop.f32.mrb[0].mxu0
      %v2869 = vadd.f32 0.0, %v2868
      %v2870 = vpop.f32.mrb[0].mxu0
      %v2871 = vpop.f32.mrb[0].mxu0
      %v2872 = vadd.f32 0.0, %v2871
      %v2873 = vpop.f32.mrb[0].mxu0
      %2874 = vmatprep.mubr.bf16.mxu0 %v1593
      %2875 = vmatmul.mubr.bf16.gmra.mrb[0].mxu0 %v1592
      %v2876 = vpop.f32.mrb[0].mxu0
      %v2877 = vadd.f32 0.0, %v2876
      %v2878 = vpop.f32.mrb[0].mxu0
      %v2879 = vpop.f32.mrb[0].mxu0
      %v2880 = vadd.f32 0.0, %v2879
      %v2881 = vpop.f32.mrb[0].mxu0
      %2882 = vmatprep.mubr.bf16.mxu0 %v1598
      %2883 = vmatmul.mubr.bf16.gmra.mrb[0].mxu0 %v1597
      %v2884 = vpop.f32.mrb[0].mxu0
      %v2885 = vadd.f32 0.0, %v2884
      %v2886 = vpop.f32.mrb[0].mxu0
      %v2887 = vpop.f32.mrb[0].mxu0
      %v2888 = vadd.f32 0.0, %v2887
      %v2889 = vpop.f32.mrb[0].mxu0
      %2890 = vmatprep.mubr.bf16.mxu0 %v1603
      %2891 = vmatmul.mubr.bf16.gmra.mrb[0].mxu0 %v1602
      %v2892 = vpop.f32.mrb[0].mxu0
      %v2893 = vadd.f32 0.0, %v2892
      %v2894 = vpop.f32.mrb[0].mxu0
      %v2895 = vpop.f32.mrb[0].mxu0
      %v2896 = vadd.f32 0.0, %v2895
      %v2897 = vpop.f32.mrb[0].mxu0
      %2898 = vmatprep.mubr.bf16.mxu0 %v1608
      %2899 = vmatmul.mubr.bf16.gmra.mrb[0].mxu0 %v1607
      %v2900 = vpop.f32.mrb[0].mxu0
      %v2901 = vadd.f32 0.0, %v2900
      %v2902 = vpop.f32.mrb[0].mxu0
      %v2903 = vpop.f32.mrb[0].mxu0
      %v2904 = vadd.f32 0.0, %v2903
      %v2905 = vpop.f32.mrb[0].mxu0
      %2906 = vmatprep.mubr.bf16.mxu0 %v1613
      %2907 = vmatmul.mubr.bf16.gmra.mrb[0].mxu0 %v1612
      %v2908 = vpop.f32.mrb[0].mxu0
      %v2909 = vadd.f32 0.0, %v2908
      %v2910 = vpop.f32.mrb[0].mxu0
      %v2911 = vpop.f32.mrb[0].mxu0
      %v2912 = vadd.f32 0.0, %v2911
      %v2913 = vpop.f32.mrb[0].mxu0
      %2914 = vmatprep.mubr.bf16.mxu0 %v1618
      %2915 = vmatmul.mubr.bf16.gmra.mrb[0].mxu0 %v1617
      %v2916 = vpop.f32.mrb[0].mxu0
      %v2917 = vadd.f32 0.0, %v2916
      %v2918 = vpop.f32.mrb[0].mxu0
      %v2919 = vpop.f32.mrb[0].mxu0
      %v2920 = vadd.f32 0.0, %v2919
      %v2921 = vpop.f32.mrb[0].mxu0
      %2922 = vmatprep.mubr.bf16.mxu0 %v1623
      %2923 = vmatmul.mubr.bf16.gmra.mrb[0].mxu0 %v1622
      %v2924 = vpop.f32.mrb[0].mxu0
      %v2925 = vadd.f32 0.0, %v2924
      %v2926 = vpop.f32.mrb[0].mxu0
      %v2927 = vpop.f32.mrb[0].mxu0
      %v2928 = vadd.f32 0.0, %v2927
      %v2929 = vpop.f32.mrb[0].mxu0
      %2930 = vdwg.mxu0
      %2931 = vmatprep.subr.bf16.mxu0 0
      %2932 = vmatpush1.bf16.msra.mxu0 %v2153
      %2933 = vmatprep.subr.bf16.mxu0 0
      %2934 = vmatpush1.bf16.msra.mxu0 %v2156
      %2935 = vmatprep.subr.bf16.mxu0 0
      %2936 = vmatpush1.bf16.msra.mxu0 %v2159
      %2937 = vmatprep.subr.bf16.mxu0 0
      %2938 = vmatpush1.bf16.msra.mxu0 %v2162
      %2939 = vmatprep.subr.bf16.mxu0 0
      %2940 = vmatpush1.bf16.msra.mxu0 %v2165
      %2941 = vmatprep.subr.bf16.mxu0 0
      %2942 = vmatpush1.bf16.msra.mxu0 %v2168
      %2943 = vmatprep.subr.bf16.mxu0 0
      %2944 = vmatpush1.bf16.msra.mxu0 %v2171
      %2945 = vmatprep.subr.bf16.mxu0 0
      %2946 = vmatpush1.bf16.msra.mxu0 %v2174
      %2947 = vmatprep.subr.bf16.mxu0 0
      %2948 = vmatpush1.bf16.msra.mxu0 %v2177
      %2949 = vmatprep.subr.bf16.mxu0 0
      %2950 = vmatpush1.bf16.msra.mxu0 %v2180
      %2951 = vmatprep.subr.bf16.mxu0 0
      %2952 = vmatpush1.bf16.msra.mxu0 %v2183
      %2953 = vmatprep.subr.bf16.mxu0 0
      %2954 = vmatpush1.bf16.msra.mxu0 %v2186
      %2955 = vmatprep.subr.bf16.mxu0 0
      %2956 = vmatpush1.bf16.msra.mxu0 %v2189
      %2957 = vmatprep.subr.bf16.mxu0 0
      %2958 = vmatpush1.bf16.msra.mxu0 %v2192
      %2959 = vmatprep.subr.bf16.mxu0 0
      %2960 = vmatpush1.bf16.msra.mxu0 %v2195
      %2961 = vmatprep.subr.bf16.mxu0 0
      %2962 = vmatpush1.bf16.msra.mxu0 %v2198
      %2963 = vmatprep.mubr.bf16.mxu0 %v1570
      %2964 = vmatmul.mubr.bf16.gmra.mrb[0].mxu0 %v1569
      %v2965 = vpop.f32.mrb[0].mxu0
      %v2966 = vadd.f32 %v2837, %v2965
      %v2967 = vpop.f32.mrb[0].mxu0
      %v2968 = vpop.f32.mrb[0].mxu0
      %v2969 = vadd.f32 %v2840, %v2968
      %v2970 = vpop.f32.mrb[0].mxu0
      %2971 = vmatprep.mubr.bf16.mxu0 %v1575
      %2972 = vmatmul.mubr.bf16.gmra.mrb[0].mxu0 %v1574
      %v2973 = vpop.f32.mrb[0].mxu0
      %v2974 = vadd.f32 %v2845, %v2973
      %v2975 = vpop.f32.mrb[0].mxu0
      %v2976 = vpop.f32.mrb[0].mxu0
      %v2977 = vadd.f32 %v2848, %v2976
      %v2978 = vpop.f32.mrb[0].mxu0
      %2979 = vmatprep.mubr.bf16.mxu0 %v1580
      %2980 = vmatmul.mubr.bf16.gmra.mrb[0].mxu0 %v1579
      %v2981 = vpop.f32.mrb[0].mxu0
      %v2982 = vadd.f32 %v2853, %v2981
      %v2983 = vpop.f32.mrb[0].mxu0
      %v2984 = vpop.f32.mrb[0].mxu0
      %v2985 = vadd.f32 %v2856, %v2984
      %v2986 = vpop.f32.mrb[0].mxu0
      %2987 = vmatprep.mubr.bf16.mxu0 %v1585
      %2988 = vmatmul.mubr.bf16.gmra.mrb[0].mxu0 %v1584
      %v2989 = vpop.f32.mrb[0].mxu0
      %v2990 = vadd.f32 %v2861, %v2989
      %v2991 = vpop.f32.mrb[0].mxu0
      %v2992 = vpop.f32.mrb[0].mxu0
      %v2993 = vadd.f32 %v2864, %v2992
      %v2994 = vpop.f32.mrb[0].mxu0
      %2995 = vmatprep.mubr.bf16.mxu0 %v1590
      %2996 = vmatmul.mubr.bf16.gmra.mrb[0].mxu0 %v1589
      %v2997 = vpop.f32.mrb[0].mxu0
      %v2998 = vadd.f32 %v2869, %v2997
      %v2999 = vpop.f32.mrb[0].mxu0
      %v3000 = vpop.f32.mrb[0].mxu0
      %v3001 = vadd.f32 %v2872, %v3000
      %v3002 = vpop.f32.mrb[0].mxu0
      %3003 = vmatprep.mubr.bf16.mxu0 %v1595
      %3004 = vmatmul.mubr.bf16.gmra.mrb[0].mxu0 %v1594
      %v3005 = vpop.f32.mrb[0].mxu0
      %v3006 = vadd.f32 %v2877, %v3005
      %v3007 = vpop.f32.mrb[0].mxu0
      %v3008 = vpop.f32.mrb[0].mxu0
      %v3009 = vadd.f32 %v2880, %v3008
      %v3010 = vpop.f32.mrb[0].mxu0
      %3011 = vmatprep.mubr.bf16.mxu0 %v1600
      %3012 = vmatmul.mubr.bf16.gmra.mrb[0].mxu0 %v1599
      %v3013 = vpop.f32.mrb[0].mxu0
      %v3014 = vadd.f32 %v2885, %v3013
      %v3015 = vpop.f32.mrb[0].mxu0
      %v3016 = vpop.f32.mrb[0].mxu0
      %v3017 = vadd.f32 %v2888, %v3016
      %v3018 = vpop.f32.mrb[0].mxu0
      %3019 = vmatprep.mubr.bf16.mxu0 %v1605
      %3020 = vmatmul.mubr.bf16.gmra.mrb[0].mxu0 %v1604
      %v3021 = vpop.f32.mrb[0].mxu0
      %v3022 = vadd.f32 %v2893, %v3021
      %v3023 = vpop.f32.mrb[0].mxu0
      %v3024 = vpop.f32.mrb[0].mxu0
      %v3025 = vadd.f32 %v2896, %v3024
      %v3026 = vpop.f32.mrb[0].mxu0
      %3027 = vmatprep.mubr.bf16.mxu0 %v1610
      %3028 = vmatmul.mubr.bf16.gmra.mrb[0].mxu0 %v1609
      %v3029 = vpop.f32.mrb[0].mxu0
      %v3030 = vadd.f32 %v2901, %v3029
      %v3031 = vpop.f32.mrb[0].mxu0
      %v3032 = vpop.f32.mrb[0].mxu0
      %v3033 = vadd.f32 %v2904, %v3032
      %v3034 = vpop.f32.mrb[0].mxu0
      %3035 = vmatprep.mubr.bf16.mxu0 %v1615
      %3036 = vmatmul.mubr.bf16.gmra.mrb[0].mxu0 %v1614
      %v3037 = vpop.f32.mrb[0].mxu0
      %v3038 = vadd.f32 %v2909, %v3037
      %v3039 = vpop.f32.mrb[0].mxu0
      %v3040 = vpop.f32.mrb[0].mxu0
      %v3041 = vadd.f32 %v2912, %v3040
      %v3042 = vpop.f32.mrb[0].mxu0
      %3043 = vmatprep.mubr.bf16.mxu0 %v1620
      %3044 = vmatmul.mubr.bf16.gmra.mrb[0].mxu0 %v1619
      %v3045 = vpop.f32.mrb[0].mxu0
      %v3046 = vadd.f32 %v2917, %v3045
      %v3047 = vpop.f32.mrb[0].mxu0
      %v3048 = vpop.f32.mrb[0].mxu0
      %v3049 = vadd.f32 %v2920, %v3048
      %v3050 = vpop.f32.mrb[0].mxu0
      %3051 = vmatprep.mubr.bf16.mxu0 %v1625
      %3052 = vmatmul.mubr.bf16.gmra.mrb[0].mxu0 %v1624
      %v3053 = vpop.f32.mrb[0].mxu0
      %v3054 = vadd.f32 %v2925, %v3053
      %v3055 = vpop.f32.mrb[0].mxu0
      %v3056 = vpop.f32.mrb[0].mxu0
      %v3057 = vadd.f32 %v2928, %v3056
      %v3058 = vpop.f32.mrb[0].mxu0
      %3059 = vdwg.mxu0
      %3060 = vmatprep.subr.bf16.mxu0 0
      %3061 = vmatpush1.bf16.msra.mxu0 %v2201
      %3062 = vmatprep.subr.bf16.mxu0 0
      %3063 = vmatpush1.bf16.msra.mxu0 %v2204
      %3064 = vmatprep.subr.bf16.mxu0 0
      %3065 = vmatpush1.bf16.msra.mxu0 0
      %3066 = vmatprep.subr.bf16.mxu0 0
      %3067 = vmatpush1.bf16.msra.mxu0 0
      %3068 = vmatprep.subr.bf16.mxu0 0
      %3069 = vmatpush1.bf16.msra.mxu0 0
      %3070 = vmatprep.subr.bf16.mxu0 0
      %3071 = vmatpush1.bf16.msra.mxu0 0
      %3072 = vmatprep.subr.bf16.mxu0 0
      %3073 = vmatpush1.bf16.msra.mxu0 0
      %3074 = vmatprep.subr.bf16.mxu0 0
      %3075 = vmatpush1.bf16.msra.mxu0 0
      %3076 = vmatprep.subr.bf16.mxu0 0
      %3077 = vmatpush1.bf16.msra.mxu0 0
      %3078 = vmatprep.subr.bf16.mxu0 0
      %3079 = vmatpush1.bf16.msra.mxu0 0
      %3080 = vmatprep.subr.bf16.mxu0 0
      %3081 = vmatpush1.bf16.msra.mxu0 0
      %3082 = vmatprep.subr.bf16.mxu0 0
      %3083 = vmatpush1.bf16.msra.mxu0 0
      %3084 = vmatprep.subr.bf16.mxu0 0
      %3085 = vmatpush1.bf16.msra.mxu0 0
      %3086 = vmatprep.subr.bf16.mxu0 0
      %3087 = vmatpush1.bf16.msra.mxu0 0
      %3088 = vmatprep.subr.bf16.mxu0 0
      %3089 = vmatpush1.bf16.msra.mxu0 0
      %3090 = vmatprep.subr.bf16.mxu0 0
      %3091 = vmatpush1.bf16.msra.mxu0 0
      %3092 = vmatprep.mubr.bf16.mxu0 0
      %3093 = vmatmul.mubr.bf16.gmra.mrb[0].mxu0 %v2308
      %v3094 = vpop.f32.mrb[0].mxu0
      %v3095 = vadd.f32 %v2966, %v3094
      %v3096 = vpop.f32.mrb[0].mxu0
      %v3097 = vpop.f32.mrb[0].mxu0
      %v3098 = vadd.f32 %v2969, %v3097
      %v3099 = vpop.f32.mrb[0].mxu0
      %3100 = vmatprep.mubr.bf16.mxu0 0
      %3101 = vmatmul.mubr.bf16.gmra.mrb[0].mxu0 %v2311
      %v3102 = vpop.f32.mrb[0].mxu0
      %v3103 = vadd.f32 %v2974, %v3102
      %v3104 = vpop.f32.mrb[0].mxu0
      %v3105 = vpop.f32.mrb[0].mxu0
      %v3106 = vadd.f32 %v2977, %v3105
      %v3107 = vpop.f32.mrb[0].mxu0
      %3108 = vmatprep.mubr.bf16.mxu0 0
      %3109 = vmatmul.mubr.bf16.gmra.mrb[0].mxu0 %v2314
      %v3110 = vpop.f32.mrb[0].mxu0
      %v3111 = vadd.f32 %v2982, %v3110
      %v3112 = vpop.f32.mrb[0].mxu0
      %v3113 = vpop.f32.mrb[0].mxu0
      %v3114 = vadd.f32 %v2985, %v3113
      %v3115 = vpop.f32.mrb[0].mxu0
      %3116 = vmatprep.mubr.bf16.mxu0 0
      %3117 = vmatmul.mubr.bf16.gmra.mrb[0].mxu0 %v2317
      %v3118 = vpop.f32.mrb[0].mxu0
      %v3119 = vadd.f32 %v2990, %v3118
      %v3120 = vpop.f32.mrb[0].mxu0
      %v3121 = vpop.f32.mrb[0].mxu0
      %v3122 = vadd.f32 %v2993, %v3121
      %v3123 = vpop.f32.mrb[0].mxu0
      %3124 = vmatprep.mubr.bf16.mxu0 0
      %3125 = vmatmul.mubr.bf16.gmra.mrb[0].mxu0 %v2320
      %v3126 = vpop.f32.mrb[0].mxu0
      %v3127 = vadd.f32 %v2998, %v3126
      %v3128 = vpop.f32.mrb[0].mxu0
      %v3129 = vpop.f32.mrb[0].mxu0
      %v3130 = vadd.f32 %v3001, %v3129
      %v3131 = vpop.f32.mrb[0].mxu0
      %3132 = vmatprep.mubr.bf16.mxu0 0
      %3133 = vmatmul.mubr.bf16.gmra.mrb[0].mxu0 %v2323
      %v3134 = vpop.f32.mrb[0].mxu0
      %v3135 = vadd.f32 %v3006, %v3134
      %v3136 = vpop.f32.mrb[0].mxu0
      %v3137 = vpop.f32.mrb[0].mxu0
      %v3138 = vadd.f32 %v3009, %v3137
      %v3139 = vpop.f32.mrb[0].mxu0
      %3140 = vmatprep.mubr.bf16.mxu0 0
      %3141 = vmatmul.mubr.bf16.gmra.mrb[0].mxu0 %v2326
      %v3142 = vpop.f32.mrb[0].mxu0
      %v3143 = vadd.f32 %v3014, %v3142
      %v3144 = vpop.f32.mrb[0].mxu0
      %v3145 = vpop.f32.mrb[0].mxu0
      %v3146 = vadd.f32 %v3017, %v3145
      %v3147 = vpop.f32.mrb[0].mxu0
      %3148 = vmatprep.mubr.bf16.mxu0 0
      %3149 = vmatmul.mubr.bf16.gmra.mrb[0].mxu0 %v2329
      %v3150 = vpop.f32.mrb[0].mxu0
      %v3151 = vadd.f32 %v3022, %v3150
      %v3152 = vpop.f32.mrb[0].mxu0
      %v3153 = vpop.f32.mrb[0].mxu0
      %v3154 = vadd.f32 %v3025, %v3153
      %v3155 = vpop.f32.mrb[0].mxu0
      %3156 = vmatprep.mubr.bf16.mxu0 0
      %3157 = vmatmul.mubr.bf16.gmra.mrb[0].mxu0 %v2332
      %v3158 = vpop.f32.mrb[0].mxu0
      %v3159 = vadd.f32 %v3030, %v3158
      %v3160 = vpop.f32.mrb[0].mxu0
      %v3161 = vpop.f32.mrb[0].mxu0
      %v3162 = vadd.f32 %v3033, %v3161
      %v3163 = vpop.f32.mrb[0].mxu0
      %3164 = vmatprep.mubr.bf16.mxu0 0
      %3165 = vmatmul.mubr.bf16.gmra.mrb[0].mxu0 %v2335
      %v3166 = vpop.f32.mrb[0].mxu0
      %v3167 = vadd.f32 %v3038, %v3166
      %v3168 = vpop.f32.mrb[0].mxu0
      %v3169 = vpop.f32.mrb[0].mxu0
      %v3170 = vadd.f32 %v3041, %v3169
      %v3171 = vpop.f32.mrb[0].mxu0
      %3172 = vmatprep.mubr.bf16.mxu0 0
      %3173 = vmatmul.mubr.bf16.gmra.mrb[0].mxu0 %v2338
      %v3174 = vpop.f32.mrb[0].mxu0
      %v3175 = vadd.f32 %v3046, %v3174
      %v3176 = vpop.f32.mrb[0].mxu0
      %v3177 = vpop.f32.mrb[0].mxu0
      %v3178 = vadd.f32 %v3049, %v3177
      %v3179 = vpop.f32.mrb[0].mxu0
      %3180 = vmatprep.mubr.bf16.mxu0 0
      %3181 = vmatmul.mubr.bf16.gmra.mrb[0].mxu0 %v2341
      %v3182 = vpop.f32.mrb[0].mxu0
      %v3183 = vadd.f32 %v3054, %v3182
      %v3184 = vpop.f32.mrb[0].mxu0
      %v3185 = vpop.f32.mrb[0].mxu0
      %v3186 = vadd.f32 %v3057, %v3185
      %v3187 = vpop.f32.mrb[0].mxu0
      %3188 = vdwg.mxu0
      %3189 = vst [vmem:[#allocation3 + $0x18] sm:$0xff] %v2684
      %3190 = vst [vmem:[#allocation3 + $0x20] sm:$0xff] %v2686
      %3191 = vst [vmem:[#allocation3 + $0x28] sm:$0xff] %v3095
      %3192 = vst [vmem:[#allocation3 + $0x30] sm:$0xff] %v2688
      %3193 = vst [vmem:[#allocation3 + $0x38] sm:$0xff] %v2690
      %3194 = vst [vmem:[#allocation3 + $0x40] sm:$0xff] %v3098
      %3195 = vst [vmem:[#allocation3 + $0x48] sm:$0xff] %v2694
      %3196 = vst [vmem:[#allocation3 + $0x50] sm:$0xff] %v2696
      %3197 = vst [vmem:[#allocation3 + $0x58] sm:$0xff] %v3103
      %3198 = vst [vmem:[#allocation3 + $0x60] sm:$0xff] %v2698
      %3199 = vst [vmem:[#allocation3 + $0x68] sm:$0xff] %v2700
      %3200 = vst [vmem:[#allocation3 + $0x70] sm:$0xff] %v3106
      %3201 = vst [vmem:[#allocation3 + $0x78] sm:$0xff] %v2704
      %3202 = vst [vmem:[#allocation3 + $0x80] sm:$0xff] %v2706
      %3203 = vst [vmem:[#allocation3 + $0x88] sm:$0xff] %v3111
      %3204 = vst [vmem:[#allocation3 + $0x90] sm:$0xff] %v2708
      %3205 = vst [vmem:[#allocation3 + $0x98] sm:$0xff] %v2710
      %3206 = vst [vmem:[#allocation3 + $0xa0] sm:$0xff] %v3114
      %3207 = vst [vmem:[#allocation3 + $0xa8] sm:$0xff] %v2714
      %3208 = vst [vmem:[#allocation3 + $0xb0] sm:$0xff] %v2716
      %3209 = vst [vmem:[#allocation3 + $0xb8] sm:$0xff] %v3119
      %3210 = vst [vmem:[#allocation3 + $0xc0] sm:$0xff] %v2718
      %3211 = vst [vmem:[#allocation3 + $0xc8] sm:$0xff] %v2720
      %3212 = vst [vmem:[#allocation3 + $0xd0] sm:$0xff] %v3122
      %3213 = vst [vmem:[#allocation3 + $0xd8] sm:$0xff] %v2724
      %3214 = vst [vmem:[#allocation3 + $0xe0] sm:$0xff] %v2726
      %3215 = vst [vmem:[#allocation3 + $0xe8] sm:$0xff] %v3127
      %3216 = vst [vmem:[#allocation3 + $0xf0] sm:$0xff] %v2728
      %3217 = vst [vmem:[#allocation3 + $0xf8] sm:$0xff] %v2730
      %3218 = vst [vmem:[#allocation3 + $0x100] sm:$0xff] %v3130
      %3219 = vst [vmem:[#allocation3 + $0x108] sm:$0xff] %v2734
      %3220 = vst [vmem:[#allocation3 + $0x110] sm:$0xff] %v2736
      %3221 = vst [vmem:[#allocation3 + $0x118] sm:$0xff] %v3135
      %3222 = vst [vmem:[#allocation3 + $0x120] sm:$0xff] %v2738
      %3223 = vst [vmem:[#allocation3 + $0x128] sm:$0xff] %v2740
      %3224 = vst [vmem:[#allocation3 + $0x130] sm:$0xff] %v3138
      %3225 = vst [vmem:[#allocation3 + $0x138] sm:$0xff] %v2744
      %3226 = vst [vmem:[#allocation3 + $0x140] sm:$0xff] %v2746
      %3227 = vst [vmem:[#allocation3 + $0x148] sm:$0xff] %v3143
      %3228 = vst [vmem:[#allocation3 + $0x150] sm:$0xff] %v2748
      %3229 = vst [vmem:[#allocation3 + $0x158] sm:$0xff] %v2750
      %3230 = vst [vmem:[#allocation3 + $0x160] sm:$0xff] %v3146
      %3231 = vst [vmem:[#allocation3 + $0x168] sm:$0xff] %v2754
      %3232 = vst [vmem:[#allocation3 + $0x170] sm:$0xff] %v2756
      %3233 = vst [vmem:[#allocation3 + $0x178] sm:$0xff] %v3151
      %3234 = vst [vmem:[#allocation3 + $0x180] sm:$0xff] %v2758
      %3235 = vst [vmem:[#allocation3 + $0x188] sm:$0xff] %v2760
      %3236 = vst [vmem:[#allocation3 + $0x190] sm:$0xff] %v3154
      %3237 = vst [vmem:[#allocation3 + $0x198] sm:$0xff] %v2764
      %3238 = vst [vmem:[#allocation3 + $0x1a0] sm:$0xff] %v2766
      %3239 = vst [vmem:[#allocation3 + $0x1a8] sm:$0xff] %v3159
      %3240 = vst [vmem:[#allocation3 + $0x1b0] sm:$0xff] %v2768
      %3241 = vst [vmem:[#allocation3 + $0x1b8] sm:$0xff] %v2770
      %3242 = vst [vmem:[#allocation3 + $0x1c0] sm:$0xff] %v3162
      %3243 = vst [vmem:[#allocation3 + $0x1c8] sm:$0xff] %v2774
      %3244 = vst [vmem:[#allocation3 + $0x1d0] sm:$0xff] %v2776
      %3245 = vst [vmem:[#allocation3 + $0x1d8] sm:$0xff] %v3167
      %3246 = vst [vmem:[#allocation3 + $0x1e0] sm:$0xff] %v2778
      %3247 = vst [vmem:[#allocation3 + $0x1e8] sm:$0xff] %v2780
      %3248 = vst [vmem:[#allocation3 + $0x1f0] sm:$0xff] %v3170
      %3249 = vst [vmem:[#allocation3 + $0x1f8] sm:$0xff] %v2784
      %3250 = vst [vmem:[#allocation3 + $0x200] sm:$0xff] %v2786
      %3251 = vst [vmem:[#allocation3 + $0x208] sm:$0xff] %v3175
      %3252 = vst [vmem:[#allocation3 + $0x210] sm:$0xff] %v2788
      %3253 = vst [vmem:[#allocation3 + $0x218] sm:$0xff] %v2790
      %3254 = vst [vmem:[#allocation3 + $0x220] sm:$0xff] %v3178
      %3255 = vst [vmem:[#allocation3 + $0x228] sm:$0xff] %v2794
      %3256 = vst [vmem:[#allocation3 + $0x230] sm:$0xff] %v2796
      %3257 = vst [vmem:[#allocation3 + $0x238] sm:$0xff] %v3183
      %3258 = vst [vmem:[#allocation3 + $0x240] sm:$0xff] %v2798
      %3259 = vst [vmem:[#allocation3 + $0x248] sm:$0xff] %v2800
      %3260 = vst [vmem:[#allocation3 + $0x250] sm:$0xff] %v3186
      %v3261 = vld [vmem:[#allocation2 + $0x28] sm:$0xff]
      %v3262 = vld [vmem:[#allocation2 + $0x30] sm:$0xff]
      %v3263 = vld [vmem:[#allocation2 + $0x38] sm:$0xff]
      %v3264 = vld [vmem:[#allocation2 + $0x40] sm:$0xff]
      %v3265 = vld [vmem:[#allocation2 + $0x48] sm:$0xff]
      %v3266 = vld [vmem:[#allocation2 + $0x50] sm:$0xff]
      %v3267 = vld [vmem:[#allocation2 + $0x58] sm:$0xff]
      %v3268 = vld [vmem:[#allocation2 + $0x60] sm:$0xff]
      %v3269 = vld [vmem:[#allocation2 + $0x68] sm:$0xff]
      %v3270 = vld [vmem:[#allocation2 + $0x70] sm:$0xff]
      %v3271 = vld [vmem:[#allocation2 + $0x78] sm:$0xff]
      %v3272 = vld [vmem:[#allocation2 + $0x80] sm:$0xff]
      %v3273 = vld [vmem:[#allocation2 + $0x88] sm:$0xff]
      %v3274 = vld [vmem:[#allocation2 + $0x90] sm:$0xff]
      %v3275 = vld [vmem:[#allocation2 + $0x98] sm:$0xff]
      %v3276 = vld [vmem:[#allocation2 + $0xa0] sm:$0xff]
      %v3277 = vld [vmem:[#allocation2 + $0xa8] sm:$0xff]
      %v3278 = vld [vmem:[#allocation2 + $0xb0] sm:$0xff]
      %v3279 = vld [vmem:[#allocation2 + $0xb8] sm:$0xff]
      %v3280 = vld [vmem:[#allocation2 + $0xc0] sm:$0xff]
      %v3281 = vld [vmem:[#allocation2 + $0xc8] sm:$0xff]
      %v3282 = vld [vmem:[#allocation2 + $0xd0] sm:$0xff]
      %v3283 = vld [vmem:[#allocation2 + $0xd8] sm:$0xff]
      %v3284 = vld [vmem:[#allocation2 + $0xe0] sm:$0xff]
      %v3285 = vld [vmem:[#allocation2 + $0xe8] sm:$0xff]
      %v3286 = vld [vmem:[#allocation2 + $0xf0] sm:$0xff]
      %v3287 = vld [vmem:[#allocation2 + $0xf8] sm:$0xff]
      %v3288 = vld [vmem:[#allocation2 + $0x100] sm:$0xff]
      %v3289 = vld [vmem:[#allocation2 + $0x108] sm:$0xff]
      %v3290 = vld [vmem:[#allocation2 + $0x110] sm:$0xff]
      %v3291 = vld [vmem:[#allocation2 + $0x118] sm:$0xff]
      %v3292 = vld [vmem:[#allocation2 + $0x120] sm:$0xff]
      %v3293 = vld [vmem:[#allocation2 + $0x128] sm:$0xff]
      %v3294 = vld [vmem:[#allocation2 + $0x130] sm:$0xff]
      %v3295 = vld [vmem:[#allocation2 + $0x138] sm:$0xff]
      %v3296 = vld [vmem:[#allocation2 + $0x140] sm:$0xff]
      %v3297 = vld [vmem:[#allocation2 + $0x148] sm:$0xff]
      %v3298 = vld [vmem:[#allocation2 + $0x150] sm:$0xff]
      %v3299 = vld [vmem:[#allocation2 + $0x158] sm:$0xff]
      %v3300 = vld [vmem:[#allocation2 + $0x160] sm:$0xff]
      %v3301 = vld [vmem:[#allocation2 + $0x168] sm:$0xff]
      %v3302 = vld [vmem:[#allocation2 + $0x170] sm:$0xff]
      %v3303 = vld [vmem:[#allocation2 + $0x178] sm:$0xff]
      %v3304 = vld [vmem:[#allocation2 + $0x180] sm:$0xff]
      %v3305 = vld [vmem:[#allocation2 + $0x188] sm:$0xff]
      %v3306 = vld [vmem:[#allocation2 + $0x190] sm:$0xff]
      %v3307 = vld [vmem:[#allocation2 + $0x198] sm:$0xff]
      %v3308 = vld [vmem:[#allocation2 + $0x1a0] sm:$0xff]
      %v3309 = vld [vmem:[#allocation2 + $0x1a8] sm:$0xff]
      %v3310 = vld [vmem:[#allocation2 + $0x1b0] sm:$0xff]
      %v3311 = vld [vmem:[#allocation2 + $0x1b8] sm:$0xff]
      %v3312 = vld [vmem:[#allocation2 + $0x1c0] sm:$0xff]
      %v3313 = vld [vmem:[#allocation2 + $0x1c8] sm:$0xff]
      %v3314 = vld [vmem:[#allocation2 + $0x1d0] sm:$0xff]
      %v3315 = vld [vmem:[#allocation2 + $0x1d8] sm:$0xff]
      %v3316 = vld [vmem:[#allocation2 + $0x1e0] sm:$0xff]
      %v3317 = vld [vmem:[#allocation2 + $0x1e8] sm:$0xff]
      %v3318 = vld [vmem:[#allocation2 + $0x1f0] sm:$0xff]
      %v3319 = vld [vmem:[#allocation2 + $0x1f8] sm:$0xff]
      %v3320 = vld [vmem:[#allocation2 + $0x200] sm:$0xff]
      %s3321 = scalar_lea.vmem %s6, 816
      %v3322 = vld [vmem:[%s3321] sm:$0xff]
      %v3323 = vld [vmem:[%s3321 + $0x8] sm:$0xf]
      %v3324 = vld [vmem:[%s3321 + $0xc] sm:$0xff]
      %v3325 = vld [vmem:[%s3321 + $0x14] sm:$0xf]
      %v3326 = vld [vmem:[%s3321 + $0x18] sm:$0xff]
      %v3327 = vld [vmem:[%s3321 + $0x20] sm:$0xf]
      %v3328 = vld [vmem:[%s3321 + $0x24] sm:$0xff]
      %v3329 = vld [vmem:[%s3321 + $0x2c] sm:$0xf]
      %v3330 = vld [vmem:[%s3321 + $0x30] sm:$0xff]
      %v3331 = vld [vmem:[%s3321 + $0x38] sm:$0xf]
      %v3332 = vld [vmem:[%s3321 + $0x3c] sm:$0xff]
      %v3333 = vld [vmem:[%s3321 + $0x44] sm:$0xf]
      %v3334 = vld [vmem:[%s3321 + $0x48] sm:$0xff]
      %v3335 = vld [vmem:[%s3321 + $0x50] sm:$0xf]
      %v3336 = vld [vmem:[%s3321 + $0x54] sm:$0xff]
      %v3337 = vld [vmem:[%s3321 + $0x5c] sm:$0xf]
      %v3338 = vld [vmem:[%s3321 + $0x60] sm:$0xff]
      %v3339 = vld [vmem:[%s3321 + $0x68] sm:$0xf]
      %v3340 = vld [vmem:[%s3321 + $0x6c] sm:$0xff]
      %v3341 = vld [vmem:[%s3321 + $0x74] sm:$0xf]
      %v3342 = vld [vmem:[%s3321 + $0x78] sm:$0xff]
      %v3343 = vld [vmem:[%s3321 + $0x80] sm:$0xf]
      %v3344 = vld [vmem:[%s3321 + $0x84] sm:$0xff]
      %v3345 = vld [vmem:[%s3321 + $0x8c] sm:$0xf]
      %v3346 = vld [vmem:[%s3321 + $0x90] sm:$0xff]
      %v3347 = vld [vmem:[%s3321 + $0x98] sm:$0xf]
      %v3348 = vld [vmem:[%s3321 + $0x9c] sm:$0xff]
      %v3349 = vld [vmem:[%s3321 + $0xa4] sm:$0xf]
      %v3350 = vld [vmem:[%s3321 + $0xa8] sm:$0xff]
      %v3351 = vld [vmem:[%s3321 + $0xb0] sm:$0xf]
      %v3352 = vld [vmem:[%s3321 + $0xb4] sm:$0xff]
      %v3353 = vld [vmem:[%s3321 + $0xbc] sm:$0xf]
      %v3354 = vld [vmem:[%s3321 + $0xc0] sm:$0xff]
      %v3355 = vld [vmem:[%s3321 + $0xc8] sm:$0xf]
      %v3356 = vld [vmem:[%s3321 + $0xcc] sm:$0xff]
      %v3357 = vld [vmem:[%s3321 + $0xd4] sm:$0xf]
      %v3358 = vld [vmem:[%s3321 + $0xd8] sm:$0xff]
      %v3359 = vld [vmem:[%s3321 + $0xe0] sm:$0xf]
      %v3360 = vld [vmem:[%s3321 + $0xe4] sm:$0xff]
      %v3361 = vld [vmem:[%s3321 + $0xec] sm:$0xf]
      %v3362 = vld [vmem:[%s3321 + $0xf0] sm:$0xff]
      %v3363 = vld [vmem:[%s3321 + $0xf8] sm:$0xf]
      %v3364 = vld [vmem:[%s3321 + $0xfc] sm:$0xff]
      %v3365 = vld [vmem:[%s3321 + $0x104] sm:$0xf]
      %v3366 = vld [vmem:[%s3321 + $0x108] sm:$0xff]
      %v3367 = vld [vmem:[%s3321 + $0x110] sm:$0xf]
      %v3368 = vld [vmem:[%s3321 + $0x114] sm:$0xff]
      %v3369 = vld [vmem:[%s3321 + $0x11c] sm:$0xf]
      %v3370 = vld [vmem:[%s3321 + $0x120] sm:$0xff]
      %v3371 = vld [vmem:[%s3321 + $0x128] sm:$0xf]
      %v3372 = vld [vmem:[%s3321 + $0x12c] sm:$0xff]
      %v3373 = vld [vmem:[%s3321 + $0x134] sm:$0xf]
      %v3374 = vld [vmem:[%s3321 + $0x138] sm:$0xff]
      %v3375 = vld [vmem:[%s3321 + $0x140] sm:$0xf]
      %v3376 = vld [vmem:[%s3321 + $0x144] sm:$0xff]
      %v3377 = vld [vmem:[%s3321 + $0x14c] sm:$0xf]
      %v3378 = vld [vmem:[%s3321 + $0x150] sm:$0xff]
      %v3379 = vld [vmem:[%s3321 + $0x158] sm:$0xf]
      %v3380 = vld [vmem:[%s3321 + $0x15c] sm:$0xff]
      %v3381 = vld [vmem:[%s3321 + $0x164] sm:$0xf]
      %v3382 = vld [vmem:[%s3321 + $0x168] sm:$0xff]
      %v3383 = vld [vmem:[%s3321 + $0x170] sm:$0xf]
      %v3384 = vld [vmem:[%s3321 + $0x174] sm:$0xff]
      %v3385 = vld [vmem:[%s3321 + $0x17c] sm:$0xf]
      %v3386 = vld [vmem:[%s3321 + $0x180] sm:$0xff]
      %v3387 = vld [vmem:[%s3321 + $0x188] sm:$0xf]
      %v3388 = vld [vmem:[%s3321 + $0x18c] sm:$0xff]
      %v3389 = vld [vmem:[%s3321 + $0x194] sm:$0xf]
      %v3390 = vld [vmem:[%s3321 + $0x198] sm:$0xff]
      %v3391 = vld [vmem:[%s3321 + $0x1a0] sm:$0xf]
      %v3392 = vld [vmem:[%s3321 + $0x1a4] sm:$0xff]
      %v3393 = vld [vmem:[%s3321 + $0x1ac] sm:$0xf]
      %v3394 = vld [vmem:[%s3321 + $0x1b0] sm:$0xff]
      %v3395 = vld [vmem:[%s3321 + $0x1b8] sm:$0xf]
      %v3396 = vld [vmem:[%s3321 + $0x1bc] sm:$0xff]
      %v3397 = vld [vmem:[%s3321 + $0x1c4] sm:$0xf]
      %v3398 = vld [vmem:[%s3321 + $0x1c8] sm:$0xff]
      %v3399 = vld [vmem:[%s3321 + $0x1d0] sm:$0xf]
      %v3400 = vld [vmem:[%s3321 + $0x1d4] sm:$0xff]
      %v3401 = vld [vmem:[%s3321 + $0x1dc] sm:$0xf]
      %v3402 = vld [vmem:[%s3321 + $0x1e0] sm:$0xff]
      %v3403 = vld [vmem:[%s3321 + $0x1e8] sm:$0xf]
      %v3404 = vld [vmem:[%s3321 + $0x1ec] sm:$0xff]
      %v3405 = vld [vmem:[%s3321 + $0x1f4] sm:$0xf]
      %v3406 = vld [vmem:[%s3321 + $0x1f8] sm:$0xff]
      %v3407 = vld [vmem:[%s3321 + $0x200] sm:$0xf]
      %v3408 = vld [vmem:[%s3321 + $0x204] sm:$0xff]
      %v3409 = vld [vmem:[%s3321 + $0x20c] sm:$0xf]
      %v3410 = vld [vmem:[%s3321 + $0x210] sm:$0xff]
      %v3411 = vld [vmem:[%s3321 + $0x218] sm:$0xf]
      %v3412 = vld [vmem:[%s3321 + $0x21c] sm:$0xff]
      %v3413 = vld [vmem:[%s3321 + $0x224] sm:$0xf]
      %v3414 = vld [vmem:[%s3321 + $0x228] sm:$0xff]
      %v3415 = vld [vmem:[%s3321 + $0x230] sm:$0xf]
      %v3416 = vld [vmem:[%s3321 + $0x234] sm:$0xff]
      %v3417 = vld [vmem:[%s3321 + $0x23c] sm:$0xf]
      %v3418 = vld [vmem:[%s3321 + $0x240] sm:$0xff]
      %v3419 = vld [vmem:[%s3321 + $0x248] sm:$0xf]
      %v3420 = vld [vmem:[%s3321 + $0x24c] sm:$0xff]
      %v3421 = vld [vmem:[%s3321 + $0x254] sm:$0xf]
      %v3422 = vld [vmem:[%s3321 + $0x258] sm:$0xff]
      %v3423 = vld [vmem:[%s3321 + $0x260] sm:$0xf]
      %v3424 = vld [vmem:[%s3321 + $0x264] sm:$0xff]
      %v3425 = vld [vmem:[%s3321 + $0x26c] sm:$0xf]
      %v3426 = vld [vmem:[%s3321 + $0x270] sm:$0xff]
      %v3427 = vld [vmem:[%s3321 + $0x278] sm:$0xf]
      %v3428 = vld [vmem:[%s3321 + $0x27c] sm:$0xff]
      %v3429 = vld [vmem:[%s3321 + $0x284] sm:$0xf]
      %v3430 = vld [vmem:[%s3321 + $0x288] sm:$0xff]
      %v3431 = vld [vmem:[%s3321 + $0x290] sm:$0xf]
      %v3432 = vld [vmem:[%s3321 + $0x294] sm:$0xff]
      %v3433 = vld [vmem:[%s3321 + $0x29c] sm:$0xf]
      %v3434 = vld [vmem:[%s3321 + $0x2a0] sm:$0xff]
      %v3435 = vld [vmem:[%s3321 + $0x2a8] sm:$0xf]
      %v3436 = vld [vmem:[%s3321 + $0x2ac] sm:$0xff]
      %v3437 = vld [vmem:[%s3321 + $0x2b4] sm:$0xf]
      %v3438 = vld [vmem:[%s3321 + $0x2b8] sm:$0xff]
      %v3439 = vld [vmem:[%s3321 + $0x2c0] sm:$0xf]
      %v3440 = vld [vmem:[%s3321 + $0x2c4] sm:$0xff]
      %v3441 = vld [vmem:[%s3321 + $0x2cc] sm:$0xf]
      %v3442 = vld [vmem:[%s3321 + $0x2d0] sm:$0xff]
      %v3443 = vld [vmem:[%s3321 + $0x2d8] sm:$0xf]
      %v3444 = vld [vmem:[%s3321 + $0x2dc] sm:$0xff]
      %v3445 = vld [vmem:[%s3321 + $0x2e4] sm:$0xf]
      %v3446 = vld [vmem:[%s3321 + $0x2e8] sm:$0xff]
      %v3447 = vld [vmem:[%s3321 + $0x2f0] sm:$0xf]
      %v3448 = vld [vmem:[%s3321 + $0x2f4] sm:$0xff]
      %v3449 = vld [vmem:[%s3321 + $0x2fc] sm:$0xf]
      %v3450 = vld [vmem:[%s3321 + $0x300] sm:$0xff]
      %v3451 = vld [vmem:[%s3321 + $0x308] sm:$0xf]
      %v3452 = vld [vmem:[%s3321 + $0x30c] sm:$0xff]
      %v3453 = vld [vmem:[%s3321 + $0x314] sm:$0xf]
      %v3454 = vld [vmem:[%s3321 + $0x318] sm:$0xff]
      %v3455 = vld [vmem:[%s3321 + $0x320] sm:$0xf]
      %v3456 = vld [vmem:[%s3321 + $0x324] sm:$0xff]
      %v3457 = vld [vmem:[%s3321 + $0x32c] sm:$0xf]
      %v3594 = vunpack.c.l.b16 %v3322
      %v3595 = vunpack.c.h.b16 %v3322
      %v3596 = vunpack.c.l.b16 %v3323
      %v3597 = vunpack.c.l.b16 %v3324
      %v3598 = vunpack.c.h.b16 %v3324
      %v3599 = vunpack.c.l.b16 %v3325
      %v3600 = vunpack.c.l.b16 %v3326
      %v3601 = vunpack.c.h.b16 %v3326
      %v3602 = vunpack.c.l.b16 %v3327
      %v3603 = vunpack.c.l.b16 %v3328
      %v3604 = vunpack.c.h.b16 %v3328
      %v3605 = vunpack.c.l.b16 %v3329
      %v3606 = vunpack.c.l.b16 %v3330
      %v3607 = vunpack.c.h.b16 %v3330
      %v3608 = vunpack.c.l.b16 %v3331
      %v3609 = vunpack.c.l.b16 %v3332
      %v3610 = vunpack.c.h.b16 %v3332
      %v3611 = vunpack.c.l.b16 %v3333
      %v3612 = vunpack.c.l.b16 %v3334
      %v3613 = vunpack.c.h.b16 %v3334
      %v3614 = vunpack.c.l.b16 %v3335
      %v3615 = vunpack.c.l.b16 %v3336
      %v3616 = vunpack.c.h.b16 %v3336
      %v3617 = vunpack.c.l.b16 %v3337
      %v3618 = vunpack.c.l.b16 %v3338
      %v3619 = vunpack.c.h.b16 %v3338
      %v3620 = vunpack.c.l.b16 %v3339
      %v3621 = vunpack.c.l.b16 %v3340
      %v3622 = vunpack.c.h.b16 %v3340
      %v3623 = vunpack.c.l.b16 %v3341
      %v3624 = vunpack.c.l.b16 %v3342
      %v3625 = vunpack.c.h.b16 %v3342
      %v3626 = vunpack.c.l.b16 %v3343
      %v3627 = vunpack.c.l.b16 %v3344
      %v3628 = vunpack.c.h.b16 %v3344
      %v3629 = vunpack.c.l.b16 %v3345
      %v3630 = vunpack.c.l.b16 %v3346
      %v3631 = vunpack.c.h.b16 %v3346
      %v3632 = vunpack.c.l.b16 %v3347
      %v3633 = vunpack.c.l.b16 %v3348
      %v3634 = vunpack.c.h.b16 %v3348
      %v3635 = vunpack.c.l.b16 %v3349
      %v3636 = vunpack.c.l.b16 %v3350
      %v3637 = vunpack.c.h.b16 %v3350
      %v3638 = vunpack.c.l.b16 %v3351
      %v3639 = vunpack.c.l.b16 %v3352
      %v3640 = vunpack.c.h.b16 %v3352
      %v3641 = vunpack.c.l.b16 %v3353
      %v3642 = vunpack.c.l.b16 %v3354
      %v3643 = vunpack.c.h.b16 %v3354
      %v3644 = vunpack.c.l.b16 %v3355
      %v3645 = vunpack.c.l.b16 %v3356
      %v3646 = vunpack.c.h.b16 %v3356
      %v3647 = vunpack.c.l.b16 %v3357
      %v3648 = vunpack.c.l.b16 %v3358
      %v3649 = vunpack.c.h.b16 %v3358
      %v3650 = vunpack.c.l.b16 %v3359
      %v3651 = vunpack.c.l.b16 %v3360
      %v3652 = vunpack.c.h.b16 %v3360
      %v3653 = vunpack.c.l.b16 %v3361
      %v3654 = vunpack.c.l.b16 %v3362
      %v3655 = vunpack.c.h.b16 %v3362
      %v3656 = vunpack.c.l.b16 %v3363
      %v3657 = vunpack.c.l.b16 %v3364
      %v3658 = vunpack.c.h.b16 %v3364
      %v3659 = vunpack.c.l.b16 %v3365
      %v3660 = vunpack.c.l.b16 %v3366
      %v3661 = vunpack.c.h.b16 %v3366
      %v3662 = vunpack.c.l.b16 %v3367
      %v3663 = vunpack.c.l.b16 %v3368
      %v3664 = vunpack.c.h.b16 %v3368
      %v3665 = vunpack.c.l.b16 %v3369
      %v3666 = vunpack.c.l.b16 %v3370
      %v3667 = vunpack.c.h.b16 %v3370
      %v3668 = vunpack.c.l.b16 %v3371
      %v3669 = vunpack.c.l.b16 %v3372
      %v3670 = vunpack.c.h.b16 %v3372
      %v3671 = vunpack.c.l.b16 %v3373
      %v3672 = vunpack.c.l.b16 %v3374
      %v3673 = vunpack.c.h.b16 %v3374
      %v3674 = vunpack.c.l.b16 %v3375
      %v3675 = vunpack.c.l.b16 %v3376
      %v3676 = vunpack.c.h.b16 %v3376
      %v3677 = vunpack.c.l.b16 %v3377
      %v3678 = vunpack.c.l.b16 %v3378
      %v3679 = vunpack.c.h.b16 %v3378
      %v3680 = vunpack.c.l.b16 %v3379
      %v3681 = vunpack.c.l.b16 %v3380
      %v3682 = vunpack.c.h.b16 %v3380
      %v3683 = vunpack.c.l.b16 %v3381
      %v3684 = vunpack.c.l.b16 %v3382
      %v3685 = vunpack.c.h.b16 %v3382
      %v3686 = vunpack.c.l.b16 %v3383
      %v3687 = vunpack.c.l.b16 %v3384
      %v3688 = vunpack.c.h.b16 %v3384
      %v3689 = vunpack.c.l.b16 %v3385
      %v3690 = vunpack.c.l.b16 %v3386
      %v3691 = vunpack.c.h.b16 %v3386
      %v3692 = vunpack.c.l.b16 %v3387
      %v3693 = vunpack.c.l.b16 %v3388
      %v3694 = vunpack.c.h.b16 %v3388
      %v3695 = vunpack.c.l.b16 %v3389
      %v3696 = vunpack.c.l.b16 %v3390
      %v3697 = vunpack.c.h.b16 %v3390
      %v3698 = vunpack.c.l.b16 %v3391
      %v3699 = vunpack.c.l.b16 %v3392
      %v3700 = vunpack.c.h.b16 %v3392
      %v3701 = vunpack.c.l.b16 %v3393
      %v3702 = vunpack.c.l.b16 %v3394
      %v3703 = vunpack.c.h.b16 %v3394
      %v3704 = vunpack.c.l.b16 %v3395
      %v3705 = vunpack.c.l.b16 %v3396
      %v3706 = vunpack.c.h.b16 %v3396
      %v3707 = vunpack.c.l.b16 %v3397
      %v3708 = vunpack.c.l.b16 %v3398
      %v3709 = vunpack.c.h.b16 %v3398
      %v3710 = vunpack.c.l.b16 %v3399
      %v3711 = vunpack.c.l.b16 %v3400
      %v3712 = vunpack.c.h.b16 %v3400
      %v3713 = vunpack.c.l.b16 %v3401
      %v3714 = vunpack.c.l.b16 %v3402
      %v3715 = vunpack.c.h.b16 %v3402
      %v3716 = vunpack.c.l.b16 %v3403
      %v3717 = vunpack.c.l.b16 %v3404
      %v3718 = vunpack.c.h.b16 %v3404
      %v3719 = vunpack.c.l.b16 %v3405
      %v3720 = vunpack.c.l.b16 %v3406
      %v3721 = vunpack.c.h.b16 %v3406
      %v3722 = vunpack.c.l.b16 %v3407
      %v3723 = vunpack.c.l.b16 %v3408
      %v3724 = vunpack.c.h.b16 %v3408
      %v3725 = vunpack.c.l.b16 %v3409
      %v3726 = vunpack.c.l.b16 %v3410
      %v3727 = vunpack.c.h.b16 %v3410
      %v3728 = vunpack.c.l.b16 %v3411
      %v3729 = vunpack.c.l.b16 %v3412
      %v3730 = vunpack.c.h.b16 %v3412
      %v3731 = vunpack.c.l.b16 %v3413
      %v3732 = vunpack.c.l.b16 %v3414
      %v3733 = vunpack.c.h.b16 %v3414
      %v3734 = vunpack.c.l.b16 %v3415
      %v3735 = vunpack.c.l.b16 %v3416
      %v3736 = vunpack.c.h.b16 %v3416
      %v3737 = vunpack.c.l.b16 %v3417
      %v3738 = vunpack.c.l.b16 %v3418
      %v3739 = vunpack.c.h.b16 %v3418
      %v3740 = vunpack.c.l.b16 %v3419
      %v3741 = vunpack.c.l.b16 %v3420
      %v3742 = vunpack.c.h.b16 %v3420
      %v3743 = vunpack.c.l.b16 %v3421
      %v3744 = vunpack.c.l.b16 %v3422
      %v3745 = vunpack.c.h.b16 %v3422
      %v3746 = vunpack.c.l.b16 %v3423
      %v3747 = vunpack.c.l.b16 %v3424
      %v3748 = vunpack.c.h.b16 %v3424
      %v3749 = vunpack.c.l.b16 %v3425
      %v3750 = vunpack.c.l.b16 %v3426
      %v3751 = vunpack.c.h.b16 %v3426
      %v3752 = vunpack.c.l.b16 %v3427
      %v3753 = vunpack.c.l.b16 %v3428
      %v3754 = vunpack.c.h.b16 %v3428
      %v3755 = vunpack.c.l.b16 %v3429
      %v3756 = vunpack.c.l.b16 %v3430
      %v3757 = vunpack.c.h.b16 %v3430
      %v3758 = vunpack.c.l.b16 %v3431
      %v3759 = vunpack.c.l.b16 %v3432
      %v3760 = vunpack.c.h.b16 %v3432
      %v3761 = vunpack.c.l.b16 %v3433
      %v3762 = vunpack.c.l.b16 %v3434
      %v3763 = vunpack.c.h.b16 %v3434
      %v3764 = vunpack.c.l.b16 %v3435
      %v3765 = vunpack.c.l.b16 %v3436
      %v3766 = vunpack.c.h.b16 %v3436
      %v3767 = vunpack.c.l.b16 %v3437
      %v3768 = vunpack.c.l.b16 %v3438
      %v3769 = vunpack.c.h.b16 %v3438
      %v3770 = vunpack.c.l.b16 %v3439
      %v3771 = vunpack.c.l.b16 %v3440
      %v3772 = vunpack.c.h.b16 %v3440
      %v3773 = vunpack.c.l.b16 %v3441
      %v3774 = vunpack.c.l.b16 %v3442
      %v3775 = vunpack.c.h.b16 %v3442
      %v3776 = vunpack.c.l.b16 %v3443
      %v3777 = vunpack.c.l.b16 %v3444
      %v3778 = vunpack.c.h.b16 %v3444
      %v3779 = vunpack.c.l.b16 %v3445
      %v3780 = vunpack.c.l.b16 %v3446
      %v3781 = vunpack.c.h.b16 %v3446
      %v3782 = vunpack.c.l.b16 %v3447
      %v3783 = vunpack.c.l.b16 %v3448
      %v3784 = vunpack.c.h.b16 %v3448
      %v3785 = vunpack.c.l.b16 %v3449
      %v3786 = vunpack.c.l.b16 %v3450
      %v3787 = vunpack.c.h.b16 %v3450
      %v3788 = vunpack.c.l.b16 %v3451
      %v3789 = vunpack.c.l.b16 %v3452
      %v3790 = vunpack.c.h.b16 %v3452
      %v3791 = vunpack.c.l.b16 %v3453
      %v3792 = vunpack.c.l.b16 %v3454
      %v3793 = vunpack.c.h.b16 %v3454
      %v3794 = vunpack.c.l.b16 %v3455
      %v3795 = vunpack.c.l.b16 %v3456
      %v3796 = vunpack.c.h.b16 %v3456
      %v3797 = vunpack.c.l.b16 %v3457
      %v3798 = vpack.c.b16 %v3597, %v3594
      %v3799 = vpack.c.b16 %v3598, %v3595
      %v3800 = vpack.c.b16 %v3599, %v3596
      %v3801 = vpack.c.b16 %v3603, %v3600
      %v3802 = vpack.c.b16 %v3604, %v3601
      %v3803 = vpack.c.b16 %v3605, %v3602
      %v3804 = vpack.c.b16 %v3609, %v3606
      %v3805 = vpack.c.b16 %v3610, %v3607
      %v3806 = vpack.c.b16 %v3611, %v3608
      %v3807 = vpack.c.b16 %v3615, %v3612
      %v3808 = vpack.c.b16 %v3616, %v3613
      %v3809 = vpack.c.b16 %v3617, %v3614
      %v3810 = vpack.c.b16 %v3621, %v3618
      %v3811 = vpack.c.b16 %v3622, %v3619
      %v3812 = vpack.c.b16 %v3623, %v3620
      %v3813 = vpack.c.b16 %v3627, %v3624
      %v3814 = vpack.c.b16 %v3628, %v3625
      %v3815 = vpack.c.b16 %v3629, %v3626
      %v3816 = vpack.c.b16 %v3633, %v3630
      %v3817 = vpack.c.b16 %v3634, %v3631
      %v3818 = vpack.c.b16 %v3635, %v3632
      %v3819 = vpack.c.b16 %v3639, %v3636
      %v3820 = vpack.c.b16 %v3640, %v3637
      %v3821 = vpack.c.b16 %v3641, %v3638
      %v3822 = vpack.c.b16 %v3645, %v3642
      %v3823 = vpack.c.b16 %v3646, %v3643
      %v3824 = vpack.c.b16 %v3647, %v3644
      %v3825 = vpack.c.b16 %v3651, %v3648
      %v3826 = vpack.c.b16 %v3652, %v3649
      %v3827 = vpack.c.b16 %v3653, %v3650
      %v3828 = vpack.c.b16 %v3657, %v3654
      %v3829 = vpack.c.b16 %v3658, %v3655
      %v3830 = vpack.c.b16 %v3659, %v3656
      %v3831 = vpack.c.b16 %v3663, %v3660
      %v3832 = vpack.c.b16 %v3664, %v3661
      %v3833 = vpack.c.b16 %v3665, %v3662
      %v3834 = vpack.c.b16 %v3669, %v3666
      %v3835 = vpack.c.b16 %v3670, %v3667
      %v3836 = vpack.c.b16 %v3671, %v3668
      %v3837 = vpack.c.b16 %v3675, %v3672
      %v3838 = vpack.c.b16 %v3676, %v3673
      %v3839 = vpack.c.b16 %v3677, %v3674
      %v3840 = vpack.c.b16 %v3681, %v3678
      %v3841 = vpack.c.b16 %v3682, %v3679
      %v3842 = vpack.c.b16 %v3683, %v3680
      %v3843 = vpack.c.b16 %v3687, %v3684
      %v3844 = vpack.c.b16 %v3688, %v3685
      %v3845 = vpack.c.b16 %v3689, %v3686
      %v3846 = vpack.c.b16 %v3693, %v3690
      %v3847 = vpack.c.b16 %v3694, %v3691
      %v3848 = vpack.c.b16 %v3695, %v3692
      %v3849 = vpack.c.b16 %v3699, %v3696
      %v3850 = vpack.c.b16 %v3700, %v3697
      %v3851 = vpack.c.b16 %v3701, %v3698
      %v3852 = vpack.c.b16 %v3705, %v3702
      %v3853 = vpack.c.b16 %v3706, %v3703
      %v3854 = vpack.c.b16 %v3707, %v3704
      %v3855 = vpack.c.b16 %v3711, %v3708
      %v3856 = vpack.c.b16 %v3712, %v3709
      %v3857 = vpack.c.b16 %v3713, %v3710
      %v3858 = vpack.c.b16 %v3717, %v3714
      %v3859 = vpack.c.b16 %v3718, %v3715
      %v3860 = vpack.c.b16 %v3719, %v3716
      %v3861 = vpack.c.b16 %v3723, %v3720
      %v3862 = vpack.c.b16 %v3724, %v3721
      %v3863 = vpack.c.b16 %v3725, %v3722
      %v3864 = vpack.c.b16 %v3729, %v3726
      %v3865 = vpack.c.b16 %v3730, %v3727
      %v3866 = vpack.c.b16 %v3731, %v3728
      %v3867 = vpack.c.b16 %v3735, %v3732
      %v3868 = vpack.c.b16 %v3736, %v3733
      %v3869 = vpack.c.b16 %v3737, %v3734
      %v3870 = vpack.c.b16 %v3741, %v3738
      %v3871 = vpack.c.b16 %v3742, %v3739
      %v3872 = vpack.c.b16 %v3743, %v3740
      %v3873 = vpack.c.b16 %v3747, %v3744
      %v3874 = vpack.c.b16 %v3748, %v3745
      %v3875 = vpack.c.b16 %v3749, %v3746
      %v3876 = vpack.c.b16 %v3753, %v3750
      %v3877 = vpack.c.b16 %v3754, %v3751
      %v3878 = vpack.c.b16 %v3755, %v3752
      %v3879 = vpack.c.b16 %v3759, %v3756
      %v3880 = vpack.c.b16 %v3760, %v3757
      %v3881 = vpack.c.b16 %v3761, %v3758
      %v3882 = vpack.c.b16 %v3765, %v3762
      %v3883 = vpack.c.b16 %v3766, %v3763
      %v3884 = vpack.c.b16 %v3767, %v3764
      %v3885 = vpack.c.b16 %v3771, %v3768
      %v3886 = vpack.c.b16 %v3772, %v3769
      %v3887 = vpack.c.b16 %v3773, %v3770
      %v3888 = vpack.c.b16 %v3777, %v3774
      %v3889 = vpack.c.b16 %v3778, %v3775
      %v3890 = vpack.c.b16 %v3779, %v3776
      %v3891 = vpack.c.b16 %v3783, %v3780
      %v3892 = vpack.c.b16 %v3784, %v3781
      %v3893 = vpack.c.b16 %v3785, %v3782
      %v3894 = vpack.c.b16 %v3789, %v3786
      %v3895 = vpack.c.b16 %v3790, %v3787
      %v3896 = vpack.c.b16 %v3791, %v3788
      %v3897 = vpack.c.b16 %v3795, %v3792
      %v3898 = vpack.c.b16 %v3796, %v3793
      %v3899 = vpack.c.b16 %v3797, %v3794
      %v4003 = vsel %vm509, %v3265, 0
      %v4006 = vsel %vm509, %v3270, 0
      %v4009 = vsel %vm509, %v3275, 0
      %v4012 = vsel %vm509, %v3280, 0
      %v4015 = vsel %vm509, %v3285, 0
      %v4018 = vsel %vm509, %v3290, 0
      %v4021 = vsel %vm509, %v3295, 0
      %v4024 = vsel %vm509, %v3300, 0
      %v4027 = vsel %vm509, %v3305, 0
      %v4030 = vsel %vm509, %v3310, 0
      %v4033 = vsel %vm509, %v3315, 0
      %v4036 = vsel %vm509, %v3320, 0
      %4038 = vmatprep.subr.bf16.mxu0 %v3799
      %4039 = vmatpush1.bf16.msra.mxu0 %v3798
      %4040 = vmatprep.subr.bf16.mxu0 %v3802
      %4041 = vmatpush1.bf16.msra.mxu0 %v3801
      %4042 = vmatprep.subr.bf16.mxu0 %v3805
      %4043 = vmatpush1.bf16.msra.mxu0 %v3804
      %4044 = vmatprep.subr.bf16.mxu0 %v3808
      %4045 = vmatpush1.bf16.msra.mxu0 %v3807
      %4046 = vmatprep.subr.bf16.mxu0 %v3811
      %4047 = vmatpush1.bf16.msra.mxu0 %v3810
      %4048 = vmatprep.subr.bf16.mxu0 %v3814
      %4049 = vmatpush1.bf16.msra.mxu0 %v3813
      %4050 = vmatprep.subr.bf16.mxu0 %v3817
      %4051 = vmatpush1.bf16.msra.mxu0 %v3816
      %4052 = vmatprep.subr.bf16.mxu0 %v3820
      %4053 = vmatpush1.bf16.msra.mxu0 %v3819
      %4054 = vmatprep.subr.bf16.mxu0 %v3823
      %4055 = vmatpush1.bf16.msra.mxu0 %v3822
      %4056 = vmatprep.subr.bf16.mxu0 %v3826
      %4057 = vmatpush1.bf16.msra.mxu0 %v3825
      %4058 = vmatprep.subr.bf16.mxu0 %v3829
      %4059 = vmatpush1.bf16.msra.mxu0 %v3828
      %4060 = vmatprep.subr.bf16.mxu0 %v3832
      %4061 = vmatpush1.bf16.msra.mxu0 %v3831
      %4062 = vmatprep.subr.bf16.mxu0 %v3835
      %4063 = vmatpush1.bf16.msra.mxu0 %v3834
      %4064 = vmatprep.subr.bf16.mxu0 %v3838
      %4065 = vmatpush1.bf16.msra.mxu0 %v3837
      %4066 = vmatprep.subr.bf16.mxu0 %v3841
      %4067 = vmatpush1.bf16.msra.mxu0 %v3840
      %4068 = vmatprep.subr.bf16.mxu0 %v3844
      %4069 = vmatpush1.bf16.msra.mxu0 %v3843
      %4070 = vmatprep.mubr.bf16.mxu0 %v3262
      %4071 = vmatmul.mubr.bf16.gmra.mrb[0].mxu0 %v3261
      %v4072 = vpop.f32.mrb[0].mxu0
      %v4073 = vadd.f32 0.0, %v4072
      %v4074 = vpop.f32.mrb[0].mxu0
      %v4075 = vadd.f32 0.0, %v4074
      %v4076 = vpop.f32.mrb[0].mxu0
      %v4077 = vadd.f32 0.0, %v4076
      %v4078 = vpop.f32.mrb[0].mxu0
      %v4079 = vadd.f32 0.0, %v4078
      %4080 = vmatprep.mubr.bf16.mxu0 %v3267
      %4081 = vmatmul.mubr.bf16.gmra.mrb[0].mxu0 %v3266
      %v4082 = vpop.f32.mrb[0].mxu0
      %v4083 = vadd.f32 0.0, %v4082
      %v4084 = vpop.f32.mrb[0].mxu0
      %v4085 = vadd.f32 0.0, %v4084
      %v4086 = vpop.f32.mrb[0].mxu0
      %v4087 = vadd.f32 0.0, %v4086
      %v4088 = vpop.f32.mrb[0].mxu0
      %v4089 = vadd.f32 0.0, %v4088
      %4090 = vmatprep.mubr.bf16.mxu0 %v3272
      %4091 = vmatmul.mubr.bf16.gmra.mrb[0].mxu0 %v3271
      %v4092 = vpop.f32.mrb[0].mxu0
      %v4093 = vadd.f32 0.0, %v4092
      %v4094 = vpop.f32.mrb[0].mxu0
      %v4095 = vadd.f32 0.0, %v4094
      %v4096 = vpop.f32.mrb[0].mxu0
      %v4097 = vadd.f32 0.0, %v4096
      %v4098 = vpop.f32.mrb[0].mxu0
      %v4099 = vadd.f32 0.0, %v4098
      %4100 = vmatprep.mubr.bf16.mxu0 %v3277
      %4101 = vmatmul.mubr.bf16.gmra.mrb[0].mxu0 %v3276
      %v4102 = vpop.f32.mrb[0].mxu0
      %v4103 = vadd.f32 0.0, %v4102
      %v4104 = vpop.f32.mrb[0].mxu0
      %v4105 = vadd.f32 0.0, %v4104
      %v4106 = vpop.f32.mrb[0].mxu0
      %v4107 = vadd.f32 0.0, %v4106
      %v4108 = vpop.f32.mrb[0].mxu0
      %v4109 = vadd.f32 0.0, %v4108
      %4110 = vmatprep.mubr.bf16.mxu0 %v3282
      %4111 = vmatmul.mubr.bf16.gmra.mrb[0].mxu0 %v3281
      %v4112 = vpop.f32.mrb[0].mxu0
      %v4113 = vadd.f32 0.0, %v4112
      %v4114 = vpop.f32.mrb[0].mxu0
      %v4115 = vadd.f32 0.0, %v4114
      %v4116 = vpop.f32.mrb[0].mxu0
      %v4117 = vadd.f32 0.0, %v4116
      %v4118 = vpop.f32.mrb[0].mxu0
      %v4119 = vadd.f32 0.0, %v4118
      %4120 = vmatprep.mubr.bf16.mxu0 %v3287
      %4121 = vmatmul.mubr.bf16.gmra.mrb[0].mxu0 %v3286
      %v4122 = vpop.f32.mrb[0].mxu0
      %v4123 = vadd.f32 0.0, %v4122
      %v4124 = vpop.f32.mrb[0].mxu0
      %v4125 = vadd.f32 0.0, %v4124
      %v4126 = vpop.f32.mrb[0].mxu0
      %v4127 = vadd.f32 0.0, %v4126
      %v4128 = vpop.f32.mrb[0].mxu0
      %v4129 = vadd.f32 0.0, %v4128
      %4130 = vmatprep.mubr.bf16.mxu0 %v3292
      %4131 = vmatmul.mubr.bf16.gmra.mrb[0].mxu0 %v3291
      %v4132 = vpop.f32.mrb[0].mxu0
      %v4133 = vadd.f32 0.0, %v4132
      %v4134 = vpop.f32.mrb[0].mxu0
      %v4135 = vadd.f32 0.0, %v4134
      %v4136 = vpop.f32.mrb[0].mxu0
      %v4137 = vadd.f32 0.0, %v4136
      %v4138 = vpop.f32.mrb[0].mxu0
      %v4139 = vadd.f32 0.0, %v4138
      %4140 = vmatprep.mubr.bf16.mxu0 %v3297
      %4141 = vmatmul.mubr.bf16.gmra.mrb[0].mxu0 %v3296
      %v4142 = vpop.f32.mrb[0].mxu0
      %v4143 = vadd.f32 0.0, %v4142
      %v4144 = vpop.f32.mrb[0].mxu0
      %v4145 = vadd.f32 0.0, %v4144
      %v4146 = vpop.f32.mrb[0].mxu0
      %v4147 = vadd.f32 0.0, %v4146
      %v4148 = vpop.f32.mrb[0].mxu0
      %v4149 = vadd.f32 0.0, %v4148
      %4150 = vmatprep.mubr.bf16.mxu0 %v3302
      %4151 = vmatmul.mubr.bf16.gmra.mrb[0].mxu0 %v3301
      %v4152 = vpop.f32.mrb[0].mxu0
      %v4153 = vadd.f32 0.0, %v4152
      %v4154 = vpop.f32.mrb[0].mxu0
      %v4155 = vadd.f32 0.0, %v4154
      %v4156 = vpop.f32.mrb[0].mxu0
      %v4157 = vadd.f32 0.0, %v4156
      %v4158 = vpop.f32.mrb[0].mxu0
      %v4159 = vadd.f32 0.0, %v4158
      %4160 = vmatprep.mubr.bf16.mxu0 %v3307
      %4161 = vmatmul.mubr.bf16.gmra.mrb[0].mxu0 %v3306
      %v4162 = vpop.f32.mrb[0].mxu0
      %v4163 = vadd.f32 0.0, %v4162
      %v4164 = vpop.f32.mrb[0].mxu0
      %v4165 = vadd.f32 0.0, %v4164
      %v4166 = vpop.f32.mrb[0].mxu0
      %v4167 = vadd.f32 0.0, %v4166
      %v4168 = vpop.f32.mrb[0].mxu0
      %v4169 = vadd.f32 0.0, %v4168
      %4170 = vmatprep.mubr.bf16.mxu0 %v3312
      %4171 = vmatmul.mubr.bf16.gmra.mrb[0].mxu0 %v3311
      %v4172 = vpop.f32.mrb[0].mxu0
      %v4173 = vadd.f32 0.0, %v4172
      %v4174 = vpop.f32.mrb[0].mxu0
      %v4175 = vadd.f32 0.0, %v4174
      %v4176 = vpop.f32.mrb[0].mxu0
      %v4177 = vadd.f32 0.0, %v4176
      %v4178 = vpop.f32.mrb[0].mxu0
      %v4179 = vadd.f32 0.0, %v4178
      %4180 = vmatprep.mubr.bf16.mxu0 %v3317
      %4181 = vmatmul.mubr.bf16.gmra.mrb[0].mxu0 %v3316
      %v4182 = vpop.f32.mrb[0].mxu0
      %v4183 = vadd.f32 0.0, %v4182
      %v4184 = vpop.f32.mrb[0].mxu0
      %v4185 = vadd.f32 0.0, %v4184
      %v4186 = vpop.f32.mrb[0].mxu0
      %v4187 = vadd.f32 0.0, %v4186
      %v4188 = vpop.f32.mrb[0].mxu0
      %v4189 = vadd.f32 0.0, %v4188
      %4190 = vdwg.mxu0
      %4191 = vmatprep.subr.bf16.mxu0 %v3847
      %4192 = vmatpush1.bf16.msra.mxu0 %v3846
      %4193 = vmatprep.subr.bf16.mxu0 %v3850
      %4194 = vmatpush1.bf16.msra.mxu0 %v3849
      %4195 = vmatprep.subr.bf16.mxu0 %v3853
      %4196 = vmatpush1.bf16.msra.mxu0 %v3852
      %4197 = vmatprep.subr.bf16.mxu0 %v3856
      %4198 = vmatpush1.bf16.msra.mxu0 %v3855
      %4199 = vmatprep.subr.bf16.mxu0 %v3859
      %4200 = vmatpush1.bf16.msra.mxu0 %v3858
      %4201 = vmatprep.subr.bf16.mxu0 %v3862
      %4202 = vmatpush1.bf16.msra.mxu0 %v3861
      %4203 = vmatprep.subr.bf16.mxu0 %v3865
      %4204 = vmatpush1.bf16.msra.mxu0 %v3864
      %4205 = vmatprep.subr.bf16.mxu0 %v3868
      %4206 = vmatpush1.bf16.msra.mxu0 %v3867
      %4207 = vmatprep.subr.bf16.mxu0 %v3871
      %4208 = vmatpush1.bf16.msra.mxu0 %v3870
      %4209 = vmatprep.subr.bf16.mxu0 %v3874
      %4210 = vmatpush1.bf16.msra.mxu0 %v3873
      %4211 = vmatprep.subr.bf16.mxu0 %v3877
      %4212 = vmatpush1.bf16.msra.mxu0 %v3876
      %4213 = vmatprep.subr.bf16.mxu0 %v3880
      %4214 = vmatpush1.bf16.msra.mxu0 %v3879
      %4215 = vmatprep.subr.bf16.mxu0 %v3883
      %4216 = vmatpush1.bf16.msra.mxu0 %v3882
      %4217 = vmatprep.subr.bf16.mxu0 %v3886
      %4218 = vmatpush1.bf16.msra.mxu0 %v3885
      %4219 = vmatprep.subr.bf16.mxu0 %v3889
      %4220 = vmatpush1.bf16.msra.mxu0 %v3888
      %4221 = vmatprep.subr.bf16.mxu0 %v3892
      %4222 = vmatpush1.bf16.msra.mxu0 %v3891
      %4223 = vmatprep.mubr.bf16.mxu0 %v3264
      %4224 = vmatmul.mubr.bf16.gmra.mrb[0].mxu0 %v3263
      %v4225 = vpop.f32.mrb[0].mxu0
      %v4226 = vadd.f32 %v4073, %v4225
      %v4227 = vpop.f32.mrb[0].mxu0
      %v4228 = vadd.f32 %v4075, %v4227
      %v4229 = vpop.f32.mrb[0].mxu0
      %v4230 = vadd.f32 %v4077, %v4229
      %v4231 = vpop.f32.mrb[0].mxu0
      %v4232 = vadd.f32 %v4079, %v4231
      %4233 = vmatprep.mubr.bf16.mxu0 %v3269
      %4234 = vmatmul.mubr.bf16.gmra.mrb[0].mxu0 %v3268
      %v4235 = vpop.f32.mrb[0].mxu0
      %v4236 = vadd.f32 %v4083, %v4235
      %v4237 = vpop.f32.mrb[0].mxu0
      %v4238 = vadd.f32 %v4085, %v4237
      %v4239 = vpop.f32.mrb[0].mxu0
      %v4240 = vadd.f32 %v4087, %v4239
      %v4241 = vpop.f32.mrb[0].mxu0
      %v4242 = vadd.f32 %v4089, %v4241
      %4243 = vmatprep.mubr.bf16.mxu0 %v3274
      %4244 = vmatmul.mubr.bf16.gmra.mrb[0].mxu0 %v3273
      %v4245 = vpop.f32.mrb[0].mxu0
      %v4246 = vadd.f32 %v4093, %v4245
      %v4247 = vpop.f32.mrb[0].mxu0
      %v4248 = vadd.f32 %v4095, %v4247
      %v4249 = vpop.f32.mrb[0].mxu0
      %v4250 = vadd.f32 %v4097, %v4249
      %v4251 = vpop.f32.mrb[0].mxu0
      %v4252 = vadd.f32 %v4099, %v4251
      %4253 = vmatprep.mubr.bf16.mxu0 %v3279
      %4254 = vmatmul.mubr.bf16.gmra.mrb[0].mxu0 %v3278
      %v4255 = vpop.f32.mrb[0].mxu0
      %v4256 = vadd.f32 %v4103, %v4255
      %v4257 = vpop.f32.mrb[0].mxu0
      %v4258 = vadd.f32 %v4105, %v4257
      %v4259 = vpop.f32.mrb[0].mxu0
      %v4260 = vadd.f32 %v4107, %v4259
      %v4261 = vpop.f32.mrb[0].mxu0
      %v4262 = vadd.f32 %v4109, %v4261
      %4263 = vmatprep.mubr.bf16.mxu0 %v3284
      %4264 = vmatmul.mubr.bf16.gmra.mrb[0].mxu0 %v3283
      %v4265 = vpop.f32.mrb[0].mxu0
      %v4266 = vadd.f32 %v4113, %v4265
      %v4267 = vpop.f32.mrb[0].mxu0
      %v4268 = vadd.f32 %v4115, %v4267
      %v4269 = vpop.f32.mrb[0].mxu0
      %v4270 = vadd.f32 %v4117, %v4269
      %v4271 = vpop.f32.mrb[0].mxu0
      %v4272 = vadd.f32 %v4119, %v4271
      %4273 = vmatprep.mubr.bf16.mxu0 %v3289
      %4274 = vmatmul.mubr.bf16.gmra.mrb[0].mxu0 %v3288
      %v4275 = vpop.f32.mrb[0].mxu0
      %v4276 = vadd.f32 %v4123, %v4275
      %v4277 = vpop.f32.mrb[0].mxu0
      %v4278 = vadd.f32 %v4125, %v4277
      %v4279 = vpop.f32.mrb[0].mxu0
      %v4280 = vadd.f32 %v4127, %v4279
      %v4281 = vpop.f32.mrb[0].mxu0
      %v4282 = vadd.f32 %v4129, %v4281
      %4283 = vmatprep.mubr.bf16.mxu0 %v3294
      %4284 = vmatmul.mubr.bf16.gmra.mrb[0].mxu0 %v3293
      %v4285 = vpop.f32.mrb[0].mxu0
      %v4286 = vadd.f32 %v4133, %v4285
      %v4287 = vpop.f32.mrb[0].mxu0
      %v4288 = vadd.f32 %v4135, %v4287
      %v4289 = vpop.f32.mrb[0].mxu0
      %v4290 = vadd.f32 %v4137, %v4289
      %v4291 = vpop.f32.mrb[0].mxu0
      %v4292 = vadd.f32 %v4139, %v4291
      %4293 = vmatprep.mubr.bf16.mxu0 %v3299
      %4294 = vmatmul.mubr.bf16.gmra.mrb[0].mxu0 %v3298
      %v4295 = vpop.f32.mrb[0].mxu0
      %v4296 = vadd.f32 %v4143, %v4295
      %v4297 = vpop.f32.mrb[0].mxu0
      %v4298 = vadd.f32 %v4145, %v4297
      %v4299 = vpop.f32.mrb[0].mxu0
      %v4300 = vadd.f32 %v4147, %v4299
      %v4301 = vpop.f32.mrb[0].mxu0
      %v4302 = vadd.f32 %v4149, %v4301
      %4303 = vmatprep.mubr.bf16.mxu0 %v3304
      %4304 = vmatmul.mubr.bf16.gmra.mrb[0].mxu0 %v3303
      %v4305 = vpop.f32.mrb[0].mxu0
      %v4306 = vadd.f32 %v4153, %v4305
      %v4307 = vpop.f32.mrb[0].mxu0
      %v4308 = vadd.f32 %v4155, %v4307
      %v4309 = vpop.f32.mrb[0].mxu0
      %v4310 = vadd.f32 %v4157, %v4309
      %v4311 = vpop.f32.mrb[0].mxu0
      %v4312 = vadd.f32 %v4159, %v4311
      %4313 = vmatprep.mubr.bf16.mxu0 %v3309
      %4314 = vmatmul.mubr.bf16.gmra.mrb[0].mxu0 %v3308
      %v4315 = vpop.f32.mrb[0].mxu0
      %v4316 = vadd.f32 %v4163, %v4315
      %v4317 = vpop.f32.mrb[0].mxu0
      %v4318 = vadd.f32 %v4165, %v4317
      %v4319 = vpop.f32.mrb[0].mxu0
      %v4320 = vadd.f32 %v4167, %v4319
      %v4321 = vpop.f32.mrb[0].mxu0
      %v4322 = vadd.f32 %v4169, %v4321
      %4323 = vmatprep.mubr.bf16.mxu0 %v3314
      %4324 = vmatmul.mubr.bf16.gmra.mrb[0].mxu0 %v3313
      %v4325 = vpop.f32.mrb[0].mxu0
      %v4326 = vadd.f32 %v4173, %v4325
      %v4327 = vpop.f32.mrb[0].mxu0
      %v4328 = vadd.f32 %v4175, %v4327
      %v4329 = vpop.f32.mrb[0].mxu0
      %v4330 = vadd.f32 %v4177, %v4329
      %v4331 = vpop.f32.mrb[0].mxu0
      %v4332 = vadd.f32 %v4179, %v4331
      %4333 = vmatprep.mubr.bf16.mxu0 %v3319
      %4334 = vmatmul.mubr.bf16.gmra.mrb[0].mxu0 %v3318
      %v4335 = vpop.f32.mrb[0].mxu0
      %v4336 = vadd.f32 %v4183, %v4335
      %v4337 = vpop.f32.mrb[0].mxu0
      %v4338 = vadd.f32 %v4185, %v4337
      %v4339 = vpop.f32.mrb[0].mxu0
      %v4340 = vadd.f32 %v4187, %v4339
      %v4341 = vpop.f32.mrb[0].mxu0
      %v4342 = vadd.f32 %v4189, %v4341
      %4343 = vdwg.mxu0
      %4344 = vmatprep.subr.bf16.mxu0 %v3895
      %4345 = vmatpush1.bf16.msra.mxu0 %v3894
      %4346 = vmatprep.subr.bf16.mxu0 %v3898
      %4347 = vmatpush1.bf16.msra.mxu0 %v3897
      %4348 = vmatprep.subr.bf16.mxu0 0
      %4349 = vmatpush1.bf16.msra.mxu0 0
      %4350 = vmatprep.subr.bf16.mxu0 0
      %4351 = vmatpush1.bf16.msra.mxu0 0
      %4352 = vmatprep.subr.bf16.mxu0 0
      %4353 = vmatpush1.bf16.msra.mxu0 0
      %4354 = vmatprep.subr.bf16.mxu0 0
      %4355 = vmatpush1.bf16.msra.mxu0 0
      %4356 = vmatprep.subr.bf16.mxu0 0
      %4357 = vmatpush1.bf16.msra.mxu0 0
      %4358 = vmatprep.subr.bf16.mxu0 0
      %4359 = vmatpush1.bf16.msra.mxu0 0
      %4360 = vmatprep.subr.bf16.mxu0 0
      %4361 = vmatpush1.bf16.msra.mxu0 0
      %4362 = vmatprep.subr.bf16.mxu0 0
      %4363 = vmatpush1.bf16.msra.mxu0 0
      %4364 = vmatprep.subr.bf16.mxu0 0
      %4365 = vmatpush1.bf16.msra.mxu0 0
      %4366 = vmatprep.subr.bf16.mxu0 0
      %4367 = vmatpush1.bf16.msra.mxu0 0
      %4368 = vmatprep.subr.bf16.mxu0 0
      %4369 = vmatpush1.bf16.msra.mxu0 0
      %4370 = vmatprep.subr.bf16.mxu0 0
      %4371 = vmatpush1.bf16.msra.mxu0 0
      %4372 = vmatprep.subr.bf16.mxu0 0
      %4373 = vmatpush1.bf16.msra.mxu0 0
      %4374 = vmatprep.subr.bf16.mxu0 0
      %4375 = vmatpush1.bf16.msra.mxu0 0
      %4376 = vmatprep.mubr.bf16.mxu0 0
      %4377 = vmatmul.mubr.bf16.gmra.mrb[0].mxu0 %v4003
      %v4378 = vpop.f32.mrb[0].mxu0
      %v4379 = vadd.f32 %v4226, %v4378
      %v4380 = vpop.f32.mrb[0].mxu0
      %v4381 = vadd.f32 %v4228, %v4380
      %v4382 = vpop.f32.mrb[0].mxu0
      %v4383 = vadd.f32 %v4230, %v4382
      %v4384 = vpop.f32.mrb[0].mxu0
      %v4385 = vadd.f32 %v4232, %v4384
      %4386 = vmatprep.mubr.bf16.mxu0 0
      %4387 = vmatmul.mubr.bf16.gmra.mrb[0].mxu0 %v4006
      %v4388 = vpop.f32.mrb[0].mxu0
      %v4389 = vadd.f32 %v4236, %v4388
      %v4390 = vpop.f32.mrb[0].mxu0
      %v4391 = vadd.f32 %v4238, %v4390
      %v4392 = vpop.f32.mrb[0].mxu0
      %v4393 = vadd.f32 %v4240, %v4392
      %v4394 = vpop.f32.mrb[0].mxu0
      %v4395 = vadd.f32 %v4242, %v4394
      %4396 = vmatprep.mubr.bf16.mxu0 0
      %4397 = vmatmul.mubr.bf16.gmra.mrb[0].mxu0 %v4009
      %v4398 = vpop.f32.mrb[0].mxu0
      %v4399 = vadd.f32 %v4246, %v4398
      %v4400 = vpop.f32.mrb[0].mxu0
      %v4401 = vadd.f32 %v4248, %v4400
      %v4402 = vpop.f32.mrb[0].mxu0
      %v4403 = vadd.f32 %v4250, %v4402
      %v4404 = vpop.f32.mrb[0].mxu0
      %v4405 = vadd.f32 %v4252, %v4404
      %4406 = vmatprep.mubr.bf16.mxu0 0
      %4407 = vmatmul.mubr.bf16.gmra.mrb[0].mxu0 %v4012
      %v4408 = vpop.f32.mrb[0].mxu0
      %v4409 = vadd.f32 %v4256, %v4408
      %v4410 = vpop.f32.mrb[0].mxu0
      %v4411 = vadd.f32 %v4258, %v4410
      %v4412 = vpop.f32.mrb[0].mxu0
      %v4413 = vadd.f32 %v4260, %v4412
      %v4414 = vpop.f32.mrb[0].mxu0
      %v4415 = vadd.f32 %v4262, %v4414
      %4416 = vmatprep.mubr.bf16.mxu0 0
      %4417 = vmatmul.mubr.bf16.gmra.mrb[0].mxu0 %v4015
      %v4418 = vpop.f32.mrb[0].mxu0
      %v4419 = vadd.f32 %v4266, %v4418
      %v4420 = vpop.f32.mrb[0].mxu0
      %v4421 = vadd.f32 %v4268, %v4420
      %v4422 = vpop.f32.mrb[0].mxu0
      %v4423 = vadd.f32 %v4270, %v4422
      %v4424 = vpop.f32.mrb[0].mxu0
      %v4425 = vadd.f32 %v4272, %v4424
      %4426 = vmatprep.mubr.bf16.mxu0 0
      %4427 = vmatmul.mubr.bf16.gmra.mrb[0].mxu0 %v4018
      %v4428 = vpop.f32.mrb[0].mxu0
      %v4429 = vadd.f32 %v4276, %v4428
      %v4430 = vpop.f32.mrb[0].mxu0
      %v4431 = vadd.f32 %v4278, %v4430
      %v4432 = vpop.f32.mrb[0].mxu0
      %v4433 = vadd.f32 %v4280, %v4432
      %v4434 = vpop.f32.mrb[0].mxu0
      %v4435 = vadd.f32 %v4282, %v4434
      %4436 = vmatprep.mubr.bf16.mxu0 0
      %4437 = vmatmul.mubr.bf16.gmra.mrb[0].mxu0 %v4021
      %v4438 = vpop.f32.mrb[0].mxu0
      %v4439 = vadd.f32 %v4286, %v4438
      %v4440 = vpop.f32.mrb[0].mxu0
      %v4441 = vadd.f32 %v4288, %v4440
      %v4442 = vpop.f32.mrb[0].mxu0
      %v4443 = vadd.f32 %v4290, %v4442
      %v4444 = vpop.f32.mrb[0].mxu0
      %v4445 = vadd.f32 %v4292, %v4444
      %4446 = vmatprep.mubr.bf16.mxu0 0
      %4447 = vmatmul.mubr.bf16.gmra.mrb[0].mxu0 %v4024
      %v4448 = vpop.f32.mrb[0].mxu0
      %v4449 = vadd.f32 %v4296, %v4448
      %v4450 = vpop.f32.mrb[0].mxu0
      %v4451 = vadd.f32 %v4298, %v4450
      %v4452 = vpop.f32.mrb[0].mxu0
      %v4453 = vadd.f32 %v4300, %v4452
      %v4454 = vpop.f32.mrb[0].mxu0
      %v4455 = vadd.f32 %v4302, %v4454
      %4456 = vmatprep.mubr.bf16.mxu0 0
      %4457 = vmatmul.mubr.bf16.gmra.mrb[0].mxu0 %v4027
      %v4458 = vpop.f32.mrb[0].mxu0
      %v4459 = vadd.f32 %v4306, %v4458
      %v4460 = vpop.f32.mrb[0].mxu0
      %v4461 = vadd.f32 %v4308, %v4460
      %v4462 = vpop.f32.mrb[0].mxu0
      %v4463 = vadd.f32 %v4310, %v4462
      %v4464 = vpop.f32.mrb[0].mxu0
      %v4465 = vadd.f32 %v4312, %v4464
      %4466 = vmatprep.mubr.bf16.mxu0 0
      %4467 = vmatmul.mubr.bf16.gmra.mrb[0].mxu0 %v4030
      %v4468 = vpop.f32.mrb[0].mxu0
      %v4469 = vadd.f32 %v4316, %v4468
      %v4470 = vpop.f32.mrb[0].mxu0
      %v4471 = vadd.f32 %v4318, %v4470
      %v4472 = vpop.f32.mrb[0].mxu0
      %v4473 = vadd.f32 %v4320, %v4472
      %v4474 = vpop.f32.mrb[0].mxu0
      %v4475 = vadd.f32 %v4322, %v4474
      %4476 = vmatprep.mubr.bf16.mxu0 0
      %4477 = vmatmul.mubr.bf16.gmra.mrb[0].mxu0 %v4033
      %v4478 = vpop.f32.mrb[0].mxu0
      %v4479 = vadd.f32 %v4326, %v4478
      %v4480 = vpop.f32.mrb[0].mxu0
      %v4481 = vadd.f32 %v4328, %v4480
      %v4482 = vpop.f32.mrb[0].mxu0
      %v4483 = vadd.f32 %v4330, %v4482
      %v4484 = vpop.f32.mrb[0].mxu0
      %v4485 = vadd.f32 %v4332, %v4484
      %4486 = vmatprep.mubr.bf16.mxu0 0
      %4487 = vmatmul.mubr.bf16.gmra.mrb[0].mxu0 %v4036
      %v4488 = vpop.f32.mrb[0].mxu0
      %v4489 = vadd.f32 %v4336, %v4488
      %v4490 = vpop.f32.mrb[0].mxu0
      %v4491 = vadd.f32 %v4338, %v4490
      %v4492 = vpop.f32.mrb[0].mxu0
      %v4493 = vadd.f32 %v4340, %v4492
      %v4494 = vpop.f32.mrb[0].mxu0
      %v4495 = vadd.f32 %v4342, %v4494
      %4496 = vdwg.mxu0
      %4497 = vmatprep.subr.bf16.mxu0 0
      %4498 = vmatpush1.bf16.msra.mxu0 %v3800
      %4499 = vmatprep.subr.bf16.mxu0 0
      %4500 = vmatpush1.bf16.msra.mxu0 %v3803
      %4501 = vmatprep.subr.bf16.mxu0 0
      %4502 = vmatpush1.bf16.msra.mxu0 %v3806
      %4503 = vmatprep.subr.bf16.mxu0 0
      %4504 = vmatpush1.bf16.msra.mxu0 %v3809
      %4505 = vmatprep.subr.bf16.mxu0 0
      %4506 = vmatpush1.bf16.msra.mxu0 %v3812
      %4507 = vmatprep.subr.bf16.mxu0 0
      %4508 = vmatpush1.bf16.msra.mxu0 %v3815
      %4509 = vmatprep.subr.bf16.mxu0 0
      %4510 = vmatpush1.bf16.msra.mxu0 %v3818
      %4511 = vmatprep.subr.bf16.mxu0 0
      %4512 = vmatpush1.bf16.msra.mxu0 %v3821
      %4513 = vmatprep.subr.bf16.mxu0 0
      %4514 = vmatpush1.bf16.msra.mxu0 %v3824
      %4515 = vmatprep.subr.bf16.mxu0 0
      %4516 = vmatpush1.bf16.msra.mxu0 %v3827
      %4517 = vmatprep.subr.bf16.mxu0 0
      %4518 = vmatpush1.bf16.msra.mxu0 %v3830
      %4519 = vmatprep.subr.bf16.mxu0 0
      %4520 = vmatpush1.bf16.msra.mxu0 %v3833
      %4521 = vmatprep.subr.bf16.mxu0 0
      %4522 = vmatpush1.bf16.msra.mxu0 %v3836
      %4523 = vmatprep.subr.bf16.mxu0 0
      %4524 = vmatpush1.bf16.msra.mxu0 %v3839
      %4525 = vmatprep.subr.bf16.mxu0 0
      %4526 = vmatpush1.bf16.msra.mxu0 %v3842
      %4527 = vmatprep.subr.bf16.mxu0 0
      %4528 = vmatpush1.bf16.msra.mxu0 %v3845
      %4529 = vmatprep.mubr.bf16.mxu0 %v3262
      %4530 = vmatmul.mubr.bf16.gmra.mrb[0].mxu0 %v3261
      %v4531 = vpop.f32.mrb[0].mxu0
      %v4532 = vadd.f32 0.0, %v4531
      %v4533 = vpop.f32.mrb[0].mxu0
      %v4534 = vpop.f32.mrb[0].mxu0
      %v4535 = vadd.f32 0.0, %v4534
      %v4536 = vpop.f32.mrb[0].mxu0
      %4537 = vmatprep.mubr.bf16.mxu0 %v3267
      %4538 = vmatmul.mubr.bf16.gmra.mrb[0].mxu0 %v3266
      %v4539 = vpop.f32.mrb[0].mxu0
      %v4540 = vadd.f32 0.0, %v4539
      %v4541 = vpop.f32.mrb[0].mxu0
      %v4542 = vpop.f32.mrb[0].mxu0
      %v4543 = vadd.f32 0.0, %v4542
      %v4544 = vpop.f32.mrb[0].mxu0
      %4545 = vmatprep.mubr.bf16.mxu0 %v3272
      %4546 = vmatmul.mubr.bf16.gmra.mrb[0].mxu0 %v3271
      %v4547 = vpop.f32.mrb[0].mxu0
      %v4548 = vadd.f32 0.0, %v4547
      %v4549 = vpop.f32.mrb[0].mxu0
      %v4550 = vpop.f32.mrb[0].mxu0
      %v4551 = vadd.f32 0.0, %v4550
      %v4552 = vpop.f32.mrb[0].mxu0
      %4553 = vmatprep.mubr.bf16.mxu0 %v3277
      %4554 = vmatmul.mubr.bf16.gmra.mrb[0].mxu0 %v3276
      %v4555 = vpop.f32.mrb[0].mxu0
      %v4556 = vadd.f32 0.0, %v4555
      %v4557 = vpop.f32.mrb[0].mxu0
      %v4558 = vpop.f32.mrb[0].mxu0
      %v4559 = vadd.f32 0.0, %v4558
      %v4560 = vpop.f32.mrb[0].mxu0
      %4561 = vmatprep.mubr.bf16.mxu0 %v3282
      %4562 = vmatmul.mubr.bf16.gmra.mrb[0].mxu0 %v3281
      %v4563 = vpop.f32.mrb[0].mxu0
      %v4564 = vadd.f32 0.0, %v4563
      %v4565 = vpop.f32.mrb[0].mxu0
      %v4566 = vpop.f32.mrb[0].mxu0
      %v4567 = vadd.f32 0.0, %v4566
      %v4568 = vpop.f32.mrb[0].mxu0
      %4569 = vmatprep.mubr.bf16.mxu0 %v3287
      %4570 = vmatmul.mubr.bf16.gmra.mrb[0].mxu0 %v3286
      %v4571 = vpop.f32.mrb[0].mxu0
      %v4572 = vadd.f32 0.0, %v4571
      %v4573 = vpop.f32.mrb[0].mxu0
      %v4574 = vpop.f32.mrb[0].mxu0
      %v4575 = vadd.f32 0.0, %v4574
      %v4576 = vpop.f32.mrb[0].mxu0
      %4577 = vmatprep.mubr.bf16.mxu0 %v3292
      %4578 = vmatmul.mubr.bf16.gmra.mrb[0].mxu0 %v3291
      %v4579 = vpop.f32.mrb[0].mxu0
      %v4580 = vadd.f32 0.0, %v4579
      %v4581 = vpop.f32.mrb[0].mxu0
      %v4582 = vpop.f32.mrb[0].mxu0
      %v4583 = vadd.f32 0.0, %v4582
      %v4584 = vpop.f32.mrb[0].mxu0
      %4585 = vmatprep.mubr.bf16.mxu0 %v3297
      %4586 = vmatmul.mubr.bf16.gmra.mrb[0].mxu0 %v3296
      %v4587 = vpop.f32.mrb[0].mxu0
      %v4588 = vadd.f32 0.0, %v4587
      %v4589 = vpop.f32.mrb[0].mxu0
      %v4590 = vpop.f32.mrb[0].mxu0
      %v4591 = vadd.f32 0.0, %v4590
      %v4592 = vpop.f32.mrb[0].mxu0
      %4593 = vmatprep.mubr.bf16.mxu0 %v3302
      %4594 = vmatmul.mubr.bf16.gmra.mrb[0].mxu0 %v3301
      %v4595 = vpop.f32.mrb[0].mxu0
      %v4596 = vadd.f32 0.0, %v4595
      %v4597 = vpop.f32.mrb[0].mxu0
      %v4598 = vpop.f32.mrb[0].mxu0
      %v4599 = vadd.f32 0.0, %v4598
      %v4600 = vpop.f32.mrb[0].mxu0
      %4601 = vmatprep.mubr.bf16.mxu0 %v3307
      %4602 = vmatmul.mubr.bf16.gmra.mrb[0].mxu0 %v3306
      %v4603 = vpop.f32.mrb[0].mxu0
      %v4604 = vadd.f32 0.0, %v4603
      %v4605 = vpop.f32.mrb[0].mxu0
      %v4606 = vpop.f32.mrb[0].mxu0
      %v4607 = vadd.f32 0.0, %v4606
      %v4608 = vpop.f32.mrb[0].mxu0
      %4609 = vmatprep.mubr.bf16.mxu0 %v3312
      %4610 = vmatmul.mubr.bf16.gmra.mrb[0].mxu0 %v3311
      %v4611 = vpop.f32.mrb[0].mxu0
      %v4612 = vadd.f32 0.0, %v4611
      %v4613 = vpop.f32.mrb[0].mxu0
      %v4614 = vpop.f32.mrb[0].mxu0
      %v4615 = vadd.f32 0.0, %v4614
      %v4616 = vpop.f32.mrb[0].mxu0
      %4617 = vmatprep.mubr.bf16.mxu0 %v3317
      %4618 = vmatmul.mubr.bf16.gmra.mrb[0].mxu0 %v3316
      %v4619 = vpop.f32.mrb[0].mxu0
      %v4620 = vadd.f32 0.0, %v4619
      %v4621 = vpop.f32.mrb[0].mxu0
      %v4622 = vpop.f32.mrb[0].mxu0
      %v4623 = vadd.f32 0.0, %v4622
      %v4624 = vpop.f32.mrb[0].mxu0
      %4625 = vdwg.mxu0
      %4626 = vmatprep.subr.bf16.mxu0 0
      %4627 = vmatpush1.bf16.msra.mxu0 %v3848
      %4628 = vmatprep.subr.bf16.mxu0 0
      %4629 = vmatpush1.bf16.msra.mxu0 %v3851
      %4630 = vmatprep.subr.bf16.mxu0 0
      %4631 = vmatpush1.bf16.msra.mxu0 %v3854
      %4632 = vmatprep.subr.bf16.mxu0 0
      %4633 = vmatpush1.bf16.msra.mxu0 %v3857
      %4634 = vmatprep.subr.bf16.mxu0 0
      %4635 = vmatpush1.bf16.msra.mxu0 %v3860
      %4636 = vmatprep.subr.bf16.mxu0 0
      %4637 = vmatpush1.bf16.msra.mxu0 %v3863
      %4638 = vmatprep.subr.bf16.mxu0 0
      %4639 = vmatpush1.bf16.msra.mxu0 %v3866
      %4640 = vmatprep.subr.bf16.mxu0 0
      %4641 = vmatpush1.bf16.msra.mxu0 %v3869
      %4642 = vmatprep.subr.bf16.mxu0 0
      %4643 = vmatpush1.bf16.msra.mxu0 %v3872
      %4644 = vmatprep.subr.bf16.mxu0 0
      %4645 = vmatpush1.bf16.msra.mxu0 %v3875
      %4646 = vmatprep.subr.bf16.mxu0 0
      %4647 = vmatpush1.bf16.msra.mxu0 %v3878
      %4648 = vmatprep.subr.bf16.mxu0 0
      %4649 = vmatpush1.bf16.msra.mxu0 %v3881
      %4650 = vmatprep.subr.bf16.mxu0 0
      %4651 = vmatpush1.bf16.msra.mxu0 %v3884
      %4652 = vmatprep.subr.bf16.mxu0 0
      %4653 = vmatpush1.bf16.msra.mxu0 %v3887
      %4654 = vmatprep.subr.bf16.mxu0 0
      %4655 = vmatpush1.bf16.msra.mxu0 %v3890
      %4656 = vmatprep.subr.bf16.mxu0 0
      %4657 = vmatpush1.bf16.msra.mxu0 %v3893
      %4658 = vmatprep.mubr.bf16.mxu0 %v3264
      %4659 = vmatmul.mubr.bf16.gmra.mrb[0].mxu0 %v3263
      %v4660 = vpop.f32.mrb[0].mxu0
      %v4661 = vadd.f32 %v4532, %v4660
      %v4662 = vpop.f32.mrb[0].mxu0
      %v4663 = vpop.f32.mrb[0].mxu0
      %v4664 = vadd.f32 %v4535, %v4663
      %v4665 = vpop.f32.mrb[0].mxu0
      %4666 = vmatprep.mubr.bf16.mxu0 %v3269
      %4667 = vmatmul.mubr.bf16.gmra.mrb[0].mxu0 %v3268
      %v4668 = vpop.f32.mrb[0].mxu0
      %v4669 = vadd.f32 %v4540, %v4668
      %v4670 = vpop.f32.mrb[0].mxu0
      %v4671 = vpop.f32.mrb[0].mxu0
      %v4672 = vadd.f32 %v4543, %v4671
      %v4673 = vpop.f32.mrb[0].mxu0
      %4674 = vmatprep.mubr.bf16.mxu0 %v3274
      %4675 = vmatmul.mubr.bf16.gmra.mrb[0].mxu0 %v3273
      %v4676 = vpop.f32.mrb[0].mxu0
      %v4677 = vadd.f32 %v4548, %v4676
      %v4678 = vpop.f32.mrb[0].mxu0
      %v4679 = vpop.f32.mrb[0].mxu0
      %v4680 = vadd.f32 %v4551, %v4679
      %v4681 = vpop.f32.mrb[0].mxu0
      %4682 = vmatprep.mubr.bf16.mxu0 %v3279
      %4683 = vmatmul.mubr.bf16.gmra.mrb[0].mxu0 %v3278
      %v4684 = vpop.f32.mrb[0].mxu0
      %v4685 = vadd.f32 %v4556, %v4684
      %v4686 = vpop.f32.mrb[0].mxu0
      %v4687 = vpop.f32.mrb[0].mxu0
      %v4688 = vadd.f32 %v4559, %v4687
      %v4689 = vpop.f32.mrb[0].mxu0
      %4690 = vmatprep.mubr.bf16.mxu0 %v3284
      %4691 = vmatmul.mubr.bf16.gmra.mrb[0].mxu0 %v3283
      %v4692 = vpop.f32.mrb[0].mxu0
      %v4693 = vadd.f32 %v4564, %v4692
      %v4694 = vpop.f32.mrb[0].mxu0
      %v4695 = vpop.f32.mrb[0].mxu0
      %v4696 = vadd.f32 %v4567, %v4695
      %v4697 = vpop.f32.mrb[0].mxu0
      %4698 = vmatprep.mubr.bf16.mxu0 %v3289
      %4699 = vmatmul.mubr.bf16.gmra.mrb[0].mxu0 %v3288
      %v4700 = vpop.f32.mrb[0].mxu0
      %v4701 = vadd.f32 %v4572, %v4700
      %v4702 = vpop.f32.mrb[0].mxu0
      %v4703 = vpop.f32.mrb[0].mxu0
      %v4704 = vadd.f32 %v4575, %v4703
      %v4705 = vpop.f32.mrb[0].mxu0
      %4706 = vmatprep.mubr.bf16.mxu0 %v3294
      %4707 = vmatmul.mubr.bf16.gmra.mrb[0].mxu0 %v3293
      %v4708 = vpop.f32.mrb[0].mxu0
      %v4709 = vadd.f32 %v4580, %v4708
      %v4710 = vpop.f32.mrb[0].mxu0
      %v4711 = vpop.f32.mrb[0].mxu0
      %v4712 = vadd.f32 %v4583, %v4711
      %v4713 = vpop.f32.mrb[0].mxu0
      %4714 = vmatprep.mubr.bf16.mxu0 %v3299
      %4715 = vmatmul.mubr.bf16.gmra.mrb[0].mxu0 %v3298
      %v4716 = vpop.f32.mrb[0].mxu0
      %v4717 = vadd.f32 %v4588, %v4716
      %v4718 = vpop.f32.mrb[0].mxu0
      %v4719 = vpop.f32.mrb[0].mxu0
      %v4720 = vadd.f32 %v4591, %v4719
      %v4721 = vpop.f32.mrb[0].mxu0
      %4722 = vmatprep.mubr.bf16.mxu0 %v3304
      %4723 = vmatmul.mubr.bf16.gmra.mrb[0].mxu0 %v3303
      %v4724 = vpop.f32.mrb[0].mxu0
      %v4725 = vadd.f32 %v4596, %v4724
      %v4726 = vpop.f32.mrb[0].mxu0
      %v4727 = vpop.f32.mrb[0].mxu0
      %v4728 = vadd.f32 %v4599, %v4727
      %v4729 = vpop.f32.mrb[0].mxu0
      %4730 = vmatprep.mubr.bf16.mxu0 %v3309
      %4731 = vmatmul.mubr.bf16.gmra.mrb[0].mxu0 %v3308
      %v4732 = vpop.f32.mrb[0].mxu0
      %v4733 = vadd.f32 %v4604, %v4732
      %v4734 = vpop.f32.mrb[0].mxu0
      %v4735 = vpop.f32.mrb[0].mxu0
      %v4736 = vadd.f32 %v4607, %v4735
      %v4737 = vpop.f32.mrb[0].mxu0
      %4738 = vmatprep.mubr.bf16.mxu0 %v3314
      %4739 = vmatmul.mubr.bf16.gmra.mrb[0].mxu0 %v3313
      %v4740 = vpop.f32.mrb[0].mxu0
      %v4741 = vadd.f32 %v4612, %v4740
      %v4742 = vpop.f32.mrb[0].mxu0
      %v4743 = vpop.f32.mrb[0].mxu0
      %v4744 = vadd.f32 %v4615, %v4743
      %v4745 = vpop.f32.mrb[0].mxu0
      %4746 = vmatprep.mubr.bf16.mxu0 %v3319
      %4747 = vmatmul.mubr.bf16.gmra.mrb[0].mxu0 %v3318
      %v4748 = vpop.f32.mrb[0].mxu0
      %v4749 = vadd.f32 %v4620, %v4748
      %v4750 = vpop.f32.mrb[0].mxu0
      %v4751 = vpop.f32.mrb[0].mxu0
      %v4752 = vadd.f32 %v4623, %v4751
      %v4753 = vpop.f32.mrb[0].mxu0
      %4754 = vdwg.mxu0
      %4755 = vmatprep.subr.bf16.mxu0 0
      %4756 = vmatpush1.bf16.msra.mxu0 %v3896
      %4757 = vmatprep.subr.bf16.mxu0 0
      %4758 = vmatpush1.bf16.msra.mxu0 %v3899
      %4759 = vmatprep.subr.bf16.mxu0 0
      %4760 = vmatpush1.bf16.msra.mxu0 0
      %4761 = vmatprep.subr.bf16.mxu0 0
      %4762 = vmatpush1.bf16.msra.mxu0 0
      %4763 = vmatprep.subr.bf16.mxu0 0
      %4764 = vmatpush1.bf16.msra.mxu0 0
      %4765 = vmatprep.subr.bf16.mxu0 0
      %4766 = vmatpush1.bf16.msra.mxu0 0
      %4767 = vmatprep.subr.bf16.mxu0 0
      %4768 = vmatpush1.bf16.msra.mxu0 0
      %4769 = vmatprep.subr.bf16.mxu0 0
      %4770 = vmatpush1.bf16.msra.mxu0 0
      %4771 = vmatprep.subr.bf16.mxu0 0
      %4772 = vmatpush1.bf16.msra.mxu0 0
      %4773 = vmatprep.subr.bf16.mxu0 0
      %4774 = vmatpush1.bf16.msra.mxu0 0
      %4775 = vmatprep.subr.bf16.mxu0 0
      %4776 = vmatpush1.bf16.msra.mxu0 0
      %4777 = vmatprep.subr.bf16.mxu0 0
      %4778 = vmatpush1.bf16.msra.mxu0 0
      %4779 = vmatprep.subr.bf16.mxu0 0
      %4780 = vmatpush1.bf16.msra.mxu0 0
      %4781 = vmatprep.subr.bf16.mxu0 0
      %4782 = vmatpush1.bf16.msra.mxu0 0
      %4783 = vmatprep.subr.bf16.mxu0 0
      %4784 = vmatpush1.bf16.msra.mxu0 0
      %4785 = vmatprep.subr.bf16.mxu0 0
      %4786 = vmatpush1.bf16.msra.mxu0 0
      %4787 = vmatprep.mubr.bf16.mxu0 0
      %4788 = vmatmul.mubr.bf16.gmra.mrb[0].mxu0 %v4003
      %v4789 = vpop.f32.mrb[0].mxu0
      %v4790 = vadd.f32 %v4661, %v4789
      %v4791 = vpop.f32.mrb[0].mxu0
      %v4792 = vpop.f32.mrb[0].mxu0
      %v4793 = vadd.f32 %v4664, %v4792
      %v4794 = vpop.f32.mrb[0].mxu0
      %4795 = vmatprep.mubr.bf16.mxu0 0
      %4796 = vmatmul.mubr.bf16.gmra.mrb[0].mxu0 %v4006
      %v4797 = vpop.f32.mrb[0].mxu0
      %v4798 = vadd.f32 %v4669, %v4797
      %v4799 = vpop.f32.mrb[0].mxu0
      %v4800 = vpop.f32.mrb[0].mxu0
      %v4801 = vadd.f32 %v4672, %v4800
      %v4802 = vpop.f32.mrb[0].mxu0
      %4803 = vmatprep.mubr.bf16.mxu0 0
      %4804 = vmatmul.mubr.bf16.gmra.mrb[0].mxu0 %v4009
      %v4805 = vpop.f32.mrb[0].mxu0
      %v4806 = vadd.f32 %v4677, %v4805
      %v4807 = vpop.f32.mrb[0].mxu0
      %v4808 = vpop.f32.mrb[0].mxu0
      %v4809 = vadd.f32 %v4680, %v4808
      %v4810 = vpop.f32.mrb[0].mxu0
      %4811 = vmatprep.mubr.bf16.mxu0 0
      %4812 = vmatmul.mubr.bf16.gmra.mrb[0].mxu0 %v4012
      %v4813 = vpop.f32.mrb[0].mxu0
      %v4814 = vadd.f32 %v4685, %v4813
      %v4815 = vpop.f32.mrb[0].mxu0
      %v4816 = vpop.f32.mrb[0].mxu0
      %v4817 = vadd.f32 %v4688, %v4816
      %v4818 = vpop.f32.mrb[0].mxu0
      %4819 = vmatprep.mubr.bf16.mxu0 0
      %4820 = vmatmul.mubr.bf16.gmra.mrb[0].mxu0 %v4015
      %v4821 = vpop.f32.mrb[0].mxu0
      %v4822 = vadd.f32 %v4693, %v4821
      %v4823 = vpop.f32.mrb[0].mxu0
      %v4824 = vpop.f32.mrb[0].mxu0
      %v4825 = vadd.f32 %v4696, %v4824
      %v4826 = vpop.f32.mrb[0].mxu0
      %4827 = vmatprep.mubr.bf16.mxu0 0
      %4828 = vmatmul.mubr.bf16.gmra.mrb[0].mxu0 %v4018
      %v4829 = vpop.f32.mrb[0].mxu0
      %v4830 = vadd.f32 %v4701, %v4829
      %v4831 = vpop.f32.mrb[0].mxu0
      %v4832 = vpop.f32.mrb[0].mxu0
      %v4833 = vadd.f32 %v4704, %v4832
      %v4834 = vpop.f32.mrb[0].mxu0
      %4835 = vmatprep.mubr.bf16.mxu0 0
      %4836 = vmatmul.mubr.bf16.gmra.mrb[0].mxu0 %v4021
      %v4837 = vpop.f32.mrb[0].mxu0
      %v4838 = vadd.f32 %v4709, %v4837
      %v4839 = vpop.f32.mrb[0].mxu0
      %v4840 = vpop.f32.mrb[0].mxu0
      %v4841 = vadd.f32 %v4712, %v4840
      %v4842 = vpop.f32.mrb[0].mxu0
      %4843 = vmatprep.mubr.bf16.mxu0 0
      %4844 = vmatmul.mubr.bf16.gmra.mrb[0].mxu0 %v4024
      %v4845 = vpop.f32.mrb[0].mxu0
      %v4846 = vadd.f32 %v4717, %v4845
      %v4847 = vpop.f32.mrb[0].mxu0
      %v4848 = vpop.f32.mrb[0].mxu0
      %v4849 = vadd.f32 %v4720, %v4848
      %v4850 = vpop.f32.mrb[0].mxu0
      %4851 = vmatprep.mubr.bf16.mxu0 0
      %4852 = vmatmul.mubr.bf16.gmra.mrb[0].mxu0 %v4027
      %v4853 = vpop.f32.mrb[0].mxu0
      %v4854 = vadd.f32 %v4725, %v4853
      %v4855 = vpop.f32.mrb[0].mxu0
      %v4856 = vpop.f32.mrb[0].mxu0
      %v4857 = vadd.f32 %v4728, %v4856
      %v4858 = vpop.f32.mrb[0].mxu0
      %4859 = vmatprep.mubr.bf16.mxu0 0
      %4860 = vmatmul.mubr.bf16.gmra.mrb[0].mxu0 %v4030
      %v4861 = vpop.f32.mrb[0].mxu0
      %v4862 = vadd.f32 %v4733, %v4861
      %v4863 = vpop.f32.mrb[0].mxu0
      %v4864 = vpop.f32.mrb[0].mxu0
      %v4865 = vadd.f32 %v4736, %v4864
      %v4866 = vpop.f32.mrb[0].mxu0
      %4867 = vmatprep.mubr.bf16.mxu0 0
      %4868 = vmatmul.mubr.bf16.gmra.mrb[0].mxu0 %v4033
      %v4869 = vpop.f32.mrb[0].mxu0
      %v4870 = vadd.f32 %v4741, %v4869
      %v4871 = vpop.f32.mrb[0].mxu0
      %v4872 = vpop.f32.mrb[0].mxu0
      %v4873 = vadd.f32 %v4744, %v4872
      %v4874 = vpop.f32.mrb[0].mxu0
      %4875 = vmatprep.mubr.bf16.mxu0 0
      %4876 = vmatmul.mubr.bf16.gmra.mrb[0].mxu0 %v4036
      %v4877 = vpop.f32.mrb[0].mxu0
      %v4878 = vadd.f32 %v4749, %v4877
      %v4879 = vpop.f32.mrb[0].mxu0
      %v4880 = vpop.f32.mrb[0].mxu0
      %v4881 = vadd.f32 %v4752, %v4880
      %v4882 = vpop.f32.mrb[0].mxu0
      %4883 = vdwg.mxu0
      %v4884 = vld [vmem:[#allocation3 + $0x18] sm:$0xff]
      %v4885 = vld [vmem:[#allocation3 + $0x20] sm:$0xff]
      %v4886 = vld [vmem:[#allocation3 + $0x28] sm:$0xff]
      %v4887 = vld [vmem:[#allocation3 + $0x30] sm:$0xff]
      %v4888 = vld [vmem:[#allocation3 + $0x38] sm:$0xff]
      %v4889 = vld [vmem:[#allocation3 + $0x40] sm:$0xff]
      %v4890 = vld [vmem:[#allocation3 + $0x48] sm:$0xff]
      %v4891 = vld [vmem:[#allocation3 + $0x50] sm:$0xff]
      %v4892 = vld [vmem:[#allocation3 + $0x58] sm:$0xff]
      %v4893 = vld [vmem:[#allocation3 + $0x60] sm:$0xff]
      %v4894 = vld [vmem:[#allocation3 + $0x68] sm:$0xff]
      %v4895 = vld [vmem:[#allocation3 + $0x70] sm:$0xff]
      %v4896 = vld [vmem:[#allocation3 + $0x78] sm:$0xff]
      %v4897 = vld [vmem:[#allocation3 + $0x80] sm:$0xff]
      %v4898 = vld [vmem:[#allocation3 + $0x88] sm:$0xff]
      %v4899 = vld [vmem:[#allocation3 + $0x90] sm:$0xff]
      %v4900 = vld [vmem:[#allocation3 + $0x98] sm:$0xff]
      %v4901 = vld [vmem:[#allocation3 + $0xa0] sm:$0xff]
      %v4902 = vld [vmem:[#allocation3 + $0xa8] sm:$0xff]
      %v4903 = vld [vmem:[#allocation3 + $0xb0] sm:$0xff]
      %v4904 = vld [vmem:[#allocation3 + $0xb8] sm:$0xff]
      %v4905 = vld [vmem:[#allocation3 + $0xc0] sm:$0xff]
      %v4906 = vld [vmem:[#allocation3 + $0xc8] sm:$0xff]
      %v4907 = vld [vmem:[#allocation3 + $0xd0] sm:$0xff]
      %v4908 = vld [vmem:[#allocation3 + $0xd8] sm:$0xff]
      %v4909 = vld [vmem:[#allocation3 + $0xe0] sm:$0xff]
      %v4910 = vld [vmem:[#allocation3 + $0xe8] sm:$0xff]
      %v4911 = vld [vmem:[#allocation3 + $0xf0] sm:$0xff]
      %v4912 = vld [vmem:[#allocation3 + $0xf8] sm:$0xff]
      %v4913 = vld [vmem:[#allocation3 + $0x100] sm:$0xff]
      %v4914 = vld [vmem:[#allocation3 + $0x108] sm:$0xff]
      %v4915 = vld [vmem:[#allocation3 + $0x110] sm:$0xff]
      %v4916 = vld [vmem:[#allocation3 + $0x118] sm:$0xff]
      %v4917 = vld [vmem:[#allocation3 + $0x120] sm:$0xff]
      %v4918 = vld [vmem:[#allocation3 + $0x128] sm:$0xff]
      %v4919 = vld [vmem:[#allocation3 + $0x130] sm:$0xff]
      %v4920 = vld [vmem:[#allocation3 + $0x138] sm:$0xff]
      %v4921 = vld [vmem:[#allocation3 + $0x140] sm:$0xff]
      %v4922 = vld [vmem:[#allocation3 + $0x148] sm:$0xff]
      %v4923 = vld [vmem:[#allocation3 + $0x150] sm:$0xff]
      %v4924 = vld [vmem:[#allocation3 + $0x158] sm:$0xff]
      %v4925 = vld [vmem:[#allocation3 + $0x160] sm:$0xff]
      %v4926 = vld [vmem:[#allocation3 + $0x168] sm:$0xff]
      %v4927 = vld [vmem:[#allocation3 + $0x170] sm:$0xff]
      %v4928 = vld [vmem:[#allocation3 + $0x178] sm:$0xff]
      %v4929 = vld [vmem:[#allocation3 + $0x180] sm:$0xff]
      %v4930 = vld [vmem:[#allocation3 + $0x188] sm:$0xff]
      %v4931 = vld [vmem:[#allocation3 + $0x190] sm:$0xff]
      %v4932 = vld [vmem:[#allocation3 + $0x198] sm:$0xff]
      %v4933 = vld [vmem:[#allocation3 + $0x1a0] sm:$0xff]
      %v4934 = vld [vmem:[#allocation3 + $0x1a8] sm:$0xff]
      %v4935 = vld [vmem:[#allocation3 + $0x1b0] sm:$0xff]
      %v4936 = vld [vmem:[#allocation3 + $0x1b8] sm:$0xff]
      %v4937 = vld [vmem:[#allocation3 + $0x1c0] sm:$0xff]
      %v4938 = vld [vmem:[#allocation3 + $0x1c8] sm:$0xff]
      %v4939 = vld [vmem:[#allocation3 + $0x1d0] sm:$0xff]
      %v4940 = vld [vmem:[#allocation3 + $0x1d8] sm:$0xff]
      %v4941 = vld [vmem:[#allocation3 + $0x1e0] sm:$0xff]
      %v4942 = vld [vmem:[#allocation3 + $0x1e8] sm:$0xff]
      %v4943 = vld [vmem:[#allocation3 + $0x1f0] sm:$0xff]
      %v4944 = vld [vmem:[#allocation3 + $0x1f8] sm:$0xff]
      %v4945 = vld [vmem:[#allocation3 + $0x200] sm:$0xff]
      %v4946 = vld [vmem:[#allocation3 + $0x208] sm:$0xff]
      %v4947 = vld [vmem:[#allocation3 + $0x210] sm:$0xff]
      %v4948 = vld [vmem:[#allocation3 + $0x218] sm:$0xff]
      %v4949 = vld [vmem:[#allocation3 + $0x220] sm:$0xff]
      %v4950 = vld [vmem:[#allocation3 + $0x228] sm:$0xff]
      %v4951 = vld [vmem:[#allocation3 + $0x230] sm:$0xff]
      %v4952 = vld [vmem:[#allocation3 + $0x238] sm:$0xff]
      %v4953 = vld [vmem:[#allocation3 + $0x240] sm:$0xff]
      %v4954 = vld [vmem:[#allocation3 + $0x248] sm:$0xff]
      %v4955 = vld [vmem:[#allocation3 + $0x250] sm:$0xff]
      %v4956 = vadd.f32 %v4884, %v4379
      %v4957 = vadd.f32 %v4885, %v4381
      %v4958 = vadd.f32 %v4886, %v4790
      %v4959 = vadd.f32 %v4887, %v4383
      %v4960 = vadd.f32 %v4888, %v4385
      %v4961 = vadd.f32 %v4889, %v4793
      %v4962 = vadd.f32 %v4890, %v4389
      %v4963 = vadd.f32 %v4891, %v4391
      %v4964 = vadd.f32 %v4892, %v4798
      %v4965 = vadd.f32 %v4893, %v4393
      %v4966 = vadd.f32 %v4894, %v4395
      %v4967 = vadd.f32 %v4895, %v4801
      %v4968 = vadd.f32 %v4896, %v4399
      %v4969 = vadd.f32 %v4897, %v4401
      %v4970 = vadd.f32 %v4898, %v4806
      %v4971 = vadd.f32 %v4899, %v4403
      %v4972 = vadd.f32 %v4900, %v4405
      %v4973 = vadd.f32 %v4901, %v4809
      %v4974 = vadd.f32 %v4902, %v4409
      %v4975 = vadd.f32 %v4903, %v4411
      %v4976 = vadd.f32 %v4904, %v4814
      %v4977 = vadd.f32 %v4905, %v4413
      %v4978 = vadd.f32 %v4906, %v4415
      %v4979 = vadd.f32 %v4907, %v4817
      %v4980 = vadd.f32 %v4908, %v4419
      %v4981 = vadd.f32 %v4909, %v4421
      %v4982 = vadd.f32 %v4910, %v4822
      %v4983 = vadd.f32 %v4911, %v4423
      %v4984 = vadd.f32 %v4912, %v4425
      %v4985 = vadd.f32 %v4913, %v4825
      %v4986 = vadd.f32 %v4914, %v4429
      %v4987 = vadd.f32 %v4915, %v4431
      %v4988 = vadd.f32 %v4916, %v4830
      %v4989 = vadd.f32 %v4917, %v4433
      %v4990 = vadd.f32 %v4918, %v4435
      %v4991 = vadd.f32 %v4919, %v4833
      %v4992 = vadd.f32 %v4920, %v4439
      %v4993 = vadd.f32 %v4921, %v4441
      %v4994 = vadd.f32 %v4922, %v4838
      %v4995 = vadd.f32 %v4923, %v4443
      %v4996 = vadd.f32 %v4924, %v4445
      %v4997 = vadd.f32 %v4925, %v4841
      %v4998 = vadd.f32 %v4926, %v4449
      %v4999 = vadd.f32 %v4927, %v4451
      %v5000 = vadd.f32 %v4928, %v4846
      %v5001 = vadd.f32 %v4929, %v4453
      %v5002 = vadd.f32 %v4930, %v4455
      %v5003 = vadd.f32 %v4931, %v4849
      %v5004 = vadd.f32 %v4932, %v4459
      %v5005 = vadd.f32 %v4933, %v4461
      %v5006 = vadd.f32 %v4934, %v4854
      %v5007 = vadd.f32 %v4935, %v4463
      %v5008 = vadd.f32 %v4936, %v4465
      %v5009 = vadd.f32 %v4937, %v4857
      %v5010 = vadd.f32 %v4938, %v4469
      %v5011 = vadd.f32 %v4939, %v4471
      %v5012 = vadd.f32 %v4940, %v4862
      %v5013 = vadd.f32 %v4941, %v4473
      %v5014 = vadd.f32 %v4942, %v4475
      %v5015 = vadd.f32 %v4943, %v4865
      %v5016 = vadd.f32 %v4944, %v4479
      %v5017 = vadd.f32 %v4945, %v4481
      %v5018 = vadd.f32 %v4946, %v4870
      %v5019 = vadd.f32 %v4947, %v4483
      %v5020 = vadd.f32 %v4948, %v4485
      %v5021 = vadd.f32 %v4949, %v4873
      %v5022 = vadd.f32 %v4950, %v4489
      %v5023 = vadd.f32 %v4951, %v4491
      %v5024 = vadd.f32 %v4952, %v4878
      %v5025 = vadd.f32 %v4953, %v4493
      %v5026 = vadd.f32 %v4954, %v4495
      %v5027 = vadd.f32 %v4955, %v4881
      %5028 = vst [vmem:[#allocation3 + $0x18] sm:$0xff] %v4956
      %5029 = vst [vmem:[#allocation3 + $0x20] sm:$0xff] %v4957
      %5030 = vst [vmem:[#allocation3 + $0x28] sm:$0xff] %v4958
      %5031 = vst [vmem:[#allocation3 + $0x30] sm:$0xff] %v4959
      %5032 = vst [vmem:[#allocation3 + $0x38] sm:$0xff] %v4960
      %5033 = vst [vmem:[#allocation3 + $0x40] sm:$0xff] %v4961
      %5034 = vst [vmem:[#allocation3 + $0x48] sm:$0xff] %v4962
      %5035 = vst [vmem:[#allocation3 + $0x50] sm:$0xff] %v4963
      %5036 = vst [vmem:[#allocation3 + $0x58] sm:$0xff] %v4964
      %5037 = vst [vmem:[#allocation3 + $0x60] sm:$0xff] %v4965
      %5038 = vst [vmem:[#allocation3 + $0x68] sm:$0xff] %v4966
      %5039 = vst [vmem:[#allocation3 + $0x70] sm:$0xff] %v4967
      %5040 = vst [vmem:[#allocation3 + $0x78] sm:$0xff] %v4968
      %5041 = vst [vmem:[#allocation3 + $0x80] sm:$0xff] %v4969
      %5042 = vst [vmem:[#allocation3 + $0x88] sm:$0xff] %v4970
      %5043 = vst [vmem:[#allocation3 + $0x90] sm:$0xff] %v4971
      %5044 = vst [vmem:[#allocation3 + $0x98] sm:$0xff] %v4972
      %5045 = vst [vmem:[#allocation3 + $0xa0] sm:$0xff] %v4973
      %5046 = vst [vmem:[#allocation3 + $0xa8] sm:$0xff] %v4974
      %5047 = vst [vmem:[#allocation3 + $0xb0] sm:$0xff] %v4975
      %5048 = vst [vmem:[#allocation3 + $0xb8] sm:$0xff] %v4976
      %5049 = vst [vmem:[#allocation3 + $0xc0] sm:$0xff] %v4977
      %5050 = vst [vmem:[#allocation3 + $0xc8] sm:$0xff] %v4978
      %5051 = vst [vmem:[#allocation3 + $0xd0] sm:$0xff] %v4979
      %5052 = vst [vmem:[#allocation3 + $0xd8] sm:$0xff] %v4980
      %5053 = vst [vmem:[#allocation3 + $0xe0] sm:$0xff] %v4981
      %5054 = vst [vmem:[#allocation3 + $0xe8] sm:$0xff] %v4982
      %5055 = vst [vmem:[#allocation3 + $0xf0] sm:$0xff] %v4983
      %5056 = vst [vmem:[#allocation3 + $0xf8] sm:$0xff] %v4984
      %5057 = vst [vmem:[#allocation3 + $0x100] sm:$0xff] %v4985
      %5058 = vst [vmem:[#allocation3 + $0x108] sm:$0xff] %v4986
      %5059 = vst [vmem:[#allocation3 + $0x110] sm:$0xff] %v4987
      %5060 = vst [vmem:[#allocation3 + $0x118] sm:$0xff] %v4988
      %5061 = vst [vmem:[#allocation3 + $0x120] sm:$0xff] %v4989
      %5062 = vst [vmem:[#allocation3 + $0x128] sm:$0xff] %v4990
      %5063 = vst [vmem:[#allocation3 + $0x130] sm:$0xff] %v4991
      %5064 = vst [vmem:[#allocation3 + $0x138] sm:$0xff] %v4992
      %5065 = vst [vmem:[#allocation3 + $0x140] sm:$0xff] %v4993
      %5066 = vst [vmem:[#allocation3 + $0x148] sm:$0xff] %v4994
      %5067 = vst [vmem:[#allocation3 + $0x150] sm:$0xff] %v4995
      %5068 = vst [vmem:[#allocation3 + $0x158] sm:$0xff] %v4996
      %5069 = vst [vmem:[#allocation3 + $0x160] sm:$0xff] %v4997
      %5070 = vst [vmem:[#allocation3 + $0x168] sm:$0xff] %v4998
      %5071 = vst [vmem:[#allocation3 + $0x170] sm:$0xff] %v4999
      %5072 = vst [vmem:[#allocation3 + $0x178] sm:$0xff] %v5000
      %5073 = vst [vmem:[#allocation3 + $0x180] sm:$0xff] %v5001
      %5074 = vst [vmem:[#allocation3 + $0x188] sm:$0xff] %v5002
      %5075 = vst [vmem:[#allocation3 + $0x190] sm:$0xff] %v5003
      %5076 = vst [vmem:[#allocation3 + $0x198] sm:$0xff] %v5004
      %5077 = vst [vmem:[#allocation3 + $0x1a0] sm:$0xff] %v5005
      %5078 = vst [vmem:[#allocation3 + $0x1a8] sm:$0xff] %v5006
      %5079 = vst [vmem:[#allocation3 + $0x1b0] sm:$0xff] %v5007
      %5080 = vst [vmem:[#allocation3 + $0x1b8] sm:$0xff] %v5008
      %5081 = vst [vmem:[#allocation3 + $0x1c0] sm:$0xff] %v5009
      %5082 = vst [vmem:[#allocation3 + $0x1c8] sm:$0xff] %v5010
      %5083 = vst [vmem:[#allocation3 + $0x1d0] sm:$0xff] %v5011
      %5084 = vst [vmem:[#allocation3 + $0x1d8] sm:$0xff] %v5012
      %5085 = vst [vmem:[#allocation3 + $0x1e0] sm:$0xff] %v5013
      %5086 = vst [vmem:[#allocation3 + $0x1e8] sm:$0xff] %v5014
      %5087 = vst [vmem:[#allocation3 + $0x1f0] sm:$0xff] %v5015
      %5088 = vst [vmem:[#allocation3 + $0x1f8] sm:$0xff] %v5016
      %5089 = vst [vmem:[#allocation3 + $0x200] sm:$0xff] %v5017
      %5090 = vst [vmem:[#allocation3 + $0x208] sm:$0xff] %v5018
      %5091 = vst [vmem:[#allocation3 + $0x210] sm:$0xff] %v5019
      %5092 = vst [vmem:[#allocation3 + $0x218] sm:$0xff] %v5020
      %5093 = vst [vmem:[#allocation3 + $0x220] sm:$0xff] %v5021
      %5094 = vst [vmem:[#allocation3 + $0x228] sm:$0xff] %v5022
      %5095 = vst [vmem:[#allocation3 + $0x230] sm:$0xff] %v5023
      %5096 = vst [vmem:[#allocation3 + $0x238] sm:$0xff] %v5024
      %5097 = vst [vmem:[#allocation3 + $0x240] sm:$0xff] %v5025
      %5098 = vst [vmem:[#allocation3 + $0x248] sm:$0xff] %v5026
      %5099 = vst [vmem:[#allocation3 + $0x250] sm:$0xff] %v5027
      %v5100 = vld [vmem:[#allocation2 + $0x50] sm:$0xff]
      %v5101 = vld [vmem:[#allocation2 + $0x58] sm:$0xff]
      %v5102 = vld [vmem:[#allocation2 + $0x60] sm:$0xff]
      %v5103 = vld [vmem:[#allocation2 + $0x68] sm:$0xff]
      %v5104 = vld [vmem:[#allocation2 + $0x70] sm:$0xff]
      %v5105 = vld [vmem:[#allocation2 + $0x78] sm:$0xff]
      %v5106 = vld [vmem:[#allocation2 + $0x80] sm:$0xff]
      %v5107 = vld [vmem:[#allocation2 + $0x88] sm:$0xff]
      %v5108 = vld [vmem:[#allocation2 + $0x90] sm:$0xff]
      %v5109 = vld [vmem:[#allocation2 + $0x98] sm:$0xff]
      %v5110 = vld [vmem:[#allocation2 + $0xa0] sm:$0xff]
      %v5111 = vld [vmem:[#allocation2 + $0xa8] sm:$0xff]
      %v5112 = vld [vmem:[#allocation2 + $0xb0] sm:$0xff]
      %v5113 = vld [vmem:[#allocation2 + $0xb8] sm:$0xff]
      %v5114 = vld [vmem:[#allocation2 + $0xc0] sm:$0xff]
      %v5115 = vld [vmem:[#allocation2 + $0xc8] sm:$0xff]
      %v5116 = vld [vmem:[#allocation2 + $0xd0] sm:$0xff]
      %v5117 = vld [vmem:[#allocation2 + $0xd8] sm:$0xff]
      %v5118 = vld [vmem:[#allocation2 + $0xe0] sm:$0xff]
      %v5119 = vld [vmem:[#allocation2 + $0xe8] sm:$0xff]
      %v5120 = vld [vmem:[#allocation2 + $0xf0] sm:$0xff]
      %v5121 = vld [vmem:[#allocation2 + $0xf8] sm:$0xff]
      %v5122 = vld [vmem:[#allocation2 + $0x100] sm:$0xff]
      %v5123 = vld [vmem:[#allocation2 + $0x108] sm:$0xff]
      %v5124 = vld [vmem:[#allocation2 + $0x110] sm:$0xff]
      %v5125 = vld [vmem:[#allocation2 + $0x118] sm:$0xff]
      %v5126 = vld [vmem:[#allocation2 + $0x120] sm:$0xff]
      %v5127 = vld [vmem:[#allocation2 + $0x128] sm:$0xff]
      %v5128 = vld [vmem:[#allocation2 + $0x130] sm:$0xff]
      %v5129 = vld [vmem:[#allocation2 + $0x138] sm:$0xff]
      %v5130 = vld [vmem:[#allocation2 + $0x140] sm:$0xff]
      %v5131 = vld [vmem:[#allocation2 + $0x148] sm:$0xff]
      %v5132 = vld [vmem:[#allocation2 + $0x150] sm:$0xff]
      %v5133 = vld [vmem:[#allocation2 + $0x158] sm:$0xff]
      %v5134 = vld [vmem:[#allocation2 + $0x160] sm:$0xff]
      %v5135 = vld [vmem:[#allocation2 + $0x168] sm:$0xff]
      %v5136 = vld [vmem:[#allocation2 + $0x170] sm:$0xff]
      %v5137 = vld [vmem:[#allocation2 + $0x178] sm:$0xff]
      %v5138 = vld [vmem:[#allocation2 + $0x180] sm:$0xff]
      %v5139 = vld [vmem:[#allocation2 + $0x188] sm:$0xff]
      %v5140 = vld [vmem:[#allocation2 + $0x190] sm:$0xff]
      %v5141 = vld [vmem:[#allocation2 + $0x198] sm:$0xff]
      %v5142 = vld [vmem:[#allocation2 + $0x1a0] sm:$0xff]
      %v5143 = vld [vmem:[#allocation2 + $0x1a8] sm:$0xff]
      %v5144 = vld [vmem:[#allocation2 + $0x1b0] sm:$0xff]
      %v5145 = vld [vmem:[#allocation2 + $0x1b8] sm:$0xff]
      %v5146 = vld [vmem:[#allocation2 + $0x1c0] sm:$0xff]
      %v5147 = vld [vmem:[#allocation2 + $0x1c8] sm:$0xff]
      %v5148 = vld [vmem:[#allocation2 + $0x1d0] sm:$0xff]
      %v5149 = vld [vmem:[#allocation2 + $0x1d8] sm:$0xff]
      %v5150 = vld [vmem:[#allocation2 + $0x1e0] sm:$0xff]
      %v5151 = vld [vmem:[#allocation2 + $0x1e8] sm:$0xff]
      %v5152 = vld [vmem:[#allocation2 + $0x1f0] sm:$0xff]
      %v5153 = vld [vmem:[#allocation2 + $0x1f8] sm:$0xff]
      %v5154 = vld [vmem:[#allocation2 + $0x200] sm:$0xff]
      %v5155 = vld [vmem:[#allocation2 + $0x208] sm:$0xff]
      %v5156 = vld [vmem:[#allocation2 + $0x210] sm:$0xff]
      %v5157 = vld [vmem:[#allocation2 + $0x218] sm:$0xff]
      %v5158 = vld [vmem:[#allocation2 + $0x220] sm:$0xff]
      %v5159 = vld [vmem:[#allocation2 + $0x228] sm:$0xff]
      %s5160 = scalar_lea.vmem %s6, 1632
      %v5161 = vld [vmem:[%s5160] sm:$0xff]
      %v5162 = vld [vmem:[%s5160 + $0x8] sm:$0xf]
      %v5163 = vld [vmem:[%s5160 + $0xc] sm:$0xff]
      %v5164 = vld [vmem:[%s5160 + $0x14] sm:$0xf]
      %v5165 = vld [vmem:[%s5160 + $0x18] sm:$0xff]
      %v5166 = vld [vmem:[%s5160 + $0x20] sm:$0xf]
      %v5167 = vld [vmem:[%s5160 + $0x24] sm:$0xff]
      %v5168 = vld [vmem:[%s5160 + $0x2c] sm:$0xf]
      %v5169 = vld [vmem:[%s5160 + $0x30] sm:$0xff]
      %v5170 = vld [vmem:[%s5160 + $0x38] sm:$0xf]
      %v5171 = vld [vmem:[%s5160 + $0x3c] sm:$0xff]
      %v5172 = vld [vmem:[%s5160 + $0x44] sm:$0xf]
      %v5173 = vld [vmem:[%s5160 + $0x48] sm:$0xff]
      %v5174 = vld [vmem:[%s5160 + $0x50] sm:$0xf]
      %v5175 = vld [vmem:[%s5160 + $0x54] sm:$0xff]
      %v5176 = vld [vmem:[%s5160 + $0x5c] sm:$0xf]
      %v5177 = vld [vmem:[%s5160 + $0x60] sm:$0xff]
      %v5178 = vld [vmem:[%s5160 + $0x68] sm:$0xf]
      %v5179 = vld [vmem:[%s5160 + $0x6c] sm:$0xff]
      %v5180 = vld [vmem:[%s5160 + $0x74] sm:$0xf]
      %v5181 = vld [vmem:[%s5160 + $0x78] sm:$0xff]
      %v5182 = vld [vmem:[%s5160 + $0x80] sm:$0xf]
      %v5183 = vld [vmem:[%s5160 + $0x84] sm:$0xff]
      %v5184 = vld [vmem:[%s5160 + $0x8c] sm:$0xf]
      %v5185 = vld [vmem:[%s5160 + $0x90] sm:$0xff]
      %v5186 = vld [vmem:[%s5160 + $0x98] sm:$0xf]
      %v5187 = vld [vmem:[%s5160 + $0x9c] sm:$0xff]
      %v5188 = vld [vmem:[%s5160 + $0xa4] sm:$0xf]
      %v5189 = vld [vmem:[%s5160 + $0xa8] sm:$0xff]
      %v5190 = vld [vmem:[%s5160 + $0xb0] sm:$0xf]
      %v5191 = vld [vmem:[%s5160 + $0xb4] sm:$0xff]
      %v5192 = vld [vmem:[%s5160 + $0xbc] sm:$0xf]
      %v5193 = vld [vmem:[%s5160 + $0xc0] sm:$0xff]
      %v5194 = vld [vmem:[%s5160 + $0xc8] sm:$0xf]
      %v5195 = vld [vmem:[%s5160 + $0xcc] sm:$0xff]
      %v5196 = vld [vmem:[%s5160 + $0xd4] sm:$0xf]
      %v5197 = vld [vmem:[%s5160 + $0xd8] sm:$0xff]
      %v5198 = vld [vmem:[%s5160 + $0xe0] sm:$0xf]
      %v5199 = vld [vmem:[%s5160 + $0xe4] sm:$0xff]
      %v5200 = vld [vmem:[%s5160 + $0xec] sm:$0xf]
      %v5201 = vld [vmem:[%s5160 + $0xf0] sm:$0xff]
      %v5202 = vld [vmem:[%s5160 + $0xf8] sm:$0xf]
      %v5203 = vld [vmem:[%s5160 + $0xfc] sm:$0xff]
      %v5204 = vld [vmem:[%s5160 + $0x104] sm:$0xf]
      %v5205 = vld [vmem:[%s5160 + $0x108] sm:$0xff]
      %v5206 = vld [vmem:[%s5160 + $0x110] sm:$0xf]
      %v5207 = vld [vmem:[%s5160 + $0x114] sm:$0xff]
      %v5208 = vld [vmem:[%s5160 + $0x11c] sm:$0xf]
      %v5209 = vld [vmem:[%s5160 + $0x120] sm:$0xff]
      %v5210 = vld [vmem:[%s5160 + $0x128] sm:$0xf]
      %v5211 = vld [vmem:[%s5160 + $0x12c] sm:$0xff]
      %v5212 = vld [vmem:[%s5160 + $0x134] sm:$0xf]
      %v5213 = vld [vmem:[%s5160 + $0x138] sm:$0xff]
      %v5214 = vld [vmem:[%s5160 + $0x140] sm:$0xf]
      %v5215 = vld [vmem:[%s5160 + $0x144] sm:$0xff]
      %v5216 = vld [vmem:[%s5160 + $0x14c] sm:$0xf]
      %v5217 = vld [vmem:[%s5160 + $0x150] sm:$0xff]
      %v5218 = vld [vmem:[%s5160 + $0x158] sm:$0xf]
      %v5219 = vld [vmem:[%s5160 + $0x15c] sm:$0xff]
      %v5220 = vld [vmem:[%s5160 + $0x164] sm:$0xf]
      %v5221 = vld [vmem:[%s5160 + $0x168] sm:$0xff]
      %v5222 = vld [vmem:[%s5160 + $0x170] sm:$0xf]
      %v5223 = vld [vmem:[%s5160 + $0x174] sm:$0xff]
      %v5224 = vld [vmem:[%s5160 + $0x17c] sm:$0xf]
      %v5225 = vld [vmem:[%s5160 + $0x180] sm:$0xff]
      %v5226 = vld [vmem:[%s5160 + $0x188] sm:$0xf]
      %v5227 = vld [vmem:[%s5160 + $0x18c] sm:$0xff]
      %v5228 = vld [vmem:[%s5160 + $0x194] sm:$0xf]
      %v5229 = vld [vmem:[%s5160 + $0x198] sm:$0xff]
      %v5230 = vld [vmem:[%s5160 + $0x1a0] sm:$0xf]
      %v5231 = vld [vmem:[%s5160 + $0x1a4] sm:$0xff]
      %v5232 = vld [vmem:[%s5160 + $0x1ac] sm:$0xf]
      %v5233 = vld [vmem:[%s5160 + $0x1b0] sm:$0xff]
      %v5234 = vld [vmem:[%s5160 + $0x1b8] sm:$0xf]
      %v5235 = vld [vmem:[%s5160 + $0x1bc] sm:$0xff]
      %v5236 = vld [vmem:[%s5160 + $0x1c4] sm:$0xf]
      %v5237 = vld [vmem:[%s5160 + $0x1c8] sm:$0xff]
      %v5238 = vld [vmem:[%s5160 + $0x1d0] sm:$0xf]
      %v5239 = vld [vmem:[%s5160 + $0x1d4] sm:$0xff]
      %v5240 = vld [vmem:[%s5160 + $0x1dc] sm:$0xf]
      %v5241 = vld [vmem:[%s5160 + $0x1e0] sm:$0xff]
      %v5242 = vld [vmem:[%s5160 + $0x1e8] sm:$0xf]
      %v5243 = vld [vmem:[%s5160 + $0x1ec] sm:$0xff]
      %v5244 = vld [vmem:[%s5160 + $0x1f4] sm:$0xf]
      %v5245 = vld [vmem:[%s5160 + $0x1f8] sm:$0xff]
      %v5246 = vld [vmem:[%s5160 + $0x200] sm:$0xf]
      %v5247 = vld [vmem:[%s5160 + $0x204] sm:$0xff]
      %v5248 = vld [vmem:[%s5160 + $0x20c] sm:$0xf]
      %v5249 = vld [vmem:[%s5160 + $0x210] sm:$0xff]
      %v5250 = vld [vmem:[%s5160 + $0x218] sm:$0xf]
      %v5251 = vld [vmem:[%s5160 + $0x21c] sm:$0xff]
      %v5252 = vld [vmem:[%s5160 + $0x224] sm:$0xf]
      %v5253 = vld [vmem:[%s5160 + $0x228] sm:$0xff]
      %v5254 = vld [vmem:[%s5160 + $0x230] sm:$0xf]
      %v5255 = vld [vmem:[%s5160 + $0x234] sm:$0xff]
      %v5256 = vld [vmem:[%s5160 + $0x23c] sm:$0xf]
      %v5257 = vld [vmem:[%s5160 + $0x240] sm:$0xff]
      %v5258 = vld [vmem:[%s5160 + $0x248] sm:$0xf]
      %v5259 = vld [vmem:[%s5160 + $0x24c] sm:$0xff]
      %v5260 = vld [vmem:[%s5160 + $0x254] sm:$0xf]
      %v5261 = vld [vmem:[%s5160 + $0x258] sm:$0xff]
      %v5262 = vld [vmem:[%s5160 + $0x260] sm:$0xf]
      %v5263 = vld [vmem:[%s5160 + $0x264] sm:$0xff]
      %v5264 = vld [vmem:[%s5160 + $0x26c] sm:$0xf]
      %v5265 = vld [vmem:[%s5160 + $0x270] sm:$0xff]
      %v5266 = vld [vmem:[%s5160 + $0x278] sm:$0xf]
      %v5267 = vld [vmem:[%s5160 + $0x27c] sm:$0xff]
      %v5268 = vld [vmem:[%s5160 + $0x284] sm:$0xf]
      %v5269 = vld [vmem:[%s5160 + $0x288] sm:$0xff]
      %v5270 = vld [vmem:[%s5160 + $0x290] sm:$0xf]
      %v5271 = vld [vmem:[%s5160 + $0x294] sm:$0xff]
      %v5272 = vld [vmem:[%s5160 + $0x29c] sm:$0xf]
      %v5273 = vld [vmem:[%s5160 + $0x2a0] sm:$0xff]
      %v5274 = vld [vmem:[%s5160 + $0x2a8] sm:$0xf]
      %v5275 = vld [vmem:[%s5160 + $0x2ac] sm:$0xff]
      %v5276 = vld [vmem:[%s5160 + $0x2b4] sm:$0xf]
      %v5277 = vld [vmem:[%s5160 + $0x2b8] sm:$0xff]
      %v5278 = vld [vmem:[%s5160 + $0x2c0] sm:$0xf]
      %v5279 = vld [vmem:[%s5160 + $0x2c4] sm:$0xff]
      %v5280 = vld [vmem:[%s5160 + $0x2cc] sm:$0xf]
      %v5281 = vld [vmem:[%s5160 + $0x2d0] sm:$0xff]
      %v5282 = vld [vmem:[%s5160 + $0x2d8] sm:$0xf]
      %v5283 = vld [vmem:[%s5160 + $0x2dc] sm:$0xff]
      %v5284 = vld [vmem:[%s5160 + $0x2e4] sm:$0xf]
      %v5285 = vld [vmem:[%s5160 + $0x2e8] sm:$0xff]
      %v5286 = vld [vmem:[%s5160 + $0x2f0] sm:$0xf]
      %v5287 = vld [vmem:[%s5160 + $0x2f4] sm:$0xff]
      %v5288 = vld [vmem:[%s5160 + $0x2fc] sm:$0xf]
      %v5289 = vld [vmem:[%s5160 + $0x300] sm:$0xff]
      %v5290 = vld [vmem:[%s5160 + $0x308] sm:$0xf]
      %v5291 = vld [vmem:[%s5160 + $0x30c] sm:$0xff]
      %v5292 = vld [vmem:[%s5160 + $0x314] sm:$0xf]
      %v5293 = vld [vmem:[%s5160 + $0x318] sm:$0xff]
      %v5294 = vld [vmem:[%s5160 + $0x320] sm:$0xf]
      %v5295 = vld [vmem:[%s5160 + $0x324] sm:$0xff]
      %v5296 = vld [vmem:[%s5160 + $0x32c] sm:$0xf]
      %v5433 = vunpack.c.l.b16 %v5161
      %v5434 = vunpack.c.h.b16 %v5161
      %v5435 = vunpack.c.l.b16 %v5162
      %v5436 = vunpack.c.l.b16 %v5163
      %v5437 = vunpack.c.h.b16 %v5163
      %v5438 = vunpack.c.l.b16 %v5164
      %v5439 = vunpack.c.l.b16 %v5165
      %v5440 = vunpack.c.h.b16 %v5165
      %v5441 = vunpack.c.l.b16 %v5166
      %v5442 = vunpack.c.l.b16 %v5167
      %v5443 = vunpack.c.h.b16 %v5167
      %v5444 = vunpack.c.l.b16 %v5168
      %v5445 = vunpack.c.l.b16 %v5169
      %v5446 = vunpack.c.h.b16 %v5169
      %v5447 = vunpack.c.l.b16 %v5170
      %v5448 = vunpack.c.l.b16 %v5171
      %v5449 = vunpack.c.h.b16 %v5171
      %v5450 = vunpack.c.l.b16 %v5172
      %v5451 = vunpack.c.l.b16 %v5173
      %v5452 = vunpack.c.h.b16 %v5173
      %v5453 = vunpack.c.l.b16 %v5174
      %v5454 = vunpack.c.l.b16 %v5175
      %v5455 = vunpack.c.h.b16 %v5175
      %v5456 = vunpack.c.l.b16 %v5176
      %v5457 = vunpack.c.l.b16 %v5177
      %v5458 = vunpack.c.h.b16 %v5177
      %v5459 = vunpack.c.l.b16 %v5178
      %v5460 = vunpack.c.l.b16 %v5179
      %v5461 = vunpack.c.h.b16 %v5179
      %v5462 = vunpack.c.l.b16 %v5180
      %v5463 = vunpack.c.l.b16 %v5181
      %v5464 = vunpack.c.h.b16 %v5181
      %v5465 = vunpack.c.l.b16 %v5182
      %v5466 = vunpack.c.l.b16 %v5183
      %v5467 = vunpack.c.h.b16 %v5183
      %v5468 = vunpack.c.l.b16 %v5184
      %v5469 = vunpack.c.l.b16 %v5185
      %v5470 = vunpack.c.h.b16 %v5185
      %v5471 = vunpack.c.l.b16 %v5186
      %v5472 = vunpack.c.l.b16 %v5187
      %v5473 = vunpack.c.h.b16 %v5187
      %v5474 = vunpack.c.l.b16 %v5188
      %v5475 = vunpack.c.l.b16 %v5189
      %v5476 = vunpack.c.h.b16 %v5189
      %v5477 = vunpack.c.l.b16 %v5190
      %v5478 = vunpack.c.l.b16 %v5191
      %v5479 = vunpack.c.h.b16 %v5191
      %v5480 = vunpack.c.l.b16 %v5192
      %v5481 = vunpack.c.l.b16 %v5193
      %v5482 = vunpack.c.h.b16 %v5193
      %v5483 = vunpack.c.l.b16 %v5194
      %v5484 = vunpack.c.l.b16 %v5195
      %v5485 = vunpack.c.h.b16 %v5195
      %v5486 = vunpack.c.l.b16 %v5196
      %v5487 = vunpack.c.l.b16 %v5197
      %v5488 = vunpack.c.h.b16 %v5197
      %v5489 = vunpack.c.l.b16 %v5198
      %v5490 = vunpack.c.l.b16 %v5199
      %v5491 = vunpack.c.h.b16 %v5199
      %v5492 = vunpack.c.l.b16 %v5200
      %v5493 = vunpack.c.l.b16 %v5201
      %v5494 = vunpack.c.h.b16 %v5201
      %v5495 = vunpack.c.l.b16 %v5202
      %v5496 = vunpack.c.l.b16 %v5203
      %v5497 = vunpack.c.h.b16 %v5203
      %v5498 = vunpack.c.l.b16 %v5204
      %v5499 = vunpack.c.l.b16 %v5205
      %v5500 = vunpack.c.h.b16 %v5205
      %v5501 = vunpack.c.l.b16 %v5206
      %v5502 = vunpack.c.l.b16 %v5207
      %v5503 = vunpack.c.h.b16 %v5207
      %v5504 = vunpack.c.l.b16 %v5208
      %v5505 = vunpack.c.l.b16 %v5209
      %v5506 = vunpack.c.h.b16 %v5209
      %v5507 = vunpack.c.l.b16 %v5210
      %v5508 = vunpack.c.l.b16 %v5211
      %v5509 = vunpack.c.h.b16 %v5211
      %v5510 = vunpack.c.l.b16 %v5212
      %v5511 = vunpack.c.l.b16 %v5213
      %v5512 = vunpack.c.h.b16 %v5213
      %v5513 = vunpack.c.l.b16 %v5214
      %v5514 = vunpack.c.l.b16 %v5215
      %v5515 = vunpack.c.h.b16 %v5215
      %v5516 = vunpack.c.l.b16 %v5216
      %v5517 = vunpack.c.l.b16 %v5217
      %v5518 = vunpack.c.h.b16 %v5217
      %v5519 = vunpack.c.l.b16 %v5218
      %v5520 = vunpack.c.l.b16 %v5219
      %v5521 = vunpack.c.h.b16 %v5219
      %v5522 = vunpack.c.l.b16 %v5220
      %v5523 = vunpack.c.l.b16 %v5221
      %v5524 = vunpack.c.h.b16 %v5221
      %v5525 = vunpack.c.l.b16 %v5222
      %v5526 = vunpack.c.l.b16 %v5223
      %v5527 = vunpack.c.h.b16 %v5223
      %v5528 = vunpack.c.l.b16 %v5224
      %v5529 = vunpack.c.l.b16 %v5225
      %v5530 = vunpack.c.h.b16 %v5225
      %v5531 = vunpack.c.l.b16 %v5226
      %v5532 = vunpack.c.l.b16 %v5227
      %v5533 = vunpack.c.h.b16 %v5227
      %v5534 = vunpack.c.l.b16 %v5228
      %v5535 = vunpack.c.l.b16 %v5229
      %v5536 = vunpack.c.h.b16 %v5229
      %v5537 = vunpack.c.l.b16 %v5230
      %v5538 = vunpack.c.l.b16 %v5231
      %v5539 = vunpack.c.h.b16 %v5231
      %v5540 = vunpack.c.l.b16 %v5232
      %v5541 = vunpack.c.l.b16 %v5233
      %v5542 = vunpack.c.h.b16 %v5233
      %v5543 = vunpack.c.l.b16 %v5234
      %v5544 = vunpack.c.l.b16 %v5235
      %v5545 = vunpack.c.h.b16 %v5235
      %v5546 = vunpack.c.l.b16 %v5236
      %v5547 = vunpack.c.l.b16 %v5237
      %v5548 = vunpack.c.h.b16 %v5237
      %v5549 = vunpack.c.l.b16 %v5238
      %v5550 = vunpack.c.l.b16 %v5239
      %v5551 = vunpack.c.h.b16 %v5239
      %v5552 = vunpack.c.l.b16 %v5240
      %v5553 = vunpack.c.l.b16 %v5241
      %v5554 = vunpack.c.h.b16 %v5241
      %v5555 = vunpack.c.l.b16 %v5242
      %v5556 = vunpack.c.l.b16 %v5243
      %v5557 = vunpack.c.h.b16 %v5243
      %v5558 = vunpack.c.l.b16 %v5244
      %v5559 = vunpack.c.l.b16 %v5245
      %v5560 = vunpack.c.h.b16 %v5245
      %v5561 = vunpack.c.l.b16 %v5246
      %v5562 = vunpack.c.l.b16 %v5247
      %v5563 = vunpack.c.h.b16 %v5247
      %v5564 = vunpack.c.l.b16 %v5248
      %v5565 = vunpack.c.l.b16 %v5249
      %v5566 = vunpack.c.h.b16 %v5249
      %v5567 = vunpack.c.l.b16 %v5250
      %v5568 = vunpack.c.l.b16 %v5251
      %v5569 = vunpack.c.h.b16 %v5251
      %v5570 = vunpack.c.l.b16 %v5252
      %v5571 = vunpack.c.l.b16 %v5253
      %v5572 = vunpack.c.h.b16 %v5253
      %v5573 = vunpack.c.l.b16 %v5254
      %v5574 = vunpack.c.l.b16 %v5255
      %v5575 = vunpack.c.h.b16 %v5255
      %v5576 = vunpack.c.l.b16 %v5256
      %v5577 = vunpack.c.l.b16 %v5257
      %v5578 = vunpack.c.h.b16 %v5257
      %v5579 = vunpack.c.l.b16 %v5258
      %v5580 = vunpack.c.l.b16 %v5259
      %v5581 = vunpack.c.h.b16 %v5259
      %v5582 = vunpack.c.l.b16 %v5260
      %v5583 = vunpack.c.l.b16 %v5261
      %v5584 = vunpack.c.h.b16 %v5261
      %v5585 = vunpack.c.l.b16 %v5262
      %v5586 = vunpack.c.l.b16 %v5263
      %v5587 = vunpack.c.h.b16 %v5263
      %v5588 = vunpack.c.l.b16 %v5264
      %v5589 = vunpack.c.l.b16 %v5265
      %v5590 = vunpack.c.h.b16 %v5265
      %v5591 = vunpack.c.l.b16 %v5266
      %v5592 = vunpack.c.l.b16 %v5267
      %v5593 = vunpack.c.h.b16 %v5267
      %v5594 = vunpack.c.l.b16 %v5268
      %v5595 = vunpack.c.l.b16 %v5269
      %v5596 = vunpack.c.h.b16 %v5269
      %v5597 = vunpack.c.l.b16 %v5270
      %v5598 = vunpack.c.l.b16 %v5271
      %v5599 = vunpack.c.h.b16 %v5271
      %v5600 = vunpack.c.l.b16 %v5272
      %v5601 = vunpack.c.l.b16 %v5273
      %v5602 = vunpack.c.h.b16 %v5273
      %v5603 = vunpack.c.l.b16 %v5274
      %v5604 = vunpack.c.l.b16 %v5275
      %v5605 = vunpack.c.h.b16 %v5275
      %v5606 = vunpack.c.l.b16 %v5276
      %v5607 = vunpack.c.l.b16 %v5277
      %v5608 = vunpack.c.h.b16 %v5277
      %v5609 = vunpack.c.l.b16 %v5278
      %v5610 = vunpack.c.l.b16 %v5279
      %v5611 = vunpack.c.h.b16 %v5279
      %v5612 = vunpack.c.l.b16 %v5280
      %v5613 = vunpack.c.l.b16 %v5281
      %v5614 = vunpack.c.h.b16 %v5281
      %v5615 = vunpack.c.l.b16 %v5282
      %v5616 = vunpack.c.l.b16 %v5283
      %v5617 = vunpack.c.h.b16 %v5283
      %v5618 = vunpack.c.l.b16 %v5284
      %v5619 = vunpack.c.l.b16 %v5285
      %v5620 = vunpack.c.h.b16 %v5285
      %v5621 = vunpack.c.l.b16 %v5286
      %v5622 = vunpack.c.l.b16 %v5287
      %v5623 = vunpack.c.h.b16 %v5287
      %v5624 = vunpack.c.l.b16 %v5288
      %v5625 = vunpack.c.l.b16 %v5289
      %v5626 = vunpack.c.h.b16 %v5289
      %v5627 = vunpack.c.l.b16 %v5290
      %v5628 = vunpack.c.l.b16 %v5291
      %v5629 = vunpack.c.h.b16 %v5291
      %v5630 = vunpack.c.l.b16 %v5292
      %v5631 = vunpack.c.l.b16 %v5293
      %v5632 = vunpack.c.h.b16 %v5293
      %v5633 = vunpack.c.l.b16 %v5294
      %v5634 = vunpack.c.l.b16 %v5295
      %v5635 = vunpack.c.h.b16 %v5295
      %v5636 = vunpack.c.l.b16 %v5296
      %v5637 = vpack.c.b16 %v5436, %v5433
      %v5638 = vpack.c.b16 %v5437, %v5434
      %v5639 = vpack.c.b16 %v5438, %v5435
      %v5640 = vpack.c.b16 %v5442, %v5439
      %v5641 = vpack.c.b16 %v5443, %v5440
      %v5642 = vpack.c.b16 %v5444, %v5441
      %v5643 = vpack.c.b16 %v5448, %v5445
      %v5644 = vpack.c.b16 %v5449, %v5446
      %v5645 = vpack.c.b16 %v5450, %v5447
      %v5646 = vpack.c.b16 %v5454, %v5451
      %v5647 = vpack.c.b16 %v5455, %v5452
      %v5648 = vpack.c.b16 %v5456, %v5453
      %v5649 = vpack.c.b16 %v5460, %v5457
      %v5650 = vpack.c.b16 %v5461, %v5458
      %v5651 = vpack.c.b16 %v5462, %v5459
      %v5652 = vpack.c.b16 %v5466, %v5463
      %v5653 = vpack.c.b16 %v5467, %v5464
      %v5654 = vpack.c.b16 %v5468, %v5465
      %v5655 = vpack.c.b16 %v5472, %v5469
      %v5656 = vpack.c.b16 %v5473, %v5470
      %v5657 = vpack.c.b16 %v5474, %v5471
      %v5658 = vpack.c.b16 %v5478, %v5475
      %v5659 = vpack.c.b16 %v5479, %v5476
      %v5660 = vpack.c.b16 %v5480, %v5477
      %v5661 = vpack.c.b16 %v5484, %v5481
      %v5662 = vpack.c.b16 %v5485, %v5482
      %v5663 = vpack.c.b16 %v5486, %v5483
      %v5664 = vpack.c.b16 %v5490, %v5487
      %v5665 = vpack.c.b16 %v5491, %v5488
      %v5666 = vpack.c.b16 %v5492, %v5489
      %v5667 = vpack.c.b16 %v5496, %v5493
      %v5668 = vpack.c.b16 %v5497, %v5494
      %v5669 = vpack.c.b16 %v5498, %v5495
      %v5670 = vpack.c.b16 %v5502, %v5499
      %v5671 = vpack.c.b16 %v5503, %v5500
      %v5672 = vpack.c.b16 %v5504, %v5501
      %v5673 = vpack.c.b16 %v5508, %v5505
      %v5674 = vpack.c.b16 %v5509, %v5506
      %v5675 = vpack.c.b16 %v5510, %v5507
      %v5676 = vpack.c.b16 %v5514, %v5511
      %v5677 = vpack.c.b16 %v5515, %v5512
      %v5678 = vpack.c.b16 %v5516, %v5513
      %v5679 = vpack.c.b16 %v5520, %v5517
      %v5680 = vpack.c.b16 %v5521, %v5518
      %v5681 = vpack.c.b16 %v5522, %v5519
      %v5682 = vpack.c.b16 %v5526, %v5523
      %v5683 = vpack.c.b16 %v5527, %v5524
      %v5684 = vpack.c.b16 %v5528, %v5525
      %v5685 = vpack.c.b16 %v5532, %v5529
      %v5686 = vpack.c.b16 %v5533, %v5530
      %v5687 = vpack.c.b16 %v5534, %v5531
      %v5688 = vpack.c.b16 %v5538, %v5535
      %v5689 = vpack.c.b16 %v5539, %v5536
      %v5690 = vpack.c.b16 %v5540, %v5537
      %v5691 = vpack.c.b16 %v5544, %v5541
      %v5692 = vpack.c.b16 %v5545, %v5542
      %v5693 = vpack.c.b16 %v5546, %v5543
      %v5694 = vpack.c.b16 %v5550, %v5547
      %v5695 = vpack.c.b16 %v5551, %v5548
      %v5696 = vpack.c.b16 %v5552, %v5549
      %v5697 = vpack.c.b16 %v5556, %v5553
      %v5698 = vpack.c.b16 %v5557, %v5554
      %v5699 = vpack.c.b16 %v5558, %v5555
      %v5700 = vpack.c.b16 %v5562, %v5559
      %v5701 = vpack.c.b16 %v5563, %v5560
      %v5702 = vpack.c.b16 %v5564, %v5561
      %v5703 = vpack.c.b16 %v5568, %v5565
      %v5704 = vpack.c.b16 %v5569, %v5566
      %v5705 = vpack.c.b16 %v5570, %v5567
      %v5706 = vpack.c.b16 %v5574, %v5571
      %v5707 = vpack.c.b16 %v5575, %v5572
      %v5708 = vpack.c.b16 %v5576, %v5573
      %v5709 = vpack.c.b16 %v5580, %v5577
      %v5710 = vpack.c.b16 %v5581, %v5578
      %v5711 = vpack.c.b16 %v5582, %v5579
      %v5712 = vpack.c.b16 %v5586, %v5583
      %v5713 = vpack.c.b16 %v5587, %v5584
      %v5714 = vpack.c.b16 %v5588, %v5585
      %v5715 = vpack.c.b16 %v5592, %v5589
      %v5716 = vpack.c.b16 %v5593, %v5590
      %v5717 = vpack.c.b16 %v5594, %v5591
      %v5718 = vpack.c.b16 %v5598, %v5595
      %v5719 = vpack.c.b16 %v5599, %v5596
      %v5720 = vpack.c.b16 %v5600, %v5597
      %v5721 = vpack.c.b16 %v5604, %v5601
      %v5722 = vpack.c.b16 %v5605, %v5602
      %v5723 = vpack.c.b16 %v5606, %v5603
      %v5724 = vpack.c.b16 %v5610, %v5607
      %v5725 = vpack.c.b16 %v5611, %v5608
      %v5726 = vpack.c.b16 %v5612, %v5609
      %v5727 = vpack.c.b16 %v5616, %v5613
      %v5728 = vpack.c.b16 %v5617, %v5614
      %v5729 = vpack.c.b16 %v5618, %v5615
      %v5730 = vpack.c.b16 %v5622, %v5619
      %v5731 = vpack.c.b16 %v5623, %v5620
      %v5732 = vpack.c.b16 %v5624, %v5621
      %v5733 = vpack.c.b16 %v5628, %v5625
      %v5734 = vpack.c.b16 %v5629, %v5626
      %v5735 = vpack.c.b16 %v5630, %v5627
      %v5736 = vpack.c.b16 %v5634, %v5631
      %v5737 = vpack.c.b16 %v5635, %v5632
      %v5738 = vpack.c.b16 %v5636, %v5633
      %v5842 = vsel %vm509, %v5104, 0
      %v5845 = vsel %vm509, %v5109, 0
      %v5848 = vsel %vm509, %v5114, 0
      %v5851 = vsel %vm509, %v5119, 0
      %v5854 = vsel %vm509, %v5124, 0
      %v5857 = vsel %vm509, %v5129, 0
      %v5860 = vsel %vm509, %v5134, 0
      %v5863 = vsel %vm509, %v5139, 0
      %v5866 = vsel %vm509, %v5144, 0
      %v5869 = vsel %vm509, %v5149, 0
      %v5872 = vsel %vm509, %v5154, 0
      %v5875 = vsel %vm509, %v5159, 0
      %5877 = vmatprep.subr.bf16.mxu0 %v5638
      %5878 = vmatpush1.bf16.msra.mxu0 %v5637
      %5879 = vmatprep.subr.bf16.mxu0 %v5641
      %5880 = vmatpush1.bf16.msra.mxu0 %v5640
      %5881 = vmatprep.subr.bf16.mxu0 %v5644
      %5882 = vmatpush1.bf16.msra.mxu0 %v5643
      %5883 = vmatprep.subr.bf16.mxu0 %v5647
      %5884 = vmatpush1.bf16.msra.mxu0 %v5646
      %5885 = vmatprep.subr.bf16.mxu0 %v5650
      %5886 = vmatpush1.bf16.msra.mxu0 %v5649
      %5887 = vmatprep.subr.bf16.mxu0 %v5653
      %5888 = vmatpush1.bf16.msra.mxu0 %v5652
      %5889 = vmatprep.subr.bf16.mxu0 %v5656
      %5890 = vmatpush1.bf16.msra.mxu0 %v5655
      %5891 = vmatprep.subr.bf16.mxu0 %v5659
      %5892 = vmatpush1.bf16.msra.mxu0 %v5658
      %5893 = vmatprep.subr.bf16.mxu0 %v5662
      %5894 = vmatpush1.bf16.msra.mxu0 %v5661
      %5895 = vmatprep.subr.bf16.mxu0 %v5665
      %5896 = vmatpush1.bf16.msra.mxu0 %v5664
      %5897 = vmatprep.subr.bf16.mxu0 %v5668
      %5898 = vmatpush1.bf16.msra.mxu0 %v5667
      %5899 = vmatprep.subr.bf16.mxu0 %v5671
      %5900 = vmatpush1.bf16.msra.mxu0 %v5670
      %5901 = vmatprep.subr.bf16.mxu0 %v5674
      %5902 = vmatpush1.bf16.msra.mxu0 %v5673
      %5903 = vmatprep.subr.bf16.mxu0 %v5677
      %5904 = vmatpush1.bf16.msra.mxu0 %v5676
      %5905 = vmatprep.subr.bf16.mxu0 %v5680
      %5906 = vmatpush1.bf16.msra.mxu0 %v5679
      %5907 = vmatprep.subr.bf16.mxu0 %v5683
      %5908 = vmatpush1.bf16.msra.mxu0 %v5682
      %5909 = vmatprep.mubr.bf16.mxu0 %v5101
      %5910 = vmatmul.mubr.bf16.gmra.mrb[0].mxu0 %v5100
      %v5911 = vpop.f32.mrb[0].mxu0
      %v5912 = vadd.f32 0.0, %v5911
      %v5913 = vpop.f32.mrb[0].mxu0
      %v5914 = vadd.f32 0.0, %v5913
      %v5915 = vpop.f32.mrb[0].mxu0
      %v5916 = vadd.f32 0.0, %v5915
      %v5917 = vpop.f32.mrb[0].mxu0
      %v5918 = vadd.f32 0.0, %v5917
      %5919 = vmatprep.mubr.bf16.mxu0 %v5106
      %5920 = vmatmul.mubr.bf16.gmra.mrb[0].mxu0 %v5105
      %v5921 = vpop.f32.mrb[0].mxu0
      %v5922 = vadd.f32 0.0, %v5921
      %v5923 = vpop.f32.mrb[0].mxu0
      %v5924 = vadd.f32 0.0, %v5923
      %v5925 = vpop.f32.mrb[0].mxu0
      %v5926 = vadd.f32 0.0, %v5925
      %v5927 = vpop.f32.mrb[0].mxu0
      %v5928 = vadd.f32 0.0, %v5927
      %5929 = vmatprep.mubr.bf16.mxu0 %v5111
      %5930 = vmatmul.mubr.bf16.gmra.mrb[0].mxu0 %v5110
      %v5931 = vpop.f32.mrb[0].mxu0
      %v5932 = vadd.f32 0.0, %v5931
      %v5933 = vpop.f32.mrb[0].mxu0
      %v5934 = vadd.f32 0.0, %v5933
      %v5935 = vpop.f32.mrb[0].mxu0
      %v5936 = vadd.f32 0.0, %v5935
      %v5937 = vpop.f32.mrb[0].mxu0
      %v5938 = vadd.f32 0.0, %v5937
      %5939 = vmatprep.mubr.bf16.mxu0 %v5116
      %5940 = vmatmul.mubr.bf16.gmra.mrb[0].mxu0 %v5115
      %v5941 = vpop.f32.mrb[0].mxu0
      %v5942 = vadd.f32 0.0, %v5941
      %v5943 = vpop.f32.mrb[0].mxu0
      %v5944 = vadd.f32 0.0, %v5943
      %v5945 = vpop.f32.mrb[0].mxu0
      %v5946 = vadd.f32 0.0, %v5945
      %v5947 = vpop.f32.mrb[0].mxu0
      %v5948 = vadd.f32 0.0, %v5947
      %5949 = vmatprep.mubr.bf16.mxu0 %v5121
      %5950 = vmatmul.mubr.bf16.gmra.mrb[0].mxu0 %v5120
      %v5951 = vpop.f32.mrb[0].mxu0
      %v5952 = vadd.f32 0.0, %v5951
      %v5953 = vpop.f32.mrb[0].mxu0
      %v5954 = vadd.f32 0.0, %v5953
      %v5955 = vpop.f32.mrb[0].mxu0
      %v5956 = vadd.f32 0.0, %v5955
      %v5957 = vpop.f32.mrb[0].mxu0
      %v5958 = vadd.f32 0.0, %v5957
      %5959 = vmatprep.mubr.bf16.mxu0 %v5126
      %5960 = vmatmul.mubr.bf16.gmra.mrb[0].mxu0 %v5125
      %v5961 = vpop.f32.mrb[0].mxu0
      %v5962 = vadd.f32 0.0, %v5961
      %v5963 = vpop.f32.mrb[0].mxu0
      %v5964 = vadd.f32 0.0, %v5963
      %v5965 = vpop.f32.mrb[0].mxu0
      %v5966 = vadd.f32 0.0, %v5965
      %v5967 = vpop.f32.mrb[0].mxu0
      %v5968 = vadd.f32 0.0, %v5967
      %5969 = vmatprep.mubr.bf16.mxu0 %v5131
      %5970 = vmatmul.mubr.bf16.gmra.mrb[0].mxu0 %v5130
      %v5971 = vpop.f32.mrb[0].mxu0
      %v5972 = vadd.f32 0.0, %v5971
      %v5973 = vpop.f32.mrb[0].mxu0
      %v5974 = vadd.f32 0.0, %v5973
      %v5975 = vpop.f32.mrb[0].mxu0
      %v5976 = vadd.f32 0.0, %v5975
      %v5977 = vpop.f32.mrb[0].mxu0
      %v5978 = vadd.f32 0.0, %v5977
      %5979 = vmatprep.mubr.bf16.mxu0 %v5136
      %5980 = vmatmul.mubr.bf16.gmra.mrb[0].mxu0 %v5135
      %v5981 = vpop.f32.mrb[0].mxu0
      %v5982 = vadd.f32 0.0, %v5981
      %v5983 = vpop.f32.mrb[0].mxu0
      %v5984 = vadd.f32 0.0, %v5983
      %v5985 = vpop.f32.mrb[0].mxu0
      %v5986 = vadd.f32 0.0, %v5985
      %v5987 = vpop.f32.mrb[0].mxu0
      %v5988 = vadd.f32 0.0, %v5987
      %5989 = vmatprep.mubr.bf16.mxu0 %v5141
      %5990 = vmatmul.mubr.bf16.gmra.mrb[0].mxu0 %v5140
      %v5991 = vpop.f32.mrb[0].mxu0
      %v5992 = vadd.f32 0.0, %v5991
      %v5993 = vpop.f32.mrb[0].mxu0
      %v5994 = vadd.f32 0.0, %v5993
      %v5995 = vpop.f32.mrb[0].mxu0
      %v5996 = vadd.f32 0.0, %v5995
      %v5997 = vpop.f32.mrb[0].mxu0
      %v5998 = vadd.f32 0.0, %v5997
      %5999 = vmatprep.mubr.bf16.mxu0 %v5146
      %6000 = vmatmul.mubr.bf16.gmra.mrb[0].mxu0 %v5145
      %v6001 = vpop.f32.mrb[0].mxu0
      %v6002 = vadd.f32 0.0, %v6001
      %v6003 = vpop.f32.mrb[0].mxu0
      %v6004 = vadd.f32 0.0, %v6003
      %v6005 = vpop.f32.mrb[0].mxu0
      %v6006 = vadd.f32 0.0, %v6005
      %v6007 = vpop.f32.mrb[0].mxu0
      %v6008 = vadd.f32 0.0, %v6007
      %6009 = vmatprep.mubr.bf16.mxu0 %v5151
      %6010 = vmatmul.mubr.bf16.gmra.mrb[0].mxu0 %v5150
      %v6011 = vpop.f32.mrb[0].mxu0
      %v6012 = vadd.f32 0.0, %v6011
      %v6013 = vpop.f32.mrb[0].mxu0
      %v6014 = vadd.f32 0.0, %v6013
      %v6015 = vpop.f32.mrb[0].mxu0
      %v6016 = vadd.f32 0.0, %v6015
      %v6017 = vpop.f32.mrb[0].mxu0
      %v6018 = vadd.f32 0.0, %v6017
      %6019 = vmatprep.mubr.bf16.mxu0 %v5156
      %6020 = vmatmul.mubr.bf16.gmra.mrb[0].mxu0 %v5155
      %v6021 = vpop.f32.mrb[0].mxu0
      %v6022 = vadd.f32 0.0, %v6021
      %v6023 = vpop.f32.mrb[0].mxu0
      %v6024 = vadd.f32 0.0, %v6023
      %v6025 = vpop.f32.mrb[0].mxu0
      %v6026 = vadd.f32 0.0, %v6025
      %v6027 = vpop.f32.mrb[0].mxu0
      %v6028 = vadd.f32 0.0, %v6027
      %6029 = vdwg.mxu0
      %6030 = vmatprep.subr.bf16.mxu0 %v5686
      %6031 = vmatpush1.bf16.msra.mxu0 %v5685
      %6032 = vmatprep.subr.bf16.mxu0 %v5689
      %6033 = vmatpush1.bf16.msra.mxu0 %v5688
      %6034 = vmatprep.subr.bf16.mxu0 %v5692
      %6035 = vmatpush1.bf16.msra.mxu0 %v5691
      %6036 = vmatprep.subr.bf16.mxu0 %v5695
      %6037 = vmatpush1.bf16.msra.mxu0 %v5694
      %6038 = vmatprep.subr.bf16.mxu0 %v5698
      %6039 = vmatpush1.bf16.msra.mxu0 %v5697
      %6040 = vmatprep.subr.bf16.mxu0 %v5701
      %6041 = vmatpush1.bf16.msra.mxu0 %v5700
      %6042 = vmatprep.subr.bf16.mxu0 %v5704
      %6043 = vmatpush1.bf16.msra.mxu0 %v5703
      %6044 = vmatprep.subr.bf16.mxu0 %v5707
      %6045 = vmatpush1.bf16.msra.mxu0 %v5706
      %6046 = vmatprep.subr.bf16.mxu0 %v5710
      %6047 = vmatpush1.bf16.msra.mxu0 %v5709
      %6048 = vmatprep.subr.bf16.mxu0 %v5713
      %6049 = vmatpush1.bf16.msra.mxu0 %v5712
      %6050 = vmatprep.subr.bf16.mxu0 %v5716
      %6051 = vmatpush1.bf16.msra.mxu0 %v5715
      %6052 = vmatprep.subr.bf16.mxu0 %v5719
      %6053 = vmatpush1.bf16.msra.mxu0 %v5718
      %6054 = vmatprep.subr.bf16.mxu0 %v5722
      %6055 = vmatpush1.bf16.msra.mxu0 %v5721
      %6056 = vmatprep.subr.bf16.mxu0 %v5725
      %6057 = vmatpush1.bf16.msra.mxu0 %v5724
      %6058 = vmatprep.subr.bf16.mxu0 %v5728
      %6059 = vmatpush1.bf16.msra.mxu0 %v5727
      %6060 = vmatprep.subr.bf16.mxu0 %v5731
      %6061 = vmatpush1.bf16.msra.mxu0 %v5730
      %6062 = vmatprep.mubr.bf16.mxu0 %v5103
      %6063 = vmatmul.mubr.bf16.gmra.mrb[0].mxu0 %v5102
      %v6064 = vpop.f32.mrb[0].mxu0
      %v6065 = vadd.f32 %v5912, %v6064
      %v6066 = vpop.f32.mrb[0].mxu0
      %v6067 = vadd.f32 %v5914, %v6066
      %v6068 = vpop.f32.mrb[0].mxu0
      %v6069 = vadd.f32 %v5916, %v6068
      %v6070 = vpop.f32.mrb[0].mxu0
      %v6071 = vadd.f32 %v5918, %v6070
      %6072 = vmatprep.mubr.bf16.mxu0 %v5108
      %6073 = vmatmul.mubr.bf16.gmra.mrb[0].mxu0 %v5107
      %v6074 = vpop.f32.mrb[0].mxu0
      %v6075 = vadd.f32 %v5922, %v6074
      %v6076 = vpop.f32.mrb[0].mxu0
      %v6077 = vadd.f32 %v5924, %v6076
      %v6078 = vpop.f32.mrb[0].mxu0
      %v6079 = vadd.f32 %v5926, %v6078
      %v6080 = vpop.f32.mrb[0].mxu0
      %v6081 = vadd.f32 %v5928, %v6080
      %6082 = vmatprep.mubr.bf16.mxu0 %v5113
      %6083 = vmatmul.mubr.bf16.gmra.mrb[0].mxu0 %v5112
      %v6084 = vpop.f32.mrb[0].mxu0
      %v6085 = vadd.f32 %v5932, %v6084
      %v6086 = vpop.f32.mrb[0].mxu0
      %v6087 = vadd.f32 %v5934, %v6086
      %v6088 = vpop.f32.mrb[0].mxu0
      %v6089 = vadd.f32 %v5936, %v6088
      %v6090 = vpop.f32.mrb[0].mxu0
      %v6091 = vadd.f32 %v5938, %v6090
      %6092 = vmatprep.mubr.bf16.mxu0 %v5118
      %6093 = vmatmul.mubr.bf16.gmra.mrb[0].mxu0 %v5117
      %v6094 = vpop.f32.mrb[0].mxu0
      %v6095 = vadd.f32 %v5942, %v6094
      %v6096 = vpop.f32.mrb[0].mxu0
      %v6097 = vadd.f32 %v5944, %v6096
      %v6098 = vpop.f32.mrb[0].mxu0
      %v6099 = vadd.f32 %v5946, %v6098
      %v6100 = vpop.f32.mrb[0].mxu0
      %v6101 = vadd.f32 %v5948, %v6100
      %6102 = vmatprep.mubr.bf16.mxu0 %v5123
      %6103 = vmatmul.mubr.bf16.gmra.mrb[0].mxu0 %v5122
      %v6104 = vpop.f32.mrb[0].mxu0
      %v6105 = vadd.f32 %v5952, %v6104
      %v6106 = vpop.f32.mrb[0].mxu0
      %v6107 = vadd.f32 %v5954, %v6106
      %v6108 = vpop.f32.mrb[0].mxu0
      %v6109 = vadd.f32 %v5956, %v6108
      %v6110 = vpop.f32.mrb[0].mxu0
      %v6111 = vadd.f32 %v5958, %v6110
      %6112 = vmatprep.mubr.bf16.mxu0 %v5128
      %6113 = vmatmul.mubr.bf16.gmra.mrb[0].mxu0 %v5127
      %v6114 = vpop.f32.mrb[0].mxu0
      %v6115 = vadd.f32 %v5962, %v6114
      %v6116 = vpop.f32.mrb[0].mxu0
      %v6117 = vadd.f32 %v5964, %v6116
      %v6118 = vpop.f32.mrb[0].mxu0
      %v6119 = vadd.f32 %v5966, %v6118
      %v6120 = vpop.f32.mrb[0].mxu0
      %v6121 = vadd.f32 %v5968, %v6120
      %6122 = vmatprep.mubr.bf16.mxu0 %v5133
      %6123 = vmatmul.mubr.bf16.gmra.mrb[0].mxu0 %v5132
      %v6124 = vpop.f32.mrb[0].mxu0
      %v6125 = vadd.f32 %v5972, %v6124
      %v6126 = vpop.f32.mrb[0].mxu0
      %v6127 = vadd.f32 %v5974, %v6126
      %v6128 = vpop.f32.mrb[0].mxu0
      %v6129 = vadd.f32 %v5976, %v6128
      %v6130 = vpop.f32.mrb[0].mxu0
      %v6131 = vadd.f32 %v5978, %v6130
      %6132 = vmatprep.mubr.bf16.mxu0 %v5138
      %6133 = vmatmul.mubr.bf16.gmra.mrb[0].mxu0 %v5137
      %v6134 = vpop.f32.mrb[0].mxu0
      %v6135 = vadd.f32 %v5982, %v6134
      %v6136 = vpop.f32.mrb[0].mxu0
      %v6137 = vadd.f32 %v5984, %v6136
      %v6138 = vpop.f32.mrb[0].mxu0
      %v6139 = vadd.f32 %v5986, %v6138
      %v6140 = vpop.f32.mrb[0].mxu0
      %v6141 = vadd.f32 %v5988, %v6140
      %6142 = vmatprep.mubr.bf16.mxu0 %v5143
      %6143 = vmatmul.mubr.bf16.gmra.mrb[0].mxu0 %v5142
      %v6144 = vpop.f32.mrb[0].mxu0
      %v6145 = vadd.f32 %v5992, %v6144
      %v6146 = vpop.f32.mrb[0].mxu0
      %v6147 = vadd.f32 %v5994, %v6146
      %v6148 = vpop.f32.mrb[0].mxu0
      %v6149 = vadd.f32 %v5996, %v6148
      %v6150 = vpop.f32.mrb[0].mxu0
      %v6151 = vadd.f32 %v5998, %v6150
      %6152 = vmatprep.mubr.bf16.mxu0 %v5148
      %6153 = vmatmul.mubr.bf16.gmra.mrb[0].mxu0 %v5147
      %v6154 = vpop.f32.mrb[0].mxu0
      %v6155 = vadd.f32 %v6002, %v6154
      %v6156 = vpop.f32.mrb[0].mxu0
      %v6157 = vadd.f32 %v6004, %v6156
      %v6158 = vpop.f32.mrb[0].mxu0
      %v6159 = vadd.f32 %v6006, %v6158
      %v6160 = vpop.f32.mrb[0].mxu0
      %v6161 = vadd.f32 %v6008, %v6160
      %6162 = vmatprep.mubr.bf16.mxu0 %v5153
      %6163 = vmatmul.mubr.bf16.gmra.mrb[0].mxu0 %v5152
      %v6164 = vpop.f32.mrb[0].mxu0
      %v6165 = vadd.f32 %v6012, %v6164
      %v6166 = vpop.f32.mrb[0].mxu0
      %v6167 = vadd.f32 %v6014, %v6166
      %v6168 = vpop.f32.mrb[0].mxu0
      %v6169 = vadd.f32 %v6016, %v6168
      %v6170 = vpop.f32.mrb[0].mxu0
      %v6171 = vadd.f32 %v6018, %v6170
      %6172 = vmatprep.mubr.bf16.mxu0 %v5158
      %6173 = vmatmul.mubr.bf16.gmra.mrb[0].mxu0 %v5157
      %v6174 = vpop.f32.mrb[0].mxu0
      %v6175 = vadd.f32 %v6022, %v6174
      %v6176 = vpop.f32.mrb[0].mxu0
      %v6177 = vadd.f32 %v6024, %v6176
      %v6178 = vpop.f32.mrb[0].mxu0
      %v6179 = vadd.f32 %v6026, %v6178
      %v6180 = vpop.f32.mrb[0].mxu0
      %v6181 = vadd.f32 %v6028, %v6180
      %6182 = vdwg.mxu0
      %6183 = vmatprep.subr.bf16.mxu0 %v5734
      %6184 = vmatpush1.bf16.msra.mxu0 %v5733
      %6185 = vmatprep.subr.bf16.mxu0 %v5737
      %6186 = vmatpush1.bf16.msra.mxu0 %v5736
      %6187 = vmatprep.subr.bf16.mxu0 0
      %6188 = vmatpush1.bf16.msra.mxu0 0
      %6189 = vmatprep.subr.bf16.mxu0 0
      %6190 = vmatpush1.bf16.msra.mxu0 0
      %6191 = vmatprep.subr.bf16.mxu0 0
      %6192 = vmatpush1.bf16.msra.mxu0 0
      %6193 = vmatprep.subr.bf16.mxu0 0
      %6194 = vmatpush1.bf16.msra.mxu0 0
      %6195 = vmatprep.subr.bf16.mxu0 0
      %6196 = vmatpush1.bf16.msra.mxu0 0
      %6197 = vmatprep.subr.bf16.mxu0 0
      %6198 = vmatpush1.bf16.msra.mxu0 0
      %6199 = vmatprep.subr.bf16.mxu0 0
      %6200 = vmatpush1.bf16.msra.mxu0 0
      %6201 = vmatprep.subr.bf16.mxu0 0
      %6202 = vmatpush1.bf16.msra.mxu0 0
      %6203 = vmatprep.subr.bf16.mxu0 0
      %6204 = vmatpush1.bf16.msra.mxu0 0
      %6205 = vmatprep.subr.bf16.mxu0 0
      %6206 = vmatpush1.bf16.msra.mxu0 0
      %6207 = vmatprep.subr.bf16.mxu0 0
      %6208 = vmatpush1.bf16.msra.mxu0 0
      %6209 = vmatprep.subr.bf16.mxu0 0
      %6210 = vmatpush1.bf16.msra.mxu0 0
      %6211 = vmatprep.subr.bf16.mxu0 0
      %6212 = vmatpush1.bf16.msra.mxu0 0
      %6213 = vmatprep.subr.bf16.mxu0 0
      %6214 = vmatpush1.bf16.msra.mxu0 0
      %6215 = vmatprep.mubr.bf16.mxu0 0
      %6216 = vmatmul.mubr.bf16.gmra.mrb[0].mxu0 %v5842
      %v6217 = vpop.f32.mrb[0].mxu0
      %v6218 = vadd.f32 %v6065, %v6217
      %v6219 = vpop.f32.mrb[0].mxu0
      %v6220 = vadd.f32 %v6067, %v6219
      %v6221 = vpop.f32.mrb[0].mxu0
      %v6222 = vadd.f32 %v6069, %v6221
      %v6223 = vpop.f32.mrb[0].mxu0
      %v6224 = vadd.f32 %v6071, %v6223
      %6225 = vmatprep.mubr.bf16.mxu0 0
      %6226 = vmatmul.mubr.bf16.gmra.mrb[0].mxu0 %v5845
      %v6227 = vpop.f32.mrb[0].mxu0
      %v6228 = vadd.f32 %v6075, %v6227
      %v6229 = vpop.f32.mrb[0].mxu0
      %v6230 = vadd.f32 %v6077, %v6229
      %v6231 = vpop.f32.mrb[0].mxu0
      %v6232 = vadd.f32 %v6079, %v6231
      %v6233 = vpop.f32.mrb[0].mxu0
      %v6234 = vadd.f32 %v6081, %v6233
      %6235 = vmatprep.mubr.bf16.mxu0 0
      %6236 = vmatmul.mubr.bf16.gmra.mrb[0].mxu0 %v5848
      %v6237 = vpop.f32.mrb[0].mxu0
      %v6238 = vadd.f32 %v6085, %v6237
      %v6239 = vpop.f32.mrb[0].mxu0
      %v6240 = vadd.f32 %v6087, %v6239
      %v6241 = vpop.f32.mrb[0].mxu0
      %v6242 = vadd.f32 %v6089, %v6241
      %v6243 = vpop.f32.mrb[0].mxu0
      %v6244 = vadd.f32 %v6091, %v6243
      %6245 = vmatprep.mubr.bf16.mxu0 0
      %6246 = vmatmul.mubr.bf16.gmra.mrb[0].mxu0 %v5851
      %v6247 = vpop.f32.mrb[0].mxu0
      %v6248 = vadd.f32 %v6095, %v6247
      %v6249 = vpop.f32.mrb[0].mxu0
      %v6250 = vadd.f32 %v6097, %v6249
      %v6251 = vpop.f32.mrb[0].mxu0
      %v6252 = vadd.f32 %v6099, %v6251
      %v6253 = vpop.f32.mrb[0].mxu0
      %v6254 = vadd.f32 %v6101, %v6253
      %6255 = vmatprep.mubr.bf16.mxu0 0
      %6256 = vmatmul.mubr.bf16.gmra.mrb[0].mxu0 %v5854
      %v6257 = vpop.f32.mrb[0].mxu0
      %v6258 = vadd.f32 %v6105, %v6257
      %v6259 = vpop.f32.mrb[0].mxu0
      %v6260 = vadd.f32 %v6107, %v6259
      %v6261 = vpop.f32.mrb[0].mxu0
      %v6262 = vadd.f32 %v6109, %v6261
      %v6263 = vpop.f32.mrb[0].mxu0
      %v6264 = vadd.f32 %v6111, %v6263
      %6265 = vmatprep.mubr.bf16.mxu0 0
      %6266 = vmatmul.mubr.bf16.gmra.mrb[0].mxu0 %v5857
      %v6267 = vpop.f32.mrb[0].mxu0
      %v6268 = vadd.f32 %v6115, %v6267
      %v6269 = vpop.f32.mrb[0].mxu0
      %v6270 = vadd.f32 %v6117, %v6269
      %v6271 = vpop.f32.mrb[0].mxu0
      %v6272 = vadd.f32 %v6119, %v6271
      %v6273 = vpop.f32.mrb[0].mxu0
      %v6274 = vadd.f32 %v6121, %v6273
      %6275 = vmatprep.mubr.bf16.mxu0 0
      %6276 = vmatmul.mubr.bf16.gmra.mrb[0].mxu0 %v5860
      %v6277 = vpop.f32.mrb[0].mxu0
      %v6278 = vadd.f32 %v6125, %v6277
      %v6279 = vpop.f32.mrb[0].mxu0
      %v6280 = vadd.f32 %v6127, %v6279
      %v6281 = vpop.f32.mrb[0].mxu0
      %v6282 = vadd.f32 %v6129, %v6281
      %v6283 = vpop.f32.mrb[0].mxu0
      %v6284 = vadd.f32 %v6131, %v6283
      %6285 = vmatprep.mubr.bf16.mxu0 0
      %6286 = vmatmul.mubr.bf16.gmra.mrb[0].mxu0 %v5863
      %v6287 = vpop.f32.mrb[0].mxu0
      %v6288 = vadd.f32 %v6135, %v6287
      %v6289 = vpop.f32.mrb[0].mxu0
      %v6290 = vadd.f32 %v6137, %v6289
      %v6291 = vpop.f32.mrb[0].mxu0
      %v6292 = vadd.f32 %v6139, %v6291
      %v6293 = vpop.f32.mrb[0].mxu0
      %v6294 = vadd.f32 %v6141, %v6293
      %6295 = vmatprep.mubr.bf16.mxu0 0
      %6296 = vmatmul.mubr.bf16.gmra.mrb[0].mxu0 %v5866
      %v6297 = vpop.f32.mrb[0].mxu0
      %v6298 = vadd.f32 %v6145, %v6297
      %v6299 = vpop.f32.mrb[0].mxu0
      %v6300 = vadd.f32 %v6147, %v6299
      %v6301 = vpop.f32.mrb[0].mxu0
      %v6302 = vadd.f32 %v6149, %v6301
      %v6303 = vpop.f32.mrb[0].mxu0
      %v6304 = vadd.f32 %v6151, %v6303
      %6305 = vmatprep.mubr.bf16.mxu0 0
      %6306 = vmatmul.mubr.bf16.gmra.mrb[0].mxu0 %v5869
      %v6307 = vpop.f32.mrb[0].mxu0
      %v6308 = vadd.f32 %v6155, %v6307
      %v6309 = vpop.f32.mrb[0].mxu0
      %v6310 = vadd.f32 %v6157, %v6309
      %v6311 = vpop.f32.mrb[0].mxu0
      %v6312 = vadd.f32 %v6159, %v6311
      %v6313 = vpop.f32.mrb[0].mxu0
      %v6314 = vadd.f32 %v6161, %v6313
      %6315 = vmatprep.mubr.bf16.mxu0 0
      %6316 = vmatmul.mubr.bf16.gmra.mrb[0].mxu0 %v5872
      %v6317 = vpop.f32.mrb[0].mxu0
      %v6318 = vadd.f32 %v6165, %v6317
      %v6319 = vpop.f32.mrb[0].mxu0
      %v6320 = vadd.f32 %v6167, %v6319
      %v6321 = vpop.f32.mrb[0].mxu0
      %v6322 = vadd.f32 %v6169, %v6321
      %v6323 = vpop.f32.mrb[0].mxu0
      %v6324 = vadd.f32 %v6171, %v6323
      %6325 = vmatprep.mubr.bf16.mxu0 0
      %6326 = vmatmul.mubr.bf16.gmra.mrb[0].mxu0 %v5875
      %v6327 = vpop.f32.mrb[0].mxu0
      %v6328 = vadd.f32 %v6175, %v6327
      %v6329 = vpop.f32.mrb[0].mxu0
      %v6330 = vadd.f32 %v6177, %v6329
      %v6331 = vpop.f32.mrb[0].mxu0
      %v6332 = vadd.f32 %v6179, %v6331
      %v6333 = vpop.f32.mrb[0].mxu0
      %v6334 = vadd.f32 %v6181, %v6333
      %6335 = vdwg.mxu0
      %6336 = vmatprep.subr.bf16.mxu0 0
      %6337 = vmatpush1.bf16.msra.mxu0 %v5639
      %6338 = vmatprep.subr.bf16.mxu0 0
      %6339 = vmatpush1.bf16.msra.mxu0 %v5642
      %6340 = vmatprep.subr.bf16.mxu0 0
      %6341 = vmatpush1.bf16.msra.mxu0 %v5645
      %6342 = vmatprep.subr.bf16.mxu0 0
      %6343 = vmatpush1.bf16.msra.mxu0 %v5648
      %6344 = vmatprep.subr.bf16.mxu0 0
      %6345 = vmatpush1.bf16.msra.mxu0 %v5651
      %6346 = vmatprep.subr.bf16.mxu0 0
      %6347 = vmatpush1.bf16.msra.mxu0 %v5654
      %6348 = vmatprep.subr.bf16.mxu0 0
      %6349 = vmatpush1.bf16.msra.mxu0 %v5657
      %6350 = vmatprep.subr.bf16.mxu0 0
      %6351 = vmatpush1.bf16.msra.mxu0 %v5660
      %6352 = vmatprep.subr.bf16.mxu0 0
      %6353 = vmatpush1.bf16.msra.mxu0 %v5663
      %6354 = vmatprep.subr.bf16.mxu0 0
      %6355 = vmatpush1.bf16.msra.mxu0 %v5666
      %6356 = vmatprep.subr.bf16.mxu0 0
      %6357 = vmatpush1.bf16.msra.mxu0 %v5669
      %6358 = vmatprep.subr.bf16.mxu0 0
      %6359 = vmatpush1.bf16.msra.mxu0 %v5672
      %6360 = vmatprep.subr.bf16.mxu0 0
      %6361 = vmatpush1.bf16.msra.mxu0 %v5675
      %6362 = vmatprep.subr.bf16.mxu0 0
      %6363 = vmatpush1.bf16.msra.mxu0 %v5678
      %6364 = vmatprep.subr.bf16.mxu0 0
      %6365 = vmatpush1.bf16.msra.mxu0 %v5681
      %6366 = vmatprep.subr.bf16.mxu0 0
      %6367 = vmatpush1.bf16.msra.mxu0 %v5684
      %6368 = vmatprep.mubr.bf16.mxu0 %v5101
      %6369 = vmatmul.mubr.bf16.gmra.mrb[0].mxu0 %v5100
      %v6370 = vpop.f32.mrb[0].mxu0
      %v6371 = vadd.f32 0.0, %v6370
      %v6372 = vpop.f32.mrb[0].mxu0
      %v6373 = vpop.f32.mrb[0].mxu0
      %v6374 = vadd.f32 0.0, %v6373
      %v6375 = vpop.f32.mrb[0].mxu0
      %6376 = vmatprep.mubr.bf16.mxu0 %v5106
      %6377 = vmatmul.mubr.bf16.gmra.mrb[0].mxu0 %v5105
      %v6378 = vpop.f32.mrb[0].mxu0
      %v6379 = vadd.f32 0.0, %v6378
      %v6380 = vpop.f32.mrb[0].mxu0
      %v6381 = vpop.f32.mrb[0].mxu0
      %v6382 = vadd.f32 0.0, %v6381
      %v6383 = vpop.f32.mrb[0].mxu0
      %6384 = vmatprep.mubr.bf16.mxu0 %v5111
      %6385 = vmatmul.mubr.bf16.gmra.mrb[0].mxu0 %v5110
      %v6386 = vpop.f32.mrb[0].mxu0
      %v6387 = vadd.f32 0.0, %v6386
      %v6388 = vpop.f32.mrb[0].mxu0
      %v6389 = vpop.f32.mrb[0].mxu0
      %v6390 = vadd.f32 0.0, %v6389
      %v6391 = vpop.f32.mrb[0].mxu0
      %6392 = vmatprep.mubr.bf16.mxu0 %v5116
      %6393 = vmatmul.mubr.bf16.gmra.mrb[0].mxu0 %v5115
      %v6394 = vpop.f32.mrb[0].mxu0
      %v6395 = vadd.f32 0.0, %v6394
      %v6396 = vpop.f32.mrb[0].mxu0
      %v6397 = vpop.f32.mrb[0].mxu0
      %v6398 = vadd.f32 0.0, %v6397
      %v6399 = vpop.f32.mrb[0].mxu0
      %6400 = vmatprep.mubr.bf16.mxu0 %v5121
      %6401 = vmatmul.mubr.bf16.gmra.mrb[0].mxu0 %v5120
      %v6402 = vpop.f32.mrb[0].mxu0
      %v6403 = vadd.f32 0.0, %v6402
      %v6404 = vpop.f32.mrb[0].mxu0
      %v6405 = vpop.f32.mrb[0].mxu0
      %v6406 = vadd.f32 0.0, %v6405
      %v6407 = vpop.f32.mrb[0].mxu0
      %6408 = vmatprep.mubr.bf16.mxu0 %v5126
      %6409 = vmatmul.mubr.bf16.gmra.mrb[0].mxu0 %v5125
      %v6410 = vpop.f32.mrb[0].mxu0
      %v6411 = vadd.f32 0.0, %v6410
      %v6412 = vpop.f32.mrb[0].mxu0
      %v6413 = vpop.f32.mrb[0].mxu0
      %v6414 = vadd.f32 0.0, %v6413
      %v6415 = vpop.f32.mrb[0].mxu0
      %6416 = vmatprep.mubr.bf16.mxu0 %v5131
      %6417 = vmatmul.mubr.bf16.gmra.mrb[0].mxu0 %v5130
      %v6418 = vpop.f32.mrb[0].mxu0
      %v6419 = vadd.f32 0.0, %v6418
      %v6420 = vpop.f32.mrb[0].mxu0
      %v6421 = vpop.f32.mrb[0].mxu0
      %v6422 = vadd.f32 0.0, %v6421
      %v6423 = vpop.f32.mrb[0].mxu0
      %6424 = vmatprep.mubr.bf16.mxu0 %v5136
      %6425 = vmatmul.mubr.bf16.gmra.mrb[0].mxu0 %v5135
      %v6426 = vpop.f32.mrb[0].mxu0
      %v6427 = vadd.f32 0.0, %v6426
      %v6428 = vpop.f32.mrb[0].mxu0
      %v6429 = vpop.f32.mrb[0].mxu0
      %v6430 = vadd.f32 0.0, %v6429
      %v6431 = vpop.f32.mrb[0].mxu0
      %6432 = vmatprep.mubr.bf16.mxu0 %v5141
      %6433 = vmatmul.mubr.bf16.gmra.mrb[0].mxu0 %v5140
      %v6434 = vpop.f32.mrb[0].mxu0
      %v6435 = vadd.f32 0.0, %v6434
      %v6436 = vpop.f32.mrb[0].mxu0
      %v6437 = vpop.f32.mrb[0].mxu0
      %v6438 = vadd.f32 0.0, %v6437
      %v6439 = vpop.f32.mrb[0].mxu0
      %6440 = vmatprep.mubr.bf16.mxu0 %v5146
      %6441 = vmatmul.mubr.bf16.gmra.mrb[0].mxu0 %v5145
      %v6442 = vpop.f32.mrb[0].mxu0
      %v6443 = vadd.f32 0.0, %v6442
      %v6444 = vpop.f32.mrb[0].mxu0
      %v6445 = vpop.f32.mrb[0].mxu0
      %v6446 = vadd.f32 0.0, %v6445
      %v6447 = vpop.f32.mrb[0].mxu0
      %6448 = vmatprep.mubr.bf16.mxu0 %v5151
      %6449 = vmatmul.mubr.bf16.gmra.mrb[0].mxu0 %v5150
      %v6450 = vpop.f32.mrb[0].mxu0
      %v6451 = vadd.f32 0.0, %v6450
      %v6452 = vpop.f32.mrb[0].mxu0
      %v6453 = vpop.f32.mrb[0].mxu0
      %v6454 = vadd.f32 0.0, %v6453
      %v6455 = vpop.f32.mrb[0].mxu0
      %6456 = vmatprep.mubr.bf16.mxu0 %v5156
      %6457 = vmatmul.mubr.bf16.gmra.mrb[0].mxu0 %v5155
      %v6458 = vpop.f32.mrb[0].mxu0
      %v6459 = vadd.f32 0.0, %v6458
      %v6460 = vpop.f32.mrb[0].mxu0
      %v6461 = vpop.f32.mrb[0].mxu0
      %v6462 = vadd.f32 0.0, %v6461
      %v6463 = vpop.f32.mrb[0].mxu0
      %6464 = vdwg.mxu0
      %6465 = vmatprep.subr.bf16.mxu0 0
      %6466 = vmatpush1.bf16.msra.mxu0 %v5687
      %6467 = vmatprep.subr.bf16.mxu0 0
      %6468 = vmatpush1.bf16.msra.mxu0 %v5690
      %6469 = vmatprep.subr.bf16.mxu0 0
      %6470 = vmatpush1.bf16.msra.mxu0 %v5693
      %6471 = vmatprep.subr.bf16.mxu0 0
      %6472 = vmatpush1.bf16.msra.mxu0 %v5696
      %6473 = vmatprep.subr.bf16.mxu0 0
      %6474 = vmatpush1.bf16.msra.mxu0 %v5699
      %6475 = vmatprep.subr.bf16.mxu0 0
      %6476 = vmatpush1.bf16.msra.mxu0 %v5702
      %6477 = vmatprep.subr.bf16.mxu0 0
      %6478 = vmatpush1.bf16.msra.mxu0 %v5705
      %6479 = vmatprep.subr.bf16.mxu0 0
      %6480 = vmatpush1.bf16.msra.mxu0 %v5708
      %6481 = vmatprep.subr.bf16.mxu0 0
      %6482 = vmatpush1.bf16.msra.mxu0 %v5711
      %6483 = vmatprep.subr.bf16.mxu0 0
      %6484 = vmatpush1.bf16.msra.mxu0 %v5714
      %6485 = vmatprep.subr.bf16.mxu0 0
      %6486 = vmatpush1.bf16.msra.mxu0 %v5717
      %6487 = vmatprep.subr.bf16.mxu0 0
      %6488 = vmatpush1.bf16.msra.mxu0 %v5720
      %6489 = vmatprep.subr.bf16.mxu0 0
      %6490 = vmatpush1.bf16.msra.mxu0 %v5723
      %6491 = vmatprep.subr.bf16.mxu0 0
      %6492 = vmatpush1.bf16.msra.mxu0 %v5726
      %6493 = vmatprep.subr.bf16.mxu0 0
      %6494 = vmatpush1.bf16.msra.mxu0 %v5729
      %6495 = vmatprep.subr.bf16.mxu0 0
      %6496 = vmatpush1.bf16.msra.mxu0 %v5732
      %6497 = vmatprep.mubr.bf16.mxu0 %v5103
      %6498 = vmatmul.mubr.bf16.gmra.mrb[0].mxu0 %v5102
      %v6499 = vpop.f32.mrb[0].mxu0
      %v6500 = vadd.f32 %v6371, %v6499
      %v6501 = vpop.f32.mrb[0].mxu0
      %v6502 = vpop.f32.mrb[0].mxu0
      %v6503 = vadd.f32 %v6374, %v6502
      %v6504 = vpop.f32.mrb[0].mxu0
      %6505 = vmatprep.mubr.bf16.mxu0 %v5108
      %6506 = vmatmul.mubr.bf16.gmra.mrb[0].mxu0 %v5107
      %v6507 = vpop.f32.mrb[0].mxu0
      %v6508 = vadd.f32 %v6379, %v6507
      %v6509 = vpop.f32.mrb[0].mxu0
      %v6510 = vpop.f32.mrb[0].mxu0
      %v6511 = vadd.f32 %v6382, %v6510
      %v6512 = vpop.f32.mrb[0].mxu0
      %6513 = vmatprep.mubr.bf16.mxu0 %v5113
      %6514 = vmatmul.mubr.bf16.gmra.mrb[0].mxu0 %v5112
      %v6515 = vpop.f32.mrb[0].mxu0
      %v6516 = vadd.f32 %v6387, %v6515
      %v6517 = vpop.f32.mrb[0].mxu0
      %v6518 = vpop.f32.mrb[0].mxu0
      %v6519 = vadd.f32 %v6390, %v6518
      %v6520 = vpop.f32.mrb[0].mxu0
      %6521 = vmatprep.mubr.bf16.mxu0 %v5118
      %6522 = vmatmul.mubr.bf16.gmra.mrb[0].mxu0 %v5117
      %v6523 = vpop.f32.mrb[0].mxu0
      %v6524 = vadd.f32 %v6395, %v6523
      %v6525 = vpop.f32.mrb[0].mxu0
      %v6526 = vpop.f32.mrb[0].mxu0
      %v6527 = vadd.f32 %v6398, %v6526
      %v6528 = vpop.f32.mrb[0].mxu0
      %6529 = vmatprep.mubr.bf16.mxu0 %v5123
      %6530 = vmatmul.mubr.bf16.gmra.mrb[0].mxu0 %v5122
      %v6531 = vpop.f32.mrb[0].mxu0
      %v6532 = vadd.f32 %v6403, %v6531
      %v6533 = vpop.f32.mrb[0].mxu0
      %v6534 = vpop.f32.mrb[0].mxu0
      %v6535 = vadd.f32 %v6406, %v6534
      %v6536 = vpop.f32.mrb[0].mxu0
      %6537 = vmatprep.mubr.bf16.mxu0 %v5128
      %6538 = vmatmul.mubr.bf16.gmra.mrb[0].mxu0 %v5127
      %v6539 = vpop.f32.mrb[0].mxu0
      %v6540 = vadd.f32 %v6411, %v6539
      %v6541 = vpop.f32.mrb[0].mxu0
      %v6542 = vpop.f32.mrb[0].mxu0
      %v6543 = vadd.f32 %v6414, %v6542
      %v6544 = vpop.f32.mrb[0].mxu0
      %6545 = vmatprep.mubr.bf16.mxu0 %v5133
      %6546 = vmatmul.mubr.bf16.gmra.mrb[0].mxu0 %v5132
      %v6547 = vpop.f32.mrb[0].mxu0
      %v6548 = vadd.f32 %v6419, %v6547
      %v6549 = vpop.f32.mrb[0].mxu0
      %v6550 = vpop.f32.mrb[0].mxu0
      %v6551 = vadd.f32 %v6422, %v6550
      %v6552 = vpop.f32.mrb[0].mxu0
      %6553 = vmatprep.mubr.bf16.mxu0 %v5138
      %6554 = vmatmul.mubr.bf16.gmra.mrb[0].mxu0 %v5137
      %v6555 = vpop.f32.mrb[0].mxu0
      %v6556 = vadd.f32 %v6427, %v6555
      %v6557 = vpop.f32.mrb[0].mxu0
      %v6558 = vpop.f32.mrb[0].mxu0
      %v6559 = vadd.f32 %v6430, %v6558
      %v6560 = vpop.f32.mrb[0].mxu0
      %6561 = vmatprep.mubr.bf16.mxu0 %v5143
      %6562 = vmatmul.mubr.bf16.gmra.mrb[0].mxu0 %v5142
      %v6563 = vpop.f32.mrb[0].mxu0
      %v6564 = vadd.f32 %v6435, %v6563
      %v6565 = vpop.f32.mrb[0].mxu0
      %v6566 = vpop.f32.mrb[0].mxu0
      %v6567 = vadd.f32 %v6438, %v6566
      %v6568 = vpop.f32.mrb[0].mxu0
      %6569 = vmatprep.mubr.bf16.mxu0 %v5148
      %6570 = vmatmul.mubr.bf16.gmra.mrb[0].mxu0 %v5147
      %v6571 = vpop.f32.mrb[0].mxu0
      %v6572 = vadd.f32 %v6443, %v6571
      %v6573 = vpop.f32.mrb[0].mxu0
      %v6574 = vpop.f32.mrb[0].mxu0
      %v6575 = vadd.f32 %v6446, %v6574
      %v6576 = vpop.f32.mrb[0].mxu0
      %6577 = vmatprep.mubr.bf16.mxu0 %v5153
      %6578 = vmatmul.mubr.bf16.gmra.mrb[0].mxu0 %v5152
      %v6579 = vpop.f32.mrb[0].mxu0
      %v6580 = vadd.f32 %v6451, %v6579
      %v6581 = vpop.f32.mrb[0].mxu0
      %v6582 = vpop.f32.mrb[0].mxu0
      %v6583 = vadd.f32 %v6454, %v6582
      %v6584 = vpop.f32.mrb[0].mxu0
      %6585 = vmatprep.mubr.bf16.mxu0 %v5158
      %6586 = vmatmul.mubr.bf16.gmra.mrb[0].mxu0 %v5157
      %v6587 = vpop.f32.mrb[0].mxu0
      %v6588 = vadd.f32 %v6459, %v6587
      %v6589 = vpop.f32.mrb[0].mxu0
      %v6590 = vpop.f32.mrb[0].mxu0
      %v6591 = vadd.f32 %v6462, %v6590
      %v6592 = vpop.f32.mrb[0].mxu0
      %6593 = vdwg.mxu0
      %6594 = vmatprep.subr.bf16.mxu0 0
      %6595 = vmatpush1.bf16.msra.mxu0 %v5735
      %6596 = vmatprep.subr.bf16.mxu0 0
      %6597 = vmatpush1.bf16.msra.mxu0 %v5738
      %6598 = vmatprep.subr.bf16.mxu0 0
      %6599 = vmatpush1.bf16.msra.mxu0 0
      %6600 = vmatprep.subr.bf16.mxu0 0
      %6601 = vmatpush1.bf16.msra.mxu0 0
      %6602 = vmatprep.subr.bf16.mxu0 0
      %6603 = vmatpush1.bf16.msra.mxu0 0
      %6604 = vmatprep.subr.bf16.mxu0 0
      %6605 = vmatpush1.bf16.msra.mxu0 0
      %6606 = vmatprep.subr.bf16.mxu0 0
      %6607 = vmatpush1.bf16.msra.mxu0 0
      %6608 = vmatprep.subr.bf16.mxu0 0
      %6609 = vmatpush1.bf16.msra.mxu0 0
      %6610 = vmatprep.subr.bf16.mxu0 0
      %6611 = vmatpush1.bf16.msra.mxu0 0
      %6612 = vmatprep.subr.bf16.mxu0 0
      %6613 = vmatpush1.bf16.msra.mxu0 0
      %6614 = vmatprep.subr.bf16.mxu0 0
      %6615 = vmatpush1.bf16.msra.mxu0 0
      %6616 = vmatprep.subr.bf16.mxu0 0
      %6617 = vmatpush1.bf16.msra.mxu0 0
      %6618 = vmatprep.subr.bf16.mxu0 0
      %6619 = vmatpush1.bf16.msra.mxu0 0
      %6620 = vmatprep.subr.bf16.mxu0 0
      %6621 = vmatpush1.bf16.msra.mxu0 0
      %6622 = vmatprep.subr.bf16.mxu0 0
      %6623 = vmatpush1.bf16.msra.mxu0 0
      %6624 = vmatprep.subr.bf16.mxu0 0
      %6625 = vmatpush1.bf16.msra.mxu0 0
      %6626 = vmatprep.mubr.bf16.mxu0 0
      %6627 = vmatmul.mubr.bf16.gmra.mrb[0].mxu0 %v5842
      %v6628 = vpop.f32.mrb[0].mxu0
      %v6629 = vadd.f32 %v6500, %v6628
      %v6630 = vpop.f32.mrb[0].mxu0
      %v6631 = vpop.f32.mrb[0].mxu0
      %v6632 = vadd.f32 %v6503, %v6631
      %v6633 = vpop.f32.mrb[0].mxu0
      %6634 = vmatprep.mubr.bf16.mxu0 0
      %6635 = vmatmul.mubr.bf16.gmra.mrb[0].mxu0 %v5845
      %v6636 = vpop.f32.mrb[0].mxu0
      %v6637 = vadd.f32 %v6508, %v6636
      %v6638 = vpop.f32.mrb[0].mxu0
      %v6639 = vpop.f32.mrb[0].mxu0
      %v6640 = vadd.f32 %v6511, %v6639
      %v6641 = vpop.f32.mrb[0].mxu0
      %6642 = vmatprep.mubr.bf16.mxu0 0
      %6643 = vmatmul.mubr.bf16.gmra.mrb[0].mxu0 %v5848
      %v6644 = vpop.f32.mrb[0].mxu0
      %v6645 = vadd.f32 %v6516, %v6644
      %v6646 = vpop.f32.mrb[0].mxu0
      %v6647 = vpop.f32.mrb[0].mxu0
      %v6648 = vadd.f32 %v6519, %v6647
      %v6649 = vpop.f32.mrb[0].mxu0
      %6650 = vmatprep.mubr.bf16.mxu0 0
      %6651 = vmatmul.mubr.bf16.gmra.mrb[0].mxu0 %v5851
      %v6652 = vpop.f32.mrb[0].mxu0
      %v6653 = vadd.f32 %v6524, %v6652
      %v6654 = vpop.f32.mrb[0].mxu0
      %v6655 = vpop.f32.mrb[0].mxu0
      %v6656 = vadd.f32 %v6527, %v6655
      %v6657 = vpop.f32.mrb[0].mxu0
      %6658 = vmatprep.mubr.bf16.mxu0 0
      %6659 = vmatmul.mubr.bf16.gmra.mrb[0].mxu0 %v5854
      %v6660 = vpop.f32.mrb[0].mxu0
      %v6661 = vadd.f32 %v6532, %v6660
      %v6662 = vpop.f32.mrb[0].mxu0
      %v6663 = vpop.f32.mrb[0].mxu0
      %v6664 = vadd.f32 %v6535, %v6663
      %v6665 = vpop.f32.mrb[0].mxu0
      %6666 = vmatprep.mubr.bf16.mxu0 0
      %6667 = vmatmul.mubr.bf16.gmra.mrb[0].mxu0 %v5857
      %v6668 = vpop.f32.mrb[0].mxu0
      %v6669 = vadd.f32 %v6540, %v6668
      %v6670 = vpop.f32.mrb[0].mxu0
      %v6671 = vpop.f32.mrb[0].mxu0
      %v6672 = vadd.f32 %v6543, %v6671
      %v6673 = vpop.f32.mrb[0].mxu0
      %6674 = vmatprep.mubr.bf16.mxu0 0
      %6675 = vmatmul.mubr.bf16.gmra.mrb[0].mxu0 %v5860
      %v6676 = vpop.f32.mrb[0].mxu0
      %v6677 = vadd.f32 %v6548, %v6676
      %v6678 = vpop.f32.mrb[0].mxu0
      %v6679 = vpop.f32.mrb[0].mxu0
      %v6680 = vadd.f32 %v6551, %v6679
      %v6681 = vpop.f32.mrb[0].mxu0
      %6682 = vmatprep.mubr.bf16.mxu0 0
      %6683 = vmatmul.mubr.bf16.gmra.mrb[0].mxu0 %v5863
      %v6684 = vpop.f32.mrb[0].mxu0
      %v6685 = vadd.f32 %v6556, %v6684
      %v6686 = vpop.f32.mrb[0].mxu0
      %v6687 = vpop.f32.mrb[0].mxu0
      %v6688 = vadd.f32 %v6559, %v6687
      %v6689 = vpop.f32.mrb[0].mxu0
      %6690 = vmatprep.mubr.bf16.mxu0 0
      %6691 = vmatmul.mubr.bf16.gmra.mrb[0].mxu0 %v5866
      %v6692 = vpop.f32.mrb[0].mxu0
      %v6693 = vadd.f32 %v6564, %v6692
      %v6694 = vpop.f32.mrb[0].mxu0
      %v6695 = vpop.f32.mrb[0].mxu0
      %v6696 = vadd.f32 %v6567, %v6695
      %v6697 = vpop.f32.mrb[0].mxu0
      %6698 = vmatprep.mubr.bf16.mxu0 0
      %6699 = vmatmul.mubr.bf16.gmra.mrb[0].mxu0 %v5869
      %v6700 = vpop.f32.mrb[0].mxu0
      %v6701 = vadd.f32 %v6572, %v6700
      %v6702 = vpop.f32.mrb[0].mxu0
      %v6703 = vpop.f32.mrb[0].mxu0
      %v6704 = vadd.f32 %v6575, %v6703
      %v6705 = vpop.f32.mrb[0].mxu0
      %6706 = vmatprep.mubr.bf16.mxu0 0
      %6707 = vmatmul.mubr.bf16.gmra.mrb[0].mxu0 %v5872
      %v6708 = vpop.f32.mrb[0].mxu0
      %v6709 = vadd.f32 %v6580, %v6708
      %v6710 = vpop.f32.mrb[0].mxu0
      %v6711 = vpop.f32.mrb[0].mxu0
      %v6712 = vadd.f32 %v6583, %v6711
      %v6713 = vpop.f32.mrb[0].mxu0
      %6714 = vmatprep.mubr.bf16.mxu0 0
      %6715 = vmatmul.mubr.bf16.gmra.mrb[0].mxu0 %v5875
      %v6716 = vpop.f32.mrb[0].mxu0
      %v6717 = vadd.f32 %v6588, %v6716
      %v6718 = vpop.f32.mrb[0].mxu0
      %v6719 = vpop.f32.mrb[0].mxu0
      %v6720 = vadd.f32 %v6591, %v6719
      %v6721 = vpop.f32.mrb[0].mxu0
      %6722 = vdwg.mxu0
      %v6723 = vld [vmem:[#allocation3 + $0x18] sm:$0xff]
      %v6724 = vld [vmem:[#allocation3 + $0x20] sm:$0xff]
      %v6725 = vld [vmem:[#allocation3 + $0x28] sm:$0xff]
      %v6726 = vld [vmem:[#allocation3 + $0x30] sm:$0xff]
      %v6727 = vld [vmem:[#allocation3 + $0x38] sm:$0xff]
      %v6728 = vld [vmem:[#allocation3 + $0x40] sm:$0xff]
      %v6729 = vld [vmem:[#allocation3 + $0x48] sm:$0xff]
      %v6730 = vld [vmem:[#allocation3 + $0x50] sm:$0xff]
      %v6731 = vld [vmem:[#allocation3 + $0x58] sm:$0xff]
      %v6732 = vld [vmem:[#allocation3 + $0x60] sm:$0xff]
      %v6733 = vld [vmem:[#allocation3 + $0x68] sm:$0xff]
      %v6734 = vld [vmem:[#allocation3 + $0x70] sm:$0xff]
      %v6735 = vld [vmem:[#allocation3 + $0x78] sm:$0xff]
      %v6736 = vld [vmem:[#allocation3 + $0x80] sm:$0xff]
      %v6737 = vld [vmem:[#allocation3 + $0x88] sm:$0xff]
      %v6738 = vld [vmem:[#allocation3 + $0x90] sm:$0xff]
      %v6739 = vld [vmem:[#allocation3 + $0x98] sm:$0xff]
      %v6740 = vld [vmem:[#allocation3 + $0xa0] sm:$0xff]
      %v6741 = vld [vmem:[#allocation3 + $0xa8] sm:$0xff]
      %v6742 = vld [vmem:[#allocation3 + $0xb0] sm:$0xff]
      %v6743 = vld [vmem:[#allocation3 + $0xb8] sm:$0xff]
      %v6744 = vld [vmem:[#allocation3 + $0xc0] sm:$0xff]
      %v6745 = vld [vmem:[#allocation3 + $0xc8] sm:$0xff]
      %v6746 = vld [vmem:[#allocation3 + $0xd0] sm:$0xff]
      %v6747 = vld [vmem:[#allocation3 + $0xd8] sm:$0xff]
      %v6748 = vld [vmem:[#allocation3 + $0xe0] sm:$0xff]
      %v6749 = vld [vmem:[#allocation3 + $0xe8] sm:$0xff]
      %v6750 = vld [vmem:[#allocation3 + $0xf0] sm:$0xff]
      %v6751 = vld [vmem:[#allocation3 + $0xf8] sm:$0xff]
      %v6752 = vld [vmem:[#allocation3 + $0x100] sm:$0xff]
      %v6753 = vld [vmem:[#allocation3 + $0x108] sm:$0xff]
      %v6754 = vld [vmem:[#allocation3 + $0x110] sm:$0xff]
      %v6755 = vld [vmem:[#allocation3 + $0x118] sm:$0xff]
      %v6756 = vld [vmem:[#allocation3 + $0x120] sm:$0xff]
      %v6757 = vld [vmem:[#allocation3 + $0x128] sm:$0xff]
      %v6758 = vld [vmem:[#allocation3 + $0x130] sm:$0xff]
      %v6759 = vld [vmem:[#allocation3 + $0x138] sm:$0xff]
      %v6760 = vld [vmem:[#allocation3 + $0x140] sm:$0xff]
      %v6761 = vld [vmem:[#allocation3 + $0x148] sm:$0xff]
      %v6762 = vld [vmem:[#allocation3 + $0x150] sm:$0xff]
      %v6763 = vld [vmem:[#allocation3 + $0x158] sm:$0xff]
      %v6764 = vld [vmem:[#allocation3 + $0x160] sm:$0xff]
      %v6765 = vld [vmem:[#allocation3 + $0x168] sm:$0xff]
      %v6766 = vld [vmem:[#allocation3 + $0x170] sm:$0xff]
      %v6767 = vld [vmem:[#allocation3 + $0x178] sm:$0xff]
      %v6768 = vld [vmem:[#allocation3 + $0x180] sm:$0xff]
      %v6769 = vld [vmem:[#allocation3 + $0x188] sm:$0xff]
      %v6770 = vld [vmem:[#allocation3 + $0x190] sm:$0xff]
      %v6771 = vld [vmem:[#allocation3 + $0x198] sm:$0xff]
      %v6772 = vld [vmem:[#allocation3 + $0x1a0] sm:$0xff]
      %v6773 = vld [vmem:[#allocation3 + $0x1a8] sm:$0xff]
      %v6774 = vld [vmem:[#allocation3 + $0x1b0] sm:$0xff]
      %v6775 = vld [vmem:[#allocation3 + $0x1b8] sm:$0xff]
      %v6776 = vld [vmem:[#allocation3 + $0x1c0] sm:$0xff]
      %v6777 = vld [vmem:[#allocation3 + $0x1c8] sm:$0xff]
      %v6778 = vld [vmem:[#allocation3 + $0x1d0] sm:$0xff]
      %v6779 = vld [vmem:[#allocation3 + $0x1d8] sm:$0xff]
      %v6780 = vld [vmem:[#allocation3 + $0x1e0] sm:$0xff]
      %v6781 = vld [vmem:[#allocation3 + $0x1e8] sm:$0xff]
      %v6782 = vld [vmem:[#allocation3 + $0x1f0] sm:$0xff]
      %v6783 = vld [vmem:[#allocation3 + $0x1f8] sm:$0xff]
      %v6784 = vld [vmem:[#allocation3 + $0x200] sm:$0xff]
      %v6785 = vld [vmem:[#allocation3 + $0x208] sm:$0xff]
      %v6786 = vld [vmem:[#allocation3 + $0x210] sm:$0xff]
      %v6787 = vld [vmem:[#allocation3 + $0x218] sm:$0xff]
      %v6788 = vld [vmem:[#allocation3 + $0x220] sm:$0xff]
      %v6789 = vld [vmem:[#allocation3 + $0x228] sm:$0xff]
      %v6790 = vld [vmem:[#allocation3 + $0x230] sm:$0xff]
      %v6791 = vld [vmem:[#allocation3 + $0x238] sm:$0xff]
      %v6792 = vld [vmem:[#allocation3 + $0x240] sm:$0xff]
      %v6793 = vld [vmem:[#allocation3 + $0x248] sm:$0xff]
      %v6794 = vld [vmem:[#allocation3 + $0x250] sm:$0xff]
      %v6795 = vadd.f32 %v6723, %v6218
      %v6796 = vadd.f32 %v6724, %v6220
      %v6797 = vadd.f32 %v6725, %v6629
      %v6798 = vadd.f32 %v6726, %v6222
      %v6799 = vadd.f32 %v6727, %v6224
      %v6800 = vadd.f32 %v6728, %v6632
      %v6801 = vadd.f32 %v6729, %v6228
      %v6802 = vadd.f32 %v6730, %v6230
      %v6803 = vadd.f32 %v6731, %v6637
      %v6804 = vadd.f32 %v6732, %v6232
      %v6805 = vadd.f32 %v6733, %v6234
      %v6806 = vadd.f32 %v6734, %v6640
      %v6807 = vadd.f32 %v6735, %v6238
      %v6808 = vadd.f32 %v6736, %v6240
      %v6809 = vadd.f32 %v6737, %v6645
      %v6810 = vadd.f32 %v6738, %v6242
      %v6811 = vadd.f32 %v6739, %v6244
      %v6812 = vadd.f32 %v6740, %v6648
      %v6813 = vadd.f32 %v6741, %v6248
      %v6814 = vadd.f32 %v6742, %v6250
      %v6815 = vadd.f32 %v6743, %v6653
      %v6816 = vadd.f32 %v6744, %v6252
      %v6817 = vadd.f32 %v6745, %v6254
      %v6818 = vadd.f32 %v6746, %v6656
      %v6819 = vadd.f32 %v6747, %v6258
      %v6820 = vadd.f32 %v6748, %v6260
      %v6821 = vadd.f32 %v6749, %v6661
      %v6822 = vadd.f32 %v6750, %v6262
      %v6823 = vadd.f32 %v6751, %v6264
      %v6824 = vadd.f32 %v6752, %v6664
      %v6825 = vadd.f32 %v6753, %v6268
      %v6826 = vadd.f32 %v6754, %v6270
      %v6827 = vadd.f32 %v6755, %v6669
      %v6828 = vadd.f32 %v6756, %v6272
      %v6829 = vadd.f32 %v6757, %v6274
      %v6830 = vadd.f32 %v6758, %v6672
      %v6831 = vadd.f32 %v6759, %v6278
      %v6832 = vadd.f32 %v6760, %v6280
      %v6833 = vadd.f32 %v6761, %v6677
      %v6834 = vadd.f32 %v6762, %v6282
      %v6835 = vadd.f32 %v6763, %v6284
      %v6836 = vadd.f32 %v6764, %v6680
      %v6837 = vadd.f32 %v6765, %v6288
      %v6838 = vadd.f32 %v6766, %v6290
      %v6839 = vadd.f32 %v6767, %v6685
      %v6840 = vadd.f32 %v6768, %v6292
      %v6841 = vadd.f32 %v6769, %v6294
      %v6842 = vadd.f32 %v6770, %v6688
      %v6843 = vadd.f32 %v6771, %v6298
      %v6844 = vadd.f32 %v6772, %v6300
      %v6845 = vadd.f32 %v6773, %v6693
      %v6846 = vadd.f32 %v6774, %v6302
      %v6847 = vadd.f32 %v6775, %v6304
      %v6848 = vadd.f32 %v6776, %v6696
      %v6849 = vadd.f32 %v6777, %v6308
      %v6850 = vadd.f32 %v6778, %v6310
      %v6851 = vadd.f32 %v6779, %v6701
      %v6852 = vadd.f32 %v6780, %v6312
      %v6853 = vadd.f32 %v6781, %v6314
      %v6854 = vadd.f32 %v6782, %v6704
      %v6855 = vadd.f32 %v6783, %v6318
      %v6856 = vadd.f32 %v6784, %v6320
      %v6857 = vadd.f32 %v6785, %v6709
      %v6858 = vadd.f32 %v6786, %v6322
      %v6859 = vadd.f32 %v6787, %v6324
      %v6860 = vadd.f32 %v6788, %v6712
      %v6861 = vadd.f32 %v6789, %v6328
      %v6862 = vadd.f32 %v6790, %v6330
      %v6863 = vadd.f32 %v6791, %v6717
      %v6864 = vadd.f32 %v6792, %v6332
      %v6865 = vadd.f32 %v6793, %v6334
      %v6866 = vadd.f32 %v6794, %v6720
      %6867 = vst [vmem:[#allocation3 + $0x18] sm:$0xff] %v6795
      %6868 = vst [vmem:[#allocation3 + $0x20] sm:$0xff] %v6796
      %6869 = vst [vmem:[#allocation3 + $0x28] sm:$0xff] %v6797
      %6870 = vst [vmem:[#allocation3 + $0x30] sm:$0xff] %v6798
      %6871 = vst [vmem:[#allocation3 + $0x38] sm:$0xff] %v6799
      %6872 = vst [vmem:[#allocation3 + $0x40] sm:$0xff] %v6800
      %6873 = vst [vmem:[#allocation3 + $0x48] sm:$0xff] %v6801
      %6874 = vst [vmem:[#allocation3 + $0x50] sm:$0xff] %v6802
      %6875 = vst [vmem:[#allocation3 + $0x58] sm:$0xff] %v6803
      %6876 = vst [vmem:[#allocation3 + $0x60] sm:$0xff] %v6804
      %6877 = vst [vmem:[#allocation3 + $0x68] sm:$0xff] %v6805
      %6878 = vst [vmem:[#allocation3 + $0x70] sm:$0xff] %v6806
      %6879 = vst [vmem:[#allocation3 + $0x78] sm:$0xff] %v6807
      %6880 = vst [vmem:[#allocation3 + $0x80] sm:$0xff] %v6808
      %6881 = vst [vmem:[#allocation3 + $0x88] sm:$0xff] %v6809
      %6882 = vst [vmem:[#allocation3 + $0x90] sm:$0xff] %v6810
      %6883 = vst [vmem:[#allocation3 + $0x98] sm:$0xff] %v6811
      %6884 = vst [vmem:[#allocation3 + $0xa0] sm:$0xff] %v6812
      %6885 = vst [vmem:[#allocation3 + $0xa8] sm:$0xff] %v6813
      %6886 = vst [vmem:[#allocation3 + $0xb0] sm:$0xff] %v6814
      %6887 = vst [vmem:[#allocation3 + $0xb8] sm:$0xff] %v6815
      %6888 = vst [vmem:[#allocation3 + $0xc0] sm:$0xff] %v6816
      %6889 = vst [vmem:[#allocation3 + $0xc8] sm:$0xff] %v6817
      %6890 = vst [vmem:[#allocation3 + $0xd0] sm:$0xff] %v6818
      %6891 = vst [vmem:[#allocation3 + $0xd8] sm:$0xff] %v6819
      %6892 = vst [vmem:[#allocation3 + $0xe0] sm:$0xff] %v6820
      %6893 = vst [vmem:[#allocation3 + $0xe8] sm:$0xff] %v6821
      %6894 = vst [vmem:[#allocation3 + $0xf0] sm:$0xff] %v6822
      %6895 = vst [vmem:[#allocation3 + $0xf8] sm:$0xff] %v6823
      %6896 = vst [vmem:[#allocation3 + $0x100] sm:$0xff] %v6824
      %6897 = vst [vmem:[#allocation3 + $0x108] sm:$0xff] %v6825
      %6898 = vst [vmem:[#allocation3 + $0x110] sm:$0xff] %v6826
      %6899 = vst [vmem:[#allocation3 + $0x118] sm:$0xff] %v6827
      %6900 = vst [vmem:[#allocation3 + $0x120] sm:$0xff] %v6828
      %6901 = vst [vmem:[#allocation3 + $0x128] sm:$0xff] %v6829
      %6902 = vst [vmem:[#allocation3 + $0x130] sm:$0xff] %v6830
      %6903 = vst [vmem:[#allocation3 + $0x138] sm:$0xff] %v6831
      %6904 = vst [vmem:[#allocation3 + $0x140] sm:$0xff] %v6832
      %6905 = vst [vmem:[#allocation3 + $0x148] sm:$0xff] %v6833
      %6906 = vst [vmem:[#allocation3 + $0x150] sm:$0xff] %v6834
      %6907 = vst [vmem:[#allocation3 + $0x158] sm:$0xff] %v6835
      %6908 = vst [vmem:[#allocation3 + $0x160] sm:$0xff] %v6836
      %6909 = vst [vmem:[#allocation3 + $0x168] sm:$0xff] %v6837
      %6910 = vst [vmem:[#allocation3 + $0x170] sm:$0xff] %v6838
      %6911 = vst [vmem:[#allocation3 + $0x178] sm:$0xff] %v6839
      %6912 = vst [vmem:[#allocation3 + $0x180] sm:$0xff] %v6840
      %6913 = vst [vmem:[#allocation3 + $0x188] sm:$0xff] %v6841
      %6914 = vst [vmem:[#allocation3 + $0x190] sm:$0xff] %v6842
      %6915 = vst [vmem:[#allocation3 + $0x198] sm:$0xff] %v6843
      %6916 = vst [vmem:[#allocation3 + $0x1a0] sm:$0xff] %v6844
      %6917 = vst [vmem:[#allocation3 + $0x1a8] sm:$0xff] %v6845
      %6918 = vst [vmem:[#allocation3 + $0x1b0] sm:$0xff] %v6846
      %6919 = vst [vmem:[#allocation3 + $0x1b8] sm:$0xff] %v6847
      %6920 = vst [vmem:[#allocation3 + $0x1c0] sm:$0xff] %v6848
      %6921 = vst [vmem:[#allocation3 + $0x1c8] sm:$0xff] %v6849
      %6922 = vst [vmem:[#allocation3 + $0x1d0] sm:$0xff] %v6850
      %6923 = vst [vmem:[#allocation3 + $0x1d8] sm:$0xff] %v6851
      %6924 = vst [vmem:[#allocation3 + $0x1e0] sm:$0xff] %v6852
      %6925 = vst [vmem:[#allocation3 + $0x1e8] sm:$0xff] %v6853
      %6926 = vst [vmem:[#allocation3 + $0x1f0] sm:$0xff] %v6854
      %6927 = vst [vmem:[#allocation3 + $0x1f8] sm:$0xff] %v6855
      %6928 = vst [vmem:[#allocation3 + $0x200] sm:$0xff] %v6856
      %6929 = vst [vmem:[#allocation3 + $0x208] sm:$0xff] %v6857
      %6930 = vst [vmem:[#allocation3 + $0x210] sm:$0xff] %v6858
      %6931 = vst [vmem:[#allocation3 + $0x218] sm:$0xff] %v6859
      %6932 = vst [vmem:[#allocation3 + $0x220] sm:$0xff] %v6860
      %6933 = vst [vmem:[#allocation3 + $0x228] sm:$0xff] %v6861
      %6934 = vst [vmem:[#allocation3 + $0x230] sm:$0xff] %v6862
      %6935 = vst [vmem:[#allocation3 + $0x238] sm:$0xff] %v6863
      %6936 = vst [vmem:[#allocation3 + $0x240] sm:$0xff] %v6864
      %6937 = vst [vmem:[#allocation3 + $0x248] sm:$0xff] %v6865
      %6938 = vst [vmem:[#allocation3 + $0x250] sm:$0xff] %v6866
      %v6939 = vld [vmem:[#allocation3 + $0x20] sm:$0xff]
      %v6940 = vld [vmem:[#allocation3 + $0x38] sm:$0xff]
      %v6941 = vld [vmem:[#allocation3 + $0x50] sm:$0xff]
      %v6942 = vld [vmem:[#allocation3 + $0x68] sm:$0xff]
      %v6943 = vld [vmem:[#allocation3 + $0x80] sm:$0xff]
      %v6944 = vld [vmem:[#allocation3 + $0x98] sm:$0xff]
      %v6945 = vld [vmem:[#allocation3 + $0xb0] sm:$0xff]
      %v6946 = vld [vmem:[#allocation3 + $0xc8] sm:$0xff]
      %v6947 = vld [vmem:[#allocation3 + $0xe0] sm:$0xff]
      %v6948 = vld [vmem:[#allocation3 + $0xf8] sm:$0xff]
      %v6949 = vld [vmem:[#allocation3 + $0x110] sm:$0xff]
      %v6950 = vld [vmem:[#allocation3 + $0x128] sm:$0xff]
      %v6951 = vld [vmem:[#allocation3 + $0x140] sm:$0xff]
      %v6952 = vld [vmem:[#allocation3 + $0x158] sm:$0xff]
      %v6953 = vld [vmem:[#allocation3 + $0x170] sm:$0xff]
      %v6954 = vld [vmem:[#allocation3 + $0x188] sm:$0xff]
      %v6955 = vld [vmem:[#allocation3 + $0x1a0] sm:$0xff]
      %v6956 = vld [vmem:[#allocation3 + $0x1b8] sm:$0xff]
      %v6957 = vld [vmem:[#allocation3 + $0x1d0] sm:$0xff]
      %v6958 = vld [vmem:[#allocation3 + $0x1e8] sm:$0xff]
      %v6959 = vld [vmem:[#allocation3 + $0x200] sm:$0xff]
      %v6960 = vld [vmem:[#allocation3 + $0x218] sm:$0xff]
      %v6961 = vld [vmem:[#allocation3 + $0x230] sm:$0xff]
      %v6962 = vld [vmem:[#allocation3 + $0x248] sm:$0xff]
      %v6963 = vld [vmem:[#allocation3] sm:$0x80]
      %v6964 = vld [vmem:[#allocation3 + $0x18] sm:$0xff]
      %v6965 = vld [vmem:[#allocation3 + $0x30] sm:$0xff]
      %v6966 = vld [vmem:[#allocation3 + $0x48] sm:$0xff]
      %v6967 = vld [vmem:[#allocation3 + $0x60] sm:$0xff]
      %v6968 = vld [vmem:[#allocation3 + $0x78] sm:$0xff]
      %v6969 = vld [vmem:[#allocation3 + $0x90] sm:$0xff]
      %v6970 = vld [vmem:[#allocation3 + $0xa8] sm:$0xff]
      %v6971 = vld [vmem:[#allocation3 + $0xc0] sm:$0xff]
      %v6972 = vld [vmem:[#allocation3 + $0xd8] sm:$0xff]
      %v6973 = vld [vmem:[#allocation3 + $0xf0] sm:$0xff]
      %v6974 = vld [vmem:[#allocation3 + $0x108] sm:$0xff]
      %v6975 = vld [vmem:[#allocation3 + $0x120] sm:$0xff]
      %v6976 = vld [vmem:[#allocation3 + $0x138] sm:$0xff]
      %v6977 = vld [vmem:[#allocation3 + $0x150] sm:$0xff]
      %v6978 = vld [vmem:[#allocation3 + $0x168] sm:$0xff]
      %v6979 = vld [vmem:[#allocation3 + $0x180] sm:$0xff]
      %v6980 = vld [vmem:[#allocation3 + $0x198] sm:$0xff]
      %v6981 = vld [vmem:[#allocation3 + $0x1b0] sm:$0xff]
      %v6982 = vld [vmem:[#allocation3 + $0x1c8] sm:$0xff]
      %v6983 = vld [vmem:[#allocation3 + $0x1e0] sm:$0xff]
      %v6984 = vld [vmem:[#allocation3 + $0x1f8] sm:$0xff]
      %v6985 = vld [vmem:[#allocation3 + $0x210] sm:$0xff]
      %v6986 = vld [vmem:[#allocation3 + $0x228] sm:$0xff]
      %v6987 = vld [vmem:[#allocation3 + $0x240] sm:$0x7f]
      %v6988 = vld [vmem:[#allocation3 + $0x28] sm:$0xfe]
      %v6989 = vld [vmem:[#allocation3 + $0x40] sm:$0xff]
      %v6990 = vld [vmem:[#allocation3 + $0x58] sm:$0xff]
      %v6991 = vld [vmem:[#allocation3 + $0x70] sm:$0xff]
      %v6992 = vld [vmem:[#allocation3 + $0x88] sm:$0xff]
      %v6993 = vld [vmem:[#allocation3 + $0xa0] sm:$0xff]
      %v6994 = vld [vmem:[#allocation3 + $0xb8] sm:$0xff]
      %v6995 = vld [vmem:[#allocation3 + $0xd0] sm:$0xff]
      %v6996 = vld [vmem:[#allocation3 + $0xe8] sm:$0xff]
      %v6997 = vld [vmem:[#allocation3 + $0x100] sm:$0xff]
      %v6998 = vld [vmem:[#allocation3 + $0x118] sm:$0xff]
      %v6999 = vld [vmem:[#allocation3 + $0x130] sm:$0xff]
      %v7000 = vld [vmem:[#allocation3 + $0x148] sm:$0xff]
      %v7001 = vld [vmem:[#allocation3 + $0x160] sm:$0xff]
      %v7002 = vld [vmem:[#allocation3 + $0x178] sm:$0xff]
      %v7003 = vld [vmem:[#allocation3 + $0x190] sm:$0xff]
      %v7004 = vld [vmem:[#allocation3 + $0x1a8] sm:$0xff]
      %v7005 = vld [vmem:[#allocation3 + $0x1c0] sm:$0xff]
      %v7006 = vld [vmem:[#allocation3 + $0x1d8] sm:$0xff]
      %v7007 = vld [vmem:[#allocation3 + $0x1f0] sm:$0xff]
      %v7008 = vld [vmem:[#allocation3 + $0x208] sm:$0xff]
      %v7009 = vld [vmem:[#allocation3 + $0x220] sm:$0xff]
      %v7010 = vld [vmem:[#allocation3 + $0x238] sm:$0xff]
      %v7011 = vld [vmem:[#allocation3 + $0x250] sm:$0xff]
      %v7012 = vld [vmem:[#allocation3 + $0x268] sm:$0x1]
      %vm7038 = vcmask 1040384
      %v7039 = vrot.slane %v6963, 7
      %v7040 = vrot.slane %v6964, 7
      %v7041 = vsel %vm7038, %v7039, %v7040
      %v7042 = vrot.slane %v6965, 7
      %v7043 = vsel %vm7038, %v7040, %v7042
      %v7044 = vrot.slane %v6966, 7
      %v7045 = vsel %vm7038, %v7042, %v7044
      %v7046 = vrot.slane %v6967, 7
      %v7047 = vsel %vm7038, %v7044, %v7046
      %v7048 = vrot.slane %v6968, 7
      %v7049 = vsel %vm7038, %v7046, %v7048
      %v7050 = vrot.slane %v6969, 7
      %v7051 = vsel %vm7038, %v7048, %v7050
      %v7052 = vrot.slane %v6970, 7
      %v7053 = vsel %vm7038, %v7050, %v7052
      %v7054 = vrot.slane %v6971, 7
      %v7055 = vsel %vm7038, %v7052, %v7054
      %v7056 = vrot.slane %v6972, 7
      %v7057 = vsel %vm7038, %v7054, %v7056
      %v7058 = vrot.slane %v6973, 7
      %v7059 = vsel %vm7038, %v7056, %v7058
      %v7060 = vrot.slane %v6974, 7
      %v7061 = vsel %vm7038, %v7058, %v7060
      %v7062 = vrot.slane %v6975, 7
      %v7063 = vsel %vm7038, %v7060, %v7062
      %v7064 = vrot.slane %v6976, 7
      %v7065 = vsel %vm7038, %v7062, %v7064
      %v7066 = vrot.slane %v6977, 7
      %v7067 = vsel %vm7038, %v7064, %v7066
      %v7068 = vrot.slane %v6978, 7
      %v7069 = vsel %vm7038, %v7066, %v7068
      %v7070 = vrot.slane %v6979, 7
      %v7071 = vsel %vm7038, %v7068, %v7070
      %v7072 = vrot.slane %v6980, 7
      %v7073 = vsel %vm7038, %v7070, %v7072
      %v7074 = vrot.slane %v6981, 7
      %v7075 = vsel %vm7038, %v7072, %v7074
      %v7076 = vrot.slane %v6982, 7
      %v7077 = vsel %vm7038, %v7074, %v7076
      %v7078 = vrot.slane %v6983, 7
      %v7079 = vsel %vm7038, %v7076, %v7078
      %v7080 = vrot.slane %v6984, 7
      %v7081 = vsel %vm7038, %v7078, %v7080
      %v7082 = vrot.slane %v6985, 7
      %v7083 = vsel %vm7038, %v7080, %v7082
      %v7084 = vrot.slane %v6986, 7
      %v7085 = vsel %vm7038, %v7082, %v7084
      %v7086 = vrot.slane %v6987, 7
      %v7087 = vsel %vm7038, %v7084, %v7086
      %v7112 = vadd.f32 %v6939, %v7041
      %v7113 = vadd.f32 %v6940, %v7043
      %v7114 = vadd.f32 %v6941, %v7045
      %v7115 = vadd.f32 %v6942, %v7047
      %v7116 = vadd.f32 %v6943, %v7049
      %v7117 = vadd.f32 %v6944, %v7051
      %v7118 = vadd.f32 %v6945, %v7053
      %v7119 = vadd.f32 %v6946, %v7055
      %v7120 = vadd.f32 %v6947, %v7057
      %v7121 = vadd.f32 %v6948, %v7059
      %v7122 = vadd.f32 %v6949, %v7061
      %v7123 = vadd.f32 %v6950, %v7063
      %v7124 = vadd.f32 %v6951, %v7065
      %v7125 = vadd.f32 %v6952, %v7067
      %v7126 = vadd.f32 %v6953, %v7069
      %v7127 = vadd.f32 %v6954, %v7071
      %v7128 = vadd.f32 %v6955, %v7073
      %v7129 = vadd.f32 %v6956, %v7075
      %v7130 = vadd.f32 %v6957, %v7077
      %v7131 = vadd.f32 %v6958, %v7079
      %v7132 = vadd.f32 %v6959, %v7081
      %v7133 = vadd.f32 %v6960, %v7083
      %v7134 = vadd.f32 %v6961, %v7085
      %v7135 = vadd.f32 %v6962, %v7087
      %vm7161 = vcmask 1046528
      %v7162 = vrot.slane %v6988, 1
      %v7163 = vrot.slane %v6989, 1
      %v7164 = vsel %vm7161, %v7162, %v7163
      %v7165 = vrot.slane %v6990, 1
      %v7166 = vsel %vm7161, %v7163, %v7165
      %v7167 = vrot.slane %v6991, 1
      %v7168 = vsel %vm7161, %v7165, %v7167
      %v7169 = vrot.slane %v6992, 1
      %v7170 = vsel %vm7161, %v7167, %v7169
      %v7171 = vrot.slane %v6993, 1
      %v7172 = vsel %vm7161, %v7169, %v7171
      %v7173 = vrot.slane %v6994, 1
      %v7174 = vsel %vm7161, %v7171, %v7173
      %v7175 = vrot.slane %v6995, 1
      %v7176 = vsel %vm7161, %v7173, %v7175
      %v7177 = vrot.slane %v6996, 1
      %v7178 = vsel %vm7161, %v7175, %v7177
      %v7179 = vrot.slane %v6997, 1
      %v7180 = vsel %vm7161, %v7177, %v7179
      %v7181 = vrot.slane %v6998, 1
      %v7182 = vsel %vm7161, %v7179, %v7181
      %v7183 = vrot.slane %v6999, 1
      %v7184 = vsel %vm7161, %v7181, %v7183
      %v7185 = vrot.slane %v7000, 1
      %v7186 = vsel %vm7161, %v7183, %v7185
      %v7187 = vrot.slane %v7001, 1
      %v7188 = vsel %vm7161, %v7185, %v7187
      %v7189 = vrot.slane %v7002, 1
      %v7190 = vsel %vm7161, %v7187, %v7189
      %v7191 = vrot.slane %v7003, 1
      %v7192 = vsel %vm7161, %v7189, %v7191
      %v7193 = vrot.slane %v7004, 1
      %v7194 = vsel %vm7161, %v7191, %v7193
      %v7195 = vrot.slane %v7005, 1
      %v7196 = vsel %vm7161, %v7193, %v7195
      %v7197 = vrot.slane %v7006, 1
      %v7198 = vsel %vm7161, %v7195, %v7197
      %v7199 = vrot.slane %v7007, 1
      %v7200 = vsel %vm7161, %v7197, %v7199
      %v7201 = vrot.slane %v7008, 1
      %v7202 = vsel %vm7161, %v7199, %v7201
      %v7203 = vrot.slane %v7009, 1
      %v7204 = vsel %vm7161, %v7201, %v7203
      %v7205 = vrot.slane %v7010, 1
      %v7206 = vsel %vm7161, %v7203, %v7205
      %v7207 = vrot.slane %v7011, 1
      %v7208 = vsel %vm7161, %v7205, %v7207
      %v7209 = vrot.slane %v7012, 1
      %v7210 = vsel %vm7161, %v7207, %v7209
      %v7235 = vadd.f32 %v7112, %v7164
      %v7236 = vadd.f32 %v7113, %v7166
      %v7237 = vadd.f32 %v7114, %v7168
      %v7238 = vadd.f32 %v7115, %v7170
      %v7239 = vadd.f32 %v7116, %v7172
      %v7240 = vadd.f32 %v7117, %v7174
      %v7241 = vadd.f32 %v7118, %v7176
      %v7242 = vadd.f32 %v7119, %v7178
      %v7243 = vadd.f32 %v7120, %v7180
      %v7244 = vadd.f32 %v7121, %v7182
      %v7245 = vadd.f32 %v7122, %v7184
      %v7246 = vadd.f32 %v7123, %v7186
      %v7247 = vadd.f32 %v7124, %v7188
      %v7248 = vadd.f32 %v7125, %v7190
      %v7249 = vadd.f32 %v7126, %v7192
      %v7250 = vadd.f32 %v7127, %v7194
      %v7251 = vadd.f32 %v7128, %v7196
      %v7252 = vadd.f32 %v7129, %v7198
      %v7253 = vadd.f32 %v7130, %v7200
      %v7254 = vadd.f32 %v7131, %v7202
      %v7255 = vadd.f32 %v7132, %v7204
      %v7256 = vadd.f32 %v7133, %v7206
      %v7257 = vadd.f32 %v7134, %v7208
      %v7258 = vadd.f32 %v7135, %v7210
      %v7259 = vld [vmem:[%s7] sm:$0x1]
      %v7261 = vlaneseq
      %v7262 = vshrl.u32 %v7261, 7
      %v7263 = vsub.s32 0, %v7262
      %v7264 = vrot.slane %v7259, %v7263
      %v7266 = vadd.f32 %v7235, %v7264
      %v7267 = vadd.f32 %v7236, %v7264
      %v7268 = vadd.f32 %v7237, %v7264
      %v7269 = vadd.f32 %v7238, %v7264
      %v7270 = vadd.f32 %v7239, %v7264
      %v7271 = vadd.f32 %v7240, %v7264
      %v7272 = vadd.f32 %v7241, %v7264
      %v7273 = vadd.f32 %v7242, %v7264
      %v7274 = vadd.f32 %v7243, %v7264
      %v7275 = vadd.f32 %v7244, %v7264
      %v7276 = vadd.f32 %v7245, %v7264
      %v7277 = vadd.f32 %v7246, %v7264
      %v7278 = vadd.f32 %v7247, %v7264
      %v7279 = vadd.f32 %v7248, %v7264
      %v7280 = vadd.f32 %v7249, %v7264
      %v7281 = vadd.f32 %v7250, %v7264
      %v7282 = vadd.f32 %v7251, %v7264
      %v7283 = vadd.f32 %v7252, %v7264
      %v7284 = vadd.f32 %v7253, %v7264
      %v7285 = vadd.f32 %v7254, %v7264
      %v7286 = vadd.f32 %v7255, %v7264
      %v7287 = vadd.f32 %v7256, %v7264
      %v7288 = vadd.f32 %v7257, %v7264
      %v7289 = vadd.f32 %v7258, %v7264
      %v7290 = vmax.f32 %v7266, 0.0
      %v7291 = vmax.f32 %v7267, 0.0
      %v7292 = vmax.f32 %v7268, 0.0
      %v7293 = vmax.f32 %v7269, 0.0
      %v7294 = vmax.f32 %v7270, 0.0
      %v7295 = vmax.f32 %v7271, 0.0
      %v7296 = vmax.f32 %v7272, 0.0
      %v7297 = vmax.f32 %v7273, 0.0
      %v7298 = vmax.f32 %v7274, 0.0
      %v7299 = vmax.f32 %v7275, 0.0
      %v7300 = vmax.f32 %v7276, 0.0
      %v7301 = vmax.f32 %v7277, 0.0
      %v7302 = vmax.f32 %v7278, 0.0
      %v7303 = vmax.f32 %v7279, 0.0
      %v7304 = vmax.f32 %v7280, 0.0
      %v7305 = vmax.f32 %v7281, 0.0
      %v7306 = vmax.f32 %v7282, 0.0
      %v7307 = vmax.f32 %v7283, 0.0
      %v7308 = vmax.f32 %v7284, 0.0
      %v7309 = vmax.f32 %v7285, 0.0
      %v7310 = vmax.f32 %v7286, 0.0
      %v7311 = vmax.f32 %v7287, 0.0
      %v7312 = vmax.f32 %v7288, 0.0
      %v7313 = vmax.f32 %v7289, 0.0
      %7314 = vst [vmem:[%s305] sm:$0xff] %v7290
      %7315 = vst [vmem:[%s305 + $0x8] sm:$0xff] %v7291
      %7316 = vst [vmem:[%s305 + $0x10] sm:$0xff] %v7292
      %7317 = vst [vmem:[%s305 + $0x18] sm:$0xff] %v7293
      %7318 = vst [vmem:[%s305 + $0x20] sm:$0xff] %v7294
      %7319 = vst [vmem:[%s305 + $0x28] sm:$0xff] %v7295
      %7320 = vst [vmem:[%s305 + $0x30] sm:$0xff] %v7296
      %7321 = vst [vmem:[%s305 + $0x38] sm:$0xff] %v7297
      %7322 = vst [vmem:[%s305 + $0x40] sm:$0xff] %v7298
      %7323 = vst [vmem:[%s305 + $0x48] sm:$0xff] %v7299
      %7324 = vst [vmem:[%s305 + $0x50] sm:$0xff] %v7300
      %7325 = vst [vmem:[%s305 + $0x58] sm:$0xff] %v7301
      %7326 = vst [vmem:[%s305 + $0x60] sm:$0xff] %v7302
      %7327 = vst [vmem:[%s305 + $0x68] sm:$0xff] %v7303
      %7328 = vst [vmem:[%s305 + $0x70] sm:$0xff] %v7304
      %7329 = vst [vmem:[%s305 + $0x78] sm:$0xff] %v7305
      %7330 = vst [vmem:[%s305 + $0x80] sm:$0xff] %v7306
      %7331 = vst [vmem:[%s305 + $0x88] sm:$0xff] %v7307
      %7332 = vst [vmem:[%s305 + $0x90] sm:$0xff] %v7308
      %7333 = vst [vmem:[%s305 + $0x98] sm:$0xff] %v7309
      %7334 = vst [vmem:[%s305 + $0xa0] sm:$0xff] %v7310
      %7335 = vst [vmem:[%s305 + $0xa8] sm:$0xff] %v7311
      %7336 = vst [vmem:[%s305 + $0xb0] sm:$0xff] %v7312
      %7337 = vst [vmem:[%s305 + $0xb8] sm:$0xff] %v7313
      %p7338 = scmp.lt.s32.totalorder %s19, 1
      %s7339 = scalar_select %p7338, %s19, 1
      %s7340 = smul.addr %s7339, 24
      %s7341 = smul.addr %s7340, 8
      %s7342 = scalar_lea.vmem %s8, %s7341
      // Predicated region
      $region53: #{psp_forward.1} parent=51 // pred_check
        %p7343 = pneg %p210
      $region54: #{psp_forward.1} parent=51 // pred_check_branch
        %7345 = sbr.rel (%p7343) target = $region56
      $region55: #{psp_forward.1} parent=51 // pred_region
        _
      $region56: #{psp_forward.1} parent=51 // pred_fallthru
        _
    $region52: #{psp_forward.1} parent=5 // pred_fallthru
      _
    %p7346 = scmp.le.s32.totalorder 2, %s14
    // Predicated region
    $region57: #{psp_forward.1} parent=5 // pred_check
      %p7347 = pneg %p7346
    $region58: #{psp_forward.1} parent=5 // pred_check_branch
      %7349 = sbr.rel (%p7347) target = $region60
    $region59: #{psp_forward.1} parent=5 // pred_region
      %s7350 = ssub.s32 %s14, 2
      // Predicated region
      $region61: #{psp_forward.1} parent=59 // pred_check
        %p7351 = pneg %p216
      $region62: #{psp_forward.1} parent=59 // pred_check_branch
        %7353 = sbr.rel (%p7351) target = $region64
      $region63: #{psp_forward.1} parent=59 // pred_region
        %p7354 = scmp.lt.s32.totalorder %s20, 1
        %s7355 = scalar_select %p7354, %s20, 1
        %s7356 = smul.addr %s7355, 24
        %s7357 = smul.addr %s7356, 8
        %s7358 = scalar_lea.vmem %s8, %s7357
      $region64: #{psp_forward.1} parent=59 // pred_fallthru
        _
    $region60: #{psp_forward.1} parent=5 // pred_fallthru
      _
  $region6: #{psp_forward.1} parent=0 // loop_footer
    %s18 = sadd.s32 1, %s14
  $region7: #{psp_forward.1} parent=0 // loop_footer_branch
    %13 = sbr.rel target = $region3
  $region8: #{psp_forward.1} parent=0 // loop_exit
    _

</llo_original>
